<compile_context>
chip_gen: v7x
topology: tpu7x:2x2x1
jax: 0.10.0
libtpu: 0.0.40
codegen_flags: <defaults>
</compile_context>

<pallas_src>
import functools
import math

import jax
import jax.numpy as jnp
from jax.experimental import pallas as pl
from jax.experimental.pallas import tpu as pltpu


_MIB = 1024 * 1024


def _vmem_limit(nbytes):
    """2x margin over the estimated working set, floored at 32 MiB, capped at 128 MiB."""
    return int(min(128 * _MIB, max(32 * _MIB, 2 * nbytes)))


def _row_tile(L):
    """Largest friendly row-tile that divides L (keeps bf16 sublane packing happy)."""
    for t in (1024, 512, 256, 128, 64, 32, 16):
        if L % t == 0:
            return t
    return L


# ---------------------------------------------------------------------------
# In-kernel helpers
# ---------------------------------------------------------------------------

def _instance_norm(s, n):
    """InstanceNorm1d over axis 0 (length) per channel; centered two-pass variance."""
    inv_n = 1.0 / n
    mean = jnp.sum(s, axis=0, keepdims=True) * inv_n
    c = s - mean
    var = jnp.sum(c * c, axis=0, keepdims=True) * inv_n
    return c * jax.lax.rsqrt(var + 1e-5)


# ---------------------------------------------------------------------------
# Kernels
# ---------------------------------------------------------------------------

def _dense_kernel(x_ref, w_ref, b_ref, o_ref):
    # pointwise Conv1d == matmul over channels (bf16 MXU operands, f32 accumulate)
    x = x_ref[0].astype(jnp.bfloat16)                       # (tl, Cin)
    y = jnp.dot(x, w_ref[...], preferred_element_type=jnp.float32) + b_ref[...]
    o_ref[0] = y.astype(o_ref.dtype)


def _dense_mask_kernel(x_ref, w_ref, b_ref, m_ref, o_ref):
    # output head: pointwise conv (lane-dense padded Cout) followed by mask multiply
    x = x_ref[0].astype(jnp.bfloat16)                       # (tl, D)
    y = jnp.dot(x, w_ref[...], preferred_element_type=jnp.float32) + b_ref[...]
    o_ref[0] = (y * m_ref[0]).astype(o_ref.dtype)           # (tl, 1) broadcast


def _fused_layer_kernel(*refs, n_heads, l_seg, self_attn):
    """One full encoder/decoder layer for a single batch element."""
    if self_attn:
        (mask_ref, x_ref,
         wq_ref, bq_ref, wk_ref, bk_ref, wv_ref, bv_ref, wo_ref, bo_ref,
         w1_ref, b1_ref, w2_ref, b2_ref, o_ref) = refs
        cross_ref = x_ref
    else:
        (mask_ref, x_ref, cross_ref,
         wq_ref, bq_ref, wk_ref, bk_ref, wv_ref, bv_ref, wo_ref, bo_ref,
         w1_ref, b1_ref, w2_ref, b2_ref, o_ref) = refs

    L, D = x_ref.shape[1], x_ref.shape[2]
    n_seg = L // l_seg
    dh = D // n_heads

    # Residual kept in f32; bf16 copies used strictly as MXU operands.
    x_in = x_ref[0]
    xb = x_in.astype(jnp.bfloat16)
    x = x_in.astype(jnp.float32)
    cb = xb if self_attn else cross_ref[0].astype(jnp.bfloat16)

    # QKV projections: full (L, D) x (D, D) MXU matmuls (1/sqrt(dh) pre-folded into wq/bq).
    q = jnp.dot(xb, wq_ref[...], preferred_element_type=jnp.float32) + bq_ref[...]
    k = jnp.dot(xb, wk_ref[...], preferred_element_type=jnp.float32) + bk_ref[...]
    v = jnp.dot(cb, wv_ref[...], preferred_element_type=jnp.float32) + bv_ref[...]

    # (L, D) -> (n_heads * n_seg, l_seg, dh): heads folded into a single batch dim so the
    # attention runs as two batched einsums instead of a per-head loop.
    def to_heads(t):
        t3 = t.reshape(n_seg, l_seg, D).astype(jnp.bfloat16)
        th = jnp.stack([t3[:, :, h * dh:(h + 1) * dh] for h in range(n_heads)], axis=0)
        return th.reshape(n_heads * n_seg, l_seg, dh)

    qh, kh, vh = to_heads(q), to_heads(k), to_heads(v)

    # Additive key-mask bias, shared across heads: (n_seg, 1, l_seg) -> (H*n_seg, 1, l_seg).
    bias = jnp.where(mask_ref[0] > 0.0, 0.0, -1e9).astype(jnp.float32)
    bias_b = jnp.broadcast_to(bias[None], (n_heads, n_seg, 1, l_seg))
    bias_b = bias_b.reshape(n_heads * n_seg, 1, l_seg)

    # Segment-local (block-diagonal) attention, batched over heads x segments.
    s = jnp.einsum('bqd,bkd->bqk', qh, kh,
                   preferred_element_type=jnp.float32)       # (H*n_seg, l_seg, l_seg)
    s = s + bias_b
    s = s - jnp.max(s, axis=-1, keepdims=True)
    p = jnp.exp(s)
    p = p * pl.reciprocal(jnp.sum(p, axis=-1, keepdims=True), approx=True)
    ctx_b = jnp.einsum('bqk,bkd->bqd', p.astype(jnp.bfloat16), vh,
                       preferred_element_type=jnp.float32)   # (H*n_seg, l_seg, dh)

    # Reassemble (L, D) and issue a single merged output projection for all heads.
    ctx4 = ctx_b.reshape(n_heads, n_seg, l_seg, dh)
    ctx = jnp.concatenate([ctx4[h] for h in range(n_heads)], axis=-1)   # (n_seg, l_seg, D)
    ctx = ctx.reshape(L, D)
    attn = jnp.dot(ctx.astype(jnp.bfloat16), wo_ref[...],
                   preferred_element_type=jnp.float32) + bo_ref[...]

    # Residual + InstanceNorm1d (post-norm, pre_norm=False).
    x1 = _instance_norm(x + attn, L)

    # FFN: conv2(relu(conv1(x))) + residual, then InstanceNorm1d.
    h1 = jnp.dot(x1.astype(jnp.bfloat16), w1_ref[...],
                 preferred_element_type=jnp.float32) + b1_ref[...]
    h1 = jnp.maximum(h1, 0.0).astype(jnp.bfloat16)           # relu in f32, bf16 MXU operand
    y = jnp.dot(h1, w2_ref[...], preferred_element_type=jnp.float32) + b2_ref[...]

    o_ref[0] = _instance_norm(x1 + y, L).astype(o_ref.dtype)


# ---------------------------------------------------------------------------
# pallas_call wrappers
# ---------------------------------------------------------------------------

def dense(x, w, b, out_dtype=jnp.bfloat16):
    """Pointwise Conv1d, tiled over (batch, L-rows)."""
    B, L, Cin = x.shape
    Cout = w.shape[1]
    tl = _row_tile(L)
    est = (2 * (tl * Cin * x.dtype.itemsize + Cin * Cout * 2 + Cout * 4
                + tl * Cout * jnp.dtype(out_dtype).itemsize)
           + tl * Cout * 4)
    return pl.pallas_call(
        _dense_kernel,
        out_shape=jax.ShapeDtypeStruct((B, L, Cout), out_dtype),
        grid=(B, L // tl),
        in_specs=[pl.BlockSpec((1, tl, Cin), lambda i, j: (i, j, 0)),
                  pl.BlockSpec((Cin, Cout), lambda i, j: (0, 0)),
                  pl.BlockSpec((1, Cout), lambda i, j: (0, 0))],
        out_specs=pl.BlockSpec((1, tl, Cout), lambda i, j: (i, j, 0)),
        compiler_params=pltpu.CompilerParams(
            dimension_semantics=("parallel", "parallel"),
            vmem_limit_bytes=_vmem_limit(est)),
    )(x, w, b)


def dense_masked(x, w, b, mask):
    """Output head; Cout is padded to a multiple of 128 so stores are lane-dense."""
    B, L, D = x.shape
    Cout = w.shape[1]
    Cpad = ((Cout + 127) // 128) * 128
    w_p = jnp.pad(w, ((0, 0), (0, Cpad - Cout)))
    b_p = jnp.pad(b, ((0, 0), (0, Cpad - Cout)))
    m = mask.reshape(B, L, 1).astype(jnp.float32)
    tl = _row_tile(L)
    est = (2 * (tl * D * x.dtype.itemsize + D * Cpad * 2 + Cpad * 4
                + tl * 4 + tl * Cpad * 4)
           + tl * Cpad * 4)
    out = pl.pallas_call(
        _dense_mask_kernel,
        out_shape=jax.ShapeDtypeStruct((B, L, Cpad), jnp.float32),
        grid=(B, L // tl),
        in_specs=[pl.BlockSpec((1, tl, D), lambda i, j: (i, j, 0)),
                  pl.BlockSpec((D, Cpad), lambda i, j: (0, 0)),
                  pl.BlockSpec((1, Cpad), lambda i, j: (0, 0)),
                  pl.BlockSpec((1, tl, 1), lambda i, j: (i, j, 0))],
        out_specs=pl.BlockSpec((1, tl, Cpad), lambda i, j: (i, j, 0)),
        compiler_params=pltpu.CompilerParams(
            dimension_semantics=("parallel", "parallel"),
            vmem_limit_bytes=_vmem_limit(est)),
    )(x, w_p, b_p, m)
    return out[:, :, :Cout]


def fused_layer(x, cross, mask, p, *, n_heads, l_seg):
    """One encoder (cross=None) or decoder layer as a single pallas_call."""
    B, L, D = x.shape
    assert L % l_seg == 0 and D % n_heads == 0
    n_seg = L // l_seg
    mask3 = mask.reshape(B, n_seg, 1, l_seg).astype(jnp.float32)

    a, f = p["attn"], p["ffn"]
    Dff = f["w1"].shape[1]

    # Fold 1/sqrt(dh) into the query projection (host side, tiny).
    scale = 1.0 / math.sqrt(D // n_heads)
    wq = (a["wq"].astype(jnp.float32) * scale).astype(a["wq"].dtype)
    bq = a["bq"] * scale

    x_spec = pl.BlockSpec((1, L, D), lambda i: (i, 0, 0))
    m_spec = pl.BlockSpec((1, n_seg, 1, l_seg), lambda i: (i, 0, 0, 0))

    def w_spec(r, c):
        return pl.BlockSpec((r, c), lambda i: (0, 0))

    weights = [wq, bq, a["wk"], a["bk"], a["wv"], a["bv"],
               a["wo"], a["bo"], f["w1"], f["b1"], f["w2"], f["b2"]]
    w_specs = ([w_spec(D, D), w_spec(1, D)] * 4
               + [w_spec(D, Dff), w_spec(1, Dff), w_spec(Dff, D), w_spec(1, D)])

    self_attn = cross is None
    if self_attn:
        inputs = [mask3, x] + weights
        in_specs = [m_spec, x_spec] + w_specs
    else:
        inputs = [mask3, x, cross] + weights
        in_specs = [m_spec, x_spec, x_spec] + w_specs

    # VMEM budget: double-buffered blocks + weights + in-kernel intermediates.
    weight_bytes = 2 * (4 * D * D + 2 * D * Dff) + 4 * (5 * D + Dff)
    block_bytes = 2 * (3 * L * D * 2 + n_seg * l_seg * 4 + weight_bytes)
    scratch_bytes = (7 * L * D * 4 + 3 * L * D * 2
                     + 2 * n_heads * n_seg * l_seg * l_seg * 4
                     + L * Dff * 4 + L * Dff * 2)
    vlim = _vmem_limit(block_bytes + scratch_bytes)

    kernel = functools.partial(_fused_layer_kernel, n_heads=n_heads,
                               l_seg=l_seg, self_attn=self_attn)
    return pl.pallas_call(
        kernel,
        out_shape=jax.ShapeDtypeStruct((B, L, D), jnp.bfloat16),
        grid=(B,),
        in_specs=in_specs,
        out_specs=x_spec,
        compiler_params=pltpu.CompilerParams(
            dimension_semantics=("parallel",), vmem_limit_bytes=vlim),
    )(*inputs)


# ---------------------------------------------------------------------------
# Glue (indexing / reshapes stay in plain JAX)
# ---------------------------------------------------------------------------

def interp_nearest(x, new_len):
    """F.interpolate(mode='nearest') along axis 1 of (B, L, C) or (B, L)."""
    old_len = x.shape[1]
    idx = (jnp.arange(new_len) * old_len) // new_len        # floor(i * L_in / L_out)
    return jnp.take(x, idx, axis=1)


def eut_single_stage(x_bcl, mask_bl, params, *, num_layers, l_seg, n_heads):
    """x_bcl: (B, input_dim, L) PyTorch layout. mask_bl: (B, L). Returns (B, num_classes, L)."""
    x = jnp.transpose(x_bcl, (0, 2, 1)).astype(jnp.float32)     # -> (B, L, C)
    # input_dropout: eval-mode identity
    x = dense(x, params["conv_in_w"], params["conv_in_b"])      # bf16 activations

    L = x.shape[1]
    len_list = [L // (2 ** i) for i in range(num_layers + 1)]

    x_down = [x]
    mask_down = [mask_bl]
    mask = mask_bl
    for i in range(num_layers):
        x = interp_nearest(x, len_list[i + 1])
        mask = interp_nearest(mask, len_list[i + 1])
        x = fused_layer(x, None, mask, params["enc"][i],
                        n_heads=n_heads, l_seg=l_seg)            # q,k,v <- x
        x_down.append(x)
        mask_down.append(mask)

    for i in range(num_layers):
        tgt = num_layers - i - 1
        x = interp_nearest(x, len_list[tgt])
        x = fused_layer(x, x_down[tgt], mask_down[tgt], params["dec"][i],
                        n_heads=n_heads, l_seg=l_seg)            # q,k <- x ; v <- cross

    out = dense_masked(x, params["conv_out_w"], params["conv_out_b"], mask_down[0])
    return jnp.transpose(out, (0, 2, 1))                         # -> (B, num_classes, L)


# ---------------------------------------------------------------------------
# Deterministic parameter init (weights bf16 for the MXU path, biases f32)
# ---------------------------------------------------------------------------

def init_params(key, input_dim, num_classes, num_layers, d_model, d_ff):
    keys = iter(jax.random.split(key, 16 + 24 * num_layers))

    def mat(shape, scale=0.1, dtype=jnp.bfloat16):
        return (scale * jax.random.normal(next(keys), shape, jnp.float32)).astype(dtype)

    def vec(shape, scale=0.02):
        return scale * jax.random.normal(next(keys), shape, jnp.float32)

    def attn_params():
        return {"wq": mat((d_model, d_model)), "bq": vec((1, d_model)),
                "wk": mat((d_model, d_model)), "bk": vec((1, d_model)),
                "wv": mat((d_model, d_model)), "bv": vec((1, d_model)),
                "wo": mat((d_model, d_model)), "bo": vec((1, d_model))}

    def ffn_params():
        return {"w1": mat((d_model, d_ff)), "b1": vec((1, d_ff)),
                "w2": mat((d_ff, d_model)), "b2": vec((1, d_model))}

    return {
        "conv_in_w": mat((input_dim, d_model)),
        "conv_in_b": vec((1, d_model)),
        "conv_out_w": mat((d_model, num_classes)),
        "conv_out_b": vec((1, num_classes)),
        "enc": [{"attn": attn_params(), "ffn": ffn_params()} for _ in range(num_layers)],
        "dec": [{"attn": attn_params(), "ffn": ffn_params()} for _ in range(num_layers)],
    }


# ---------------------------------------------------------------------------
# Demo
# ---------------------------------------------------------------------------

if __name__ == "__main__":
    B, INPUT_DIM, L = 2, 6, 16
    NUM_CLASSES = 5
    NUM_LAYERS = 2
    L_SEG = 4
    D_MODEL = 32
    N_HEADS = 4
    D_FF = 64

    root = jax.random.PRNGKey(0)
    k_x, k_p = jax.random.split(root)
    x = jax.random.normal(k_x, (B, INPUT_DIM, L), jnp.float32)   # PyTorch (B, C, L)
    mask = jnp.ones((B, L), jnp.float32)

    params = init_params(k_p, INPUT_DIM, NUM_CLASSES, NUM_LAYERS, D_MODEL, D_FF)

    fwd = jax.jit(functools.partial(eut_single_stage, num_layers=NUM_LAYERS,
                                    l_seg=L_SEG, n_heads=N_HEADS))
    out = fwd(x, mask, params)
    out = jax.block_until_ready(out)

    assert out.shape == (B, NUM_CLASSES, L), out.shape
    assert bool(jnp.all(jnp.isfinite(out)))
    print("KERNEL_OK")
</pallas_src>

<mosaic_0001>
module attributes {stable_mosaic.version = 11 : i64} {
  func.func @_dense_kernel(%arg0: i32, %arg1: i32, %arg2: memref<1x16x6xf32, #tpu.memory_space<vmem>>, %arg3: memref<6x32xbf16, #tpu.memory_space<vmem>>, %arg4: memref<1x32xf32, #tpu.memory_space<vmem>>, %arg5: memref<1x16x32xbf16, #tpu.memory_space<vmem>>) attributes {dimension_semantics = [#tpu.dimension_semantics<parallel>, #tpu.dimension_semantics<parallel>], iteration_bounds = array<i64: 2, 1>, scalar_prefetch = 0 : i64, scratch_operands = 0 : i64, tpu.core_type = #tpu.core_type<tc>, window_params = [{transform_indices = @transform_0, window_bounds = array<i64: 1, 16, 6>}, {pipeline_mode = #tpu.pipeline_mode<synchronous>, transform_indices = @transform_1, window_bounds = array<i64: 6, 32>}, {pipeline_mode = #tpu.pipeline_mode<synchronous>, transform_indices = @transform_2, window_bounds = array<i64: 1, 32>}, {transform_indices = @transform_3, window_bounds = array<i64: 1, 16, 32>}]} {
    %c0 = arith.constant 0 : index
    %c0_0 = arith.constant 0 : index
    %c0_1 = arith.constant 0 : index
    %0 = vector.load %arg2[%c0, %c0_0, %c0_1] : memref<1x16x6xf32, #tpu.memory_space<vmem>>, vector<1x16x6xf32>
    %1 = vector.shape_cast %0 : vector<1x16x6xf32> to vector<16x6xf32>
    %2 = arith.truncf %1 : vector<16x6xf32> to vector<16x6xbf16>
    %c0_2 = arith.constant 0 : index
    %c0_3 = arith.constant 0 : index
    %3 = vector.load %arg3[%c0_2, %c0_3] : memref<6x32xbf16, #tpu.memory_space<vmem>>, vector<6x32xbf16>
    %cst = arith.constant dense<0.000000e+00> : vector<16x32xf32>
    %4 = tpu.matmul %2, %3, %cst {dimension_numbers = #tpu.dot_dimension_numbers<[1], [0], [0], [1], [0, 0, 1, 1], [], []>} : vector<16x6xbf16>, vector<6x32xbf16>, vector<16x32xf32> -> vector<16x32xf32>
    %c0_4 = arith.constant 0 : index
    %c0_5 = arith.constant 0 : index
    %5 = vector.load %arg4[%c0_4, %c0_5] : memref<1x32xf32, #tpu.memory_space<vmem>>, vector<1x32xf32>
    %6 = vector.broadcast %5 : vector<1x32xf32> to vector<16x32xf32>
    %7 = arith.addf %4, %6 : vector<16x32xf32>
    %8 = arith.truncf %7 : vector<16x32xf32> to vector<16x32xbf16>
    %c0_6 = arith.constant 0 : index
    %c0_7 = arith.constant 0 : index
    %c0_8 = arith.constant 0 : index
    %9 = vector.load %arg5[%c0_6, %c0_7, %c0_8] : memref<1x16x32xbf16, #tpu.memory_space<vmem>>, vector<1x16x32xbf16>
    %10 = vector.shape_cast %9 : vector<1x16x32xbf16> to vector<16x32xbf16>
    %11 = vector.shape_cast %8 : vector<16x32xbf16> to vector<1x16x32xbf16>
    tpu.vector_store %arg5[%c0_6, %c0_7, %c0_8], %11 {strides = array<i32>} : memref<1x16x32xbf16, #tpu.memory_space<vmem>>, vector<1x16x32xbf16>,
    return
  }
  func.func @transform_0(%arg0: i32, %arg1: i32) -> (i32, i32, i32) {
    %c0_i32 = arith.constant 0 : i32
    %c0_i32_0 = arith.constant 0 : i32
    return %arg0, %arg1, %c0_i32 : i32, i32, i32
  }
  func.func @transform_1(%arg0: i32, %arg1: i32) -> (i32, i32) {
    %c0_i32 = arith.constant 0 : i32
    %c0_i32_0 = arith.constant 0 : i32
    %c0_i32_1 = arith.constant 0 : i32
    return %c0_i32, %c0_i32_0 : i32, i32
  }
  func.func @transform_2(%arg0: i32, %arg1: i32) -> (i32, i32) {
    %c0_i32 = arith.constant 0 : i32
    %c0_i32_0 = arith.constant 0 : i32
    %c0_i32_1 = arith.constant 0 : i32
    return %c0_i32, %c0_i32_0 : i32, i32
  }
  func.func @transform_3(%arg0: i32, %arg1: i32) -> (i32, i32, i32) {
    %c0_i32 = arith.constant 0 : i32
    %c0_i32_0 = arith.constant 0 : i32
    return %arg0, %arg1, %c0_i32 : i32, i32, i32
  }
}

module attributes {stable_mosaic.version = 11 : i64} {
  func.func @_fused_layer_kernel(%arg0: i32, %arg1: memref<1x2x1x4xf32, #tpu.memory_space<vmem>>, %arg2: memref<1x8x32xbf16, #tpu.memory_space<vmem>>, %arg3: memref<32x32xbf16, #tpu.memory_space<vmem>>, %arg4: memref<1x32xf32, #tpu.memory_space<vmem>>, %arg5: memref<32x32xbf16, #tpu.memory_space<vmem>>, %arg6: memref<1x32xf32, #tpu.memory_space<vmem>>, %arg7: memref<32x32xbf16, #tpu.memory_space<vmem>>, %arg8: memref<1x32xf32, #tpu.memory_space<vmem>>, %arg9: memref<32x32xbf16, #tpu.memory_space<vmem>>, %arg10: memref<1x32xf32, #tpu.memory_space<vmem>>, %arg11: memref<32x64xbf16, #tpu.memory_space<vmem>>, %arg12: memref<1x64xf32, #tpu.memory_space<vmem>>, %arg13: memref<64x32xbf16, #tpu.memory_space<vmem>>, %arg14: memref<1x32xf32, #tpu.memory_space<vmem>>, %arg15: memref<1x8x32xbf16, #tpu.memory_space<vmem>>) attributes {dimension_semantics = [#tpu.dimension_semantics<parallel>], iteration_bounds = array<i64: 2>, scalar_prefetch = 0 : i64, scratch_operands = 0 : i64, tpu.core_type = #tpu.core_type<tc>, window_params = [{transform_indices = @transform_0, window_bounds = array<i64: 1, 2, 1, 4>}, {transform_indices = @transform_1, window_bounds = array<i64: 1, 8, 32>}, {pipeline_mode = #tpu.pipeline_mode<synchronous>, transform_indices = @transform_2, window_bounds = array<i64: 32, 32>}, {pipeline_mode = #tpu.pipeline_mode<synchronous>, transform_indices = @transform_3, window_bounds = array<i64: 1, 32>}, {pipeline_mode = #tpu.pipeline_mode<synchronous>, transform_indices = @transform_4, window_bounds = array<i64: 32, 32>}, {pipeline_mode = #tpu.pipeline_mode<synchronous>, transform_indices = @transform_5, window_bounds = array<i64: 1, 32>}, {pipeline_mode = #tpu.pipeline_mode<synchronous>, transform_indices = @transform_6, window_bounds = array<i64: 32, 32>}, {pipeline_mode = #tpu.pipeline_mode<synchronous>, transform_indices = @transform_7, window_bounds = array<i64: 1, 32>}, {pipeline_mode = #tpu.pipeline_mode<synchronous>, transform_indices = @transform_8, window_bounds = array<i64: 32, 32>}, {pipeline_mode = #tpu.pipeline_mode<synchronous>, transform_indices = @transform_9, window_bounds = array<i64: 1, 32>}, {pipeline_mode = #tpu.pipeline_mode<synchronous>, transform_indices = @transform_10, window_bounds = array<i64: 32, 64>}, {pipeline_mode = #tpu.pipeline_mode<synchronous>, transform_indices = @transform_11, window_bounds = array<i64: 1, 64>}, {pipeline_mode = #tpu.pipeline_mode<synchronous>, transform_indices = @transform_12, window_bounds = array<i64: 64, 32>}, {pipeline_mode = #tpu.pipeline_mode<synchronous>, transform_indices = @transform_13, window_bounds = array<i64: 1, 32>}, {transform_indices = @transform_14, window_bounds = array<i64: 1, 8, 32>}]} {
    %c0 = arith.constant 0 : index
    %c0_0 = arith.constant 0 : index
    %c0_1 = arith.constant 0 : index
    %0 = vector.load %arg2[%c0, %c0_0, %c0_1] : memref<1x8x32xbf16, #tpu.memory_space<vmem>>, vector<1x8x32xbf16>
    %1 = vector.shape_cast %0 : vector<1x8x32xbf16> to vector<8x32xbf16>
    %2 = arith.extf %1 : vector<8x32xbf16> to vector<8x32xf32>
    %c0_2 = arith.constant 0 : index
    %c0_3 = arith.constant 0 : index
    %3 = vector.load %arg3[%c0_2, %c0_3] : memref<32x32xbf16, #tpu.memory_space<vmem>>, vector<32x32xbf16>
    %cst = arith.constant dense<0.000000e+00> : vector<8x32xf32>
    %4 = tpu.matmul %1, %3, %cst {dimension_numbers = #tpu.dot_dimension_numbers<[1], [0], [0], [1], [0, 0, 1, 1], [], []>} : vector<8x32xbf16>, vector<32x32xbf16>, vector<8x32xf32> -> vector<8x32xf32>
    %c0_4 = arith.constant 0 : index
    %c0_5 = arith.constant 0 : index
    %5 = vector.load %arg4[%c0_4, %c0_5] : memref<1x32xf32, #tpu.memory_space<vmem>>, vector<1x32xf32>
    %6 = vector.broadcast %5 : vector<1x32xf32> to vector<8x32xf32>
    %7 = arith.addf %4, %6 : vector<8x32xf32>
    %c0_6 = arith.constant 0 : index
    %c0_7 = arith.constant 0 : index
    %8 = vector.load %arg5[%c0_6, %c0_7] : memref<32x32xbf16, #tpu.memory_space<vmem>>, vector<32x32xbf16>
    %cst_8 = arith.constant dense<0.000000e+00> : vector<8x32xf32>
    %9 = tpu.matmul %1, %8, %cst_8 {dimension_numbers = #tpu.dot_dimension_numbers<[1], [0], [0], [1], [0, 0, 1, 1], [], []>} : vector<8x32xbf16>, vector<32x32xbf16>, vector<8x32xf32> -> vector<8x32xf32>
    %c0_9 = arith.constant 0 : index
    %c0_10 = arith.constant 0 : index
    %10 = vector.load %arg6[%c0_9, %c0_10] : memref<1x32xf32, #tpu.memory_space<vmem>>, vector<1x32xf32>
    %11 = vector.broadcast %10 : vector<1x32xf32> to vector<8x32xf32>
    %12 = arith.addf %9, %11 : vector<8x32xf32>
    %c0_11 = arith.constant 0 : index
    %c0_12 = arith.constant 0 : index
    %13 = vector.load %arg7[%c0_11, %c0_12] : memref<32x32xbf16, #tpu.memory_space<vmem>>, vector<32x32xbf16>
    %cst_13 = arith.constant dense<0.000000e+00> : vector<8x32xf32>
    %14 = tpu.matmul %1, %13, %cst_13 {dimension_numbers = #tpu.dot_dimension_numbers<[1], [0], [0], [1], [0, 0, 1, 1], [], []>} : vector<8x32xbf16>, vector<32x32xbf16>, vector<8x32xf32> -> vector<8x32xf32>
    %c0_14 = arith.constant 0 : index
    %c0_15 = arith.constant 0 : index
    %15 = vector.load %arg8[%c0_14, %c0_15] : memref<1x32xf32, #tpu.memory_space<vmem>>, vector<1x32xf32>
    %16 = vector.broadcast %15 : vector<1x32xf32> to vector<8x32xf32>
    %17 = arith.addf %14, %16 : vector<8x32xf32>
    %18 = vector.shape_cast %7 : vector<8x32xf32> to vector<2x4x32xf32>
    %19 = arith.truncf %18 : vector<2x4x32xf32> to vector<2x4x32xbf16>
    %20 = vector.extract_strided_slice %19 {offsets = [0, 0, 0], sizes = [2, 4, 8], strides = [1, 1, 1]} : vector<2x4x32xbf16> to vector<2x4x8xbf16>
    %21 = vector.extract_strided_slice %19 {offsets = [0, 0, 8], sizes = [2, 4, 8], strides = [1, 1, 1]} : vector<2x4x32xbf16> to vector<2x4x8xbf16>
    %22 = vector.extract_strided_slice %19 {offsets = [0, 0, 16], sizes = [2, 4, 8], strides = [1, 1, 1]} : vector<2x4x32xbf16> to vector<2x4x8xbf16>
    %23 = vector.extract_strided_slice %19 {offsets = [0, 0, 24], sizes = [2, 4, 8], strides = [1, 1, 1]} : vector<2x4x32xbf16> to vector<2x4x8xbf16>
    %24 = vector.shape_cast %20 : vector<2x4x8xbf16> to vector<1x2x4x8xbf16>
    %25 = vector.shape_cast %21 : vector<2x4x8xbf16> to vector<1x2x4x8xbf16>
    %26 = vector.shape_cast %22 : vector<2x4x8xbf16> to vector<1x2x4x8xbf16>
    %27 = vector.shape_cast %23 : vector<2x4x8xbf16> to vector<1x2x4x8xbf16>
    %28 = tpu.concatenate %24, %25, %26, %27 in 0 : vector<1x2x4x8xbf16>, vector<1x2x4x8xbf16>, vector<1x2x4x8xbf16>, vector<1x2x4x8xbf16> -> vector<4x2x4x8xbf16>
    %29 = vector.shape_cast %28 : vector<4x2x4x8xbf16> to vector<8x4x8xbf16>
    %30 = vector.shape_cast %12 : vector<8x32xf32> to vector<2x4x32xf32>
    %31 = arith.truncf %30 : vector<2x4x32xf32> to vector<2x4x32xbf16>
    %32 = vector.extract_strided_slice %31 {offsets = [0, 0, 0], sizes = [2, 4, 8], strides = [1, 1, 1]} : vector<2x4x32xbf16> to vector<2x4x8xbf16>
    %33 = vector.extract_strided_slice %31 {offsets = [0, 0, 8], sizes = [2, 4, 8], strides = [1, 1, 1]} : vector<2x4x32xbf16> to vector<2x4x8xbf16>
    %34 = vector.extract_strided_slice %31 {offsets = [0, 0, 16], sizes = [2, 4, 8], strides = [1, 1, 1]} : vector<2x4x32xbf16> to vector<2x4x8xbf16>
    %35 = vector.extract_strided_slice %31 {offsets = [0, 0, 24], sizes = [2, 4, 8], strides = [1, 1, 1]} : vector<2x4x32xbf16> to vector<2x4x8xbf16>
    %36 = vector.shape_cast %32 : vector<2x4x8xbf16> to vector<1x2x4x8xbf16>
    %37 = vector.shape_cast %33 : vector<2x4x8xbf16> to vector<1x2x4x8xbf16>
    %38 = vector.shape_cast %34 : vector<2x4x8xbf16> to vector<1x2x4x8xbf16>
    %39 = vector.shape_cast %35 : vector<2x4x8xbf16> to vector<1x2x4x8xbf16>
    %40 = tpu.concatenate %36, %37, %38, %39 in 0 : vector<1x2x4x8xbf16>, vector<1x2x4x8xbf16>, vector<1x2x4x8xbf16>, vector<1x2x4x8xbf16> -> vector<4x2x4x8xbf16>
    %41 = vector.shape_cast %40 : vector<4x2x4x8xbf16> to vector<8x4x8xbf16>
    %42 = vector.shape_cast %17 : vector<8x32xf32> to vector<2x4x32xf32>
    %43 = arith.truncf %42 : vector<2x4x32xf32> to vector<2x4x32xbf16>
    %44 = vector.extract_strided_slice %43 {offsets = [0, 0, 0], sizes = [2, 4, 8], strides = [1, 1, 1]} : vector<2x4x32xbf16> to vector<2x4x8xbf16>
    %45 = vector.extract_strided_slice %43 {offsets = [0, 0, 8], sizes = [2, 4, 8], strides = [1, 1, 1]} : vector<2x4x32xbf16> to vector<2x4x8xbf16>
    %46 = vector.extract_strided_slice %43 {offsets = [0, 0, 16], sizes = [2, 4, 8], strides = [1, 1, 1]} : vector<2x4x32xbf16> to vector<2x4x8xbf16>
    %47 = vector.extract_strided_slice %43 {offsets = [0, 0, 24], sizes = [2, 4, 8], strides = [1, 1, 1]} : vector<2x4x32xbf16> to vector<2x4x8xbf16>
    %48 = vector.shape_cast %44 : vector<2x4x8xbf16> to vector<1x2x4x8xbf16>
    %49 = vector.shape_cast %45 : vector<2x4x8xbf16> to vector<1x2x4x8xbf16>
    %50 = vector.shape_cast %46 : vector<2x4x8xbf16> to vector<1x2x4x8xbf16>
    %51 = vector.shape_cast %47 : vector<2x4x8xbf16> to vector<1x2x4x8xbf16>
    %52 = tpu.concatenate %48, %49, %50, %51 in 0 : vector<1x2x4x8xbf16>, vector<1x2x4x8xbf16>, vector<1x2x4x8xbf16>, vector<1x2x4x8xbf16> -> vector<4x2x4x8xbf16>
    %53 = vector.shape_cast %52 : vector<4x2x4x8xbf16> to vector<8x4x8xbf16>
    %c0_16 = arith.constant 0 : index
    %c0_17 = arith.constant 0 : index
    %c0_18 = arith.constant 0 : index
    %c0_19 = arith.constant 0 : index
    %54 = vector.load %arg1[%c0_16, %c0_17, %c0_18, %c0_19] : memref<1x2x1x4xf32, #tpu.memory_space<vmem>>, vector<1x2x1x4xf32>
    %55 = vector.shape_cast %54 : vector<1x2x1x4xf32> to vector<2x1x4xf32>
    %cst_20 = arith.constant 0.000000e+00 : f32
    %56 = vector.broadcast %cst_20 : f32 to vector<2x1x4xf32>
    %57 = arith.cmpf ogt, %55, %56 : vector<2x1x4xf32>
    %cst_21 = arith.constant 0.000000e+00 : f32
    %cst_22 = arith.constant -1.000000e+09 : f32
    %58 = vector.broadcast %cst_21 : f32 to vector<2x1x4xf32>
    %59 = vector.broadcast %cst_22 : f32 to vector<2x1x4xf32>
    %60 = arith.select %57, %58, %59 : vector<2x1x4xi1>, vector<2x1x4xf32>
    %61 = vector.shape_cast %60 : vector<2x1x4xf32> to vector<1x2x1x4xf32>
    %62 = vector.shape_cast %61 : vector<1x2x1x4xf32> to vector<1x2x1x4xf32>
    %63 = vector.broadcast %62 : vector<1x2x1x4xf32> to vector<4x2x1x4xf32>
    %64 = vector.shape_cast %63 : vector<4x2x1x4xf32> to vector<8x1x4xf32>
    "tpu.trace_start"() <{level = 10 : i32, message = "bqd,bkd->bqk"}> : () -> ()
    %cst_23 = arith.constant dense<0.000000e+00> : vector<8x4x4xf32>
    %65 = tpu.matmul %29, %41, %cst_23 {dimension_numbers = #tpu.dot_dimension_numbers<[2], [2], [1], [1], [0, 0, 0, 1, 1, 1], [0], [0]>} : vector<8x4x8xbf16>, vector<8x4x8xbf16>, vector<8x4x4xf32> -> vector<8x4x4xf32>
    "tpu.trace_stop"() : () -> ()
    %66 = vector.broadcast %64 : vector<8x1x4xf32> to vector<8x4x4xf32>
    %67 = arith.addf %65, %66 : vector<8x4x4xf32>
    %cst_24 = arith.constant dense<0xFF800000> : vector<8x4xf32>
    %68 = vector.multi_reduction <maximumf>, %67, %cst_24 [2] : vector<8x4x4xf32> to vector<8x4xf32>
    %69 = vector.shape_cast %68 : vector<8x4xf32> to vector<8x4x1xf32>
    %70 = vector.broadcast %69 : vector<8x4x1xf32> to vector<8x4x4xf32>
    %71 = arith.subf %67, %70 : vector<8x4x4xf32>
    %72 = math.exp %71 : vector<8x4x4xf32>
    %cst_25 = arith.constant dense<0.000000e+00> : vector<8x4xf32>
    %73 = vector.multi_reduction <add>, %72, %cst_25 [2] : vector<8x4x4xf32> to vector<8x4xf32>
    %74 = vector.shape_cast %73 : vector<8x4xf32> to vector<8x4x1xf32>
    %75 = tpu.reciprocal %74 {approx = true} : vector<8x4x1xf32> -> vector<8x4x1xf32>
    %76 = vector.broadcast %75 : vector<8x4x1xf32> to vector<8x4x4xf32>
    %77 = arith.mulf %72, %76 : vector<8x4x4xf32>
    %78 = arith.truncf %77 : vector<8x4x4xf32> to vector<8x4x4xbf16>
    "tpu.trace_start"() <{level = 10 : i32, message = "bqk,bkd->bqd"}> : () -> ()
    %cst_26 = arith.constant dense<0.000000e+00> : vector<8x4x8xf32>
    %79 = tpu.matmul %78, %53, %cst_26 {dimension_numbers = #tpu.dot_dimension_numbers<[2], [1], [1], [2], [0, 0, 0, 1, 1, 2], [0], [0]>} : vector<8x4x4xbf16>, vector<8x4x8xbf16>, vector<8x4x8xf32> -> vector<8x4x8xf32>
    "tpu.trace_stop"() : () -> ()
    %80 = vector.shape_cast %79 : vector<8x4x8xf32> to vector<4x2x4x8xf32>
    %81 = vector.extract_strided_slice %80 {offsets = [0, 0, 0, 0], sizes = [1, 2, 4, 8], strides = [1, 1, 1, 1]} : vector<4x2x4x8xf32> to vector<1x2x4x8xf32>
    %82 = vector.shape_cast %81 : vector<1x2x4x8xf32> to vector<2x4x8xf32>
    %83 = vector.extract_strided_slice %80 {offsets = [1, 0, 0, 0], sizes = [1, 2, 4, 8], strides = [1, 1, 1, 1]} : vector<4x2x4x8xf32> to vector<1x2x4x8xf32>
    %84 = vector.shape_cast %83 : vector<1x2x4x8xf32> to vector<2x4x8xf32>
    %85 = vector.extract_strided_slice %80 {offsets = [2, 0, 0, 0], sizes = [1, 2, 4, 8], strides = [1, 1, 1, 1]} : vector<4x2x4x8xf32> to vector<1x2x4x8xf32>
    %86 = vector.shape_cast %85 : vector<1x2x4x8xf32> to vector<2x4x8xf32>
    %87 = vector.extract_strided_slice %80 {offsets = [3, 0, 0, 0], sizes = [1, 2, 4, 8], strides = [1, 1, 1, 1]} : vector<4x2x4x8xf32> to vector<1x2x4x8xf32>
    %88 = vector.shape_cast %87 : vector<1x2x4x8xf32> to vector<2x4x8xf32>
    %89 = tpu.concatenate %82, %84, %86, %88 in 2 : vector<2x4x8xf32>, vector<2x4x8xf32>, vector<2x4x8xf32>, vector<2x4x8xf32> -> vector<2x4x32xf32>
    %90 = vector.shape_cast %89 : vector<2x4x32xf32> to vector<8x32xf32>
    %91 = arith.truncf %90 : vector<8x32xf32> to vector<8x32xbf16>
    %c0_27 = arith.constant 0 : index
    %c0_28 = arith.constant 0 : index
    %92 = vector.load %arg9[%c0_27, %c0_28] : memref<32x32xbf16, #tpu.memory_space<vmem>>, vector<32x32xbf16>
    %cst_29 = arith.constant dense<0.000000e+00> : vector<8x32xf32>
    %93 = tpu.matmul %91, %92, %cst_29 {dimension_numbers = #tpu.dot_dimension_numbers<[1], [0], [0], [1], [0, 0, 1, 1], [], []>} : vector<8x32xbf16>, vector<32x32xbf16>, vector<8x32xf32> -> vector<8x32xf32>
    %c0_30 = arith.constant 0 : index
    %c0_31 = arith.constant 0 : index
    %94 = vector.load %arg10[%c0_30, %c0_31] : memref<1x32xf32, #tpu.memory_space<vmem>>, vector<1x32xf32>
    %95 = vector.broadcast %94 : vector<1x32xf32> to vector<8x32xf32>
    %96 = arith.addf %93, %95 : vector<8x32xf32>
    %97 = arith.addf %2, %96 : vector<8x32xf32>
    %cst_32 = arith.constant dense<0.000000e+00> : vector<32xf32>
    %98 = vector.multi_reduction <add>, %97, %cst_32 [0] : vector<8x32xf32> to vector<32xf32>
    %99 = vector.shape_cast %98 : vector<32xf32> to vector<1x32xf32>
    %cst_33 = arith.constant 1.250000e-01 : f32
    %100 = vector.broadcast %cst_33 : f32 to vector<1x32xf32>
    %101 = arith.mulf %99, %100 : vector<1x32xf32>
    %102 = vector.broadcast %101 : vector<1x32xf32> to vector<8x32xf32>
    %103 = arith.subf %97, %102 : vector<8x32xf32>
    %104 = arith.mulf %103, %103 : vector<8x32xf32>
    %cst_34 = arith.constant dense<0.000000e+00> : vector<32xf32>
    %105 = vector.multi_reduction <add>, %104, %cst_34 [0] : vector<8x32xf32> to vector<32xf32>
    %106 = vector.shape_cast %105 : vector<32xf32> to vector<1x32xf32>
    %cst_35 = arith.constant 1.250000e-01 : f32
    %107 = vector.broadcast %cst_35 : f32 to vector<1x32xf32>
    %108 = arith.mulf %106, %107 : vector<1x32xf32>
    %cst_36 = arith.constant 9.99999974E-6 : f32
    %109 = vector.broadcast %cst_36 : f32 to vector<1x32xf32>
    %110 = arith.addf %108, %109 : vector<1x32xf32>
    %111 = math.rsqrt %110 : vector<1x32xf32>
    %112 = vector.broadcast %111 : vector<1x32xf32> to vector<8x32xf32>
    %113 = arith.mulf %103, %112 : vector<8x32xf32>
    %114 = arith.truncf %113 : vector<8x32xf32> to vector<8x32xbf16>
    %c0_37 = arith.constant 0 : index
    %c0_38 = arith.constant 0 : index
    %115 = vector.load %arg11[%c0_37, %c0_38] : memref<32x64xbf16, #tpu.memory_space<vmem>>, vector<32x64xbf16>
    %cst_39 = arith.constant dense<0.000000e+00> : vector<8x64xf32>
    %116 = tpu.matmul %114, %115, %cst_39 {dimension_numbers = #tpu.dot_dimension_numbers<[1], [0], [0], [1], [0, 0, 1, 1], [], []>} : vector<8x32xbf16>, vector<32x64xbf16>, vector<8x64xf32> -> vector<8x64xf32>
    %c0_40 = arith.constant 0 : index
    %c0_41 = arith.constant 0 : index
    %117 = vector.load %arg12[%c0_40, %c0_41] : memref<1x64xf32, #tpu.memory_space<vmem>>, vector<1x64xf32>
    %118 = vector.broadcast %117 : vector<1x64xf32> to vector<8x64xf32>
    %119 = arith.addf %116, %118 : vector<8x64xf32>
    %cst_42 = arith.constant 0.000000e+00 : f32
    %120 = vector.broadcast %cst_42 : f32 to vector<8x64xf32>
    %121 = arith.maximumf %119, %120 : vector<8x64xf32>
    %122 = arith.truncf %121 : vector<8x64xf32> to vector<8x64xbf16>
    %c0_43 = arith.constant 0 : index
    %c0_44 = arith.constant 0 : index
    %123 = vector.load %arg13[%c0_43, %c0_44] : memref<64x32xbf16, #tpu.memory_space<vmem>>, vector<64x32xbf16>
    %cst_45 = arith.constant dense<0.000000e+00> : vector<8x32xf32>
    %124 = tpu.matmul %122, %123, %cst_45 {dimension_numbers = #tpu.dot_dimension_numbers<[1], [0], [0], [1], [0, 0, 1, 1], [], []>} : vector<8x64xbf16>, vector<64x32xbf16>, vector<8x32xf32> -> vector<8x32xf32>
    %c0_46 = arith.constant 0 : index
    %c0_47 = arith.constant 0 : index
    %125 = vector.load %arg14[%c0_46, %c0_47] : memref<1x32xf32, #tpu.memory_space<vmem>>, vector<1x32xf32>
    %126 = vector.broadcast %125 : vector<1x32xf32> to vector<8x32xf32>
    %127 = arith.addf %124, %126 : vector<8x32xf32>
    %128 = arith.addf %113, %127 : vector<8x32xf32>
    %cst_48 = arith.constant dense<0.000000e+00> : vector<32xf32>
    %129 = vector.multi_reduction <add>, %128, %cst_48 [0] : vector<8x32xf32> to vector<32xf32>
    %130 = vector.shape_cast %129 : vector<32xf32> to vector<1x32xf32>
    %cst_49 = arith.constant 1.250000e-01 : f32
    %131 = vector.broadcast %cst_49 : f32 to vector<1x32xf32>
    %132 = arith.mulf %130, %131 : vector<1x32xf32>
    %133 = vector.broadcast %132 : vector<1x32xf32> to vector<8x32xf32>
    %134 = arith.subf %128, %133 : vector<8x32xf32>
    %135 = arith.mulf %134, %134 : vector<8x32xf32>
    %cst_50 = arith.constant dense<0.000000e+00> : vector<32xf32>
    %136 = vector.multi_reduction <add>, %135, %cst_50 [0] : vector<8x32xf32> to vector<32xf32>
    %137 = vector.shape_cast %136 : vector<32xf32> to vector<1x32xf32>
    %cst_51 = arith.constant 1.250000e-01 : f32
    %138 = vector.broadcast %cst_51 : f32 to vector<1x32xf32>
    %139 = arith.mulf %137, %138 : vector<1x32xf32>
    %cst_52 = arith.constant 9.99999974E-6 : f32
    %140 = vector.broadcast %cst_52 : f32 to vector<1x32xf32>
    %141 = arith.addf %139, %140 : vector<1x32xf32>
    %142 = math.rsqrt %141 : vector<1x32xf32>
    %143 = vector.broadcast %142 : vector<1x32xf32> to vector<8x32xf32>
    %144 = arith.mulf %134, %143 : vector<8x32xf32>
    %145 = arith.truncf %144 : vector<8x32xf32> to vector<8x32xbf16>
    %c0_53 = arith.constant 0 : index
    %c0_54 = arith.constant 0 : index
    %c0_55 = arith.constant 0 : index
    %146 = vector.load %arg15[%c0_53, %c0_54, %c0_55] : memref<1x8x32xbf16, #tpu.memory_space<vmem>>, vector<1x8x32xbf16>
    %147 = vector.shape_cast %146 : vector<1x8x32xbf16> to vector<8x32xbf16>
    %148 = vector.shape_cast %145 : vector<8x32xbf16> to vector<1x8x32xbf16>
    tpu.vector_store %arg15[%c0_53, %c0_54, %c0_55], %148 {strides = array<i32>} : memref<1x8x32xbf16, #tpu.memory_space<vmem>>, vector<1x8x32xbf16>,
    return
  }
  func.func @transform_0(%arg0: i32) -> (i32, i32, i32, i32) {
    %c0_i32 = arith.constant 0 : i32
    %c0_i32_0 = arith.constant 0 : i32
    %c0_i32_1 = arith.constant 0 : i32
    %c0_i32_2 = arith.constant 0 : i32
    return %arg0, %c0_i32, %c0_i32_0, %c0_i32_1 : i32, i32, i32, i32
  }
  func.func @transform_1(%arg0: i32) -> (i32, i32, i32) {
    %c0_i32 = arith.constant 0 : i32
    %c0_i32_0 = arith.constant 0 : i32
    %c0_i32_1 = arith.constant 0 : i32
    return %arg0, %c0_i32, %c0_i32_0 : i32, i32, i32
  }
  func.func @transform_2(%arg0: i32) -> (i32, i32) {
    %c0_i32 = arith.constant 0 : i32
    %c0_i32_0 = arith.constant 0 : i32
    %c0_i32_1 = arith.constant 0 : i32
    return %c0_i32, %c0_i32_0 : i32, i32
  }
  func.func @transform_3(%arg0: i32) -> (i32, i32) {
    %c0_i32 = arith.constant 0 : i32
    %c0_i32_0 = arith.constant 0 : i32
    %c0_i32_1 = arith.constant 0 : i32
    return %c0_i32, %c0_i32_0 : i32, i32
  }
  func.func @transform_4(%arg0: i32) -> (i32, i32) {
    %c0_i32 = arith.constant 0 : i32
    %c0_i32_0 = arith.constant 0 : i32
    %c0_i32_1 = arith.constant 0 : i32
    return %c0_i32, %c0_i32_0 : i32, i32
  }
  func.func @transform_5(%arg0: i32) -> (i32, i32) {
    %c0_i32 = arith.constant 0 : i32
    %c0_i32_0 = arith.constant 0 : i32
    %c0_i32_1 = arith.constant 0 : i32
    return %c0_i32, %c0_i32_0 : i32, i32
  }
  func.func @transform_6(%arg0: i32) -> (i32, i32) {
    %c0_i32 = arith.constant 0 : i32
    %c0_i32_0 = arith.constant 0 : i32
    %c0_i32_1 = arith.constant 0 : i32
    return %c0_i32, %c0_i32_0 : i32, i32
  }
  func.func @transform_7(%arg0: i32) -> (i32, i32) {
    %c0_i32 = arith.constant 0 : i32
    %c0_i32_0 = arith.constant 0 : i32
    %c0_i32_1 = arith.constant 0 : i32
    return %c0_i32, %c0_i32_0 : i32, i32
  }
  func.func @transform_8(%arg0: i32) -> (i32, i32) {
    %c0_i32 = arith.constant 0 : i32
    %c0_i32_0 = arith.constant 0 : i32
    %c0_i32_1 = arith.constant 0 : i32
    return %c0_i32, %c0_i32_0 : i32, i32
  }
  func.func @transform_9(%arg0: i32) -> (i32, i32) {
    %c0_i32 = arith.constant 0 : i32
    %c0_i32_0 = arith.constant 0 : i32
    %c0_i32_1 = arith.constant 0 : i32
    return %c0_i32, %c0_i32_0 : i32, i32
  }
  func.func @transform_10(%arg0: i32) -> (i32, i32) {
    %c0_i32 = arith.constant 0 : i32
    %c0_i32_0 = arith.constant 0 : i32
    %c0_i32_1 = arith.constant 0 : i32
    return %c0_i32, %c0_i32_0 : i32, i32
  }
  func.func @transform_11(%arg0: i32) -> (i32, i32) {
    %c0_i32 = arith.constant 0 : i32
    %c0_i32_0 = arith.constant 0 : i32
    %c0_i32_1 = arith.constant 0 : i32
    return %c0_i32, %c0_i32_0 : i32, i32
  }
  func.func @transform_12(%arg0: i32) -> (i32, i32) {
    %c0_i32 = arith.constant 0 : i32
    %c0_i32_0 = arith.constant 0 : i32
    %c0_i32_1 = arith.constant 0 : i32
    return %c0_i32, %c0_i32_0 : i32, i32
  }
  func.func @transform_13(%arg0: i32) -> (i32, i32) {
    %c0_i32 = arith.constant 0 : i32
    %c0_i32_0 = arith.constant 0 : i32
    %c0_i32_1 = arith.constant 0 : i32
    return %c0_i32, %c0_i32_0 : i32, i32
  }
  func.func @transform_14(%arg0: i32) -> (i32, i32, i32) {
    %c0_i32 = arith.constant 0 : i32
    %c0_i32_0 = arith.constant 0 : i32
    %c0_i32_1 = arith.constant 0 : i32
    return %arg0, %c0_i32, %c0_i32_0 : i32, i32, i32
  }
}

module attributes {stable_mosaic.version = 11 : i64} {
  func.func @_fused_layer_kernel(%arg0: i32, %arg1: memref<1x1x1x4xf32, #tpu.memory_space<vmem>>, %arg2: memref<1x4x32xbf16, #tpu.memory_space<vmem>>, %arg3: memref<32x32xbf16, #tpu.memory_space<vmem>>, %arg4: memref<1x32xf32, #tpu.memory_space<vmem>>, %arg5: memref<32x32xbf16, #tpu.memory_space<vmem>>, %arg6: memref<1x32xf32, #tpu.memory_space<vmem>>, %arg7: memref<32x32xbf16, #tpu.memory_space<vmem>>, %arg8: memref<1x32xf32, #tpu.memory_space<vmem>>, %arg9: memref<32x32xbf16, #tpu.memory_space<vmem>>, %arg10: memref<1x32xf32, #tpu.memory_space<vmem>>, %arg11: memref<32x64xbf16, #tpu.memory_space<vmem>>, %arg12: memref<1x64xf32, #tpu.memory_space<vmem>>, %arg13: memref<64x32xbf16, #tpu.memory_space<vmem>>, %arg14: memref<1x32xf32, #tpu.memory_space<vmem>>, %arg15: memref<1x4x32xbf16, #tpu.memory_space<vmem>>) attributes {dimension_semantics = [#tpu.dimension_semantics<parallel>], iteration_bounds = array<i64: 2>, scalar_prefetch = 0 : i64, scratch_operands = 0 : i64, tpu.core_type = #tpu.core_type<tc>, window_params = [{transform_indices = @transform_0, window_bounds = array<i64: 1, 1, 1, 4>}, {transform_indices = @transform_1, window_bounds = array<i64: 1, 4, 32>}, {pipeline_mode = #tpu.pipeline_mode<synchronous>, transform_indices = @transform_2, window_bounds = array<i64: 32, 32>}, {pipeline_mode = #tpu.pipeline_mode<synchronous>, transform_indices = @transform_3, window_bounds = array<i64: 1, 32>}, {pipeline_mode = #tpu.pipeline_mode<synchronous>, transform_indices = @transform_4, window_bounds = array<i64: 32, 32>}, {pipeline_mode = #tpu.pipeline_mode<synchronous>, transform_indices = @transform_5, window_bounds = array<i64: 1, 32>}, {pipeline_mode = #tpu.pipeline_mode<synchronous>, transform_indices = @transform_6, window_bounds = array<i64: 32, 32>}, {pipeline_mode = #tpu.pipeline_mode<synchronous>, transform_indices = @transform_7, window_bounds = array<i64: 1, 32>}, {pipeline_mode = #tpu.pipeline_mode<synchronous>, transform_indices = @transform_8, window_bounds = array<i64: 32, 32>}, {pipeline_mode = #tpu.pipeline_mode<synchronous>, transform_indices = @transform_9, window_bounds = array<i64: 1, 32>}, {pipeline_mode = #tpu.pipeline_mode<synchronous>, transform_indices = @transform_10, window_bounds = array<i64: 32, 64>}, {pipeline_mode = #tpu.pipeline_mode<synchronous>, transform_indices = @transform_11, window_bounds = array<i64: 1, 64>}, {pipeline_mode = #tpu.pipeline_mode<synchronous>, transform_indices = @transform_12, window_bounds = array<i64: 64, 32>}, {pipeline_mode = #tpu.pipeline_mode<synchronous>, transform_indices = @transform_13, window_bounds = array<i64: 1, 32>}, {transform_indices = @transform_14, window_bounds = array<i64: 1, 4, 32>}]} {
    %c0 = arith.constant 0 : index
    %c0_0 = arith.constant 0 : index
    %c0_1 = arith.constant 0 : index
    %0 = vector.load %arg2[%c0, %c0_0, %c0_1] : memref<1x4x32xbf16, #tpu.memory_space<vmem>>, vector<1x4x32xbf16>
    %1 = vector.shape_cast %0 : vector<1x4x32xbf16> to vector<4x32xbf16>
    %2 = arith.extf %1 : vector<4x32xbf16> to vector<4x32xf32>
    %c0_2 = arith.constant 0 : index
    %c0_3 = arith.constant 0 : index
    %3 = vector.load %arg3[%c0_2, %c0_3] : memref<32x32xbf16, #tpu.memory_space<vmem>>, vector<32x32xbf16>
    %cst = arith.constant dense<0.000000e+00> : vector<4x32xf32>
    %4 = tpu.matmul %1, %3, %cst {dimension_numbers = #tpu.dot_dimension_numbers<[1], [0], [0], [1], [0, 0, 1, 1], [], []>} : vector<4x32xbf16>, vector<32x32xbf16>, vector<4x32xf32> -> vector<4x32xf32>
    %c0_4 = arith.constant 0 : index
    %c0_5 = arith.constant 0 : index
    %5 = vector.load %arg4[%c0_4, %c0_5] : memref<1x32xf32, #tpu.memory_space<vmem>>, vector<1x32xf32>
    %6 = vector.broadcast %5 : vector<1x32xf32> to vector<4x32xf32>
    %7 = arith.addf %4, %6 : vector<4x32xf32>
    %c0_6 = arith.constant 0 : index
    %c0_7 = arith.constant 0 : index
    %8 = vector.load %arg5[%c0_6, %c0_7] : memref<32x32xbf16, #tpu.memory_space<vmem>>, vector<32x32xbf16>
    %cst_8 = arith.constant dense<0.000000e+00> : vector<4x32xf32>
    %9 = tpu.matmul %1, %8, %cst_8 {dimension_numbers = #tpu.dot_dimension_numbers<[1], [0], [0], [1], [0, 0, 1, 1], [], []>} : vector<4x32xbf16>, vector<32x32xbf16>, vector<4x32xf32> -> vector<4x32xf32>
    %c0_9 = arith.constant 0 : index
    %c0_10 = arith.constant 0 : index
    %10 = vector.load %arg6[%c0_9, %c0_10] : memref<1x32xf32, #tpu.memory_space<vmem>>, vector<1x32xf32>
    %11 = vector.broadcast %10 : vector<1x32xf32> to vector<4x32xf32>
    %12 = arith.addf %9, %11 : vector<4x32xf32>
    %c0_11 = arith.constant 0 : index
    %c0_12 = arith.constant 0 : index
    %13 = vector.load %arg7[%c0_11, %c0_12] : memref<32x32xbf16, #tpu.memory_space<vmem>>, vector<32x32xbf16>
    %cst_13 = arith.constant dense<0.000000e+00> : vector<4x32xf32>
    %14 = tpu.matmul %1, %13, %cst_13 {dimension_numbers = #tpu.dot_dimension_numbers<[1], [0], [0], [1], [0, 0, 1, 1], [], []>} : vector<4x32xbf16>, vector<32x32xbf16>, vector<4x32xf32> -> vector<4x32xf32>
    %c0_14 = arith.constant 0 : index
    %c0_15 = arith.constant 0 : index
    %15 = vector.load %arg8[%c0_14, %c0_15] : memref<1x32xf32, #tpu.memory_space<vmem>>, vector<1x32xf32>
    %16 = vector.broadcast %15 : vector<1x32xf32> to vector<4x32xf32>
    %17 = arith.addf %14, %16 : vector<4x32xf32>
    %18 = vector.shape_cast %7 : vector<4x32xf32> to vector<1x4x32xf32>
    %19 = arith.truncf %18 : vector<1x4x32xf32> to vector<1x4x32xbf16>
    %20 = vector.extract_strided_slice %19 {offsets = [0, 0, 0], sizes = [1, 4, 8], strides = [1, 1, 1]} : vector<1x4x32xbf16> to vector<1x4x8xbf16>
    %21 = vector.extract_strided_slice %19 {offsets = [0, 0, 8], sizes = [1, 4, 8], strides = [1, 1, 1]} : vector<1x4x32xbf16> to vector<1x4x8xbf16>
    %22 = vector.extract_strided_slice %19 {offsets = [0, 0, 16], sizes = [1, 4, 8], strides = [1, 1, 1]} : vector<1x4x32xbf16> to vector<1x4x8xbf16>
    %23 = vector.extract_strided_slice %19 {offsets = [0, 0, 24], sizes = [1, 4, 8], strides = [1, 1, 1]} : vector<1x4x32xbf16> to vector<1x4x8xbf16>
    %24 = vector.shape_cast %20 : vector<1x4x8xbf16> to vector<1x1x4x8xbf16>
    %25 = vector.shape_cast %21 : vector<1x4x8xbf16> to vector<1x1x4x8xbf16>
    %26 = vector.shape_cast %22 : vector<1x4x8xbf16> to vector<1x1x4x8xbf16>
    %27 = vector.shape_cast %23 : vector<1x4x8xbf16> to vector<1x1x4x8xbf16>
    %28 = tpu.concatenate %24, %25, %26, %27 in 0 : vector<1x1x4x8xbf16>, vector<1x1x4x8xbf16>, vector<1x1x4x8xbf16>, vector<1x1x4x8xbf16> -> vector<4x1x4x8xbf16>
    %29 = vector.shape_cast %28 : vector<4x1x4x8xbf16> to vector<4x4x8xbf16>
    %30 = vector.shape_cast %12 : vector<4x32xf32> to vector<1x4x32xf32>
    %31 = arith.truncf %30 : vector<1x4x32xf32> to vector<1x4x32xbf16>
    %32 = vector.extract_strided_slice %31 {offsets = [0, 0, 0], sizes = [1, 4, 8], strides = [1, 1, 1]} : vector<1x4x32xbf16> to vector<1x4x8xbf16>
    %33 = vector.extract_strided_slice %31 {offsets = [0, 0, 8], sizes = [1, 4, 8], strides = [1, 1, 1]} : vector<1x4x32xbf16> to vector<1x4x8xbf16>
    %34 = vector.extract_strided_slice %31 {offsets = [0, 0, 16], sizes = [1, 4, 8], strides = [1, 1, 1]} : vector<1x4x32xbf16> to vector<1x4x8xbf16>
    %35 = vector.extract_strided_slice %31 {offsets = [0, 0, 24], sizes = [1, 4, 8], strides = [1, 1, 1]} : vector<1x4x32xbf16> to vector<1x4x8xbf16>
    %36 = vector.shape_cast %32 : vector<1x4x8xbf16> to vector<1x1x4x8xbf16>
    %37 = vector.shape_cast %33 : vector<1x4x8xbf16> to vector<1x1x4x8xbf16>
    %38 = vector.shape_cast %34 : vector<1x4x8xbf16> to vector<1x1x4x8xbf16>
    %39 = vector.shape_cast %35 : vector<1x4x8xbf16> to vector<1x1x4x8xbf16>
    %40 = tpu.concatenate %36, %37, %38, %39 in 0 : vector<1x1x4x8xbf16>, vector<1x1x4x8xbf16>, vector<1x1x4x8xbf16>, vector<1x1x4x8xbf16> -> vector<4x1x4x8xbf16>
    %41 = vector.shape_cast %40 : vector<4x1x4x8xbf16> to vector<4x4x8xbf16>
    %42 = vector.shape_cast %17 : vector<4x32xf32> to vector<1x4x32xf32>
    %43 = arith.truncf %42 : vector<1x4x32xf32> to vector<1x4x32xbf16>
    %44 = vector.extract_strided_slice %43 {offsets = [0, 0, 0], sizes = [1, 4, 8], strides = [1, 1, 1]} : vector<1x4x32xbf16> to vector<1x4x8xbf16>
    %45 = vector.extract_strided_slice %43 {offsets = [0, 0, 8], sizes = [1, 4, 8], strides = [1, 1, 1]} : vector<1x4x32xbf16> to vector<1x4x8xbf16>
    %46 = vector.extract_strided_slice %43 {offsets = [0, 0, 16], sizes = [1, 4, 8], strides = [1, 1, 1]} : vector<1x4x32xbf16> to vector<1x4x8xbf16>
    %47 = vector.extract_strided_slice %43 {offsets = [0, 0, 24], sizes = [1, 4, 8], strides = [1, 1, 1]} : vector<1x4x32xbf16> to vector<1x4x8xbf16>
    %48 = vector.shape_cast %44 : vector<1x4x8xbf16> to vector<1x1x4x8xbf16>
    %49 = vector.shape_cast %45 : vector<1x4x8xbf16> to vector<1x1x4x8xbf16>
    %50 = vector.shape_cast %46 : vector<1x4x8xbf16> to vector<1x1x4x8xbf16>
    %51 = vector.shape_cast %47 : vector<1x4x8xbf16> to vector<1x1x4x8xbf16>
    %52 = tpu.concatenate %48, %49, %50, %51 in 0 : vector<1x1x4x8xbf16>, vector<1x1x4x8xbf16>, vector<1x1x4x8xbf16>, vector<1x1x4x8xbf16> -> vector<4x1x4x8xbf16>
    %53 = vector.shape_cast %52 : vector<4x1x4x8xbf16> to vector<4x4x8xbf16>
    %c0_16 = arith.constant 0 : index
    %c0_17 = arith.constant 0 : index
    %c0_18 = arith.constant 0 : index
    %c0_19 = arith.constant 0 : index
    %54 = vector.load %arg1[%c0_16, %c0_17, %c0_18, %c0_19] : memref<1x1x1x4xf32, #tpu.memory_space<vmem>>, vector<1x1x1x4xf32>
    %55 = vector.shape_cast %54 : vector<1x1x1x4xf32> to vector<1x1x4xf32>
    %cst_20 = arith.constant 0.000000e+00 : f32
    %56 = vector.broadcast %cst_20 : f32 to vector<1x1x4xf32>
    %57 = arith.cmpf ogt, %55, %56 : vector<1x1x4xf32>
    %cst_21 = arith.constant 0.000000e+00 : f32
    %cst_22 = arith.constant -1.000000e+09 : f32
    %58 = vector.broadcast %cst_21 : f32 to vector<1x1x4xf32>
    %59 = vector.broadcast %cst_22 : f32 to vector<1x1x4xf32>
    %60 = arith.select %57, %58, %59 : vector<1x1x4xi1>, vector<1x1x4xf32>
    %61 = vector.shape_cast %60 : vector<1x1x4xf32> to vector<1x1x1x4xf32>
    %62 = vector.shape_cast %61 : vector<1x1x1x4xf32> to vector<1x1x1x4xf32>
    %63 = vector.broadcast %62 : vector<1x1x1x4xf32> to vector<4x1x1x4xf32>
    %64 = vector.shape_cast %63 : vector<4x1x1x4xf32> to vector<4x1x4xf32>
    "tpu.trace_start"() <{level = 10 : i32, message = "bqd,bkd->bqk"}> : () -> ()
    %cst_23 = arith.constant dense<0.000000e+00> : vector<4x4x4xf32>
    %65 = tpu.matmul %29, %41, %cst_23 {dimension_numbers = #tpu.dot_dimension_numbers<[2], [2], [1], [1], [0, 0, 0, 1, 1, 1], [0], [0]>} : vector<4x4x8xbf16>, vector<4x4x8xbf16>, vector<4x4x4xf32> -> vector<4x4x4xf32>
    "tpu.trace_stop"() : () -> ()
    %66 = vector.broadcast %64 : vector<4x1x4xf32> to vector<4x4x4xf32>
    %67 = arith.addf %65, %66 : vector<4x4x4xf32>
    %cst_24 = arith.constant dense<0xFF800000> : vector<4x4xf32>
    %68 = vector.multi_reduction <maximumf>, %67, %cst_24 [2] : vector<4x4x4xf32> to vector<4x4xf32>
    %69 = vector.shape_cast %68 : vector<4x4xf32> to vector<4x4x1xf32>
    %70 = vector.broadcast %69 : vector<4x4x1xf32> to vector<4x4x4xf32>
    %71 = arith.subf %67, %70 : vector<4x4x4xf32>
    %72 = math.exp %71 : vector<4x4x4xf32>
    %cst_25 = arith.constant dense<0.000000e+00> : vector<4x4xf32>
    %73 = vector.multi_reduction <add>, %72, %cst_25 [2] : vector<4x4x4xf32> to vector<4x4xf32>
    %74 = vector.shape_cast %73 : vector<4x4xf32> to vector<4x4x1xf32>
    %75 = tpu.reciprocal %74 {approx = true} : vector<4x4x1xf32> -> vector<4x4x1xf32>
    %76 = vector.broadcast %75 : vector<4x4x1xf32> to vector<4x4x4xf32>
    %77 = arith.mulf %72, %76 : vector<4x4x4xf32>
    %78 = arith.truncf %77 : vector<4x4x4xf32> to vector<4x4x4xbf16>
    "tpu.trace_start"() <{level = 10 : i32, message = "bqk,bkd->bqd"}> : () -> ()
    %cst_26 = arith.constant dense<0.000000e+00> : vector<4x4x8xf32>
    %79 = tpu.matmul %78, %53, %cst_26 {dimension_numbers = #tpu.dot_dimension_numbers<[2], [1], [1], [2], [0, 0, 0, 1, 1, 2], [0], [0]>} : vector<4x4x4xbf16>, vector<4x4x8xbf16>, vector<4x4x8xf32> -> vector<4x4x8xf32>
    "tpu.trace_stop"() : () -> ()
    %80 = vector.shape_cast %79 : vector<4x4x8xf32> to vector<4x1x4x8xf32>
    %81 = vector.extract_strided_slice %80 {offsets = [0, 0, 0, 0], sizes = [1, 1, 4, 8], strides = [1, 1, 1, 1]} : vector<4x1x4x8xf32> to vector<1x1x4x8xf32>
    %82 = vector.shape_cast %81 : vector<1x1x4x8xf32> to vector<1x4x8xf32>
    %83 = vector.extract_strided_slice %80 {offsets = [1, 0, 0, 0], sizes = [1, 1, 4, 8], strides = [1, 1, 1, 1]} : vector<4x1x4x8xf32> to vector<1x1x4x8xf32>
    %84 = vector.shape_cast %83 : vector<1x1x4x8xf32> to vector<1x4x8xf32>
    %85 = vector.extract_strided_slice %80 {offsets = [2, 0, 0, 0], sizes = [1, 1, 4, 8], strides = [1, 1, 1, 1]} : vector<4x1x4x8xf32> to vector<1x1x4x8xf32>
    %86 = vector.shape_cast %85 : vector<1x1x4x8xf32> to vector<1x4x8xf32>
    %87 = vector.extract_strided_slice %80 {offsets = [3, 0, 0, 0], sizes = [1, 1, 4, 8], strides = [1, 1, 1, 1]} : vector<4x1x4x8xf32> to vector<1x1x4x8xf32>
    %88 = vector.shape_cast %87 : vector<1x1x4x8xf32> to vector<1x4x8xf32>
    %89 = tpu.concatenate %82, %84, %86, %88 in 2 : vector<1x4x8xf32>, vector<1x4x8xf32>, vector<1x4x8xf32>, vector<1x4x8xf32> -> vector<1x4x32xf32>
    %90 = vector.shape_cast %89 : vector<1x4x32xf32> to vector<4x32xf32>
    %91 = arith.truncf %90 : vector<4x32xf32> to vector<4x32xbf16>
    %c0_27 = arith.constant 0 : index
    %c0_28 = arith.constant 0 : index
    %92 = vector.load %arg9[%c0_27, %c0_28] : memref<32x32xbf16, #tpu.memory_space<vmem>>, vector<32x32xbf16>
    %cst_29 = arith.constant dense<0.000000e+00> : vector<4x32xf32>
    %93 = tpu.matmul %91, %92, %cst_29 {dimension_numbers = #tpu.dot_dimension_numbers<[1], [0], [0], [1], [0, 0, 1, 1], [], []>} : vector<4x32xbf16>, vector<32x32xbf16>, vector<4x32xf32> -> vector<4x32xf32>
    %c0_30 = arith.constant 0 : index
    %c0_31 = arith.constant 0 : index
    %94 = vector.load %arg10[%c0_30, %c0_31] : memref<1x32xf32, #tpu.memory_space<vmem>>, vector<1x32xf32>
    %95 = vector.broadcast %94 : vector<1x32xf32> to vector<4x32xf32>
    %96 = arith.addf %93, %95 : vector<4x32xf32>
    %97 = arith.addf %2, %96 : vector<4x32xf32>
    %cst_32 = arith.constant dense<0.000000e+00> : vector<32xf32>
    %98 = vector.multi_reduction <add>, %97, %cst_32 [0] : vector<4x32xf32> to vector<32xf32>
    %99 = vector.shape_cast %98 : vector<32xf32> to vector<1x32xf32>
    %cst_33 = arith.constant 2.500000e-01 : f32
    %100 = vector.broadcast %cst_33 : f32 to vector<1x32xf32>
    %101 = arith.mulf %99, %100 : vector<1x32xf32>
    %102 = vector.broadcast %101 : vector<1x32xf32> to vector<4x32xf32>
    %103 = arith.subf %97, %102 : vector<4x32xf32>
    %104 = arith.mulf %103, %103 : vector<4x32xf32>
    %cst_34 = arith.constant dense<0.000000e+00> : vector<32xf32>
    %105 = vector.multi_reduction <add>, %104, %cst_34 [0] : vector<4x32xf32> to vector<32xf32>
    %106 = vector.shape_cast %105 : vector<32xf32> to vector<1x32xf32>
    %cst_35 = arith.constant 2.500000e-01 : f32
    %107 = vector.broadcast %cst_35 : f32 to vector<1x32xf32>
    %108 = arith.mulf %106, %107 : vector<1x32xf32>
    %cst_36 = arith.constant 9.99999974E-6 : f32
    %109 = vector.broadcast %cst_36 : f32 to vector<1x32xf32>
    %110 = arith.addf %108, %109 : vector<1x32xf32>
    %111 = math.rsqrt %110 : vector<1x32xf32>
    %112 = vector.broadcast %111 : vector<1x32xf32> to vector<4x32xf32>
    %113 = arith.mulf %103, %112 : vector<4x32xf32>
    %114 = arith.truncf %113 : vector<4x32xf32> to vector<4x32xbf16>
    %c0_37 = arith.constant 0 : index
    %c0_38 = arith.constant 0 : index
    %115 = vector.load %arg11[%c0_37, %c0_38] : memref<32x64xbf16, #tpu.memory_space<vmem>>, vector<32x64xbf16>
    %cst_39 = arith.constant dense<0.000000e+00> : vector<4x64xf32>
    %116 = tpu.matmul %114, %115, %cst_39 {dimension_numbers = #tpu.dot_dimension_numbers<[1], [0], [0], [1], [0, 0, 1, 1], [], []>} : vector<4x32xbf16>, vector<32x64xbf16>, vector<4x64xf32> -> vector<4x64xf32>
    %c0_40 = arith.constant 0 : index
    %c0_41 = arith.constant 0 : index
    %117 = vector.load %arg12[%c0_40, %c0_41] : memref<1x64xf32, #tpu.memory_space<vmem>>, vector<1x64xf32>
    %118 = vector.broadcast %117 : vector<1x64xf32> to vector<4x64xf32>
    %119 = arith.addf %116, %118 : vector<4x64xf32>
    %cst_42 = arith.constant 0.000000e+00 : f32
    %120 = vector.broadcast %cst_42 : f32 to vector<4x64xf32>
    %121 = arith.maximumf %119, %120 : vector<4x64xf32>
    %122 = arith.truncf %121 : vector<4x64xf32> to vector<4x64xbf16>
    %c0_43 = arith.constant 0 : index
    %c0_44 = arith.constant 0 : index
    %123 = vector.load %arg13[%c0_43, %c0_44] : memref<64x32xbf16, #tpu.memory_space<vmem>>, vector<64x32xbf16>
    %cst_45 = arith.constant dense<0.000000e+00> : vector<4x32xf32>
    %124 = tpu.matmul %122, %123, %cst_45 {dimension_numbers = #tpu.dot_dimension_numbers<[1], [0], [0], [1], [0, 0, 1, 1], [], []>} : vector<4x64xbf16>, vector<64x32xbf16>, vector<4x32xf32> -> vector<4x32xf32>
    %c0_46 = arith.constant 0 : index
    %c0_47 = arith.constant 0 : index
    %125 = vector.load %arg14[%c0_46, %c0_47] : memref<1x32xf32, #tpu.memory_space<vmem>>, vector<1x32xf32>
    %126 = vector.broadcast %125 : vector<1x32xf32> to vector<4x32xf32>
    %127 = arith.addf %124, %126 : vector<4x32xf32>
    %128 = arith.addf %113, %127 : vector<4x32xf32>
    %cst_48 = arith.constant dense<0.000000e+00> : vector<32xf32>
    %129 = vector.multi_reduction <add>, %128, %cst_48 [0] : vector<4x32xf32> to vector<32xf32>
    %130 = vector.shape_cast %129 : vector<32xf32> to vector<1x32xf32>
    %cst_49 = arith.constant 2.500000e-01 : f32
    %131 = vector.broadcast %cst_49 : f32 to vector<1x32xf32>
    %132 = arith.mulf %130, %131 : vector<1x32xf32>
    %133 = vector.broadcast %132 : vector<1x32xf32> to vector<4x32xf32>
    %134 = arith.subf %128, %133 : vector<4x32xf32>
    %135 = arith.mulf %134, %134 : vector<4x32xf32>
    %cst_50 = arith.constant dense<0.000000e+00> : vector<32xf32>
    %136 = vector.multi_reduction <add>, %135, %cst_50 [0] : vector<4x32xf32> to vector<32xf32>
    %137 = vector.shape_cast %136 : vector<32xf32> to vector<1x32xf32>
    %cst_51 = arith.constant 2.500000e-01 : f32
    %138 = vector.broadcast %cst_51 : f32 to vector<1x32xf32>
    %139 = arith.mulf %137, %138 : vector<1x32xf32>
    %cst_52 = arith.constant 9.99999974E-6 : f32
    %140 = vector.broadcast %cst_52 : f32 to vector<1x32xf32>
    %141 = arith.addf %139, %140 : vector<1x32xf32>
    %142 = math.rsqrt %141 : vector<1x32xf32>
    %143 = vector.broadcast %142 : vector<1x32xf32> to vector<4x32xf32>
    %144 = arith.mulf %134, %143 : vector<4x32xf32>
    %145 = arith.truncf %144 : vector<4x32xf32> to vector<4x32xbf16>
    %c0_53 = arith.constant 0 : index
    %c0_54 = arith.constant 0 : index
    %c0_55 = arith.constant 0 : index
    %146 = vector.load %arg15[%c0_53, %c0_54, %c0_55] : memref<1x4x32xbf16, #tpu.memory_space<vmem>>, vector<1x4x32xbf16>
    %147 = vector.shape_cast %146 : vector<1x4x32xbf16> to vector<4x32xbf16>
    %148 = vector.shape_cast %145 : vector<4x32xbf16> to vector<1x4x32xbf16>
    tpu.vector_store %arg15[%c0_53, %c0_54, %c0_55], %148 {strides = array<i32>} : memref<1x4x32xbf16, #tpu.memory_space<vmem>>, vector<1x4x32xbf16>,
    return
  }
  func.func @transform_0(%arg0: i32) -> (i32, i32, i32, i32) {
    %c0_i32 = arith.constant 0 : i32
    %c0_i32_0 = arith.constant 0 : i32
    %c0_i32_1 = arith.constant 0 : i32
    %c0_i32_2 = arith.constant 0 : i32
    return %arg0, %c0_i32, %c0_i32_0, %c0_i32_1 : i32, i32, i32, i32
  }
  func.func @transform_1(%arg0: i32) -> (i32, i32, i32) {
    %c0_i32 = arith.constant 0 : i32
    %c0_i32_0 = arith.constant 0 : i32
    %c0_i32_1 = arith.constant 0 : i32
    return %arg0, %c0_i32, %c0_i32_0 : i32, i32, i32
  }
  func.func @transform_2(%arg0: i32) -> (i32, i32) {
    %c0_i32 = arith.constant 0 : i32
    %c0_i32_0 = arith.constant 0 : i32
    %c0_i32_1 = arith.constant 0 : i32
    return %c0_i32, %c0_i32_0 : i32, i32
  }
  func.func @transform_3(%arg0: i32) -> (i32, i32) {
    %c0_i32 = arith.constant 0 : i32
    %c0_i32_0 = arith.constant 0 : i32
    %c0_i32_1 = arith.constant 0 : i32
    return %c0_i32, %c0_i32_0 : i32, i32
  }
  func.func @transform_4(%arg0: i32) -> (i32, i32) {
    %c0_i32 = arith.constant 0 : i32
    %c0_i32_0 = arith.constant 0 : i32
    %c0_i32_1 = arith.constant 0 : i32
    return %c0_i32, %c0_i32_0 : i32, i32
  }
  func.func @transform_5(%arg0: i32) -> (i32, i32) {
    %c0_i32 = arith.constant 0 : i32
    %c0_i32_0 = arith.constant 0 : i32
    %c0_i32_1 = arith.constant 0 : i32
    return %c0_i32, %c0_i32_0 : i32, i32
  }
  func.func @transform_6(%arg0: i32) -> (i32, i32) {
    %c0_i32 = arith.constant 0 : i32
    %c0_i32_0 = arith.constant 0 : i32
    %c0_i32_1 = arith.constant 0 : i32
    return %c0_i32, %c0_i32_0 : i32, i32
  }
  func.func @transform_7(%arg0: i32) -> (i32, i32) {
    %c0_i32 = arith.constant 0 : i32
    %c0_i32_0 = arith.constant 0 : i32
    %c0_i32_1 = arith.constant 0 : i32
    return %c0_i32, %c0_i32_0 : i32, i32
  }
  func.func @transform_8(%arg0: i32) -> (i32, i32) {
    %c0_i32 = arith.constant 0 : i32
    %c0_i32_0 = arith.constant 0 : i32
    %c0_i32_1 = arith.constant 0 : i32
    return %c0_i32, %c0_i32_0 : i32, i32
  }
  func.func @transform_9(%arg0: i32) -> (i32, i32) {
    %c0_i32 = arith.constant 0 : i32
    %c0_i32_0 = arith.constant 0 : i32
    %c0_i32_1 = arith.constant 0 : i32
    return %c0_i32, %c0_i32_0 : i32, i32
  }
  func.func @transform_10(%arg0: i32) -> (i32, i32) {
    %c0_i32 = arith.constant 0 : i32
    %c0_i32_0 = arith.constant 0 : i32
    %c0_i32_1 = arith.constant 0 : i32
    return %c0_i32, %c0_i32_0 : i32, i32
  }
  func.func @transform_11(%arg0: i32) -> (i32, i32) {
    %c0_i32 = arith.constant 0 : i32
    %c0_i32_0 = arith.constant 0 : i32
    %c0_i32_1 = arith.constant 0 : i32
    return %c0_i32, %c0_i32_0 : i32, i32
  }
  func.func @transform_12(%arg0: i32) -> (i32, i32) {
    %c0_i32 = arith.constant 0 : i32
    %c0_i32_0 = arith.constant 0 : i32
    %c0_i32_1 = arith.constant 0 : i32
    return %c0_i32, %c0_i32_0 : i32, i32
  }
  func.func @transform_13(%arg0: i32) -> (i32, i32) {
    %c0_i32 = arith.constant 0 : i32
    %c0_i32_0 = arith.constant 0 : i32
    %c0_i32_1 = arith.constant 0 : i32
    return %c0_i32, %c0_i32_0 : i32, i32
  }
  func.func @transform_14(%arg0: i32) -> (i32, i32, i32) {
    %c0_i32 = arith.constant 0 : i32
    %c0_i32_0 = arith.constant 0 : i32
    %c0_i32_1 = arith.constant 0 : i32
    return %arg0, %c0_i32, %c0_i32_0 : i32, i32, i32
  }
}

module attributes {stable_mosaic.version = 11 : i64} {
  func.func @_fused_layer_kernel(%arg0: i32, %arg1: memref<1x2x1x4xf32, #tpu.memory_space<vmem>>, %arg2: memref<1x8x32xbf16, #tpu.memory_space<vmem>>, %arg3: memref<1x8x32xbf16, #tpu.memory_space<vmem>>, %arg4: memref<32x32xbf16, #tpu.memory_space<vmem>>, %arg5: memref<1x32xf32, #tpu.memory_space<vmem>>, %arg6: memref<32x32xbf16, #tpu.memory_space<vmem>>, %arg7: memref<1x32xf32, #tpu.memory_space<vmem>>, %arg8: memref<32x32xbf16, #tpu.memory_space<vmem>>, %arg9: memref<1x32xf32, #tpu.memory_space<vmem>>, %arg10: memref<32x32xbf16, #tpu.memory_space<vmem>>, %arg11: memref<1x32xf32, #tpu.memory_space<vmem>>, %arg12: memref<32x64xbf16, #tpu.memory_space<vmem>>, %arg13: memref<1x64xf32, #tpu.memory_space<vmem>>, %arg14: memref<64x32xbf16, #tpu.memory_space<vmem>>, %arg15: memref<1x32xf32, #tpu.memory_space<vmem>>, %arg16: memref<1x8x32xbf16, #tpu.memory_space<vmem>>) attributes {dimension_semantics = [#tpu.dimension_semantics<parallel>], iteration_bounds = array<i64: 2>, scalar_prefetch = 0 : i64, scratch_operands = 0 : i64, tpu.core_type = #tpu.core_type<tc>, window_params = [{transform_indices = @transform_0, window_bounds = array<i64: 1, 2, 1, 4>}, {transform_indices = @transform_1, window_bounds = array<i64: 1, 8, 32>}, {transform_indices = @transform_2, window_bounds = array<i64: 1, 8, 32>}, {pipeline_mode = #tpu.pipeline_mode<synchronous>, transform_indices = @transform_3, window_bounds = array<i64: 32, 32>}, {pipeline_mode = #tpu.pipeline_mode<synchronous>, transform_indices = @transform_4, window_bounds = array<i64: 1, 32>}, {pipeline_mode = #tpu.pipeline_mode<synchronous>, transform_indices = @transform_5, window_bounds = array<i64: 32, 32>}, {pipeline_mode = #tpu.pipeline_mode<synchronous>, transform_indices = @transform_6, window_bounds = array<i64: 1, 32>}, {pipeline_mode = #tpu.pipeline_mode<synchronous>, transform_indices = @transform_7, window_bounds = array<i64: 32, 32>}, {pipeline_mode = #tpu.pipeline_mode<synchronous>, transform_indices = @transform_8, window_bounds = array<i64: 1, 32>}, {pipeline_mode = #tpu.pipeline_mode<synchronous>, transform_indices = @transform_9, window_bounds = array<i64: 32, 32>}, {pipeline_mode = #tpu.pipeline_mode<synchronous>, transform_indices = @transform_10, window_bounds = array<i64: 1, 32>}, {pipeline_mode = #tpu.pipeline_mode<synchronous>, transform_indices = @transform_11, window_bounds = array<i64: 32, 64>}, {pipeline_mode = #tpu.pipeline_mode<synchronous>, transform_indices = @transform_12, window_bounds = array<i64: 1, 64>}, {pipeline_mode = #tpu.pipeline_mode<synchronous>, transform_indices = @transform_13, window_bounds = array<i64: 64, 32>}, {pipeline_mode = #tpu.pipeline_mode<synchronous>, transform_indices = @transform_14, window_bounds = array<i64: 1, 32>}, {transform_indices = @transform_15, window_bounds = array<i64: 1, 8, 32>}]} {
    %c0 = arith.constant 0 : index
    %c0_0 = arith.constant 0 : index
    %c0_1 = arith.constant 0 : index
    %0 = vector.load %arg2[%c0, %c0_0, %c0_1] : memref<1x8x32xbf16, #tpu.memory_space<vmem>>, vector<1x8x32xbf16>
    %1 = vector.shape_cast %0 : vector<1x8x32xbf16> to vector<8x32xbf16>
    %2 = arith.extf %1 : vector<8x32xbf16> to vector<8x32xf32>
    %c0_2 = arith.constant 0 : index
    %c0_3 = arith.constant 0 : index
    %c0_4 = arith.constant 0 : index
    %3 = vector.load %arg3[%c0_2, %c0_3, %c0_4] : memref<1x8x32xbf16, #tpu.memory_space<vmem>>, vector<1x8x32xbf16>
    %4 = vector.shape_cast %3 : vector<1x8x32xbf16> to vector<8x32xbf16>
    %c0_5 = arith.constant 0 : index
    %c0_6 = arith.constant 0 : index
    %5 = vector.load %arg4[%c0_5, %c0_6] : memref<32x32xbf16, #tpu.memory_space<vmem>>, vector<32x32xbf16>
    %cst = arith.constant dense<0.000000e+00> : vector<8x32xf32>
    %6 = tpu.matmul %1, %5, %cst {dimension_numbers = #tpu.dot_dimension_numbers<[1], [0], [0], [1], [0, 0, 1, 1], [], []>} : vector<8x32xbf16>, vector<32x32xbf16>, vector<8x32xf32> -> vector<8x32xf32>
    %c0_7 = arith.constant 0 : index
    %c0_8 = arith.constant 0 : index
    %7 = vector.load %arg5[%c0_7, %c0_8] : memref<1x32xf32, #tpu.memory_space<vmem>>, vector<1x32xf32>
    %8 = vector.broadcast %7 : vector<1x32xf32> to vector<8x32xf32>
    %9 = arith.addf %6, %8 : vector<8x32xf32>
    %c0_9 = arith.constant 0 : index
    %c0_10 = arith.constant 0 : index
    %10 = vector.load %arg6[%c0_9, %c0_10] : memref<32x32xbf16, #tpu.memory_space<vmem>>, vector<32x32xbf16>
    %cst_11 = arith.constant dense<0.000000e+00> : vector<8x32xf32>
    %11 = tpu.matmul %1, %10, %cst_11 {dimension_numbers = #tpu.dot_dimension_numbers<[1], [0], [0], [1], [0, 0, 1, 1], [], []>} : vector<8x32xbf16>, vector<32x32xbf16>, vector<8x32xf32> -> vector<8x32xf32>
    %c0_12 = arith.constant 0 : index
    %c0_13 = arith.constant 0 : index
    %12 = vector.load %arg7[%c0_12, %c0_13] : memref<1x32xf32, #tpu.memory_space<vmem>>, vector<1x32xf32>
    %13 = vector.broadcast %12 : vector<1x32xf32> to vector<8x32xf32>
    %14 = arith.addf %11, %13 : vector<8x32xf32>
    %c0_14 = arith.constant 0 : index
    %c0_15 = arith.constant 0 : index
    %15 = vector.load %arg8[%c0_14, %c0_15] : memref<32x32xbf16, #tpu.memory_space<vmem>>, vector<32x32xbf16>
    %cst_16 = arith.constant dense<0.000000e+00> : vector<8x32xf32>
    %16 = tpu.matmul %4, %15, %cst_16 {dimension_numbers = #tpu.dot_dimension_numbers<[1], [0], [0], [1], [0, 0, 1, 1], [], []>} : vector<8x32xbf16>, vector<32x32xbf16>, vector<8x32xf32> -> vector<8x32xf32>
    %c0_17 = arith.constant 0 : index
    %c0_18 = arith.constant 0 : index
    %17 = vector.load %arg9[%c0_17, %c0_18] : memref<1x32xf32, #tpu.memory_space<vmem>>, vector<1x32xf32>
    %18 = vector.broadcast %17 : vector<1x32xf32> to vector<8x32xf32>
    %19 = arith.addf %16, %18 : vector<8x32xf32>
    %20 = vector.shape_cast %9 : vector<8x32xf32> to vector<2x4x32xf32>
    %21 = arith.truncf %20 : vector<2x4x32xf32> to vector<2x4x32xbf16>
    %22 = vector.extract_strided_slice %21 {offsets = [0, 0, 0], sizes = [2, 4, 8], strides = [1, 1, 1]} : vector<2x4x32xbf16> to vector<2x4x8xbf16>
    %23 = vector.extract_strided_slice %21 {offsets = [0, 0, 8], sizes = [2, 4, 8], strides = [1, 1, 1]} : vector<2x4x32xbf16> to vector<2x4x8xbf16>
    %24 = vector.extract_strided_slice %21 {offsets = [0, 0, 16], sizes = [2, 4, 8], strides = [1, 1, 1]} : vector<2x4x32xbf16> to vector<2x4x8xbf16>
    %25 = vector.extract_strided_slice %21 {offsets = [0, 0, 24], sizes = [2, 4, 8], strides = [1, 1, 1]} : vector<2x4x32xbf16> to vector<2x4x8xbf16>
    %26 = vector.shape_cast %22 : vector<2x4x8xbf16> to vector<1x2x4x8xbf16>
    %27 = vector.shape_cast %23 : vector<2x4x8xbf16> to vector<1x2x4x8xbf16>
    %28 = vector.shape_cast %24 : vector<2x4x8xbf16> to vector<1x2x4x8xbf16>
    %29 = vector.shape_cast %25 : vector<2x4x8xbf16> to vector<1x2x4x8xbf16>
    %30 = tpu.concatenate %26, %27, %28, %29 in 0 : vector<1x2x4x8xbf16>, vector<1x2x4x8xbf16>, vector<1x2x4x8xbf16>, vector<1x2x4x8xbf16> -> vector<4x2x4x8xbf16>
    %31 = vector.shape_cast %30 : vector<4x2x4x8xbf16> to vector<8x4x8xbf16>
    %32 = vector.shape_cast %14 : vector<8x32xf32> to vector<2x4x32xf32>
    %33 = arith.truncf %32 : vector<2x4x32xf32> to vector<2x4x32xbf16>
    %34 = vector.extract_strided_slice %33 {offsets = [0, 0, 0], sizes = [2, 4, 8], strides = [1, 1, 1]} : vector<2x4x32xbf16> to vector<2x4x8xbf16>
    %35 = vector.extract_strided_slice %33 {offsets = [0, 0, 8], sizes = [2, 4, 8], strides = [1, 1, 1]} : vector<2x4x32xbf16> to vector<2x4x8xbf16>
    %36 = vector.extract_strided_slice %33 {offsets = [0, 0, 16], sizes = [2, 4, 8], strides = [1, 1, 1]} : vector<2x4x32xbf16> to vector<2x4x8xbf16>
    %37 = vector.extract_strided_slice %33 {offsets = [0, 0, 24], sizes = [2, 4, 8], strides = [1, 1, 1]} : vector<2x4x32xbf16> to vector<2x4x8xbf16>
    %38 = vector.shape_cast %34 : vector<2x4x8xbf16> to vector<1x2x4x8xbf16>
    %39 = vector.shape_cast %35 : vector<2x4x8xbf16> to vector<1x2x4x8xbf16>
    %40 = vector.shape_cast %36 : vector<2x4x8xbf16> to vector<1x2x4x8xbf16>
    %41 = vector.shape_cast %37 : vector<2x4x8xbf16> to vector<1x2x4x8xbf16>
    %42 = tpu.concatenate %38, %39, %40, %41 in 0 : vector<1x2x4x8xbf16>, vector<1x2x4x8xbf16>, vector<1x2x4x8xbf16>, vector<1x2x4x8xbf16> -> vector<4x2x4x8xbf16>
    %43 = vector.shape_cast %42 : vector<4x2x4x8xbf16> to vector<8x4x8xbf16>
    %44 = vector.shape_cast %19 : vector<8x32xf32> to vector<2x4x32xf32>
    %45 = arith.truncf %44 : vector<2x4x32xf32> to vector<2x4x32xbf16>
    %46 = vector.extract_strided_slice %45 {offsets = [0, 0, 0], sizes = [2, 4, 8], strides = [1, 1, 1]} : vector<2x4x32xbf16> to vector<2x4x8xbf16>
    %47 = vector.extract_strided_slice %45 {offsets = [0, 0, 8], sizes = [2, 4, 8], strides = [1, 1, 1]} : vector<2x4x32xbf16> to vector<2x4x8xbf16>
    %48 = vector.extract_strided_slice %45 {offsets = [0, 0, 16], sizes = [2, 4, 8], strides = [1, 1, 1]} : vector<2x4x32xbf16> to vector<2x4x8xbf16>
    %49 = vector.extract_strided_slice %45 {offsets = [0, 0, 24], sizes = [2, 4, 8], strides = [1, 1, 1]} : vector<2x4x32xbf16> to vector<2x4x8xbf16>
    %50 = vector.shape_cast %46 : vector<2x4x8xbf16> to vector<1x2x4x8xbf16>
    %51 = vector.shape_cast %47 : vector<2x4x8xbf16> to vector<1x2x4x8xbf16>
    %52 = vector.shape_cast %48 : vector<2x4x8xbf16> to vector<1x2x4x8xbf16>
    %53 = vector.shape_cast %49 : vector<2x4x8xbf16> to vector<1x2x4x8xbf16>
    %54 = tpu.concatenate %50, %51, %52, %53 in 0 : vector<1x2x4x8xbf16>, vector<1x2x4x8xbf16>, vector<1x2x4x8xbf16>, vector<1x2x4x8xbf16> -> vector<4x2x4x8xbf16>
    %55 = vector.shape_cast %54 : vector<4x2x4x8xbf16> to vector<8x4x8xbf16>
    %c0_19 = arith.constant 0 : index
    %c0_20 = arith.constant 0 : index
    %c0_21 = arith.constant 0 : index
    %c0_22 = arith.constant 0 : index
    %56 = vector.load %arg1[%c0_19, %c0_20, %c0_21, %c0_22] : memref<1x2x1x4xf32, #tpu.memory_space<vmem>>, vector<1x2x1x4xf32>
    %57 = vector.shape_cast %56 : vector<1x2x1x4xf32> to vector<2x1x4xf32>
    %cst_23 = arith.constant 0.000000e+00 : f32
    %58 = vector.broadcast %cst_23 : f32 to vector<2x1x4xf32>
    %59 = arith.cmpf ogt, %57, %58 : vector<2x1x4xf32>
    %cst_24 = arith.constant 0.000000e+00 : f32
    %cst_25 = arith.constant -1.000000e+09 : f32
    %60 = vector.broadcast %cst_24 : f32 to vector<2x1x4xf32>
    %61 = vector.broadcast %cst_25 : f32 to vector<2x1x4xf32>
    %62 = arith.select %59, %60, %61 : vector<2x1x4xi1>, vector<2x1x4xf32>
    %63 = vector.shape_cast %62 : vector<2x1x4xf32> to vector<1x2x1x4xf32>
    %64 = vector.shape_cast %63 : vector<1x2x1x4xf32> to vector<1x2x1x4xf32>
    %65 = vector.broadcast %64 : vector<1x2x1x4xf32> to vector<4x2x1x4xf32>
    %66 = vector.shape_cast %65 : vector<4x2x1x4xf32> to vector<8x1x4xf32>
    "tpu.trace_start"() <{level = 10 : i32, message = "bqd,bkd->bqk"}> : () -> ()
    %cst_26 = arith.constant dense<0.000000e+00> : vector<8x4x4xf32>
    %67 = tpu.matmul %31, %43, %cst_26 {dimension_numbers = #tpu.dot_dimension_numbers<[2], [2], [1], [1], [0, 0, 0, 1, 1, 1], [0], [0]>} : vector<8x4x8xbf16>, vector<8x4x8xbf16>, vector<8x4x4xf32> -> vector<8x4x4xf32>
    "tpu.trace_stop"() : () -> ()
    %68 = vector.broadcast %66 : vector<8x1x4xf32> to vector<8x4x4xf32>
    %69 = arith.addf %67, %68 : vector<8x4x4xf32>
    %cst_27 = arith.constant dense<0xFF800000> : vector<8x4xf32>
    %70 = vector.multi_reduction <maximumf>, %69, %cst_27 [2] : vector<8x4x4xf32> to vector<8x4xf32>
    %71 = vector.shape_cast %70 : vector<8x4xf32> to vector<8x4x1xf32>
    %72 = vector.broadcast %71 : vector<8x4x1xf32> to vector<8x4x4xf32>
    %73 = arith.subf %69, %72 : vector<8x4x4xf32>
    %74 = math.exp %73 : vector<8x4x4xf32>
    %cst_28 = arith.constant dense<0.000000e+00> : vector<8x4xf32>
    %75 = vector.multi_reduction <add>, %74, %cst_28 [2] : vector<8x4x4xf32> to vector<8x4xf32>
    %76 = vector.shape_cast %75 : vector<8x4xf32> to vector<8x4x1xf32>
    %77 = tpu.reciprocal %76 {approx = true} : vector<8x4x1xf32> -> vector<8x4x1xf32>
    %78 = vector.broadcast %77 : vector<8x4x1xf32> to vector<8x4x4xf32>
    %79 = arith.mulf %74, %78 : vector<8x4x4xf32>
    %80 = arith.truncf %79 : vector<8x4x4xf32> to vector<8x4x4xbf16>
    "tpu.trace_start"() <{level = 10 : i32, message = "bqk,bkd->bqd"}> : () -> ()
    %cst_29 = arith.constant dense<0.000000e+00> : vector<8x4x8xf32>
    %81 = tpu.matmul %80, %55, %cst_29 {dimension_numbers = #tpu.dot_dimension_numbers<[2], [1], [1], [2], [0, 0, 0, 1, 1, 2], [0], [0]>} : vector<8x4x4xbf16>, vector<8x4x8xbf16>, vector<8x4x8xf32> -> vector<8x4x8xf32>
    "tpu.trace_stop"() : () -> ()
    %82 = vector.shape_cast %81 : vector<8x4x8xf32> to vector<4x2x4x8xf32>
    %83 = vector.extract_strided_slice %82 {offsets = [0, 0, 0, 0], sizes = [1, 2, 4, 8], strides = [1, 1, 1, 1]} : vector<4x2x4x8xf32> to vector<1x2x4x8xf32>
    %84 = vector.shape_cast %83 : vector<1x2x4x8xf32> to vector<2x4x8xf32>
    %85 = vector.extract_strided_slice %82 {offsets = [1, 0, 0, 0], sizes = [1, 2, 4, 8], strides = [1, 1, 1, 1]} : vector<4x2x4x8xf32> to vector<1x2x4x8xf32>
    %86 = vector.shape_cast %85 : vector<1x2x4x8xf32> to vector<2x4x8xf32>
    %87 = vector.extract_strided_slice %82 {offsets = [2, 0, 0, 0], sizes = [1, 2, 4, 8], strides = [1, 1, 1, 1]} : vector<4x2x4x8xf32> to vector<1x2x4x8xf32>
    %88 = vector.shape_cast %87 : vector<1x2x4x8xf32> to vector<2x4x8xf32>
    %89 = vector.extract_strided_slice %82 {offsets = [3, 0, 0, 0], sizes = [1, 2, 4, 8], strides = [1, 1, 1, 1]} : vector<4x2x4x8xf32> to vector<1x2x4x8xf32>
    %90 = vector.shape_cast %89 : vector<1x2x4x8xf32> to vector<2x4x8xf32>
    %91 = tpu.concatenate %84, %86, %88, %90 in 2 : vector<2x4x8xf32>, vector<2x4x8xf32>, vector<2x4x8xf32>, vector<2x4x8xf32> -> vector<2x4x32xf32>
    %92 = vector.shape_cast %91 : vector<2x4x32xf32> to vector<8x32xf32>
    %93 = arith.truncf %92 : vector<8x32xf32> to vector<8x32xbf16>
    %c0_30 = arith.constant 0 : index
    %c0_31 = arith.constant 0 : index
    %94 = vector.load %arg10[%c0_30, %c0_31] : memref<32x32xbf16, #tpu.memory_space<vmem>>, vector<32x32xbf16>
    %cst_32 = arith.constant dense<0.000000e+00> : vector<8x32xf32>
    %95 = tpu.matmul %93, %94, %cst_32 {dimension_numbers = #tpu.dot_dimension_numbers<[1], [0], [0], [1], [0, 0, 1, 1], [], []>} : vector<8x32xbf16>, vector<32x32xbf16>, vector<8x32xf32> -> vector<8x32xf32>
    %c0_33 = arith.constant 0 : index
    %c0_34 = arith.constant 0 : index
    %96 = vector.load %arg11[%c0_33, %c0_34] : memref<1x32xf32, #tpu.memory_space<vmem>>, vector<1x32xf32>
    %97 = vector.broadcast %96 : vector<1x32xf32> to vector<8x32xf32>
    %98 = arith.addf %95, %97 : vector<8x32xf32>
    %99 = arith.addf %2, %98 : vector<8x32xf32>
    %cst_35 = arith.constant dense<0.000000e+00> : vector<32xf32>
    %100 = vector.multi_reduction <add>, %99, %cst_35 [0] : vector<8x32xf32> to vector<32xf32>
    %101 = vector.shape_cast %100 : vector<32xf32> to vector<1x32xf32>
    %cst_36 = arith.constant 1.250000e-01 : f32
    %102 = vector.broadcast %cst_36 : f32 to vector<1x32xf32>
    %103 = arith.mulf %101, %102 : vector<1x32xf32>
    %104 = vector.broadcast %103 : vector<1x32xf32> to vector<8x32xf32>
    %105 = arith.subf %99, %104 : vector<8x32xf32>
    %106 = arith.mulf %105, %105 : vector<8x32xf32>
    %cst_37 = arith.constant dense<0.000000e+00> : vector<32xf32>
    %107 = vector.multi_reduction <add>, %106, %cst_37 [0] : vector<8x32xf32> to vector<32xf32>
    %108 = vector.shape_cast %107 : vector<32xf32> to vector<1x32xf32>
    %cst_38 = arith.constant 1.250000e-01 : f32
    %109 = vector.broadcast %cst_38 : f32 to vector<1x32xf32>
    %110 = arith.mulf %108, %109 : vector<1x32xf32>
    %cst_39 = arith.constant 9.99999974E-6 : f32
    %111 = vector.broadcast %cst_39 : f32 to vector<1x32xf32>
    %112 = arith.addf %110, %111 : vector<1x32xf32>
    %113 = math.rsqrt %112 : vector<1x32xf32>
    %114 = vector.broadcast %113 : vector<1x32xf32> to vector<8x32xf32>
    %115 = arith.mulf %105, %114 : vector<8x32xf32>
    %116 = arith.truncf %115 : vector<8x32xf32> to vector<8x32xbf16>
    %c0_40 = arith.constant 0 : index
    %c0_41 = arith.constant 0 : index
    %117 = vector.load %arg12[%c0_40, %c0_41] : memref<32x64xbf16, #tpu.memory_space<vmem>>, vector<32x64xbf16>
    %cst_42 = arith.constant dense<0.000000e+00> : vector<8x64xf32>
    %118 = tpu.matmul %116, %117, %cst_42 {dimension_numbers = #tpu.dot_dimension_numbers<[1], [0], [0], [1], [0, 0, 1, 1], [], []>} : vector<8x32xbf16>, vector<32x64xbf16>, vector<8x64xf32> -> vector<8x64xf32>
    %c0_43 = arith.constant 0 : index
    %c0_44 = arith.constant 0 : index
    %119 = vector.load %arg13[%c0_43, %c0_44] : memref<1x64xf32, #tpu.memory_space<vmem>>, vector<1x64xf32>
    %120 = vector.broadcast %119 : vector<1x64xf32> to vector<8x64xf32>
    %121 = arith.addf %118, %120 : vector<8x64xf32>
    %cst_45 = arith.constant 0.000000e+00 : f32
    %122 = vector.broadcast %cst_45 : f32 to vector<8x64xf32>
    %123 = arith.maximumf %121, %122 : vector<8x64xf32>
    %124 = arith.truncf %123 : vector<8x64xf32> to vector<8x64xbf16>
    %c0_46 = arith.constant 0 : index
    %c0_47 = arith.constant 0 : index
    %125 = vector.load %arg14[%c0_46, %c0_47] : memref<64x32xbf16, #tpu.memory_space<vmem>>, vector<64x32xbf16>
    %cst_48 = arith.constant dense<0.000000e+00> : vector<8x32xf32>
    %126 = tpu.matmul %124, %125, %cst_48 {dimension_numbers = #tpu.dot_dimension_numbers<[1], [0], [0], [1], [0, 0, 1, 1], [], []>} : vector<8x64xbf16>, vector<64x32xbf16>, vector<8x32xf32> -> vector<8x32xf32>
    %c0_49 = arith.constant 0 : index
    %c0_50 = arith.constant 0 : index
    %127 = vector.load %arg15[%c0_49, %c0_50] : memref<1x32xf32, #tpu.memory_space<vmem>>, vector<1x32xf32>
    %128 = vector.broadcast %127 : vector<1x32xf32> to vector<8x32xf32>
    %129 = arith.addf %126, %128 : vector<8x32xf32>
    %130 = arith.addf %115, %129 : vector<8x32xf32>
    %cst_51 = arith.constant dense<0.000000e+00> : vector<32xf32>
    %131 = vector.multi_reduction <add>, %130, %cst_51 [0] : vector<8x32xf32> to vector<32xf32>
    %132 = vector.shape_cast %131 : vector<32xf32> to vector<1x32xf32>
    %cst_52 = arith.constant 1.250000e-01 : f32
    %133 = vector.broadcast %cst_52 : f32 to vector<1x32xf32>
    %134 = arith.mulf %132, %133 : vector<1x32xf32>
    %135 = vector.broadcast %134 : vector<1x32xf32> to vector<8x32xf32>
    %136 = arith.subf %130, %135 : vector<8x32xf32>
    %137 = arith.mulf %136, %136 : vector<8x32xf32>
    %cst_53 = arith.constant dense<0.000000e+00> : vector<32xf32>
    %138 = vector.multi_reduction <add>, %137, %cst_53 [0] : vector<8x32xf32> to vector<32xf32>
    %139 = vector.shape_cast %138 : vector<32xf32> to vector<1x32xf32>
    %cst_54 = arith.constant 1.250000e-01 : f32
    %140 = vector.broadcast %cst_54 : f32 to vector<1x32xf32>
    %141 = arith.mulf %139, %140 : vector<1x32xf32>
    %cst_55 = arith.constant 9.99999974E-6 : f32
    %142 = vector.broadcast %cst_55 : f32 to vector<1x32xf32>
    %143 = arith.addf %141, %142 : vector<1x32xf32>
    %144 = math.rsqrt %143 : vector<1x32xf32>
    %145 = vector.broadcast %144 : vector<1x32xf32> to vector<8x32xf32>
    %146 = arith.mulf %136, %145 : vector<8x32xf32>
    %147 = arith.truncf %146 : vector<8x32xf32> to vector<8x32xbf16>
    %c0_56 = arith.constant 0 : index
    %c0_57 = arith.constant 0 : index
    %c0_58 = arith.constant 0 : index
    %148 = vector.load %arg16[%c0_56, %c0_57, %c0_58] : memref<1x8x32xbf16, #tpu.memory_space<vmem>>, vector<1x8x32xbf16>
    %149 = vector.shape_cast %148 : vector<1x8x32xbf16> to vector<8x32xbf16>
    %150 = vector.shape_cast %147 : vector<8x32xbf16> to vector<1x8x32xbf16>
    tpu.vector_store %arg16[%c0_56, %c0_57, %c0_58], %150 {strides = array<i32>} : memref<1x8x32xbf16, #tpu.memory_space<vmem>>, vector<1x8x32xbf16>,
    return
  }
  func.func @transform_0(%arg0: i32) -> (i32, i32, i32, i32) {
    %c0_i32 = arith.constant 0 : i32
    %c0_i32_0 = arith.constant 0 : i32
    %c0_i32_1 = arith.constant 0 : i32
    %c0_i32_2 = arith.constant 0 : i32
    return %arg0, %c0_i32, %c0_i32_0, %c0_i32_1 : i32, i32, i32, i32
  }
  func.func @transform_1(%arg0: i32) -> (i32, i32, i32) {
    %c0_i32 = arith.constant 0 : i32
    %c0_i32_0 = arith.constant 0 : i32
    %c0_i32_1 = arith.constant 0 : i32
    return %arg0, %c0_i32, %c0_i32_0 : i32, i32, i32
  }
  func.func @transform_2(%arg0: i32) -> (i32, i32, i32) {
    %c0_i32 = arith.constant 0 : i32
    %c0_i32_0 = arith.constant 0 : i32
    %c0_i32_1 = arith.constant 0 : i32
    return %arg0, %c0_i32, %c0_i32_0 : i32, i32, i32
  }
  func.func @transform_3(%arg0: i32) -> (i32, i32) {
    %c0_i32 = arith.constant 0 : i32
    %c0_i32_0 = arith.constant 0 : i32
    %c0_i32_1 = arith.constant 0 : i32
    return %c0_i32, %c0_i32_0 : i32, i32
  }
  func.func @transform_4(%arg0: i32) -> (i32, i32) {
    %c0_i32 = arith.constant 0 : i32
    %c0_i32_0 = arith.constant 0 : i32
    %c0_i32_1 = arith.constant 0 : i32
    return %c0_i32, %c0_i32_0 : i32, i32
  }
  func.func @transform_5(%arg0: i32) -> (i32, i32) {
    %c0_i32 = arith.constant 0 : i32
    %c0_i32_0 = arith.constant 0 : i32
    %c0_i32_1 = arith.constant 0 : i32
    return %c0_i32, %c0_i32_0 : i32, i32
  }
  func.func @transform_6(%arg0: i32) -> (i32, i32) {
    %c0_i32 = arith.constant 0 : i32
    %c0_i32_0 = arith.constant 0 : i32
    %c0_i32_1 = arith.constant 0 : i32
    return %c0_i32, %c0_i32_0 : i32, i32
  }
  func.func @transform_7(%arg0: i32) -> (i32, i32) {
    %c0_i32 = arith.constant 0 : i32
    %c0_i32_0 = arith.constant 0 : i32
    %c0_i32_1 = arith.constant 0 : i32
    return %c0_i32, %c0_i32_0 : i32, i32
  }
  func.func @transform_8(%arg0: i32) -> (i32, i32) {
    %c0_i32 = arith.constant 0 : i32
    %c0_i32_0 = arith.constant 0 : i32
    %c0_i32_1 = arith.constant 0 : i32
    return %c0_i32, %c0_i32_0 : i32, i32
  }
  func.func @transform_9(%arg0: i32) -> (i32, i32) {
    %c0_i32 = arith.constant 0 : i32
    %c0_i32_0 = arith.constant 0 : i32
    %c0_i32_1 = arith.constant 0 : i32
    return %c0_i32, %c0_i32_0 : i32, i32
  }
  func.func @transform_10(%arg0: i32) -> (i32, i32) {
    %c0_i32 = arith.constant 0 : i32
    %c0_i32_0 = arith.constant 0 : i32
    %c0_i32_1 = arith.constant 0 : i32
    return %c0_i32, %c0_i32_0 : i32, i32
  }
  func.func @transform_11(%arg0: i32) -> (i32, i32) {
    %c0_i32 = arith.constant 0 : i32
    %c0_i32_0 = arith.constant 0 : i32
    %c0_i32_1 = arith.constant 0 : i32
    return %c0_i32, %c0_i32_0 : i32, i32
  }
  func.func @transform_12(%arg0: i32) -> (i32, i32) {
    %c0_i32 = arith.constant 0 : i32
    %c0_i32_0 = arith.constant 0 : i32
    %c0_i32_1 = arith.constant 0 : i32
    return %c0_i32, %c0_i32_0 : i32, i32
  }
  func.func @transform_13(%arg0: i32) -> (i32, i32) {
    %c0_i32 = arith.constant 0 : i32
    %c0_i32_0 = arith.constant 0 : i32
    %c0_i32_1 = arith.constant 0 : i32
    return %c0_i32, %c0_i32_0 : i32, i32
  }
  func.func @transform_14(%arg0: i32) -> (i32, i32) {
    %c0_i32 = arith.constant 0 : i32
    %c0_i32_0 = arith.constant 0 : i32
    %c0_i32_1 = arith.constant 0 : i32
    return %c0_i32, %c0_i32_0 : i32, i32
  }
  func.func @transform_15(%arg0: i32) -> (i32, i32, i32) {
    %c0_i32 = arith.constant 0 : i32
    %c0_i32_0 = arith.constant 0 : i32
    %c0_i32_1 = arith.constant 0 : i32
    return %arg0, %c0_i32, %c0_i32_0 : i32, i32, i32
  }
}

module attributes {stable_mosaic.version = 11 : i64} {
  func.func @_dense_mask_kernel(%arg0: i32, %arg1: i32, %arg2: memref<1x16x32xbf16, #tpu.memory_space<vmem>>, %arg3: memref<32x128xbf16, #tpu.memory_space<vmem>>, %arg4: memref<1x128xf32, #tpu.memory_space<vmem>>, %arg5: memref<1x16x1xf32, #tpu.memory_space<vmem>>, %arg6: memref<1x16x128xf32, #tpu.memory_space<vmem>>) attributes {dimension_semantics = [#tpu.dimension_semantics<parallel>, #tpu.dimension_semantics<parallel>], iteration_bounds = array<i64: 2, 1>, scalar_prefetch = 0 : i64, scratch_operands = 0 : i64, tpu.core_type = #tpu.core_type<tc>, window_params = [{transform_indices = @transform_0, window_bounds = array<i64: 1, 16, 32>}, {pipeline_mode = #tpu.pipeline_mode<synchronous>, transform_indices = @transform_1, window_bounds = array<i64: 32, 128>}, {pipeline_mode = #tpu.pipeline_mode<synchronous>, transform_indices = @transform_2, window_bounds = array<i64: 1, 128>}, {transform_indices = @transform_3, window_bounds = array<i64: 1, 16, 1>}, {transform_indices = @transform_4, window_bounds = array<i64: 1, 16, 128>}]} {
    %c0 = arith.constant 0 : index
    %c0_0 = arith.constant 0 : index
    %c0_1 = arith.constant 0 : index
    %0 = vector.load %arg2[%c0, %c0_0, %c0_1] : memref<1x16x32xbf16, #tpu.memory_space<vmem>>, vector<1x16x32xbf16>
    %1 = vector.shape_cast %0 : vector<1x16x32xbf16> to vector<16x32xbf16>
    %c0_2 = arith.constant 0 : index
    %c0_3 = arith.constant 0 : index
    %2 = vector.load %arg3[%c0_2, %c0_3] : memref<32x128xbf16, #tpu.memory_space<vmem>>, vector<32x128xbf16>
    %cst = arith.constant dense<0.000000e+00> : vector<16x128xf32>
    %3 = tpu.matmul %1, %2, %cst {dimension_numbers = #tpu.dot_dimension_numbers<[1], [0], [0], [1], [0, 0, 1, 1], [], []>} : vector<16x32xbf16>, vector<32x128xbf16>, vector<16x128xf32> -> vector<16x128xf32>
    %c0_4 = arith.constant 0 : index
    %c0_5 = arith.constant 0 : index
    %4 = vector.load %arg4[%c0_4, %c0_5] : memref<1x128xf32, #tpu.memory_space<vmem>>, vector<1x128xf32>
    %5 = vector.broadcast %4 : vector<1x128xf32> to vector<16x128xf32>
    %6 = arith.addf %3, %5 : vector<16x128xf32>
    %c0_6 = arith.constant 0 : index
    %c0_7 = arith.constant 0 : index
    %c0_8 = arith.constant 0 : index
    %7 = vector.load %arg5[%c0_6, %c0_7, %c0_8] : memref<1x16x1xf32, #tpu.memory_space<vmem>>, vector<1x16x1xf32>
    %8 = vector.shape_cast %7 : vector<1x16x1xf32> to vector<16x1xf32>
    %9 = vector.broadcast %8 : vector<16x1xf32> to vector<16x128xf32>
    %10 = arith.mulf %6, %9 : vector<16x128xf32>
    %c0_9 = arith.constant 0 : index
    %c0_10 = arith.constant 0 : index
    %c0_11 = arith.constant 0 : index
    %11 = vector.load %arg6[%c0_9, %c0_10, %c0_11] : memref<1x16x128xf32, #tpu.memory_space<vmem>>, vector<1x16x128xf32>
    %12 = vector.shape_cast %11 : vector<1x16x128xf32> to vector<16x128xf32>
    %13 = vector.shape_cast %10 : vector<16x128xf32> to vector<1x16x128xf32>
    tpu.vector_store %arg6[%c0_9, %c0_10, %c0_11], %13 {strides = array<i32>} : memref<1x16x128xf32, #tpu.memory_space<vmem>>, vector<1x16x128xf32>,
    return
  }
  func.func @transform_0(%arg0: i32, %arg1: i32) -> (i32, i32, i32) {
    %c0_i32 = arith.constant 0 : i32
    %c0_i32_0 = arith.constant 0 : i32
    return %arg0, %arg1, %c0_i32 : i32, i32, i32
  }
  func.func @transform_1(%arg0: i32, %arg1: i32) -> (i32, i32) {
    %c0_i32 = arith.constant 0 : i32
    %c0_i32_0 = arith.constant 0 : i32
    %c0_i32_1 = arith.constant 0 : i32
    return %c0_i32, %c0_i32_0 : i32, i32
  }
  func.func @transform_2(%arg0: i32, %arg1: i32) -> (i32, i32) {
    %c0_i32 = arith.constant 0 : i32
    %c0_i32_0 = arith.constant 0 : i32
    %c0_i32_1 = arith.constant 0 : i32
    return %c0_i32, %c0_i32_0 : i32, i32
  }
  func.func @transform_3(%arg0: i32, %arg1: i32) -> (i32, i32, i32) {
    %c0_i32 = arith.constant 0 : i32
    %c0_i32_0 = arith.constant 0 : i32
    return %arg0, %arg1, %c0_i32 : i32, i32, i32
  }
  func.func @transform_4(%arg0: i32, %arg1: i32) -> (i32, i32, i32) {
    %c0_i32 = arith.constant 0 : i32
    %c0_i32_0 = arith.constant 0 : i32
    return %arg0, %arg1, %c0_i32 : i32, i32, i32
  }
}

module attributes {stable_mosaic.version = 11 : i64} {
  func.func @_fused_layer_kernel(%arg0: i32, %arg1: memref<1x4x1x4xf32, #tpu.memory_space<vmem>>, %arg2: memref<1x16x32xbf16, #tpu.memory_space<vmem>>, %arg3: memref<1x16x32xbf16, #tpu.memory_space<vmem>>, %arg4: memref<32x32xbf16, #tpu.memory_space<vmem>>, %arg5: memref<1x32xf32, #tpu.memory_space<vmem>>, %arg6: memref<32x32xbf16, #tpu.memory_space<vmem>>, %arg7: memref<1x32xf32, #tpu.memory_space<vmem>>, %arg8: memref<32x32xbf16, #tpu.memory_space<vmem>>, %arg9: memref<1x32xf32, #tpu.memory_space<vmem>>, %arg10: memref<32x32xbf16, #tpu.memory_space<vmem>>, %arg11: memref<1x32xf32, #tpu.memory_space<vmem>>, %arg12: memref<32x64xbf16, #tpu.memory_space<vmem>>, %arg13: memref<1x64xf32, #tpu.memory_space<vmem>>, %arg14: memref<64x32xbf16, #tpu.memory_space<vmem>>, %arg15: memref<1x32xf32, #tpu.memory_space<vmem>>, %arg16: memref<1x16x32xbf16, #tpu.memory_space<vmem>>) attributes {dimension_semantics = [#tpu.dimension_semantics<parallel>], iteration_bounds = array<i64: 2>, scalar_prefetch = 0 : i64, scratch_operands = 0 : i64, tpu.core_type = #tpu.core_type<tc>, window_params = [{transform_indices = @transform_0, window_bounds = array<i64: 1, 4, 1, 4>}, {transform_indices = @transform_1, window_bounds = array<i64: 1, 16, 32>}, {transform_indices = @transform_2, window_bounds = array<i64: 1, 16, 32>}, {pipeline_mode = #tpu.pipeline_mode<synchronous>, transform_indices = @transform_3, window_bounds = array<i64: 32, 32>}, {pipeline_mode = #tpu.pipeline_mode<synchronous>, transform_indices = @transform_4, window_bounds = array<i64: 1, 32>}, {pipeline_mode = #tpu.pipeline_mode<synchronous>, transform_indices = @transform_5, window_bounds = array<i64: 32, 32>}, {pipeline_mode = #tpu.pipeline_mode<synchronous>, transform_indices = @transform_6, window_bounds = array<i64: 1, 32>}, {pipeline_mode = #tpu.pipeline_mode<synchronous>, transform_indices = @transform_7, window_bounds = array<i64: 32, 32>}, {pipeline_mode = #tpu.pipeline_mode<synchronous>, transform_indices = @transform_8, window_bounds = array<i64: 1, 32>}, {pipeline_mode = #tpu.pipeline_mode<synchronous>, transform_indices = @transform_9, window_bounds = array<i64: 32, 32>}, {pipeline_mode = #tpu.pipeline_mode<synchronous>, transform_indices = @transform_10, window_bounds = array<i64: 1, 32>}, {pipeline_mode = #tpu.pipeline_mode<synchronous>, transform_indices = @transform_11, window_bounds = array<i64: 32, 64>}, {pipeline_mode = #tpu.pipeline_mode<synchronous>, transform_indices = @transform_12, window_bounds = array<i64: 1, 64>}, {pipeline_mode = #tpu.pipeline_mode<synchronous>, transform_indices = @transform_13, window_bounds = array<i64: 64, 32>}, {pipeline_mode = #tpu.pipeline_mode<synchronous>, transform_indices = @transform_14, window_bounds = array<i64: 1, 32>}, {transform_indices = @transform_15, window_bounds = array<i64: 1, 16, 32>}]} {
    %c0 = arith.constant 0 : index
    %c0_0 = arith.constant 0 : index
    %c0_1 = arith.constant 0 : index
    %0 = vector.load %arg2[%c0, %c0_0, %c0_1] : memref<1x16x32xbf16, #tpu.memory_space<vmem>>, vector<1x16x32xbf16>
    %1 = vector.shape_cast %0 : vector<1x16x32xbf16> to vector<16x32xbf16>
    %2 = arith.extf %1 : vector<16x32xbf16> to vector<16x32xf32>
    %c0_2 = arith.constant 0 : index
    %c0_3 = arith.constant 0 : index
    %c0_4 = arith.constant 0 : index
    %3 = vector.load %arg3[%c0_2, %c0_3, %c0_4] : memref<1x16x32xbf16, #tpu.memory_space<vmem>>, vector<1x16x32xbf16>
    %4 = vector.shape_cast %3 : vector<1x16x32xbf16> to vector<16x32xbf16>
    %c0_5 = arith.constant 0 : index
    %c0_6 = arith.constant 0 : index
    %5 = vector.load %arg4[%c0_5, %c0_6] : memref<32x32xbf16, #tpu.memory_space<vmem>>, vector<32x32xbf16>
    %cst = arith.constant dense<0.000000e+00> : vector<16x32xf32>
    %6 = tpu.matmul %1, %5, %cst {dimension_numbers = #tpu.dot_dimension_numbers<[1], [0], [0], [1], [0, 0, 1, 1], [], []>} : vector<16x32xbf16>, vector<32x32xbf16>, vector<16x32xf32> -> vector<16x32xf32>
    %c0_7 = arith.constant 0 : index
    %c0_8 = arith.constant 0 : index
    %7 = vector.load %arg5[%c0_7, %c0_8] : memref<1x32xf32, #tpu.memory_space<vmem>>, vector<1x32xf32>
    %8 = vector.broadcast %7 : vector<1x32xf32> to vector<16x32xf32>
    %9 = arith.addf %6, %8 : vector<16x32xf32>
    %c0_9 = arith.constant 0 : index
    %c0_10 = arith.constant 0 : index
    %10 = vector.load %arg6[%c0_9, %c0_10] : memref<32x32xbf16, #tpu.memory_space<vmem>>, vector<32x32xbf16>
    %cst_11 = arith.constant dense<0.000000e+00> : vector<16x32xf32>
    %11 = tpu.matmul %1, %10, %cst_11 {dimension_numbers = #tpu.dot_dimension_numbers<[1], [0], [0], [1], [0, 0, 1, 1], [], []>} : vector<16x32xbf16>, vector<32x32xbf16>, vector<16x32xf32> -> vector<16x32xf32>
    %c0_12 = arith.constant 0 : index
    %c0_13 = arith.constant 0 : index
    %12 = vector.load %arg7[%c0_12, %c0_13] : memref<1x32xf32, #tpu.memory_space<vmem>>, vector<1x32xf32>
    %13 = vector.broadcast %12 : vector<1x32xf32> to vector<16x32xf32>
    %14 = arith.addf %11, %13 : vector<16x32xf32>
    %c0_14 = arith.constant 0 : index
    %c0_15 = arith.constant 0 : index
    %15 = vector.load %arg8[%c0_14, %c0_15] : memref<32x32xbf16, #tpu.memory_space<vmem>>, vector<32x32xbf16>
    %cst_16 = arith.constant dense<0.000000e+00> : vector<16x32xf32>
    %16 = tpu.matmul %4, %15, %cst_16 {dimension_numbers = #tpu.dot_dimension_numbers<[1], [0], [0], [1], [0, 0, 1, 1], [], []>} : vector<16x32xbf16>, vector<32x32xbf16>, vector<16x32xf32> -> vector<16x32xf32>
    %c0_17 = arith.constant 0 : index
    %c0_18 = arith.constant 0 : index
    %17 = vector.load %arg9[%c0_17, %c0_18] : memref<1x32xf32, #tpu.memory_space<vmem>>, vector<1x32xf32>
    %18 = vector.broadcast %17 : vector<1x32xf32> to vector<16x32xf32>
    %19 = arith.addf %16, %18 : vector<16x32xf32>
    %20 = vector.shape_cast %9 : vector<16x32xf32> to vector<4x4x32xf32>
    %21 = arith.truncf %20 : vector<4x4x32xf32> to vector<4x4x32xbf16>
    %22 = vector.extract_strided_slice %21 {offsets = [0, 0, 0], sizes = [4, 4, 8], strides = [1, 1, 1]} : vector<4x4x32xbf16> to vector<4x4x8xbf16>
    %23 = vector.extract_strided_slice %21 {offsets = [0, 0, 8], sizes = [4, 4, 8], strides = [1, 1, 1]} : vector<4x4x32xbf16> to vector<4x4x8xbf16>
    %24 = vector.extract_strided_slice %21 {offsets = [0, 0, 16], sizes = [4, 4, 8], strides = [1, 1, 1]} : vector<4x4x32xbf16> to vector<4x4x8xbf16>
    %25 = vector.extract_strided_slice %21 {offsets = [0, 0, 24], sizes = [4, 4, 8], strides = [1, 1, 1]} : vector<4x4x32xbf16> to vector<4x4x8xbf16>
    %26 = vector.shape_cast %22 : vector<4x4x8xbf16> to vector<1x4x4x8xbf16>
    %27 = vector.shape_cast %23 : vector<4x4x8xbf16> to vector<1x4x4x8xbf16>
    %28 = vector.shape_cast %24 : vector<4x4x8xbf16> to vector<1x4x4x8xbf16>
    %29 = vector.shape_cast %25 : vector<4x4x8xbf16> to vector<1x4x4x8xbf16>
    %30 = tpu.concatenate %26, %27, %28, %29 in 0 : vector<1x4x4x8xbf16>, vector<1x4x4x8xbf16>, vector<1x4x4x8xbf16>, vector<1x4x4x8xbf16> -> vector<4x4x4x8xbf16>
    %31 = vector.shape_cast %30 : vector<4x4x4x8xbf16> to vector<16x4x8xbf16>
    %32 = vector.shape_cast %14 : vector<16x32xf32> to vector<4x4x32xf32>
    %33 = arith.truncf %32 : vector<4x4x32xf32> to vector<4x4x32xbf16>
    %34 = vector.extract_strided_slice %33 {offsets = [0, 0, 0], sizes = [4, 4, 8], strides = [1, 1, 1]} : vector<4x4x32xbf16> to vector<4x4x8xbf16>
    %35 = vector.extract_strided_slice %33 {offsets = [0, 0, 8], sizes = [4, 4, 8], strides = [1, 1, 1]} : vector<4x4x32xbf16> to vector<4x4x8xbf16>
    %36 = vector.extract_strided_slice %33 {offsets = [0, 0, 16], sizes = [4, 4, 8], strides = [1, 1, 1]} : vector<4x4x32xbf16> to vector<4x4x8xbf16>
    %37 = vector.extract_strided_slice %33 {offsets = [0, 0, 24], sizes = [4, 4, 8], strides = [1, 1, 1]} : vector<4x4x32xbf16> to vector<4x4x8xbf16>
    %38 = vector.shape_cast %34 : vector<4x4x8xbf16> to vector<1x4x4x8xbf16>
    %39 = vector.shape_cast %35 : vector<4x4x8xbf16> to vector<1x4x4x8xbf16>
    %40 = vector.shape_cast %36 : vector<4x4x8xbf16> to vector<1x4x4x8xbf16>
    %41 = vector.shape_cast %37 : vector<4x4x8xbf16> to vector<1x4x4x8xbf16>
    %42 = tpu.concatenate %38, %39, %40, %41 in 0 : vector<1x4x4x8xbf16>, vector<1x4x4x8xbf16>, vector<1x4x4x8xbf16>, vector<1x4x4x8xbf16> -> vector<4x4x4x8xbf16>
    %43 = vector.shape_cast %42 : vector<4x4x4x8xbf16> to vector<16x4x8xbf16>
    %44 = vector.shape_cast %19 : vector<16x32xf32> to vector<4x4x32xf32>
    %45 = arith.truncf %44 : vector<4x4x32xf32> to vector<4x4x32xbf16>
    %46 = vector.extract_strided_slice %45 {offsets = [0, 0, 0], sizes = [4, 4, 8], strides = [1, 1, 1]} : vector<4x4x32xbf16> to vector<4x4x8xbf16>
    %47 = vector.extract_strided_slice %45 {offsets = [0, 0, 8], sizes = [4, 4, 8], strides = [1, 1, 1]} : vector<4x4x32xbf16> to vector<4x4x8xbf16>
    %48 = vector.extract_strided_slice %45 {offsets = [0, 0, 16], sizes = [4, 4, 8], strides = [1, 1, 1]} : vector<4x4x32xbf16> to vector<4x4x8xbf16>
    %49 = vector.extract_strided_slice %45 {offsets = [0, 0, 24], sizes = [4, 4, 8], strides = [1, 1, 1]} : vector<4x4x32xbf16> to vector<4x4x8xbf16>
    %50 = vector.shape_cast %46 : vector<4x4x8xbf16> to vector<1x4x4x8xbf16>
    %51 = vector.shape_cast %47 : vector<4x4x8xbf16> to vector<1x4x4x8xbf16>
    %52 = vector.shape_cast %48 : vector<4x4x8xbf16> to vector<1x4x4x8xbf16>
    %53 = vector.shape_cast %49 : vector<4x4x8xbf16> to vector<1x4x4x8xbf16>
    %54 = tpu.concatenate %50, %51, %52, %53 in 0 : vector<1x4x4x8xbf16>, vector<1x4x4x8xbf16>, vector<1x4x4x8xbf16>, vector<1x4x4x8xbf16> -> vector<4x4x4x8xbf16>
    %55 = vector.shape_cast %54 : vector<4x4x4x8xbf16> to vector<16x4x8xbf16>
    %c0_19 = arith.constant 0 : index
    %c0_20 = arith.constant 0 : index
    %c0_21 = arith.constant 0 : index
    %c0_22 = arith.constant 0 : index
    %56 = vector.load %arg1[%c0_19, %c0_20, %c0_21, %c0_22] : memref<1x4x1x4xf32, #tpu.memory_space<vmem>>, vector<1x4x1x4xf32>
    %57 = vector.shape_cast %56 : vector<1x4x1x4xf32> to vector<4x1x4xf32>
    %cst_23 = arith.constant 0.000000e+00 : f32
    %58 = vector.broadcast %cst_23 : f32 to vector<4x1x4xf32>
    %59 = arith.cmpf ogt, %57, %58 : vector<4x1x4xf32>
    %cst_24 = arith.constant 0.000000e+00 : f32
    %cst_25 = arith.constant -1.000000e+09 : f32
    %60 = vector.broadcast %cst_24 : f32 to vector<4x1x4xf32>
    %61 = vector.broadcast %cst_25 : f32 to vector<4x1x4xf32>
    %62 = arith.select %59, %60, %61 : vector<4x1x4xi1>, vector<4x1x4xf32>
    %63 = vector.shape_cast %62 : vector<4x1x4xf32> to vector<1x4x1x4xf32>
    %64 = vector.shape_cast %63 : vector<1x4x1x4xf32> to vector<1x4x1x4xf32>
    %65 = vector.broadcast %64 : vector<1x4x1x4xf32> to vector<4x4x1x4xf32>
    %66 = vector.shape_cast %65 : vector<4x4x1x4xf32> to vector<16x1x4xf32>
    "tpu.trace_start"() <{level = 10 : i32, message = "bqd,bkd->bqk"}> : () -> ()
    %cst_26 = arith.constant dense<0.000000e+00> : vector<16x4x4xf32>
    %67 = tpu.matmul %31, %43, %cst_26 {dimension_numbers = #tpu.dot_dimension_numbers<[2], [2], [1], [1], [0, 0, 0, 1, 1, 1], [0], [0]>} : vector<16x4x8xbf16>, vector<16x4x8xbf16>, vector<16x4x4xf32> -> vector<16x4x4xf32>
    "tpu.trace_stop"() : () -> ()
    %68 = vector.broadcast %66 : vector<16x1x4xf32> to vector<16x4x4xf32>
    %69 = arith.addf %67, %68 : vector<16x4x4xf32>
    %cst_27 = arith.constant dense<0xFF800000> : vector<16x4xf32>
    %70 = vector.multi_reduction <maximumf>, %69, %cst_27 [2] : vector<16x4x4xf32> to vector<16x4xf32>
    %71 = vector.shape_cast %70 : vector<16x4xf32> to vector<16x4x1xf32>
    %72 = vector.broadcast %71 : vector<16x4x1xf32> to vector<16x4x4xf32>
    %73 = arith.subf %69, %72 : vector<16x4x4xf32>
    %74 = math.exp %73 : vector<16x4x4xf32>
    %cst_28 = arith.constant dense<0.000000e+00> : vector<16x4xf32>
    %75 = vector.multi_reduction <add>, %74, %cst_28 [2] : vector<16x4x4xf32> to vector<16x4xf32>
    %76 = vector.shape_cast %75 : vector<16x4xf32> to vector<16x4x1xf32>
    %77 = tpu.reciprocal %76 {approx = true} : vector<16x4x1xf32> -> vector<16x4x1xf32>
    %78 = vector.broadcast %77 : vector<16x4x1xf32> to vector<16x4x4xf32>
    %79 = arith.mulf %74, %78 : vector<16x4x4xf32>
    %80 = arith.truncf %79 : vector<16x4x4xf32> to vector<16x4x4xbf16>
    "tpu.trace_start"() <{level = 10 : i32, message = "bqk,bkd->bqd"}> : () -> ()
    %cst_29 = arith.constant dense<0.000000e+00> : vector<16x4x8xf32>
    %81 = tpu.matmul %80, %55, %cst_29 {dimension_numbers = #tpu.dot_dimension_numbers<[2], [1], [1], [2], [0, 0, 0, 1, 1, 2], [0], [0]>} : vector<16x4x4xbf16>, vector<16x4x8xbf16>, vector<16x4x8xf32> -> vector<16x4x8xf32>
    "tpu.trace_stop"() : () -> ()
    %82 = vector.shape_cast %81 : vector<16x4x8xf32> to vector<4x4x4x8xf32>
    %83 = vector.extract_strided_slice %82 {offsets = [0, 0, 0, 0], sizes = [1, 4, 4, 8], strides = [1, 1, 1, 1]} : vector<4x4x4x8xf32> to vector<1x4x4x8xf32>
    %84 = vector.shape_cast %83 : vector<1x4x4x8xf32> to vector<4x4x8xf32>
    %85 = vector.extract_strided_slice %82 {offsets = [1, 0, 0, 0], sizes = [1, 4, 4, 8], strides = [1, 1, 1, 1]} : vector<4x4x4x8xf32> to vector<1x4x4x8xf32>
    %86 = vector.shape_cast %85 : vector<1x4x4x8xf32> to vector<4x4x8xf32>
    %87 = vector.extract_strided_slice %82 {offsets = [2, 0, 0, 0], sizes = [1, 4, 4, 8], strides = [1, 1, 1, 1]} : vector<4x4x4x8xf32> to vector<1x4x4x8xf32>
    %88 = vector.shape_cast %87 : vector<1x4x4x8xf32> to vector<4x4x8xf32>
    %89 = vector.extract_strided_slice %82 {offsets = [3, 0, 0, 0], sizes = [1, 4, 4, 8], strides = [1, 1, 1, 1]} : vector<4x4x4x8xf32> to vector<1x4x4x8xf32>
    %90 = vector.shape_cast %89 : vector<1x4x4x8xf32> to vector<4x4x8xf32>
    %91 = tpu.concatenate %84, %86, %88, %90 in 2 : vector<4x4x8xf32>, vector<4x4x8xf32>, vector<4x4x8xf32>, vector<4x4x8xf32> -> vector<4x4x32xf32>
    %92 = vector.shape_cast %91 : vector<4x4x32xf32> to vector<16x32xf32>
    %93 = arith.truncf %92 : vector<16x32xf32> to vector<16x32xbf16>
    %c0_30 = arith.constant 0 : index
    %c0_31 = arith.constant 0 : index
    %94 = vector.load %arg10[%c0_30, %c0_31] : memref<32x32xbf16, #tpu.memory_space<vmem>>, vector<32x32xbf16>
    %cst_32 = arith.constant dense<0.000000e+00> : vector<16x32xf32>
    %95 = tpu.matmul %93, %94, %cst_32 {dimension_numbers = #tpu.dot_dimension_numbers<[1], [0], [0], [1], [0, 0, 1, 1], [], []>} : vector<16x32xbf16>, vector<32x32xbf16>, vector<16x32xf32> -> vector<16x32xf32>
    %c0_33 = arith.constant 0 : index
    %c0_34 = arith.constant 0 : index
    %96 = vector.load %arg11[%c0_33, %c0_34] : memref<1x32xf32, #tpu.memory_space<vmem>>, vector<1x32xf32>
    %97 = vector.broadcast %96 : vector<1x32xf32> to vector<16x32xf32>
    %98 = arith.addf %95, %97 : vector<16x32xf32>
    %99 = arith.addf %2, %98 : vector<16x32xf32>
    %cst_35 = arith.constant dense<0.000000e+00> : vector<32xf32>
    %100 = vector.multi_reduction <add>, %99, %cst_35 [0] : vector<16x32xf32> to vector<32xf32>
    %101 = vector.shape_cast %100 : vector<32xf32> to vector<1x32xf32>
    %cst_36 = arith.constant 6.250000e-02 : f32
    %102 = vector.broadcast %cst_36 : f32 to vector<1x32xf32>
    %103 = arith.mulf %101, %102 : vector<1x32xf32>
    %104 = vector.broadcast %103 : vector<1x32xf32> to vector<16x32xf32>
    %105 = arith.subf %99, %104 : vector<16x32xf32>
    %106 = arith.mulf %105, %105 : vector<16x32xf32>
    %cst_37 = arith.constant dense<0.000000e+00> : vector<32xf32>
    %107 = vector.multi_reduction <add>, %106, %cst_37 [0] : vector<16x32xf32> to vector<32xf32>
    %108 = vector.shape_cast %107 : vector<32xf32> to vector<1x32xf32>
    %cst_38 = arith.constant 6.250000e-02 : f32
    %109 = vector.broadcast %cst_38 : f32 to vector<1x32xf32>
    %110 = arith.mulf %108, %109 : vector<1x32xf32>
    %cst_39 = arith.constant 9.99999974E-6 : f32
    %111 = vector.broadcast %cst_39 : f32 to vector<1x32xf32>
    %112 = arith.addf %110, %111 : vector<1x32xf32>
    %113 = math.rsqrt %112 : vector<1x32xf32>
    %114 = vector.broadcast %113 : vector<1x32xf32> to vector<16x32xf32>
    %115 = arith.mulf %105, %114 : vector<16x32xf32>
    %116 = arith.truncf %115 : vector<16x32xf32> to vector<16x32xbf16>
    %c0_40 = arith.constant 0 : index
    %c0_41 = arith.constant 0 : index
    %117 = vector.load %arg12[%c0_40, %c0_41] : memref<32x64xbf16, #tpu.memory_space<vmem>>, vector<32x64xbf16>
    %cst_42 = arith.constant dense<0.000000e+00> : vector<16x64xf32>
    %118 = tpu.matmul %116, %117, %cst_42 {dimension_numbers = #tpu.dot_dimension_numbers<[1], [0], [0], [1], [0, 0, 1, 1], [], []>} : vector<16x32xbf16>, vector<32x64xbf16>, vector<16x64xf32> -> vector<16x64xf32>
    %c0_43 = arith.constant 0 : index
    %c0_44 = arith.constant 0 : index
    %119 = vector.load %arg13[%c0_43, %c0_44] : memref<1x64xf32, #tpu.memory_space<vmem>>, vector<1x64xf32>
    %120 = vector.broadcast %119 : vector<1x64xf32> to vector<16x64xf32>
    %121 = arith.addf %118, %120 : vector<16x64xf32>
    %cst_45 = arith.constant 0.000000e+00 : f32
    %122 = vector.broadcast %cst_45 : f32 to vector<16x64xf32>
    %123 = arith.maximumf %121, %122 : vector<16x64xf32>
    %124 = arith.truncf %123 : vector<16x64xf32> to vector<16x64xbf16>
    %c0_46 = arith.constant 0 : index
    %c0_47 = arith.constant 0 : index
    %125 = vector.load %arg14[%c0_46, %c0_47] : memref<64x32xbf16, #tpu.memory_space<vmem>>, vector<64x32xbf16>
    %cst_48 = arith.constant dense<0.000000e+00> : vector<16x32xf32>
    %126 = tpu.matmul %124, %125, %cst_48 {dimension_numbers = #tpu.dot_dimension_numbers<[1], [0], [0], [1], [0, 0, 1, 1], [], []>} : vector<16x64xbf16>, vector<64x32xbf16>, vector<16x32xf32> -> vector<16x32xf32>
    %c0_49 = arith.constant 0 : index
    %c0_50 = arith.constant 0 : index
    %127 = vector.load %arg15[%c0_49, %c0_50] : memref<1x32xf32, #tpu.memory_space<vmem>>, vector<1x32xf32>
    %128 = vector.broadcast %127 : vector<1x32xf32> to vector<16x32xf32>
    %129 = arith.addf %126, %128 : vector<16x32xf32>
    %130 = arith.addf %115, %129 : vector<16x32xf32>
    %cst_51 = arith.constant dense<0.000000e+00> : vector<32xf32>
    %131 = vector.multi_reduction <add>, %130, %cst_51 [0] : vector<16x32xf32> to vector<32xf32>
    %132 = vector.shape_cast %131 : vector<32xf32> to vector<1x32xf32>
    %cst_52 = arith.constant 6.250000e-02 : f32
    %133 = vector.broadcast %cst_52 : f32 to vector<1x32xf32>
    %134 = arith.mulf %132, %133 : vector<1x32xf32>
    %135 = vector.broadcast %134 : vector<1x32xf32> to vector<16x32xf32>
    %136 = arith.subf %130, %135 : vector<16x32xf32>
    %137 = arith.mulf %136, %136 : vector<16x32xf32>
    %cst_53 = arith.constant dense<0.000000e+00> : vector<32xf32>
    %138 = vector.multi_reduction <add>, %137, %cst_53 [0] : vector<16x32xf32> to vector<32xf32>
    %139 = vector.shape_cast %138 : vector<32xf32> to vector<1x32xf32>
    %cst_54 = arith.constant 6.250000e-02 : f32
    %140 = vector.broadcast %cst_54 : f32 to vector<1x32xf32>
    %141 = arith.mulf %139, %140 : vector<1x32xf32>
    %cst_55 = arith.constant 9.99999974E-6 : f32
    %142 = vector.broadcast %cst_55 : f32 to vector<1x32xf32>
    %143 = arith.addf %141, %142 : vector<1x32xf32>
    %144 = math.rsqrt %143 : vector<1x32xf32>
    %145 = vector.broadcast %144 : vector<1x32xf32> to vector<16x32xf32>
    %146 = arith.mulf %136, %145 : vector<16x32xf32>
    %147 = arith.truncf %146 : vector<16x32xf32> to vector<16x32xbf16>
    %c0_56 = arith.constant 0 : index
    %c0_57 = arith.constant 0 : index
    %c0_58 = arith.constant 0 : index
    %148 = vector.load %arg16[%c0_56, %c0_57, %c0_58] : memref<1x16x32xbf16, #tpu.memory_space<vmem>>, vector<1x16x32xbf16>
    %149 = vector.shape_cast %148 : vector<1x16x32xbf16> to vector<16x32xbf16>
    %150 = vector.shape_cast %147 : vector<16x32xbf16> to vector<1x16x32xbf16>
    tpu.vector_store %arg16[%c0_56, %c0_57, %c0_58], %150 {strides = array<i32>} : memref<1x16x32xbf16, #tpu.memory_space<vmem>>, vector<1x16x32xbf16>,
    return
  }
  func.func @transform_0(%arg0: i32) -> (i32, i32, i32, i32) {
    %c0_i32 = arith.constant 0 : i32
    %c0_i32_0 = arith.constant 0 : i32
    %c0_i32_1 = arith.constant 0 : i32
    %c0_i32_2 = arith.constant 0 : i32
    return %arg0, %c0_i32, %c0_i32_0, %c0_i32_1 : i32, i32, i32, i32
  }
  func.func @transform_1(%arg0: i32) -> (i32, i32, i32) {
    %c0_i32 = arith.constant 0 : i32
    %c0_i32_0 = arith.constant 0 : i32
    %c0_i32_1 = arith.constant 0 : i32
    return %arg0, %c0_i32, %c0_i32_0 : i32, i32, i32
  }
  func.func @transform_2(%arg0: i32) -> (i32, i32, i32) {
    %c0_i32 = arith.constant 0 : i32
    %c0_i32_0 = arith.constant 0 : i32
    %c0_i32_1 = arith.constant 0 : i32
    return %arg0, %c0_i32, %c0_i32_0 : i32, i32, i32
  }
  func.func @transform_3(%arg0: i32) -> (i32, i32) {
    %c0_i32 = arith.constant 0 : i32
    %c0_i32_0 = arith.constant 0 : i32
    %c0_i32_1 = arith.constant 0 : i32
    return %c0_i32, %c0_i32_0 : i32, i32
  }
  func.func @transform_4(%arg0: i32) -> (i32, i32) {
    %c0_i32 = arith.constant 0 : i32
    %c0_i32_0 = arith.constant 0 : i32
    %c0_i32_1 = arith.constant 0 : i32
    return %c0_i32, %c0_i32_0 : i32, i32
  }
  func.func @transform_5(%arg0: i32) -> (i32, i32) {
    %c0_i32 = arith.constant 0 : i32
    %c0_i32_0 = arith.constant 0 : i32
    %c0_i32_1 = arith.constant 0 : i32
    return %c0_i32, %c0_i32_0 : i32, i32
  }
  func.func @transform_6(%arg0: i32) -> (i32, i32) {
    %c0_i32 = arith.constant 0 : i32
    %c0_i32_0 = arith.constant 0 : i32
    %c0_i32_1 = arith.constant 0 : i32
    return %c0_i32, %c0_i32_0 : i32, i32
  }
  func.func @transform_7(%arg0: i32) -> (i32, i32) {
    %c0_i32 = arith.constant 0 : i32
    %c0_i32_0 = arith.constant 0 : i32
    %c0_i32_1 = arith.constant 0 : i32
    return %c0_i32, %c0_i32_0 : i32, i32
  }
  func.func @transform_8(%arg0: i32) -> (i32, i32) {
    %c0_i32 = arith.constant 0 : i32
    %c0_i32_0 = arith.constant 0 : i32
    %c0_i32_1 = arith.constant 0 : i32
    return %c0_i32, %c0_i32_0 : i32, i32
  }
  func.func @transform_9(%arg0: i32) -> (i32, i32) {
    %c0_i32 = arith.constant 0 : i32
    %c0_i32_0 = arith.constant 0 : i32
    %c0_i32_1 = arith.constant 0 : i32
    return %c0_i32, %c0_i32_0 : i32, i32
  }
  func.func @transform_10(%arg0: i32) -> (i32, i32) {
    %c0_i32 = arith.constant 0 : i32
    %c0_i32_0 = arith.constant 0 : i32
    %c0_i32_1 = arith.constant 0 : i32
    return %c0_i32, %c0_i32_0 : i32, i32
  }
  func.func @transform_11(%arg0: i32) -> (i32, i32) {
    %c0_i32 = arith.constant 0 : i32
    %c0_i32_0 = arith.constant 0 : i32
    %c0_i32_1 = arith.constant 0 : i32
    return %c0_i32, %c0_i32_0 : i32, i32
  }
  func.func @transform_12(%arg0: i32) -> (i32, i32) {
    %c0_i32 = arith.constant 0 : i32
    %c0_i32_0 = arith.constant 0 : i32
    %c0_i32_1 = arith.constant 0 : i32
    return %c0_i32, %c0_i32_0 : i32, i32
  }
  func.func @transform_13(%arg0: i32) -> (i32, i32) {
    %c0_i32 = arith.constant 0 : i32
    %c0_i32_0 = arith.constant 0 : i32
    %c0_i32_1 = arith.constant 0 : i32
    return %c0_i32, %c0_i32_0 : i32, i32
  }
  func.func @transform_14(%arg0: i32) -> (i32, i32) {
    %c0_i32 = arith.constant 0 : i32
    %c0_i32_0 = arith.constant 0 : i32
    %c0_i32_1 = arith.constant 0 : i32
    return %c0_i32, %c0_i32_0 : i32, i32
  }
  func.func @transform_15(%arg0: i32) -> (i32, i32, i32) {
    %c0_i32 = arith.constant 0 : i32
    %c0_i32_0 = arith.constant 0 : i32
    %c0_i32_1 = arith.constant 0 : i32
    return %arg0, %c0_i32, %c0_i32_0 : i32, i32, i32
  }
}

</mosaic_0001>

<llo_original>
// kernel: eut_single_stage.6
$region0: #{eut_single_stage.6}
  #allocation0 [shape = 'u32[]', space=smem, size = 0x4, offset = 0x4, fixed_abs, tag = 'smem constant byte address 0x4 - core index']
  #allocation1 [shape = 'u32[144,128]{1,0:T(1,128)}', space=vmem, size = 0x12000, scoped, tag = 'internal scratch']
  %s0 = inlined_call_operand.vmem [shape: f32[2,16,6], index: 0, kind: input, shape index: {}]
  %s1 = inlined_call_operand.vmem [shape: bf16[6,32], index: 1, kind: input, shape index: {}]
  %s2 = inlined_call_operand.vmem [shape: f32[1,32], index: 2, kind: input, shape index: {}]
  %s3 = inlined_call_operand.vmem [shape: bf16[2,16,32], index: 3, kind: output, shape index: {}]
  %s4 = sld [smem:[#allocation0]]
  $region45: #{eut_single_stage.6} parent=0
    _
  %s6 = ssub.s32 1, %s4
  %s7 = scalar_select 0, %s6, %s4
  loop: start=0, step=1, limit=4
  $region2: #{eut_single_stage.6} parent=0 // loop_pre_header
    _
  $region3: #{eut_single_stage.6} parent=0 // loop_header
    %s9 = sphi 0, %s13
    %p10 = scmp.ge.s32.totalorder %s9, 4
    %s16 = sphi 0, %s28
    %s17 = sphi 0, %s24
    %s18 = sphi 0, %s16
    %s19 = sphi 0, %s17
    %s20 = sphi 0, %s18
    %s21 = sphi 0, %s19
    %s33 = sphi 0, %s35
    %s36 = sphi 0, %s33
    %s37 = sphi 0, %s36
    %s53 = sphi 0, %s37
    %s57 = sphi 0, %s57
    %s59 = sphi 0, %s57
    %s60 = sphi 0, %s59
    %s74 = sphi 0, %s60
    %s78 = sphi 0, %s78
    %s80 = sphi 0, %s78
    %s81 = sphi 0, %s80
    %s95 = sphi 0, %s81
    %s103 = sphi 0, %s105
    %s106 = sphi 0, %s103
    %s107 = sphi 0, %s106
    %s123 = sphi 0, %s107
  $region4: #{eut_single_stage.6} parent=0 // loop_header_branch
    %12 = sbr.rel (%p10) target = $region8
  $region5: #{eut_single_stage.6} parent=0 // loop_body
    %s14 = ssub.s32 %s9, 1
    %s15 = ssub.s32 %s9, 2
    %s22 = sadd.s32 1, %s17
    %p23 = scmp.ge.s32.totalorder %s22, 1
    %s24 = scalar_select %p23, 0, %s22
    %s25 = sadd.s32 1, %s16
    %s26 = scalar_select %p23, %s25, %s16
    %p27 = scmp.ge.s32.totalorder %s26, 2
    %s28 = scalar_select %p27, 0, %s26
    %s29 = ssub.s32 %s16, %s28
    %s30 = ssub.s32 %s17, %s24
    %s31 = sor.u32 %s29, %s30
    %p32 = scmp.eq.s32.totalorder %s31, 0
    %s34 = sadd.s32 %s33, 1
    %s35 = scalar_select %p32, %s33, %s34
    %p38 = pneg %p32
    %p39 = scmp.eq.s32.totalorder %s9, 1
    %p40 = por %p38, %p39
    %p41 = scmp.ne.s32.totalorder %s33, %s36
    %p42 = scmp.eq.s32.totalorder %s9, 0
    %p43 = por %p41, %p42
    %p44 = scmp.ne.s32.totalorder %s33, %s36
    %p45 = scmp.eq.s32.totalorder %s14, 1
    %p46 = por %p44, %p45
    %p47 = scmp.ne.s32.totalorder %s36, %s37
    %p48 = scmp.eq.s32.totalorder %s14, 0
    %p49 = por %p47, %p48
    %p50 = scmp.ne.s32.totalorder %s36, %s37
    %p51 = scmp.eq.s32.totalorder %s15, 1
    %p52 = por %p50, %p51
    %p54 = scmp.ne.s32.totalorder %s37, %s53
    %p55 = scmp.eq.s32.totalorder %s15, 0
    %p56 = por %p54, %p55
    %s58 = sadd.s32 %s57, 1
    %p61 = scmp.eq.s32.totalorder %s9, 1
    %p62 = scmp.ne.s32.totalorder %s57, %s59
    %p63 = scmp.eq.s32.totalorder %s9, 0
    %p64 = por %p62, %p63
    %p65 = scmp.ne.s32.totalorder %s57, %s59
    %p66 = scmp.eq.s32.totalorder %s14, 1
    %p67 = por %p65, %p66
    %p68 = scmp.ne.s32.totalorder %s59, %s60
    %p69 = scmp.eq.s32.totalorder %s14, 0
    %p70 = por %p68, %p69
    %p71 = scmp.ne.s32.totalorder %s59, %s60
    %p72 = scmp.eq.s32.totalorder %s15, 1
    %p73 = por %p71, %p72
    %p75 = scmp.ne.s32.totalorder %s60, %s74
    %p76 = scmp.eq.s32.totalorder %s15, 0
    %p77 = por %p75, %p76
    %s79 = sadd.s32 %s78, 1
    %p82 = scmp.eq.s32.totalorder %s9, 1
    %p83 = scmp.ne.s32.totalorder %s78, %s80
    %p84 = scmp.eq.s32.totalorder %s9, 0
    %p85 = por %p83, %p84
    %p86 = scmp.ne.s32.totalorder %s78, %s80
    %p87 = scmp.eq.s32.totalorder %s14, 1
    %p88 = por %p86, %p87
    %p89 = scmp.ne.s32.totalorder %s80, %s81
    %p90 = scmp.eq.s32.totalorder %s14, 0
    %p91 = por %p89, %p90
    %p92 = scmp.ne.s32.totalorder %s80, %s81
    %p93 = scmp.eq.s32.totalorder %s15, 1
    %p94 = por %p92, %p93
    %p96 = scmp.ne.s32.totalorder %s81, %s95
    %p97 = scmp.eq.s32.totalorder %s15, 0
    %p98 = por %p96, %p97
    %s99 = ssub.s32 %s16, %s28
    %s100 = ssub.s32 %s17, %s24
    %s101 = sor.u32 %s99, %s100
    %p102 = scmp.eq.s32.totalorder %s101, 0
    %s104 = sadd.s32 %s103, 1
    %s105 = scalar_select %p102, %s103, %s104
    %p108 = pneg %p102
    %p109 = scmp.eq.s32.totalorder %s9, 1
    %p110 = por %p108, %p109
    %p111 = scmp.ne.s32.totalorder %s103, %s106
    %p112 = scmp.eq.s32.totalorder %s9, 0
    %p113 = por %p111, %p112
    %p114 = scmp.ne.s32.totalorder %s103, %s106
    %p115 = scmp.eq.s32.totalorder %s14, 1
    %p116 = por %p114, %p115
    %p117 = scmp.ne.s32.totalorder %s106, %s107
    %p118 = scmp.eq.s32.totalorder %s14, 0
    %p119 = por %p117, %p118
    %p120 = scmp.ne.s32.totalorder %s106, %s107
    %p121 = scmp.eq.s32.totalorder %s15, 1
    %p122 = por %p120, %p121
    %p124 = scmp.ne.s32.totalorder %s107, %s123
    %p125 = scmp.eq.s32.totalorder %s15, 0
    %p126 = por %p124, %p125
    %p127 = scmp.le.s32.totalorder 1, %s9
    %p128 = scmp.lt.s32.totalorder %s9, 3
    %p129 = pnand %p127, %p128
    %p130 = pneg %p129
    // Predicated region
    $region9: #{eut_single_stage.6} parent=5 // pred_check
      _
    $region10: #{eut_single_stage.6} parent=5 // pred_check_branch
      %132 = sbr.rel (%p129) target = $region12
    $region11: #{eut_single_stage.6} parent=5 // pred_region
      %s133 = ssub.s32 %s9, 1
      // Predicated region
      $region13: #{eut_single_stage.6} parent=11 // pred_check
        %p134 = pneg %p70
      $region14: #{eut_single_stage.6} parent=11 // pred_check_branch
        %136 = sbr.rel (%p134) target = $region16
      $region15: #{eut_single_stage.6} parent=11 // pred_region
        _
      $region16: #{eut_single_stage.6} parent=11 // pred_fallthru
        _
      // Predicated region
      $region17: #{eut_single_stage.6} parent=11 // pred_check
        %p137 = pneg %p91
      $region18: #{eut_single_stage.6} parent=11 // pred_check_branch
        %139 = sbr.rel (%p137) target = $region20
      $region19: #{eut_single_stage.6} parent=11 // pred_region
        _
      $region20: #{eut_single_stage.6} parent=11 // pred_fallthru
        _
    $region12: #{eut_single_stage.6} parent=5 // pred_fallthru
      _
    %p140 = scmp.lt.s32.totalorder %s9, 2
    // Predicated region
    $region21: #{eut_single_stage.6} parent=5 // pred_check
      %p141 = pneg %p140
    $region22: #{eut_single_stage.6} parent=5 // pred_check_branch
      %143 = sbr.rel (%p141) target = $region24
    $region23: #{eut_single_stage.6} parent=5 // pred_region
      // Predicated region
      $region25: #{eut_single_stage.6} parent=23 // pred_check
        %p144 = pneg %p43
      $region26: #{eut_single_stage.6} parent=23 // pred_check_branch
        %146 = sbr.rel (%p144) target = $region28
      $region27: #{eut_single_stage.6} parent=23 // pred_region
        %s147 = smul.u32 2, %s17
        %p148 = scmp.lt.s32.totalorder %s16, 1
        %s149 = scalar_select %p148, %s16, 1
        %p150 = scmp.lt.s32.totalorder %s147, 1
        %s151 = scalar_select %p150, %s147, 1
        %s152 = smul.addr %s149, 2
        %s153 = sadd.s32 %s151, %s152
        %s154 = smul.addr %s153, 8
        %s155 = scalar_lea.vmem %s0, %s154
        %s156 = smul.u32 2, %s17
      $region28: #{eut_single_stage.6} parent=23 // pred_fallthru
        _
    $region24: #{eut_single_stage.6} parent=5 // pred_fallthru
      _
    %p157 = scmp.le.s32.totalorder 1, %s9
    %p158 = scmp.lt.s32.totalorder %s9, 3
    %p159 = pnand %p157, %p158
    %p160 = pneg %p159
    // Predicated region
    $region29: #{eut_single_stage.6} parent=5 // pred_check
      _
    $region30: #{eut_single_stage.6} parent=5 // pred_check_branch
      %162 = sbr.rel (%p159) target = $region32
    $region31: #{eut_single_stage.6} parent=5 // pred_region
      %s163 = ssub.s32 %s9, 1
      %s164 = smul.u32 2, %s19
      %p165 = scmp.lt.s32.totalorder %s18, 1
      %s166 = scalar_select %p165, %s18, 1
      %p167 = scmp.lt.s32.totalorder %s164, 1
      %s168 = scalar_select %p167, %s164, 1
      %s169 = smul.addr %s166, 2
      %s170 = sadd.s32 %s168, %s169
      %s171 = smul.addr %s170, 8
      %s172 = scalar_lea.vmem %s0, %s171
      %p173 = pneg %p49
      %p174 = pneg %p46
      %p175 = pneg %p70
      %p176 = pneg %p67
      %p177 = pneg %p91
      %p178 = pneg %p88
      %p179 = pneg %p119
      %p180 = pneg %p116
      %s181 = smul.u32 2, %s19
      %p182 = scmp.lt.s32.totalorder %s18, 1
      %s183 = scalar_select %p182, %s18, 1
      %p184 = scmp.lt.s32.totalorder %s181, 1
      %s185 = scalar_select %p184, %s181, 1
      %s186 = smul.addr %s183, 2
      %s187 = sadd.s32 %s185, %s186
      %s188 = smul.addr %s187, 4
      %s189 = scalar_lea.vmem %s3, %s188
      %s190 = smul.u32 2, %s19
      %p191 = scmp.lt.s32.totalorder %s18, 1
      %s192 = scalar_select %p191, %s18, 1
      %p193 = scmp.lt.s32.totalorder %s190, 1
      %s194 = scalar_select %p193, %s190, 1
      %s195 = smul.addr %s192, 2
      %s196 = sadd.s32 %s194, %s195
      %s197 = smul.addr %s196, 8
      %s198 = scalar_lea.vmem %s0, %s197
      %s199 = smul.u32 2, %s19
      %s200 = smul.u32 2, %s19
      %p201 = scmp.lt.s32.totalorder %s18, 1
      %s202 = scalar_select %p201, %s18, 1
      %p203 = scmp.lt.s32.totalorder %s200, 1
      %s204 = scalar_select %p203, %s200, 1
      %s205 = smul.addr %s202, 2
      %s206 = sadd.s32 %s204, %s205
      %s207 = smul.addr %s206, 4
      %s208 = scalar_lea.vmem %s3, %s207
      %s209 = smul.u32 2, %s19
      %v211 = vld [vmem:[%s198] sm:$0xff]
      %v212 = vld [vmem:[%s198 + $0x8] sm:$0xff]
      %v213 = vpack.c.bf16 %v212, %v211
      %v214 = vld [vmem:[%s1] sm:$0x7]
      %v215 = vld [vmem:[%s2] sm:$0x1]
      %v217 = vlaneseq
      %v218 = vshrl.u32 %v217, 7
      %v219 = vsub.s32 0, %v218
      %v220 = vrot.slane %v215, %v219
      %vm222 = vcmask 48128
      %v224 = vsel %vm222, %v213, 0
      %vm226 = vcmask 1042432
      %v228 = vsel %vm226, %v214, 0
      %230 = vmatprep.subr.bf16.mxu0 0
      %231 = vmatpush1.bf16.msra.mxu0 %v228
      %232 = vmatprep.subr.bf16.mxu0 0
      %233 = vmatpush1.bf16.msra.mxu0 0
      %234 = vmatprep.subr.bf16.mxu0 0
      %235 = vmatpush1.bf16.msra.mxu0 0
      %236 = vmatprep.subr.bf16.mxu0 0
      %237 = vmatpush1.bf16.msra.mxu0 0
      %238 = vmatprep.subr.bf16.mxu0 0
      %239 = vmatpush1.bf16.msra.mxu0 0
      %240 = vmatprep.subr.bf16.mxu0 0
      %241 = vmatpush1.bf16.msra.mxu0 0
      %242 = vmatprep.subr.bf16.mxu0 0
      %243 = vmatpush1.bf16.msra.mxu0 0
      %244 = vmatprep.subr.bf16.mxu0 0
      %245 = vmatpush1.bf16.msra.mxu0 0
      %246 = vmatprep.subr.bf16.mxu0 0
      %247 = vmatpush1.bf16.msra.mxu0 0
      %248 = vmatprep.subr.bf16.mxu0 0
      %249 = vmatpush1.bf16.msra.mxu0 0
      %250 = vmatprep.subr.bf16.mxu0 0
      %251 = vmatpush1.bf16.msra.mxu0 0
      %252 = vmatprep.subr.bf16.mxu0 0
      %253 = vmatpush1.bf16.msra.mxu0 0
      %254 = vmatprep.subr.bf16.mxu0 0
      %255 = vmatpush1.bf16.msra.mxu0 0
      %256 = vmatprep.subr.bf16.mxu0 0
      %257 = vmatpush1.bf16.msra.mxu0 0
      %258 = vmatprep.subr.bf16.mxu0 0
      %259 = vmatpush1.bf16.msra.mxu0 0
      %260 = vmatprep.subr.bf16.mxu0 0
      %261 = vmatpush1.bf16.msra.mxu0 0
      %262 = vmatprep.mubr.bf16.mxu0 0
      %263 = vmatmul.mubr.bf16.gmra.mrb[0].mxu0 %v224
      %v264 = vpop.f32.mrb[0].mxu0
      %v265 = vadd.f32 %v220, %v264
      %v266 = vpop.f32.mrb[0].mxu0
      %v267 = vpop.f32.mrb[0].mxu0
      %v268 = vadd.f32 %v220, %v267
      %v269 = vpop.f32.mrb[0].mxu0
      %270 = vdwg.mxu0
      %v271 = vpack.c.bf16 %v268, %v265
      %v273 = vunpack.c.l.b16 %v271
      %v274 = vunpack.c.h.b16 %v271
      %v275 = vpack.c.b16 %v273, %v273
      %v276 = vpack.c.b16 %v274, %v274
      %vm279 = vcmask 257024
      %280 = vst.msk [vmem:[%s208] sm:$0xf] %vm279, %v275
      %281 = vst.msk [vmem:[%s208 + $0x4] sm:$0xf] %vm279, %v276
      %s282 = smul.u32 2, %s19
      %p283 = scmp.lt.s32.totalorder %s18, 1
      %s284 = scalar_select %p283, %s18, 1
      %p285 = scmp.lt.s32.totalorder %s282, 1
      %s286 = scalar_select %p285, %s282, 1
      %s287 = smul.addr %s284, 2
      %s288 = sadd.s32 %s286, %s287
      %s289 = smul.addr %s288, 4
      %s290 = scalar_lea.vmem %s3, %s289
      // Predicated region
      $region33: #{eut_single_stage.6} parent=31 // pred_check
        %p291 = pneg %p116
      $region34: #{eut_single_stage.6} parent=31 // pred_check_branch
        %293 = sbr.rel (%p291) target = $region36
      $region35: #{eut_single_stage.6} parent=31 // pred_region
        %s294 = smul.u32 2, %s19
      $region36: #{eut_single_stage.6} parent=31 // pred_fallthru
        _
    $region32: #{eut_single_stage.6} parent=5 // pred_fallthru
      _
    %p295 = scmp.le.s32.totalorder 2, %s9
    // Predicated region
    $region37: #{eut_single_stage.6} parent=5 // pred_check
      %p296 = pneg %p295
    $region38: #{eut_single_stage.6} parent=5 // pred_check_branch
      %298 = sbr.rel (%p296) target = $region40
    $region39: #{eut_single_stage.6} parent=5 // pred_region
      %s299 = ssub.s32 %s9, 2
      // Predicated region
      $region41: #{eut_single_stage.6} parent=39 // pred_check
        %p300 = pneg %p122
      $region42: #{eut_single_stage.6} parent=39 // pred_check_branch
        %302 = sbr.rel (%p300) target = $region44
      $region43: #{eut_single_stage.6} parent=39 // pred_region
        %s303 = smul.u32 2, %s21
        %p304 = scmp.lt.s32.totalorder %s20, 1
        %s305 = scalar_select %p304, %s20, 1
        %p306 = scmp.lt.s32.totalorder %s303, 1
        %s307 = scalar_select %p306, %s303, 1
        %s308 = smul.addr %s305, 2
        %s309 = sadd.s32 %s307, %s308
        %s310 = smul.addr %s309, 4
        %s311 = scalar_lea.vmem %s3, %s310
      $region44: #{eut_single_stage.6} parent=39 // pred_fallthru
        _
    $region40: #{eut_single_stage.6} parent=5 // pred_fallthru
      _
  $region6: #{eut_single_stage.6} parent=0 // loop_footer
    %s13 = sadd.s32 1, %s9
  $region7: #{eut_single_stage.6} parent=0 // loop_footer_branch
    %8 = sbr.rel target = $region3
  $region8: #{eut_single_stage.6} parent=0 // loop_exit
    _

// kernel: eut_single_stage.7
$region0: #{eut_single_stage.7}
  #allocation0 [shape = 'u32[]', space=smem, size = 0x4, offset = 0x4, fixed_abs, tag = 'smem constant byte address 0x4 - core index']
  #allocation1 [shape = 'u32[144,128]{1,0:T(1,128)}', space=vmem, size = 0x12000, scoped, tag = 'internal scratch']
  %s0 = inlined_call_operand.vmem [shape: f32[2,2,1,4], index: 0, kind: input, shape index: {}]
  %s1 = inlined_call_operand.vmem [shape: bf16[2,8,32], index: 1, kind: input, shape index: {}]
  %s2 = inlined_call_operand.vmem [shape: bf16[32,32], index: 2, kind: input, shape index: {}]
  %s3 = inlined_call_operand.vmem [shape: f32[1,32], index: 3, kind: input, shape index: {}]
  %s4 = inlined_call_operand.vmem [shape: bf16[32,32], index: 4, kind: input, shape index: {}]
  %s5 = inlined_call_operand.vmem [shape: f32[1,32], index: 5, kind: input, shape index: {}]
  %s6 = inlined_call_operand.vmem [shape: bf16[32,32], index: 6, kind: input, shape index: {}]
  %s7 = inlined_call_operand.vmem [shape: f32[1,32], index: 7, kind: input, shape index: {}]
  %s8 = inlined_call_operand.vmem [shape: bf16[32,32], index: 8, kind: input, shape index: {}]
  %s9 = inlined_call_operand.vmem [shape: f32[1,32], index: 9, kind: input, shape index: {}]
  %s10 = inlined_call_operand.vmem [shape: bf16[32,64], index: 10, kind: input, shape index: {}]
  %s11 = inlined_call_operand.vmem [shape: f32[1,64], index: 11, kind: input, shape index: {}]
  %s12 = inlined_call_operand.vmem [shape: bf16[64,32], index: 12, kind: input, shape index: {}]
  %s13 = inlined_call_operand.vmem [shape: f32[1,32], index: 13, kind: input, shape index: {}]
  %s14 = inlined_call_operand.vmem [shape: bf16[2,8,32], index: 14, kind: output, shape index: {}]
  %s15 = sld [smem:[#allocation0]]
  $region89: #{eut_single_stage.7} parent=0
    _
  %s17 = ssub.s32 1, %s15
  %s18 = scalar_select 0, %s17, %s15
  loop: start=0, step=1, limit=4
  $region2: #{eut_single_stage.7} parent=0 // loop_pre_header
    _
  $region3: #{eut_single_stage.7} parent=0 // loop_header
    %s20 = sphi 0, %s24
    %p21 = scmp.ge.s32.totalorder %s20, 4
    %s30 = sphi 0, %s32
    %s33 = sphi 0, %s30
    %s34 = sphi 0, %s33
    %s50 = sphi 0, %s34
    %s56 = sphi 0, %s58
    %s59 = sphi 0, %s56
    %s60 = sphi 0, %s59
    %s76 = sphi 0, %s60
    %s80 = sphi 0, %s80
    %s82 = sphi 0, %s80
    %s83 = sphi 0, %s82
    %s97 = sphi 0, %s83
    %s101 = sphi 0, %s101
    %s103 = sphi 0, %s101
    %s104 = sphi 0, %s103
    %s118 = sphi 0, %s104
    %s122 = sphi 0, %s122
    %s124 = sphi 0, %s122
    %s125 = sphi 0, %s124
    %s139 = sphi 0, %s125
    %s143 = sphi 0, %s143
    %s145 = sphi 0, %s143
    %s146 = sphi 0, %s145
    %s160 = sphi 0, %s146
    %s164 = sphi 0, %s164
    %s166 = sphi 0, %s164
    %s167 = sphi 0, %s166
    %s181 = sphi 0, %s167
    %s185 = sphi 0, %s185
    %s187 = sphi 0, %s185
    %s188 = sphi 0, %s187
    %s202 = sphi 0, %s188
    %s206 = sphi 0, %s206
    %s208 = sphi 0, %s206
    %s209 = sphi 0, %s208
    %s223 = sphi 0, %s209
    %s227 = sphi 0, %s227
    %s229 = sphi 0, %s227
    %s230 = sphi 0, %s229
    %s244 = sphi 0, %s230
    %s248 = sphi 0, %s248
    %s250 = sphi 0, %s248
    %s251 = sphi 0, %s250
    %s265 = sphi 0, %s251
    %s269 = sphi 0, %s269
    %s271 = sphi 0, %s269
    %s272 = sphi 0, %s271
    %s286 = sphi 0, %s272
    %s290 = sphi 0, %s290
    %s292 = sphi 0, %s290
    %s293 = sphi 0, %s292
    %s307 = sphi 0, %s293
    %s311 = sphi 0, %s311
    %s313 = sphi 0, %s311
    %s314 = sphi 0, %s313
    %s328 = sphi 0, %s314
    %s334 = sphi 0, %s336
    %s337 = sphi 0, %s334
    %s338 = sphi 0, %s337
    %s354 = sphi 0, %s338
  $region4: #{eut_single_stage.7} parent=0 // loop_header_branch
    %23 = sbr.rel (%p21) target = $region8
  $region5: #{eut_single_stage.7} parent=0 // loop_body
    %s25 = ssub.s32 %s20, 1
    %s26 = ssub.s32 %s20, 2
    %s27 = sadd.s32 %s20, 1
    %s28 = ssub.s32 %s20, %s27
    %p29 = scmp.eq.s32.totalorder %s28, 0
    %s31 = sadd.s32 %s30, 1
    %s32 = scalar_select %p29, %s30, %s31
    %p35 = pneg %p29
    %p36 = scmp.eq.s32.totalorder %s20, 1
    %p37 = por %p35, %p36
    %p38 = scmp.ne.s32.totalorder %s30, %s33
    %p39 = scmp.eq.s32.totalorder %s20, 0
    %p40 = por %p38, %p39
    %p41 = scmp.ne.s32.totalorder %s30, %s33
    %p42 = scmp.eq.s32.totalorder %s25, 1
    %p43 = por %p41, %p42
    %p44 = scmp.ne.s32.totalorder %s33, %s34
    %p45 = scmp.eq.s32.totalorder %s25, 0
    %p46 = por %p44, %p45
    %p47 = scmp.ne.s32.totalorder %s33, %s34
    %p48 = scmp.eq.s32.totalorder %s26, 1
    %p49 = por %p47, %p48
    %p51 = scmp.ne.s32.totalorder %s34, %s50
    %p52 = scmp.eq.s32.totalorder %s26, 0
    %p53 = por %p51, %p52
    %s54 = ssub.s32 %s20, %s27
    %p55 = scmp.eq.s32.totalorder %s54, 0
    %s57 = sadd.s32 %s56, 1
    %s58 = scalar_select %p55, %s56, %s57
    %p61 = pneg %p55
    %p62 = scmp.eq.s32.totalorder %s20, 1
    %p63 = por %p61, %p62
    %p64 = scmp.ne.s32.totalorder %s56, %s59
    %p65 = scmp.eq.s32.totalorder %s20, 0
    %p66 = por %p64, %p65
    %p67 = scmp.ne.s32.totalorder %s56, %s59
    %p68 = scmp.eq.s32.totalorder %s25, 1
    %p69 = por %p67, %p68
    %p70 = scmp.ne.s32.totalorder %s59, %s60
    %p71 = scmp.eq.s32.totalorder %s25, 0
    %p72 = por %p70, %p71
    %p73 = scmp.ne.s32.totalorder %s59, %s60
    %p74 = scmp.eq.s32.totalorder %s26, 1
    %p75 = por %p73, %p74
    %p77 = scmp.ne.s32.totalorder %s60, %s76
    %p78 = scmp.eq.s32.totalorder %s26, 0
    %p79 = por %p77, %p78
    %s81 = sadd.s32 %s80, 1
    %p84 = scmp.eq.s32.totalorder %s20, 1
    %p85 = scmp.ne.s32.totalorder %s80, %s82
    %p86 = scmp.eq.s32.totalorder %s20, 0
    %p87 = por %p85, %p86
    %p88 = scmp.ne.s32.totalorder %s80, %s82
    %p89 = scmp.eq.s32.totalorder %s25, 1
    %p90 = por %p88, %p89
    %p91 = scmp.ne.s32.totalorder %s82, %s83
    %p92 = scmp.eq.s32.totalorder %s25, 0
    %p93 = por %p91, %p92
    %p94 = scmp.ne.s32.totalorder %s82, %s83
    %p95 = scmp.eq.s32.totalorder %s26, 1
    %p96 = por %p94, %p95
    %p98 = scmp.ne.s32.totalorder %s83, %s97
    %p99 = scmp.eq.s32.totalorder %s26, 0
    %p100 = por %p98, %p99
    %s102 = sadd.s32 %s101, 1
    %p105 = scmp.eq.s32.totalorder %s20, 1
    %p106 = scmp.ne.s32.totalorder %s101, %s103
    %p107 = scmp.eq.s32.totalorder %s20, 0
    %p108 = por %p106, %p107
    %p109 = scmp.ne.s32.totalorder %s101, %s103
    %p110 = scmp.eq.s32.totalorder %s25, 1
    %p111 = por %p109, %p110
    %p112 = scmp.ne.s32.totalorder %s103, %s104
    %p113 = scmp.eq.s32.totalorder %s25, 0
    %p114 = por %p112, %p113
    %p115 = scmp.ne.s32.totalorder %s103, %s104
    %p116 = scmp.eq.s32.totalorder %s26, 1
    %p117 = por %p115, %p116
    %p119 = scmp.ne.s32.totalorder %s104, %s118
    %p120 = scmp.eq.s32.totalorder %s26, 0
    %p121 = por %p119, %p120
    %s123 = sadd.s32 %s122, 1
    %p126 = scmp.eq.s32.totalorder %s20, 1
    %p127 = scmp.ne.s32.totalorder %s122, %s124
    %p128 = scmp.eq.s32.totalorder %s20, 0
    %p129 = por %p127, %p128
    %p130 = scmp.ne.s32.totalorder %s122, %s124
    %p131 = scmp.eq.s32.totalorder %s25, 1
    %p132 = por %p130, %p131
    %p133 = scmp.ne.s32.totalorder %s124, %s125
    %p134 = scmp.eq.s32.totalorder %s25, 0
    %p135 = por %p133, %p134
    %p136 = scmp.ne.s32.totalorder %s124, %s125
    %p137 = scmp.eq.s32.totalorder %s26, 1
    %p138 = por %p136, %p137
    %p140 = scmp.ne.s32.totalorder %s125, %s139
    %p141 = scmp.eq.s32.totalorder %s26, 0
    %p142 = por %p140, %p141
    %s144 = sadd.s32 %s143, 1
    %p147 = scmp.eq.s32.totalorder %s20, 1
    %p148 = scmp.ne.s32.totalorder %s143, %s145
    %p149 = scmp.eq.s32.totalorder %s20, 0
    %p150 = por %p148, %p149
    %p151 = scmp.ne.s32.totalorder %s143, %s145
    %p152 = scmp.eq.s32.totalorder %s25, 1
    %p153 = por %p151, %p152
    %p154 = scmp.ne.s32.totalorder %s145, %s146
    %p155 = scmp.eq.s32.totalorder %s25, 0
    %p156 = por %p154, %p155
    %p157 = scmp.ne.s32.totalorder %s145, %s146
    %p158 = scmp.eq.s32.totalorder %s26, 1
    %p159 = por %p157, %p158
    %p161 = scmp.ne.s32.totalorder %s146, %s160
    %p162 = scmp.eq.s32.totalorder %s26, 0
    %p163 = por %p161, %p162
    %s165 = sadd.s32 %s164, 1
    %p168 = scmp.eq.s32.totalorder %s20, 1
    %p169 = scmp.ne.s32.totalorder %s164, %s166
    %p170 = scmp.eq.s32.totalorder %s20, 0
    %p171 = por %p169, %p170
    %p172 = scmp.ne.s32.totalorder %s164, %s166
    %p173 = scmp.eq.s32.totalorder %s25, 1
    %p174 = por %p172, %p173
    %p175 = scmp.ne.s32.totalorder %s166, %s167
    %p176 = scmp.eq.s32.totalorder %s25, 0
    %p177 = por %p175, %p176
    %p178 = scmp.ne.s32.totalorder %s166, %s167
    %p179 = scmp.eq.s32.totalorder %s26, 1
    %p180 = por %p178, %p179
    %p182 = scmp.ne.s32.totalorder %s167, %s181
    %p183 = scmp.eq.s32.totalorder %s26, 0
    %p184 = por %p182, %p183
    %s186 = sadd.s32 %s185, 1
    %p189 = scmp.eq.s32.totalorder %s20, 1
    %p190 = scmp.ne.s32.totalorder %s185, %s187
    %p191 = scmp.eq.s32.totalorder %s20, 0
    %p192 = por %p190, %p191
    %p193 = scmp.ne.s32.totalorder %s185, %s187
    %p194 = scmp.eq.s32.totalorder %s25, 1
    %p195 = por %p193, %p194
    %p196 = scmp.ne.s32.totalorder %s187, %s188
    %p197 = scmp.eq.s32.totalorder %s25, 0
    %p198 = por %p196, %p197
    %p199 = scmp.ne.s32.totalorder %s187, %s188
    %p200 = scmp.eq.s32.totalorder %s26, 1
    %p201 = por %p199, %p200
    %p203 = scmp.ne.s32.totalorder %s188, %s202
    %p204 = scmp.eq.s32.totalorder %s26, 0
    %p205 = por %p203, %p204
    %s207 = sadd.s32 %s206, 1
    %p210 = scmp.eq.s32.totalorder %s20, 1
    %p211 = scmp.ne.s32.totalorder %s206, %s208
    %p212 = scmp.eq.s32.totalorder %s20, 0
    %p213 = por %p211, %p212
    %p214 = scmp.ne.s32.totalorder %s206, %s208
    %p215 = scmp.eq.s32.totalorder %s25, 1
    %p216 = por %p214, %p215
    %p217 = scmp.ne.s32.totalorder %s208, %s209
    %p218 = scmp.eq.s32.totalorder %s25, 0
    %p219 = por %p217, %p218
    %p220 = scmp.ne.s32.totalorder %s208, %s209
    %p221 = scmp.eq.s32.totalorder %s26, 1
    %p222 = por %p220, %p221
    %p224 = scmp.ne.s32.totalorder %s209, %s223
    %p225 = scmp.eq.s32.totalorder %s26, 0
    %p226 = por %p224, %p225
    %s228 = sadd.s32 %s227, 1
    %p231 = scmp.eq.s32.totalorder %s20, 1
    %p232 = scmp.ne.s32.totalorder %s227, %s229
    %p233 = scmp.eq.s32.totalorder %s20, 0
    %p234 = por %p232, %p233
    %p235 = scmp.ne.s32.totalorder %s227, %s229
    %p236 = scmp.eq.s32.totalorder %s25, 1
    %p237 = por %p235, %p236
    %p238 = scmp.ne.s32.totalorder %s229, %s230
    %p239 = scmp.eq.s32.totalorder %s25, 0
    %p240 = por %p238, %p239
    %p241 = scmp.ne.s32.totalorder %s229, %s230
    %p242 = scmp.eq.s32.totalorder %s26, 1
    %p243 = por %p241, %p242
    %p245 = scmp.ne.s32.totalorder %s230, %s244
    %p246 = scmp.eq.s32.totalorder %s26, 0
    %p247 = por %p245, %p246
    %s249 = sadd.s32 %s248, 1
    %p252 = scmp.eq.s32.totalorder %s20, 1
    %p253 = scmp.ne.s32.totalorder %s248, %s250
    %p254 = scmp.eq.s32.totalorder %s20, 0
    %p255 = por %p253, %p254
    %p256 = scmp.ne.s32.totalorder %s248, %s250
    %p257 = scmp.eq.s32.totalorder %s25, 1
    %p258 = por %p256, %p257
    %p259 = scmp.ne.s32.totalorder %s250, %s251
    %p260 = scmp.eq.s32.totalorder %s25, 0
    %p261 = por %p259, %p260
    %p262 = scmp.ne.s32.totalorder %s250, %s251
    %p263 = scmp.eq.s32.totalorder %s26, 1
    %p264 = por %p262, %p263
    %p266 = scmp.ne.s32.totalorder %s251, %s265
    %p267 = scmp.eq.s32.totalorder %s26, 0
    %p268 = por %p266, %p267
    %s270 = sadd.s32 %s269, 1
    %p273 = scmp.eq.s32.totalorder %s20, 1
    %p274 = scmp.ne.s32.totalorder %s269, %s271
    %p275 = scmp.eq.s32.totalorder %s20, 0
    %p276 = por %p274, %p275
    %p277 = scmp.ne.s32.totalorder %s269, %s271
    %p278 = scmp.eq.s32.totalorder %s25, 1
    %p279 = por %p277, %p278
    %p280 = scmp.ne.s32.totalorder %s271, %s272
    %p281 = scmp.eq.s32.totalorder %s25, 0
    %p282 = por %p280, %p281
    %p283 = scmp.ne.s32.totalorder %s271, %s272
    %p284 = scmp.eq.s32.totalorder %s26, 1
    %p285 = por %p283, %p284
    %p287 = scmp.ne.s32.totalorder %s272, %s286
    %p288 = scmp.eq.s32.totalorder %s26, 0
    %p289 = por %p287, %p288
    %s291 = sadd.s32 %s290, 1
    %p294 = scmp.eq.s32.totalorder %s20, 1
    %p295 = scmp.ne.s32.totalorder %s290, %s292
    %p296 = scmp.eq.s32.totalorder %s20, 0
    %p297 = por %p295, %p296
    %p298 = scmp.ne.s32.totalorder %s290, %s292
    %p299 = scmp.eq.s32.totalorder %s25, 1
    %p300 = por %p298, %p299
    %p301 = scmp.ne.s32.totalorder %s292, %s293
    %p302 = scmp.eq.s32.totalorder %s25, 0
    %p303 = por %p301, %p302
    %p304 = scmp.ne.s32.totalorder %s292, %s293
    %p305 = scmp.eq.s32.totalorder %s26, 1
    %p306 = por %p304, %p305
    %p308 = scmp.ne.s32.totalorder %s293, %s307
    %p309 = scmp.eq.s32.totalorder %s26, 0
    %p310 = por %p308, %p309
    %s312 = sadd.s32 %s311, 1
    %p315 = scmp.eq.s32.totalorder %s20, 1
    %p316 = scmp.ne.s32.totalorder %s311, %s313
    %p317 = scmp.eq.s32.totalorder %s20, 0
    %p318 = por %p316, %p317
    %p319 = scmp.ne.s32.totalorder %s311, %s313
    %p320 = scmp.eq.s32.totalorder %s25, 1
    %p321 = por %p319, %p320
    %p322 = scmp.ne.s32.totalorder %s313, %s314
    %p323 = scmp.eq.s32.totalorder %s25, 0
    %p324 = por %p322, %p323
    %p325 = scmp.ne.s32.totalorder %s313, %s314
    %p326 = scmp.eq.s32.totalorder %s26, 1
    %p327 = por %p325, %p326
    %p329 = scmp.ne.s32.totalorder %s314, %s328
    %p330 = scmp.eq.s32.totalorder %s26, 0
    %p331 = por %p329, %p330
    %s332 = ssub.s32 %s20, %s27
    %p333 = scmp.eq.s32.totalorder %s332, 0
    %s335 = sadd.s32 %s334, 1
    %s336 = scalar_select %p333, %s334, %s335
    %p339 = pneg %p333
    %p340 = scmp.eq.s32.totalorder %s20, 1
    %p341 = por %p339, %p340
    %p342 = scmp.ne.s32.totalorder %s334, %s337
    %p343 = scmp.eq.s32.totalorder %s20, 0
    %p344 = por %p342, %p343
    %p345 = scmp.ne.s32.totalorder %s334, %s337
    %p346 = scmp.eq.s32.totalorder %s25, 1
    %p347 = por %p345, %p346
    %p348 = scmp.ne.s32.totalorder %s337, %s338
    %p349 = scmp.eq.s32.totalorder %s25, 0
    %p350 = por %p348, %p349
    %p351 = scmp.ne.s32.totalorder %s337, %s338
    %p352 = scmp.eq.s32.totalorder %s26, 1
    %p353 = por %p351, %p352
    %p355 = scmp.ne.s32.totalorder %s338, %s354
    %p356 = scmp.eq.s32.totalorder %s26, 0
    %p357 = por %p355, %p356
    %p358 = scmp.le.s32.totalorder 1, %s20
    %p359 = scmp.lt.s32.totalorder %s20, 3
    %p360 = pnand %p358, %p359
    %p361 = pneg %p360
    // Predicated region
    $region9: #{eut_single_stage.7} parent=5 // pred_check
      _
    $region10: #{eut_single_stage.7} parent=5 // pred_check_branch
      %363 = sbr.rel (%p360) target = $region12
    $region11: #{eut_single_stage.7} parent=5 // pred_region
      %s364 = ssub.s32 %s20, 1
      // Predicated region
      $region13: #{eut_single_stage.7} parent=11 // pred_check
        %p365 = pneg %p93
      $region14: #{eut_single_stage.7} parent=11 // pred_check_branch
        %367 = sbr.rel (%p365) target = $region16
      $region15: #{eut_single_stage.7} parent=11 // pred_region
        _
      $region16: #{eut_single_stage.7} parent=11 // pred_fallthru
        _
      // Predicated region
      $region17: #{eut_single_stage.7} parent=11 // pred_check
        %p368 = pneg %p114
      $region18: #{eut_single_stage.7} parent=11 // pred_check_branch
        %370 = sbr.rel (%p368) target = $region20
      $region19: #{eut_single_stage.7} parent=11 // pred_region
        _
      $region20: #{eut_single_stage.7} parent=11 // pred_fallthru
        _
      // Predicated region
      $region21: #{eut_single_stage.7} parent=11 // pred_check
        %p371 = pneg %p135
      $region22: #{eut_single_stage.7} parent=11 // pred_check_branch
        %373 = sbr.rel (%p371) target = $region24
      $region23: #{eut_single_stage.7} parent=11 // pred_region
        _
      $region24: #{eut_single_stage.7} parent=11 // pred_fallthru
        _
      // Predicated region
      $region25: #{eut_single_stage.7} parent=11 // pred_check
        %p374 = pneg %p156
      $region26: #{eut_single_stage.7} parent=11 // pred_check_branch
        %376 = sbr.rel (%p374) target = $region28
      $region27: #{eut_single_stage.7} parent=11 // pred_region
        _
      $region28: #{eut_single_stage.7} parent=11 // pred_fallthru
        _
      // Predicated region
      $region29: #{eut_single_stage.7} parent=11 // pred_check
        %p377 = pneg %p177
      $region30: #{eut_single_stage.7} parent=11 // pred_check_branch
        %379 = sbr.rel (%p377) target = $region32
      $region31: #{eut_single_stage.7} parent=11 // pred_region
        _
      $region32: #{eut_single_stage.7} parent=11 // pred_fallthru
        _
      // Predicated region
      $region33: #{eut_single_stage.7} parent=11 // pred_check
        %p380 = pneg %p198
      $region34: #{eut_single_stage.7} parent=11 // pred_check_branch
        %382 = sbr.rel (%p380) target = $region36
      $region35: #{eut_single_stage.7} parent=11 // pred_region
        _
      $region36: #{eut_single_stage.7} parent=11 // pred_fallthru
        _
      // Predicated region
      $region37: #{eut_single_stage.7} parent=11 // pred_check
        %p383 = pneg %p219
      $region38: #{eut_single_stage.7} parent=11 // pred_check_branch
        %385 = sbr.rel (%p383) target = $region40
      $region39: #{eut_single_stage.7} parent=11 // pred_region
        _
      $region40: #{eut_single_stage.7} parent=11 // pred_fallthru
        _
      // Predicated region
      $region41: #{eut_single_stage.7} parent=11 // pred_check
        %p386 = pneg %p240
      $region42: #{eut_single_stage.7} parent=11 // pred_check_branch
        %388 = sbr.rel (%p386) target = $region44
      $region43: #{eut_single_stage.7} parent=11 // pred_region
        _
      $region44: #{eut_single_stage.7} parent=11 // pred_fallthru
        _
      // Predicated region
      $region45: #{eut_single_stage.7} parent=11 // pred_check
        %p389 = pneg %p261
      $region46: #{eut_single_stage.7} parent=11 // pred_check_branch
        %391 = sbr.rel (%p389) target = $region48
      $region47: #{eut_single_stage.7} parent=11 // pred_region
        _
      $region48: #{eut_single_stage.7} parent=11 // pred_fallthru
        _
      // Predicated region
      $region49: #{eut_single_stage.7} parent=11 // pred_check
        %p392 = pneg %p282
      $region50: #{eut_single_stage.7} parent=11 // pred_check_branch
        %394 = sbr.rel (%p392) target = $region52
      $region51: #{eut_single_stage.7} parent=11 // pred_region
        _
      $region52: #{eut_single_stage.7} parent=11 // pred_fallthru
        _
      // Predicated region
      $region53: #{eut_single_stage.7} parent=11 // pred_check
        %p395 = pneg %p303
      $region54: #{eut_single_stage.7} parent=11 // pred_check_branch
        %397 = sbr.rel (%p395) target = $region56
      $region55: #{eut_single_stage.7} parent=11 // pred_region
        _
      $region56: #{eut_single_stage.7} parent=11 // pred_fallthru
        _
      // Predicated region
      $region57: #{eut_single_stage.7} parent=11 // pred_check
        %p398 = pneg %p324
      $region58: #{eut_single_stage.7} parent=11 // pred_check_branch
        %400 = sbr.rel (%p398) target = $region60
      $region59: #{eut_single_stage.7} parent=11 // pred_region
        _
      $region60: #{eut_single_stage.7} parent=11 // pred_fallthru
        _
    $region12: #{eut_single_stage.7} parent=5 // pred_fallthru
      _
    %p401 = scmp.lt.s32.totalorder %s20, 2
    // Predicated region
    $region61: #{eut_single_stage.7} parent=5 // pred_check
      %p402 = pneg %p401
    $region62: #{eut_single_stage.7} parent=5 // pred_check_branch
      %404 = sbr.rel (%p402) target = $region64
    $region63: #{eut_single_stage.7} parent=5 // pred_region
      // Predicated region
      $region65: #{eut_single_stage.7} parent=63 // pred_check
        %p405 = pneg %p40
      $region66: #{eut_single_stage.7} parent=63 // pred_check_branch
        %407 = sbr.rel (%p405) target = $region68
      $region67: #{eut_single_stage.7} parent=63 // pred_region
        %p408 = scmp.lt.s32.totalorder %s20, 1
        %s409 = scalar_select %p408, %s20, 1
        %s410 = smul.addr %s409, 2
        %s411 = scalar_lea.vmem %s0, %s410
      $region68: #{eut_single_stage.7} parent=63 // pred_fallthru
        _
      // Predicated region
      $region69: #{eut_single_stage.7} parent=63 // pred_check
        %p412 = pneg %p66
      $region70: #{eut_single_stage.7} parent=63 // pred_check_branch
        %414 = sbr.rel (%p412) target = $region72
      $region71: #{eut_single_stage.7} parent=63 // pred_region
        %p415 = scmp.lt.s32.totalorder %s20, 1
        %s416 = scalar_select %p415, %s20, 1
        %s417 = smul.addr %s416, 4
        %s418 = scalar_lea.vmem %s1, %s417
      $region72: #{eut_single_stage.7} parent=63 // pred_fallthru
        _
    $region64: #{eut_single_stage.7} parent=5 // pred_fallthru
      _
    %p419 = scmp.le.s32.totalorder 1, %s20
    %p420 = scmp.lt.s32.totalorder %s20, 3
    %p421 = pnand %p419, %p420
    %p422 = pneg %p421
    // Predicated region
    $region73: #{eut_single_stage.7} parent=5 // pred_check
      _
    $region74: #{eut_single_stage.7} parent=5 // pred_check_branch
      %424 = sbr.rel (%p421) target = $region76
    $region75: #{eut_single_stage.7} parent=5 // pred_region
      %s425 = ssub.s32 %s20, 1
      %p426 = scmp.lt.s32.totalorder %s25, 1
      %s427 = scalar_select %p426, %s25, 1
      %s428 = smul.addr %s427, 2
      %s429 = scalar_lea.vmem %s0, %s428
      %p430 = pneg %p46
      %p431 = pneg %p43
      %p432 = scmp.lt.s32.totalorder %s25, 1
      %s433 = scalar_select %p432, %s25, 1
      %s434 = smul.addr %s433, 4
      %s435 = scalar_lea.vmem %s1, %s434
      %p436 = pneg %p72
      %p437 = pneg %p69
      %p438 = pneg %p93
      %p439 = pneg %p90
      %p440 = pneg %p114
      %p441 = pneg %p111
      %p442 = pneg %p135
      %p443 = pneg %p132
      %p444 = pneg %p156
      %p445 = pneg %p153
      %p446 = pneg %p177
      %p447 = pneg %p174
      %p448 = pneg %p198
      %p449 = pneg %p195
      %p450 = pneg %p219
      %p451 = pneg %p216
      %p452 = pneg %p240
      %p453 = pneg %p237
      %p454 = pneg %p261
      %p455 = pneg %p258
      %p456 = pneg %p282
      %p457 = pneg %p279
      %p458 = pneg %p303
      %p459 = pneg %p300
      %p460 = pneg %p324
      %p461 = pneg %p321
      %p462 = pneg %p350
      %p463 = pneg %p347
      %p464 = scmp.lt.s32.totalorder %s25, 1
      %s465 = scalar_select %p464, %s25, 1
      %s466 = smul.addr %s465, 4
      %s467 = scalar_lea.vmem %s14, %s466
      %p468 = scmp.lt.s32.totalorder %s25, 1
      %s469 = scalar_select %p468, %s25, 1
      %s470 = smul.addr %s469, 2
      %s471 = scalar_lea.vmem %s0, %s470
      %p472 = scmp.lt.s32.totalorder %s25, 1
      %s473 = scalar_select %p472, %s25, 1
      %s474 = smul.addr %s473, 4
      %s475 = scalar_lea.vmem %s1, %s474
      %p476 = scmp.lt.s32.totalorder %s25, 1
      %s477 = scalar_select %p476, %s25, 1
      %s478 = smul.addr %s477, 4
      %s479 = scalar_lea.vmem %s14, %s478
      %v481 = vld [vmem:[%s475] sm:$0xf]
      %v482 = vunpack.c.l.bf16 %v481
      %v483 = vld [vmem:[%s2] sm:$0xf]
      %v484 = vld [vmem:[%s2 + $0x4] sm:$0xf]
      %v485 = vld [vmem:[%s2 + $0x8] sm:$0xf]
      %v486 = vld [vmem:[%s2 + $0xc] sm:$0xf]
      %v487 = vld [vmem:[%s3] sm:$0x1]
      %v489 = vlaneseq
      %v490 = vshrl.u32 %v489, 7
      %v491 = vsub.s32 0, %v490
      %v492 = vrot.slane %v487, %v491
      %v498 = vunpack.c.l.b16 %v483
      %v499 = vunpack.c.l.b16 %v484
      %v500 = vunpack.c.l.b16 %v485
      %v501 = vunpack.c.l.b16 %v486
      %v502 = vpack.c.b16 %v499, %v498
      %v503 = vpack.c.b16 %v501, %v500
      %vm506 = vcmask 261120
      %v508 = vsel %vm506, %v481, 0
      %510 = vmatprep.subr.bf16.mxu0 0
      %511 = vmatpush1.bf16.msra.mxu0 %v502
      %512 = vmatprep.subr.bf16.mxu0 0
      %513 = vmatpush1.bf16.msra.mxu0 %v503
      %514 = vmatprep.subr.bf16.mxu0 0
      %515 = vmatpush1.bf16.msra.mxu0 0
      %516 = vmatprep.subr.bf16.mxu0 0
      %517 = vmatpush1.bf16.msra.mxu0 0
      %518 = vmatprep.subr.bf16.mxu0 0
      %519 = vmatpush1.bf16.msra.mxu0 0
      %520 = vmatprep.subr.bf16.mxu0 0
      %521 = vmatpush1.bf16.msra.mxu0 0
      %522 = vmatprep.subr.bf16.mxu0 0
      %523 = vmatpush1.bf16.msra.mxu0 0
      %524 = vmatprep.subr.bf16.mxu0 0
      %525 = vmatpush1.bf16.msra.mxu0 0
      %526 = vmatprep.subr.bf16.mxu0 0
      %527 = vmatpush1.bf16.msra.mxu0 0
      %528 = vmatprep.subr.bf16.mxu0 0
      %529 = vmatpush1.bf16.msra.mxu0 0
      %530 = vmatprep.subr.bf16.mxu0 0
      %531 = vmatpush1.bf16.msra.mxu0 0
      %532 = vmatprep.subr.bf16.mxu0 0
      %533 = vmatpush1.bf16.msra.mxu0 0
      %534 = vmatprep.subr.bf16.mxu0 0
      %535 = vmatpush1.bf16.msra.mxu0 0
      %536 = vmatprep.subr.bf16.mxu0 0
      %537 = vmatpush1.bf16.msra.mxu0 0
      %538 = vmatprep.subr.bf16.mxu0 0
      %539 = vmatpush1.bf16.msra.mxu0 0
      %540 = vmatprep.subr.bf16.mxu0 0
      %541 = vmatpush1.bf16.msra.mxu0 0
      %542 = vmatprep.mubr.bf16.mxu0 0
      %543 = vmatmul.mubr.bf16.gmra.mrb[0].mxu0 %v508
      %v544 = vpop.f32.mrb[0].mxu0
      %v545 = vadd.f32 %v492, %v544
      %v546 = vpop.f32.mrb[0].mxu0
      %v547 = vpop.f32.mrb[0].mxu0
      %v548 = vpop.f32.mrb[0].mxu0
      %549 = vdwg.mxu0
      %v550 = vld [vmem:[%s4] sm:$0xf]
      %v551 = vld [vmem:[%s4 + $0x4] sm:$0xf]
      %v552 = vld [vmem:[%s4 + $0x8] sm:$0xf]
      %v553 = vld [vmem:[%s4 + $0xc] sm:$0xf]
      %v554 = vld [vmem:[%s5] sm:$0x1]
      %v556 = vlaneseq
      %v557 = vshrl.u32 %v556, 7
      %v558 = vsub.s32 0, %v557
      %v559 = vrot.slane %v554, %v558
      %v565 = vunpack.c.l.b16 %v550
      %v566 = vunpack.c.l.b16 %v551
      %v567 = vunpack.c.l.b16 %v552
      %v568 = vunpack.c.l.b16 %v553
      %v569 = vpack.c.b16 %v566, %v565
      %v570 = vpack.c.b16 %v568, %v567
      %573 = vmatprep.subr.bf16.mxu0 0
      %574 = vmatpush1.bf16.msra.mxu0 %v569
      %575 = vmatprep.subr.bf16.mxu0 0
      %576 = vmatpush1.bf16.msra.mxu0 %v570
      %577 = vmatprep.subr.bf16.mxu0 0
      %578 = vmatpush1.bf16.msra.mxu0 0
      %579 = vmatprep.subr.bf16.mxu0 0
      %580 = vmatpush1.bf16.msra.mxu0 0
      %581 = vmatprep.subr.bf16.mxu0 0
      %582 = vmatpush1.bf16.msra.mxu0 0
      %583 = vmatprep.subr.bf16.mxu0 0
      %584 = vmatpush1.bf16.msra.mxu0 0
      %585 = vmatprep.subr.bf16.mxu0 0
      %586 = vmatpush1.bf16.msra.mxu0 0
      %587 = vmatprep.subr.bf16.mxu0 0
      %588 = vmatpush1.bf16.msra.mxu0 0
      %589 = vmatprep.subr.bf16.mxu0 0
      %590 = vmatpush1.bf16.msra.mxu0 0
      %591 = vmatprep.subr.bf16.mxu0 0
      %592 = vmatpush1.bf16.msra.mxu0 0
      %593 = vmatprep.subr.bf16.mxu0 0
      %594 = vmatpush1.bf16.msra.mxu0 0
      %595 = vmatprep.subr.bf16.mxu0 0
      %596 = vmatpush1.bf16.msra.mxu0 0
      %597 = vmatprep.subr.bf16.mxu0 0
      %598 = vmatpush1.bf16.msra.mxu0 0
      %599 = vmatprep.subr.bf16.mxu0 0
      %600 = vmatpush1.bf16.msra.mxu0 0
      %601 = vmatprep.subr.bf16.mxu0 0
      %602 = vmatpush1.bf16.msra.mxu0 0
      %603 = vmatprep.subr.bf16.mxu0 0
      %604 = vmatpush1.bf16.msra.mxu0 0
      %605 = vmatprep.mubr.bf16.mxu0 0
      %606 = vmatmul.mubr.bf16.gmra.mrb[0].mxu0 %v508
      %v607 = vpop.f32.mrb[0].mxu0
      %v608 = vadd.f32 %v559, %v607
      %v609 = vpop.f32.mrb[0].mxu0
      %v610 = vpop.f32.mrb[0].mxu0
      %v611 = vpop.f32.mrb[0].mxu0
      %612 = vdwg.mxu0
      %v613 = vld [vmem:[%s6] sm:$0xf]
      %v614 = vld [vmem:[%s6 + $0x4] sm:$0xf]
      %v615 = vld [vmem:[%s6 + $0x8] sm:$0xf]
      %v616 = vld [vmem:[%s6 + $0xc] sm:$0xf]
      %v617 = vld [vmem:[%s7] sm:$0x1]
      %v619 = vlaneseq
      %v620 = vshrl.u32 %v619, 7
      %v621 = vsub.s32 0, %v620
      %v622 = vrot.slane %v617, %v621
      %v628 = vunpack.c.l.b16 %v613
      %v629 = vunpack.c.l.b16 %v614
      %v630 = vunpack.c.l.b16 %v615
      %v631 = vunpack.c.l.b16 %v616
      %v632 = vpack.c.b16 %v629, %v628
      %v633 = vpack.c.b16 %v631, %v630
      %636 = vmatprep.subr.bf16.mxu0 0
      %637 = vmatpush1.bf16.msra.mxu0 %v632
      %638 = vmatprep.subr.bf16.mxu0 0
      %639 = vmatpush1.bf16.msra.mxu0 %v633
      %640 = vmatprep.subr.bf16.mxu0 0
      %641 = vmatpush1.bf16.msra.mxu0 0
      %642 = vmatprep.subr.bf16.mxu0 0
      %643 = vmatpush1.bf16.msra.mxu0 0
      %644 = vmatprep.subr.bf16.mxu0 0
      %645 = vmatpush1.bf16.msra.mxu0 0
      %646 = vmatprep.subr.bf16.mxu0 0
      %647 = vmatpush1.bf16.msra.mxu0 0
      %648 = vmatprep.subr.bf16.mxu0 0
      %649 = vmatpush1.bf16.msra.mxu0 0
      %650 = vmatprep.subr.bf16.mxu0 0
      %651 = vmatpush1.bf16.msra.mxu0 0
      %652 = vmatprep.subr.bf16.mxu0 0
      %653 = vmatpush1.bf16.msra.mxu0 0
      %654 = vmatprep.subr.bf16.mxu0 0
      %655 = vmatpush1.bf16.msra.mxu0 0
      %656 = vmatprep.subr.bf16.mxu0 0
      %657 = vmatpush1.bf16.msra.mxu0 0
      %658 = vmatprep.subr.bf16.mxu0 0
      %659 = vmatpush1.bf16.msra.mxu0 0
      %660 = vmatprep.subr.bf16.mxu0 0
      %661 = vmatpush1.bf16.msra.mxu0 0
      %662 = vmatprep.subr.bf16.mxu0 0
      %663 = vmatpush1.bf16.msra.mxu0 0
      %664 = vmatprep.subr.bf16.mxu0 0
      %665 = vmatpush1.bf16.msra.mxu0 0
      %666 = vmatprep.subr.bf16.mxu0 0
      %667 = vmatpush1.bf16.msra.mxu0 0
      %668 = vmatprep.mubr.bf16.mxu0 0
      %669 = vmatmul.mubr.bf16.gmra.mrb[0].mxu0 %v508
      %v670 = vpop.f32.mrb[0].mxu0
      %v671 = vadd.f32 %v622, %v670
      %v672 = vpop.f32.mrb[0].mxu0
      %v673 = vpop.f32.mrb[0].mxu0
      %v674 = vpop.f32.mrb[0].mxu0
      %675 = vdwg.mxu0
      %v677 = vcombine.high %v545, %v545
      %v679 = vpack.c.bf16 %v545, %v545
      %v680 = vpack.c.bf16 %v677, %v677
      %683 = vrot.lane.b32.xlu0 %v679, 120
      %v684 = vpop.permute.xlu0 %683
      %685 = vrot.lane.b32.xlu0 %v680, 120
      %v686 = vpop.permute.xlu0 %685
      %687 = vrot.lane.b32.xlu0 %v679, 112
      %v688 = vpop.permute.xlu0 %687
      %689 = vrot.lane.b32.xlu0 %v680, 112
      %v690 = vpop.permute.xlu0 %689
      %691 = vrot.lane.b32.xlu0 %v679, 104
      %v692 = vpop.permute.xlu0 %691
      %693 = vrot.lane.b32.xlu0 %v680, 104
      %v694 = vpop.permute.xlu0 %693
      %v696 = vcombine.high %v608, %v608
      %v698 = vpack.c.bf16 %v608, %v608
      %v699 = vpack.c.bf16 %v696, %v696
      %702 = vrot.lane.b32.xlu0 %v698, 120
      %v703 = vpop.permute.xlu0 %702
      %704 = vrot.lane.b32.xlu0 %v699, 120
      %v705 = vpop.permute.xlu0 %704
      %706 = vrot.lane.b32.xlu0 %v698, 112
      %v707 = vpop.permute.xlu0 %706
      %708 = vrot.lane.b32.xlu0 %v699, 112
      %v709 = vpop.permute.xlu0 %708
      %710 = vrot.lane.b32.xlu0 %v698, 104
      %v711 = vpop.permute.xlu0 %710
      %712 = vrot.lane.b32.xlu0 %v699, 104
      %v713 = vpop.permute.xlu0 %712
      %v715 = vcombine.high %v671, %v671
      %v717 = vpack.c.bf16 %v671, %v671
      %v718 = vpack.c.bf16 %v715, %v715
      %721 = vrot.lane.b32.xlu0 %v717, 120
      %v722 = vpop.permute.xlu0 %721
      %723 = vrot.lane.b32.xlu0 %v718, 120
      %v724 = vpop.permute.xlu0 %723
      %725 = vrot.lane.b32.xlu0 %v717, 112
      %v726 = vpop.permute.xlu0 %725
      %727 = vrot.lane.b32.xlu0 %v718, 112
      %v728 = vpop.permute.xlu0 %727
      %729 = vrot.lane.b32.xlu0 %v717, 104
      %v730 = vpop.permute.xlu0 %729
      %731 = vrot.lane.b32.xlu0 %v718, 104
      %v732 = vpop.permute.xlu0 %731
      %v733 = vld [vmem:[%s471] sm:$0x1]
      %v734 = vld [vmem:[%s471 + $0x1] sm:$0x1]
      %vm735 = vcmp.gt.f32.partialorder %v733, 0.0
      %vm736 = vcmp.gt.f32.partialorder %v734, 0.0
      %v737 = vsel %vm735, 0.0, -1e+09
      %v738 = vsel %vm736, 0.0, -1e+09
      %v741 = vlaneseq
      %v742 = vshrl.u32 %v741, 7
      %v743 = vsub.s32 0, %v742
      %v744 = vrot.slane %v737, %v743
      %v745 = vlaneseq
      %v746 = vshrl.u32 %v745, 7
      %v747 = vsub.s32 0, %v746
      %v748 = vrot.slane %v738, %v747
      %vm751 = vcmask 64512
      %v753 = vsel %vm751, %v679, 0
      %v756 = vsel %vm751, %v698, 0
      %758 = vmatprep.subr.bf16.mxu0 0
      %759 = vmatpush1.bf16.xpose.msra.mxu0 %v756
      %760 = vmatprep.subr.bf16.mxu0 0
      %761 = vmatpush1.bf16.xpose.msra.mxu0 0
      %762 = vmatprep.subr.bf16.mxu0 0
      %763 = vmatpush1.bf16.xpose.msra.mxu0 0
      %764 = vmatprep.subr.bf16.mxu0 0
      %765 = vmatpush1.bf16.xpose.msra.mxu0 0
      %766 = vmatprep.subr.bf16.mxu0 0
      %767 = vmatpush1.bf16.xpose.msra.mxu0 0
      %768 = vmatprep.subr.bf16.mxu0 0
      %769 = vmatpush1.bf16.xpose.msra.mxu0 0
      %770 = vmatprep.subr.bf16.mxu0 0
      %771 = vmatpush1.bf16.xpose.msra.mxu0 0
      %772 = vmatprep.subr.bf16.mxu0 0
      %773 = vmatpush1.bf16.xpose.msra.mxu0 0
      %774 = vmatprep.subr.bf16.mxu0 0
      %775 = vmatpush1.bf16.xpose.msra.mxu0 0
      %776 = vmatprep.subr.bf16.mxu0 0
      %777 = vmatpush1.bf16.xpose.msra.mxu0 0
      %778 = vmatprep.subr.bf16.mxu0 0
      %779 = vmatpush1.bf16.xpose.msra.mxu0 0
      %780 = vmatprep.subr.bf16.mxu0 0
      %781 = vmatpush1.bf16.xpose.msra.mxu0 0
      %782 = vmatprep.subr.bf16.mxu0 0
      %783 = vmatpush1.bf16.xpose.msra.mxu0 0
      %784 = vmatprep.subr.bf16.mxu0 0
      %785 = vmatpush1.bf16.xpose.msra.mxu0 0
      %786 = vmatprep.subr.bf16.mxu0 0
      %787 = vmatpush1.bf16.xpose.msra.mxu0 0
      %788 = vmatprep.subr.bf16.mxu0 0
      %789 = vmatpush1.bf16.xpose.msra.mxu0 0
      %790 = vmatprep.mubr.bf16.mxu0 0
      %791 = vmatmul.mubr.bf16.gmra.mrb[0].mxu0 %v753
      %v792 = vpop.f32.mrb[0].mxu0
      %v793 = vadd.f32 %v744, %v792
      %v794 = vpop.f32.mrb[0].mxu0
      %v795 = vpop.f32.mrb[0].mxu0
      %v796 = vpop.f32.mrb[0].mxu0
      %797 = vdwg.mxu0
      %v799 = vsel %vm751, %v680, 0
      %v802 = vsel %vm751, %v699, 0
      %804 = vmatprep.subr.bf16.mxu0 0
      %805 = vmatpush1.bf16.xpose.msra.mxu0 %v802
      %806 = vmatprep.subr.bf16.mxu0 0
      %807 = vmatpush1.bf16.xpose.msra.mxu0 0
      %808 = vmatprep.subr.bf16.mxu0 0
      %809 = vmatpush1.bf16.xpose.msra.mxu0 0
      %810 = vmatprep.subr.bf16.mxu0 0
      %811 = vmatpush1.bf16.xpose.msra.mxu0 0
      %812 = vmatprep.subr.bf16.mxu0 0
      %813 = vmatpush1.bf16.xpose.msra.mxu0 0
      %814 = vmatprep.subr.bf16.mxu0 0
      %815 = vmatpush1.bf16.xpose.msra.mxu0 0
      %816 = vmatprep.subr.bf16.mxu0 0
      %817 = vmatpush1.bf16.xpose.msra.mxu0 0
      %818 = vmatprep.subr.bf16.mxu0 0
      %819 = vmatpush1.bf16.xpose.msra.mxu0 0
      %820 = vmatprep.subr.bf16.mxu0 0
      %821 = vmatpush1.bf16.xpose.msra.mxu0 0
      %822 = vmatprep.subr.bf16.mxu0 0
      %823 = vmatpush1.bf16.xpose.msra.mxu0 0
      %824 = vmatprep.subr.bf16.mxu0 0
      %825 = vmatpush1.bf16.xpose.msra.mxu0 0
      %826 = vmatprep.subr.bf16.mxu0 0
      %827 = vmatpush1.bf16.xpose.msra.mxu0 0
      %828 = vmatprep.subr.bf16.mxu0 0
      %829 = vmatpush1.bf16.xpose.msra.mxu0 0
      %830 = vmatprep.subr.bf16.mxu0 0
      %831 = vmatpush1.bf16.xpose.msra.mxu0 0
      %832 = vmatprep.subr.bf16.mxu0 0
      %833 = vmatpush1.bf16.xpose.msra.mxu0 0
      %834 = vmatprep.subr.bf16.mxu0 0
      %835 = vmatpush1.bf16.xpose.msra.mxu0 0
      %836 = vmatprep.mubr.bf16.mxu0 0
      %837 = vmatmul.mubr.bf16.gmra.mrb[0].mxu0 %v799
      %v838 = vpop.f32.mrb[0].mxu0
      %v839 = vadd.f32 %v748, %v838
      %v840 = vpop.f32.mrb[0].mxu0
      %v841 = vpop.f32.mrb[0].mxu0
      %v842 = vpop.f32.mrb[0].mxu0
      %843 = vdwg.mxu0
      %v845 = vsel %vm751, %v684, 0
      %v848 = vsel %vm751, %v703, 0
      %850 = vmatprep.subr.bf16.mxu0 0
      %851 = vmatpush1.bf16.xpose.msra.mxu0 %v848
      %852 = vmatprep.subr.bf16.mxu0 0
      %853 = vmatpush1.bf16.xpose.msra.mxu0 0
      %854 = vmatprep.subr.bf16.mxu0 0
      %855 = vmatpush1.bf16.xpose.msra.mxu0 0
      %856 = vmatprep.subr.bf16.mxu0 0
      %857 = vmatpush1.bf16.xpose.msra.mxu0 0
      %858 = vmatprep.subr.bf16.mxu0 0
      %859 = vmatpush1.bf16.xpose.msra.mxu0 0
      %860 = vmatprep.subr.bf16.mxu0 0
      %861 = vmatpush1.bf16.xpose.msra.mxu0 0
      %862 = vmatprep.subr.bf16.mxu0 0
      %863 = vmatpush1.bf16.xpose.msra.mxu0 0
      %864 = vmatprep.subr.bf16.mxu0 0
      %865 = vmatpush1.bf16.xpose.msra.mxu0 0
      %866 = vmatprep.subr.bf16.mxu0 0
      %867 = vmatpush1.bf16.xpose.msra.mxu0 0
      %868 = vmatprep.subr.bf16.mxu0 0
      %869 = vmatpush1.bf16.xpose.msra.mxu0 0
      %870 = vmatprep.subr.bf16.mxu0 0
      %871 = vmatpush1.bf16.xpose.msra.mxu0 0
      %872 = vmatprep.subr.bf16.mxu0 0
      %873 = vmatpush1.bf16.xpose.msra.mxu0 0
      %874 = vmatprep.subr.bf16.mxu0 0
      %875 = vmatpush1.bf16.xpose.msra.mxu0 0
      %876 = vmatprep.subr.bf16.mxu0 0
      %877 = vmatpush1.bf16.xpose.msra.mxu0 0
      %878 = vmatprep.subr.bf16.mxu0 0
      %879 = vmatpush1.bf16.xpose.msra.mxu0 0
      %880 = vmatprep.subr.bf16.mxu0 0
      %881 = vmatpush1.bf16.xpose.msra.mxu0 0
      %882 = vmatprep.mubr.bf16.mxu0 0
      %883 = vmatmul.mubr.bf16.gmra.mrb[0].mxu0 %v845
      %v884 = vpop.f32.mrb[0].mxu0
      %v885 = vadd.f32 %v744, %v884
      %v886 = vpop.f32.mrb[0].mxu0
      %v887 = vpop.f32.mrb[0].mxu0
      %v888 = vpop.f32.mrb[0].mxu0
      %889 = vdwg.mxu0
      %v891 = vsel %vm751, %v686, 0
      %v894 = vsel %vm751, %v705, 0
      %896 = vmatprep.subr.bf16.mxu0 0
      %897 = vmatpush1.bf16.xpose.msra.mxu0 %v894
      %898 = vmatprep.subr.bf16.mxu0 0
      %899 = vmatpush1.bf16.xpose.msra.mxu0 0
      %900 = vmatprep.subr.bf16.mxu0 0
      %901 = vmatpush1.bf16.xpose.msra.mxu0 0
      %902 = vmatprep.subr.bf16.mxu0 0
      %903 = vmatpush1.bf16.xpose.msra.mxu0 0
      %904 = vmatprep.subr.bf16.mxu0 0
      %905 = vmatpush1.bf16.xpose.msra.mxu0 0
      %906 = vmatprep.subr.bf16.mxu0 0
      %907 = vmatpush1.bf16.xpose.msra.mxu0 0
      %908 = vmatprep.subr.bf16.mxu0 0
      %909 = vmatpush1.bf16.xpose.msra.mxu0 0
      %910 = vmatprep.subr.bf16.mxu0 0
      %911 = vmatpush1.bf16.xpose.msra.mxu0 0
      %912 = vmatprep.subr.bf16.mxu0 0
      %913 = vmatpush1.bf16.xpose.msra.mxu0 0
      %914 = vmatprep.subr.bf16.mxu0 0
      %915 = vmatpush1.bf16.xpose.msra.mxu0 0
      %916 = vmatprep.subr.bf16.mxu0 0
      %917 = vmatpush1.bf16.xpose.msra.mxu0 0
      %918 = vmatprep.subr.bf16.mxu0 0
      %919 = vmatpush1.bf16.xpose.msra.mxu0 0
      %920 = vmatprep.subr.bf16.mxu0 0
      %921 = vmatpush1.bf16.xpose.msra.mxu0 0
      %922 = vmatprep.subr.bf16.mxu0 0
      %923 = vmatpush1.bf16.xpose.msra.mxu0 0
      %924 = vmatprep.subr.bf16.mxu0 0
      %925 = vmatpush1.bf16.xpose.msra.mxu0 0
      %926 = vmatprep.subr.bf16.mxu0 0
      %927 = vmatpush1.bf16.xpose.msra.mxu0 0
      %928 = vmatprep.mubr.bf16.mxu0 0
      %929 = vmatmul.mubr.bf16.gmra.mrb[0].mxu0 %v891
      %v930 = vpop.f32.mrb[0].mxu0
      %v931 = vadd.f32 %v748, %v930
      %v932 = vpop.f32.mrb[0].mxu0
      %v933 = vpop.f32.mrb[0].mxu0
      %v934 = vpop.f32.mrb[0].mxu0
      %935 = vdwg.mxu0
      %v937 = vsel %vm751, %v688, 0
      %v940 = vsel %vm751, %v707, 0
      %942 = vmatprep.subr.bf16.mxu0 0
      %943 = vmatpush1.bf16.xpose.msra.mxu0 %v940
      %944 = vmatprep.subr.bf16.mxu0 0
      %945 = vmatpush1.bf16.xpose.msra.mxu0 0
      %946 = vmatprep.subr.bf16.mxu0 0
      %947 = vmatpush1.bf16.xpose.msra.mxu0 0
      %948 = vmatprep.subr.bf16.mxu0 0
      %949 = vmatpush1.bf16.xpose.msra.mxu0 0
      %950 = vmatprep.subr.bf16.mxu0 0
      %951 = vmatpush1.bf16.xpose.msra.mxu0 0
      %952 = vmatprep.subr.bf16.mxu0 0
      %953 = vmatpush1.bf16.xpose.msra.mxu0 0
      %954 = vmatprep.subr.bf16.mxu0 0
      %955 = vmatpush1.bf16.xpose.msra.mxu0 0
      %956 = vmatprep.subr.bf16.mxu0 0
      %957 = vmatpush1.bf16.xpose.msra.mxu0 0
      %958 = vmatprep.subr.bf16.mxu0 0
      %959 = vmatpush1.bf16.xpose.msra.mxu0 0
      %960 = vmatprep.subr.bf16.mxu0 0
      %961 = vmatpush1.bf16.xpose.msra.mxu0 0
      %962 = vmatprep.subr.bf16.mxu0 0
      %963 = vmatpush1.bf16.xpose.msra.mxu0 0
      %964 = vmatprep.subr.bf16.mxu0 0
      %965 = vmatpush1.bf16.xpose.msra.mxu0 0
      %966 = vmatprep.subr.bf16.mxu0 0
      %967 = vmatpush1.bf16.xpose.msra.mxu0 0
      %968 = vmatprep.subr.bf16.mxu0 0
      %969 = vmatpush1.bf16.xpose.msra.mxu0 0
      %970 = vmatprep.subr.bf16.mxu0 0
      %971 = vmatpush1.bf16.xpose.msra.mxu0 0
      %972 = vmatprep.subr.bf16.mxu0 0
      %973 = vmatpush1.bf16.xpose.msra.mxu0 0
      %974 = vmatprep.mubr.bf16.mxu0 0
      %975 = vmatmul.mubr.bf16.gmra.mrb[0].mxu0 %v937
      %v976 = vpop.f32.mrb[0].mxu0
      %v977 = vadd.f32 %v744, %v976
      %v978 = vpop.f32.mrb[0].mxu0
      %v979 = vpop.f32.mrb[0].mxu0
      %v980 = vpop.f32.mrb[0].mxu0
      %981 = vdwg.mxu0
      %v983 = vsel %vm751, %v690, 0
      %v986 = vsel %vm751, %v709, 0
      %988 = vmatprep.subr.bf16.mxu0 0
      %989 = vmatpush1.bf16.xpose.msra.mxu0 %v986
      %990 = vmatprep.subr.bf16.mxu0 0
      %991 = vmatpush1.bf16.xpose.msra.mxu0 0
      %992 = vmatprep.subr.bf16.mxu0 0
      %993 = vmatpush1.bf16.xpose.msra.mxu0 0
      %994 = vmatprep.subr.bf16.mxu0 0
      %995 = vmatpush1.bf16.xpose.msra.mxu0 0
      %996 = vmatprep.subr.bf16.mxu0 0
      %997 = vmatpush1.bf16.xpose.msra.mxu0 0
      %998 = vmatprep.subr.bf16.mxu0 0
      %999 = vmatpush1.bf16.xpose.msra.mxu0 0
      %1000 = vmatprep.subr.bf16.mxu0 0
      %1001 = vmatpush1.bf16.xpose.msra.mxu0 0
      %1002 = vmatprep.subr.bf16.mxu0 0
      %1003 = vmatpush1.bf16.xpose.msra.mxu0 0
      %1004 = vmatprep.subr.bf16.mxu0 0
      %1005 = vmatpush1.bf16.xpose.msra.mxu0 0
      %1006 = vmatprep.subr.bf16.mxu0 0
      %1007 = vmatpush1.bf16.xpose.msra.mxu0 0
      %1008 = vmatprep.subr.bf16.mxu0 0
      %1009 = vmatpush1.bf16.xpose.msra.mxu0 0
      %1010 = vmatprep.subr.bf16.mxu0 0
      %1011 = vmatpush1.bf16.xpose.msra.mxu0 0
      %1012 = vmatprep.subr.bf16.mxu0 0
      %1013 = vmatpush1.bf16.xpose.msra.mxu0 0
      %1014 = vmatprep.subr.bf16.mxu0 0
      %1015 = vmatpush1.bf16.xpose.msra.mxu0 0
      %1016 = vmatprep.subr.bf16.mxu0 0
      %1017 = vmatpush1.bf16.xpose.msra.mxu0 0
      %1018 = vmatprep.subr.bf16.mxu0 0
      %1019 = vmatpush1.bf16.xpose.msra.mxu0 0
      %1020 = vmatprep.mubr.bf16.mxu0 0
      %1021 = vmatmul.mubr.bf16.gmra.mrb[0].mxu0 %v983
      %v1022 = vpop.f32.mrb[0].mxu0
      %v1023 = vadd.f32 %v748, %v1022
      %v1024 = vpop.f32.mrb[0].mxu0
      %v1025 = vpop.f32.mrb[0].mxu0
      %v1026 = vpop.f32.mrb[0].mxu0
      %1027 = vdwg.mxu0
      %v1029 = vsel %vm751, %v692, 0
      %v1032 = vsel %vm751, %v711, 0
      %1034 = vmatprep.subr.bf16.mxu0 0
      %1035 = vmatpush1.bf16.xpose.msra.mxu0 %v1032
      %1036 = vmatprep.subr.bf16.mxu0 0
      %1037 = vmatpush1.bf16.xpose.msra.mxu0 0
      %1038 = vmatprep.subr.bf16.mxu0 0
      %1039 = vmatpush1.bf16.xpose.msra.mxu0 0
      %1040 = vmatprep.subr.bf16.mxu0 0
      %1041 = vmatpush1.bf16.xpose.msra.mxu0 0
      %1042 = vmatprep.subr.bf16.mxu0 0
      %1043 = vmatpush1.bf16.xpose.msra.mxu0 0
      %1044 = vmatprep.subr.bf16.mxu0 0
      %1045 = vmatpush1.bf16.xpose.msra.mxu0 0
      %1046 = vmatprep.subr.bf16.mxu0 0
      %1047 = vmatpush1.bf16.xpose.msra.mxu0 0
      %1048 = vmatprep.subr.bf16.mxu0 0
      %1049 = vmatpush1.bf16.xpose.msra.mxu0 0
      %1050 = vmatprep.subr.bf16.mxu0 0
      %1051 = vmatpush1.bf16.xpose.msra.mxu0 0
      %1052 = vmatprep.subr.bf16.mxu0 0
      %1053 = vmatpush1.bf16.xpose.msra.mxu0 0
      %1054 = vmatprep.subr.bf16.mxu0 0
      %1055 = vmatpush1.bf16.xpose.msra.mxu0 0
      %1056 = vmatprep.subr.bf16.mxu0 0
      %1057 = vmatpush1.bf16.xpose.msra.mxu0 0
      %1058 = vmatprep.subr.bf16.mxu0 0
      %1059 = vmatpush1.bf16.xpose.msra.mxu0 0
      %1060 = vmatprep.subr.bf16.mxu0 0
      %1061 = vmatpush1.bf16.xpose.msra.mxu0 0
      %1062 = vmatprep.subr.bf16.mxu0 0
      %1063 = vmatpush1.bf16.xpose.msra.mxu0 0
      %1064 = vmatprep.subr.bf16.mxu0 0
      %1065 = vmatpush1.bf16.xpose.msra.mxu0 0
      %1066 = vmatprep.mubr.bf16.mxu0 0
      %1067 = vmatmul.mubr.bf16.gmra.mrb[0].mxu0 %v1029
      %v1068 = vpop.f32.mrb[0].mxu0
      %v1069 = vadd.f32 %v744, %v1068
      %v1070 = vpop.f32.mrb[0].mxu0
      %v1071 = vpop.f32.mrb[0].mxu0
      %v1072 = vpop.f32.mrb[0].mxu0
      %1073 = vdwg.mxu0
      %v1075 = vsel %vm751, %v694, 0
      %v1078 = vsel %vm751, %v713, 0
      %1080 = vmatprep.subr.bf16.mxu0 0
      %1081 = vmatpush1.bf16.xpose.msra.mxu0 %v1078
      %1082 = vmatprep.subr.bf16.mxu0 0
      %1083 = vmatpush1.bf16.xpose.msra.mxu0 0
      %1084 = vmatprep.subr.bf16.mxu0 0
      %1085 = vmatpush1.bf16.xpose.msra.mxu0 0
      %1086 = vmatprep.subr.bf16.mxu0 0
      %1087 = vmatpush1.bf16.xpose.msra.mxu0 0
      %1088 = vmatprep.subr.bf16.mxu0 0
      %1089 = vmatpush1.bf16.xpose.msra.mxu0 0
      %1090 = vmatprep.subr.bf16.mxu0 0
      %1091 = vmatpush1.bf16.xpose.msra.mxu0 0
      %1092 = vmatprep.subr.bf16.mxu0 0
      %1093 = vmatpush1.bf16.xpose.msra.mxu0 0
      %1094 = vmatprep.subr.bf16.mxu0 0
      %1095 = vmatpush1.bf16.xpose.msra.mxu0 0
      %1096 = vmatprep.subr.bf16.mxu0 0
      %1097 = vmatpush1.bf16.xpose.msra.mxu0 0
      %1098 = vmatprep.subr.bf16.mxu0 0
      %1099 = vmatpush1.bf16.xpose.msra.mxu0 0
      %1100 = vmatprep.subr.bf16.mxu0 0
      %1101 = vmatpush1.bf16.xpose.msra.mxu0 0
      %1102 = vmatprep.subr.bf16.mxu0 0
      %1103 = vmatpush1.bf16.xpose.msra.mxu0 0
      %1104 = vmatprep.subr.bf16.mxu0 0
      %1105 = vmatpush1.bf16.xpose.msra.mxu0 0
      %1106 = vmatprep.subr.bf16.mxu0 0
      %1107 = vmatpush1.bf16.xpose.msra.mxu0 0
      %1108 = vmatprep.subr.bf16.mxu0 0
      %1109 = vmatpush1.bf16.xpose.msra.mxu0 0
      %1110 = vmatprep.subr.bf16.mxu0 0
      %1111 = vmatpush1.bf16.xpose.msra.mxu0 0
      %1112 = vmatprep.mubr.bf16.mxu0 0
      %1113 = vmatmul.mubr.bf16.gmra.mrb[0].mxu0 %v1075
      %v1114 = vpop.f32.mrb[0].mxu0
      %v1115 = vadd.f32 %v748, %v1114
      %v1116 = vpop.f32.mrb[0].mxu0
      %v1117 = vpop.f32.mrb[0].mxu0
      %v1118 = vpop.f32.mrb[0].mxu0
      %1119 = vdwg.mxu0
      %vm1120 = vcmask 27648
      %v1121 = vsel %vm1120, %v793, -inf
      %1122 = vmax.xlane.f32.xlu0 %v1121
      %v1123 = vpop.xlane.xlu0 %1122
      %v1124 = vsel %vm1120, %v839, -inf
      %1125 = vmax.xlane.f32.xlu0 %v1124
      %v1126 = vpop.xlane.xlu0 %1125
      %v1127 = vsel %vm1120, %v885, -inf
      %1128 = vmax.xlane.f32.xlu0 %v1127
      %v1129 = vpop.xlane.xlu0 %1128
      %v1130 = vsel %vm1120, %v931, -inf
      %1131 = vmax.xlane.f32.xlu0 %v1130
      %v1132 = vpop.xlane.xlu0 %1131
      %v1133 = vsel %vm1120, %v977, -inf
      %1134 = vmax.xlane.f32.xlu0 %v1133
      %v1135 = vpop.xlane.xlu0 %1134
      %v1136 = vsel %vm1120, %v1023, -inf
      %1137 = vmax.xlane.f32.xlu0 %v1136
      %v1138 = vpop.xlane.xlu0 %1137
      %v1139 = vsel %vm1120, %v1069, -inf
      %1140 = vmax.xlane.f32.xlu0 %v1139
      %v1141 = vpop.xlane.xlu0 %1140
      %v1142 = vsel %vm1120, %v1115, -inf
      %1143 = vmax.xlane.f32.xlu0 %v1142
      %v1144 = vpop.xlane.xlu0 %1143
      %v1145 = vsub.f32 %v793, %v1123
      %v1146 = vsub.f32 %v839, %v1126
      %v1147 = vsub.f32 %v885, %v1129
      %v1148 = vsub.f32 %v931, %v1132
      %v1149 = vsub.f32 %v977, %v1135
      %v1150 = vsub.f32 %v1023, %v1138
      %v1151 = vsub.f32 %v1069, %v1141
      %v1152 = vsub.f32 %v1115, %v1144
      %v1153 = vmul.f32 %v1145, 1.442695
      %v1154 = vpow.pop %v1153
      %v1155 = vmul.f32 %v1146, 1.442695
      %v1156 = vpow.pop %v1155
      %v1157 = vmul.f32 %v1147, 1.442695
      %v1158 = vpow.pop %v1157
      %v1159 = vmul.f32 %v1148, 1.442695
      %v1160 = vpow.pop %v1159
      %v1161 = vmul.f32 %v1149, 1.442695
      %v1162 = vpow.pop %v1161
      %v1163 = vmul.f32 %v1150, 1.442695
      %v1164 = vpow.pop %v1163
      %v1165 = vmul.f32 %v1151, 1.442695
      %v1166 = vpow.pop %v1165
      %v1167 = vmul.f32 %v1152, 1.442695
      %v1168 = vpow.pop %v1167
      %v1169 = vsel %vm1120, %v1154, 0.0
      %1170 = vadd.xlane.f32.xlu0 %v1169
      %v1171 = vpop.xlane.xlu0 %1170
      %v1172 = vsel %vm1120, %v1156, 0.0
      %1173 = vadd.xlane.f32.xlu0 %v1172
      %v1174 = vpop.xlane.xlu0 %1173
      %v1175 = vsel %vm1120, %v1158, 0.0
      %1176 = vadd.xlane.f32.xlu0 %v1175
      %v1177 = vpop.xlane.xlu0 %1176
      %v1178 = vsel %vm1120, %v1160, 0.0
      %1179 = vadd.xlane.f32.xlu0 %v1178
      %v1180 = vpop.xlane.xlu0 %1179
      %v1181 = vsel %vm1120, %v1162, 0.0
      %1182 = vadd.xlane.f32.xlu0 %v1181
      %v1183 = vpop.xlane.xlu0 %1182
      %v1184 = vsel %vm1120, %v1164, 0.0
      %1185 = vadd.xlane.f32.xlu0 %v1184
      %v1186 = vpop.xlane.xlu0 %1185
      %v1187 = vsel %vm1120, %v1166, 0.0
      %1188 = vadd.xlane.f32.xlu0 %v1187
      %v1189 = vpop.xlane.xlu0 %1188
      %v1190 = vsel %vm1120, %v1168, 0.0
      %1191 = vadd.xlane.f32.xlu0 %v1190
      %v1192 = vpop.xlane.xlu0 %1191
      %v1193 = vrcp.pop %v1171
      %v1194 = vrcp.pop %v1174
      %v1195 = vrcp.pop %v1177
      %v1196 = vrcp.pop %v1180
      %v1197 = vrcp.pop %v1183
      %v1198 = vrcp.pop %v1186
      %v1199 = vrcp.pop %v1189
      %v1200 = vrcp.pop %v1192
      %v1201 = vmul.f32 %v1154, %v1193
      %v1202 = vmul.f32 %v1156, %v1194
      %v1203 = vmul.f32 %v1158, %v1195
      %v1204 = vmul.f32 %v1160, %v1196
      %v1205 = vmul.f32 %v1162, %v1197
      %v1206 = vmul.f32 %v1164, %v1198
      %v1207 = vmul.f32 %v1166, %v1199
      %v1208 = vmul.f32 %v1168, %v1200
      %v1209 = vpack.c.bf16 %v1201, %v1201
      %v1210 = vpack.c.bf16 %v1202, %v1202
      %v1211 = vpack.c.bf16 %v1203, %v1203
      %v1212 = vpack.c.bf16 %v1204, %v1204
      %v1213 = vpack.c.bf16 %v1205, %v1205
      %v1214 = vpack.c.bf16 %v1206, %v1206
      %v1215 = vpack.c.bf16 %v1207, %v1207
      %v1216 = vpack.c.bf16 %v1208, %v1208
      %vm1217 = vcmask 31744
      %v1219 = vsel %vm1217, %v1209, 0
      %vm1221 = vcmask 1041408
      %v1223 = vsel %vm1221, %v717, 0
      %1225 = vmatprep.subr.bf16.mxu0 0
      %1226 = vmatpush1.bf16.msra.mxu0 %v1223
      %1227 = vmatprep.subr.bf16.mxu0 0
      %1228 = vmatpush1.bf16.msra.mxu0 0
      %1229 = vmatprep.subr.bf16.mxu0 0
      %1230 = vmatpush1.bf16.msra.mxu0 0
      %1231 = vmatprep.subr.bf16.mxu0 0
      %1232 = vmatpush1.bf16.msra.mxu0 0
      %1233 = vmatprep.subr.bf16.mxu0 0
      %1234 = vmatpush1.bf16.msra.mxu0 0
      %1235 = vmatprep.subr.bf16.mxu0 0
      %1236 = vmatpush1.bf16.msra.mxu0 0
      %1237 = vmatprep.subr.bf16.mxu0 0
      %1238 = vmatpush1.bf16.msra.mxu0 0
      %1239 = vmatprep.subr.bf16.mxu0 0
      %1240 = vmatpush1.bf16.msra.mxu0 0
      %1241 = vmatprep.subr.bf16.mxu0 0
      %1242 = vmatpush1.bf16.msra.mxu0 0
      %1243 = vmatprep.subr.bf16.mxu0 0
      %1244 = vmatpush1.bf16.msra.mxu0 0
      %1245 = vmatprep.subr.bf16.mxu0 0
      %1246 = vmatpush1.bf16.msra.mxu0 0
      %1247 = vmatprep.subr.bf16.mxu0 0
      %1248 = vmatpush1.bf16.msra.mxu0 0
      %1249 = vmatprep.subr.bf16.mxu0 0
      %1250 = vmatpush1.bf16.msra.mxu0 0
      %1251 = vmatprep.subr.bf16.mxu0 0
      %1252 = vmatpush1.bf16.msra.mxu0 0
      %1253 = vmatprep.subr.bf16.mxu0 0
      %1254 = vmatpush1.bf16.msra.mxu0 0
      %1255 = vmatprep.subr.bf16.mxu0 0
      %1256 = vmatpush1.bf16.msra.mxu0 0
      %1257 = vmatprep.mubr.bf16.mxu0 0
      %1258 = vmatmul.mubr.bf16.gmra.mrb[0].mxu0 %v1219
      %v1259 = vpop.f32.mrb[0].mxu0
      %v1260 = vadd.f32 0.0, %v1259
      %v1261 = vpop.f32.mrb[0].mxu0
      %v1262 = vpop.f32.mrb[0].mxu0
      %v1263 = vpop.f32.mrb[0].mxu0
      %1264 = vdwg.mxu0
      %v1266 = vsel %vm1217, %v1210, 0
      %v1269 = vsel %vm1221, %v718, 0
      %1271 = vmatprep.subr.bf16.mxu0 0
      %1272 = vmatpush1.bf16.msra.mxu0 %v1269
      %1273 = vmatprep.subr.bf16.mxu0 0
      %1274 = vmatpush1.bf16.msra.mxu0 0
      %1275 = vmatprep.subr.bf16.mxu0 0
      %1276 = vmatpush1.bf16.msra.mxu0 0
      %1277 = vmatprep.subr.bf16.mxu0 0
      %1278 = vmatpush1.bf16.msra.mxu0 0
      %1279 = vmatprep.subr.bf16.mxu0 0
      %1280 = vmatpush1.bf16.msra.mxu0 0
      %1281 = vmatprep.subr.bf16.mxu0 0
      %1282 = vmatpush1.bf16.msra.mxu0 0
      %1283 = vmatprep.subr.bf16.mxu0 0
      %1284 = vmatpush1.bf16.msra.mxu0 0
      %1285 = vmatprep.subr.bf16.mxu0 0
      %1286 = vmatpush1.bf16.msra.mxu0 0
      %1287 = vmatprep.subr.bf16.mxu0 0
      %1288 = vmatpush1.bf16.msra.mxu0 0
      %1289 = vmatprep.subr.bf16.mxu0 0
      %1290 = vmatpush1.bf16.msra.mxu0 0
      %1291 = vmatprep.subr.bf16.mxu0 0
      %1292 = vmatpush1.bf16.msra.mxu0 0
      %1293 = vmatprep.subr.bf16.mxu0 0
      %1294 = vmatpush1.bf16.msra.mxu0 0
      %1295 = vmatprep.subr.bf16.mxu0 0
      %1296 = vmatpush1.bf16.msra.mxu0 0
      %1297 = vmatprep.subr.bf16.mxu0 0
      %1298 = vmatpush1.bf16.msra.mxu0 0
      %1299 = vmatprep.subr.bf16.mxu0 0
      %1300 = vmatpush1.bf16.msra.mxu0 0
      %1301 = vmatprep.subr.bf16.mxu0 0
      %1302 = vmatpush1.bf16.msra.mxu0 0
      %1303 = vmatprep.mubr.bf16.mxu0 0
      %1304 = vmatmul.mubr.bf16.gmra.mrb[0].mxu0 %v1266
      %v1305 = vpop.f32.mrb[0].mxu0
      %v1306 = vadd.f32 0.0, %v1305
      %v1307 = vpop.f32.mrb[0].mxu0
      %v1308 = vpop.f32.mrb[0].mxu0
      %v1309 = vpop.f32.mrb[0].mxu0
      %1310 = vdwg.mxu0
      %v1312 = vsel %vm1217, %v1211, 0
      %v1315 = vsel %vm1221, %v722, 0
      %1317 = vmatprep.subr.bf16.mxu0 0
      %1318 = vmatpush1.bf16.msra.mxu0 %v1315
      %1319 = vmatprep.subr.bf16.mxu0 0
      %1320 = vmatpush1.bf16.msra.mxu0 0
      %1321 = vmatprep.subr.bf16.mxu0 0
      %1322 = vmatpush1.bf16.msra.mxu0 0
      %1323 = vmatprep.subr.bf16.mxu0 0
      %1324 = vmatpush1.bf16.msra.mxu0 0
      %1325 = vmatprep.subr.bf16.mxu0 0
      %1326 = vmatpush1.bf16.msra.mxu0 0
      %1327 = vmatprep.subr.bf16.mxu0 0
      %1328 = vmatpush1.bf16.msra.mxu0 0
      %1329 = vmatprep.subr.bf16.mxu0 0
      %1330 = vmatpush1.bf16.msra.mxu0 0
      %1331 = vmatprep.subr.bf16.mxu0 0
      %1332 = vmatpush1.bf16.msra.mxu0 0
      %1333 = vmatprep.subr.bf16.mxu0 0
      %1334 = vmatpush1.bf16.msra.mxu0 0
      %1335 = vmatprep.subr.bf16.mxu0 0
      %1336 = vmatpush1.bf16.msra.mxu0 0
      %1337 = vmatprep.subr.bf16.mxu0 0
      %1338 = vmatpush1.bf16.msra.mxu0 0
      %1339 = vmatprep.subr.bf16.mxu0 0
      %1340 = vmatpush1.bf16.msra.mxu0 0
      %1341 = vmatprep.subr.bf16.mxu0 0
      %1342 = vmatpush1.bf16.msra.mxu0 0
      %1343 = vmatprep.subr.bf16.mxu0 0
      %1344 = vmatpush1.bf16.msra.mxu0 0
      %1345 = vmatprep.subr.bf16.mxu0 0
      %1346 = vmatpush1.bf16.msra.mxu0 0
      %1347 = vmatprep.subr.bf16.mxu0 0
      %1348 = vmatpush1.bf16.msra.mxu0 0
      %1349 = vmatprep.mubr.bf16.mxu0 0
      %1350 = vmatmul.mubr.bf16.gmra.mrb[0].mxu0 %v1312
      %v1351 = vpop.f32.mrb[0].mxu0
      %v1352 = vadd.f32 0.0, %v1351
      %v1353 = vpop.f32.mrb[0].mxu0
      %v1354 = vpop.f32.mrb[0].mxu0
      %v1355 = vpop.f32.mrb[0].mxu0
      %1356 = vdwg.mxu0
      %v1358 = vsel %vm1217, %v1212, 0
      %v1361 = vsel %vm1221, %v724, 0
      %1363 = vmatprep.subr.bf16.mxu0 0
      %1364 = vmatpush1.bf16.msra.mxu0 %v1361
      %1365 = vmatprep.subr.bf16.mxu0 0
      %1366 = vmatpush1.bf16.msra.mxu0 0
      %1367 = vmatprep.subr.bf16.mxu0 0
      %1368 = vmatpush1.bf16.msra.mxu0 0
      %1369 = vmatprep.subr.bf16.mxu0 0
      %1370 = vmatpush1.bf16.msra.mxu0 0
      %1371 = vmatprep.subr.bf16.mxu0 0
      %1372 = vmatpush1.bf16.msra.mxu0 0
      %1373 = vmatprep.subr.bf16.mxu0 0
      %1374 = vmatpush1.bf16.msra.mxu0 0
      %1375 = vmatprep.subr.bf16.mxu0 0
      %1376 = vmatpush1.bf16.msra.mxu0 0
      %1377 = vmatprep.subr.bf16.mxu0 0
      %1378 = vmatpush1.bf16.msra.mxu0 0
      %1379 = vmatprep.subr.bf16.mxu0 0
      %1380 = vmatpush1.bf16.msra.mxu0 0
      %1381 = vmatprep.subr.bf16.mxu0 0
      %1382 = vmatpush1.bf16.msra.mxu0 0
      %1383 = vmatprep.subr.bf16.mxu0 0
      %1384 = vmatpush1.bf16.msra.mxu0 0
      %1385 = vmatprep.subr.bf16.mxu0 0
      %1386 = vmatpush1.bf16.msra.mxu0 0
      %1387 = vmatprep.subr.bf16.mxu0 0
      %1388 = vmatpush1.bf16.msra.mxu0 0
      %1389 = vmatprep.subr.bf16.mxu0 0
      %1390 = vmatpush1.bf16.msra.mxu0 0
      %1391 = vmatprep.subr.bf16.mxu0 0
      %1392 = vmatpush1.bf16.msra.mxu0 0
      %1393 = vmatprep.subr.bf16.mxu0 0
      %1394 = vmatpush1.bf16.msra.mxu0 0
      %1395 = vmatprep.mubr.bf16.mxu0 0
      %1396 = vmatmul.mubr.bf16.gmra.mrb[0].mxu0 %v1358
      %v1397 = vpop.f32.mrb[0].mxu0
      %v1398 = vadd.f32 0.0, %v1397
      %v1399 = vpop.f32.mrb[0].mxu0
      %v1400 = vpop.f32.mrb[0].mxu0
      %v1401 = vpop.f32.mrb[0].mxu0
      %1402 = vdwg.mxu0
      %v1404 = vsel %vm1217, %v1213, 0
      %v1407 = vsel %vm1221, %v726, 0
      %1409 = vmatprep.subr.bf16.mxu0 0
      %1410 = vmatpush1.bf16.msra.mxu0 %v1407
      %1411 = vmatprep.subr.bf16.mxu0 0
      %1412 = vmatpush1.bf16.msra.mxu0 0
      %1413 = vmatprep.subr.bf16.mxu0 0
      %1414 = vmatpush1.bf16.msra.mxu0 0
      %1415 = vmatprep.subr.bf16.mxu0 0
      %1416 = vmatpush1.bf16.msra.mxu0 0
      %1417 = vmatprep.subr.bf16.mxu0 0
      %1418 = vmatpush1.bf16.msra.mxu0 0
      %1419 = vmatprep.subr.bf16.mxu0 0
      %1420 = vmatpush1.bf16.msra.mxu0 0
      %1421 = vmatprep.subr.bf16.mxu0 0
      %1422 = vmatpush1.bf16.msra.mxu0 0
      %1423 = vmatprep.subr.bf16.mxu0 0
      %1424 = vmatpush1.bf16.msra.mxu0 0
      %1425 = vmatprep.subr.bf16.mxu0 0
      %1426 = vmatpush1.bf16.msra.mxu0 0
      %1427 = vmatprep.subr.bf16.mxu0 0
      %1428 = vmatpush1.bf16.msra.mxu0 0
      %1429 = vmatprep.subr.bf16.mxu0 0
      %1430 = vmatpush1.bf16.msra.mxu0 0
      %1431 = vmatprep.subr.bf16.mxu0 0
      %1432 = vmatpush1.bf16.msra.mxu0 0
      %1433 = vmatprep.subr.bf16.mxu0 0
      %1434 = vmatpush1.bf16.msra.mxu0 0
      %1435 = vmatprep.subr.bf16.mxu0 0
      %1436 = vmatpush1.bf16.msra.mxu0 0
      %1437 = vmatprep.subr.bf16.mxu0 0
      %1438 = vmatpush1.bf16.msra.mxu0 0
      %1439 = vmatprep.subr.bf16.mxu0 0
      %1440 = vmatpush1.bf16.msra.mxu0 0
      %1441 = vmatprep.mubr.bf16.mxu0 0
      %1442 = vmatmul.mubr.bf16.gmra.mrb[0].mxu0 %v1404
      %v1443 = vpop.f32.mrb[0].mxu0
      %v1444 = vadd.f32 0.0, %v1443
      %v1445 = vpop.f32.mrb[0].mxu0
      %v1446 = vpop.f32.mrb[0].mxu0
      %v1447 = vpop.f32.mrb[0].mxu0
      %1448 = vdwg.mxu0
      %v1450 = vsel %vm1217, %v1214, 0
      %v1453 = vsel %vm1221, %v728, 0
      %1455 = vmatprep.subr.bf16.mxu0 0
      %1456 = vmatpush1.bf16.msra.mxu0 %v1453
      %1457 = vmatprep.subr.bf16.mxu0 0
      %1458 = vmatpush1.bf16.msra.mxu0 0
      %1459 = vmatprep.subr.bf16.mxu0 0
      %1460 = vmatpush1.bf16.msra.mxu0 0
      %1461 = vmatprep.subr.bf16.mxu0 0
      %1462 = vmatpush1.bf16.msra.mxu0 0
      %1463 = vmatprep.subr.bf16.mxu0 0
      %1464 = vmatpush1.bf16.msra.mxu0 0
      %1465 = vmatprep.subr.bf16.mxu0 0
      %1466 = vmatpush1.bf16.msra.mxu0 0
      %1467 = vmatprep.subr.bf16.mxu0 0
      %1468 = vmatpush1.bf16.msra.mxu0 0
      %1469 = vmatprep.subr.bf16.mxu0 0
      %1470 = vmatpush1.bf16.msra.mxu0 0
      %1471 = vmatprep.subr.bf16.mxu0 0
      %1472 = vmatpush1.bf16.msra.mxu0 0
      %1473 = vmatprep.subr.bf16.mxu0 0
      %1474 = vmatpush1.bf16.msra.mxu0 0
      %1475 = vmatprep.subr.bf16.mxu0 0
      %1476 = vmatpush1.bf16.msra.mxu0 0
      %1477 = vmatprep.subr.bf16.mxu0 0
      %1478 = vmatpush1.bf16.msra.mxu0 0
      %1479 = vmatprep.subr.bf16.mxu0 0
      %1480 = vmatpush1.bf16.msra.mxu0 0
      %1481 = vmatprep.subr.bf16.mxu0 0
      %1482 = vmatpush1.bf16.msra.mxu0 0
      %1483 = vmatprep.subr.bf16.mxu0 0
      %1484 = vmatpush1.bf16.msra.mxu0 0
      %1485 = vmatprep.subr.bf16.mxu0 0
      %1486 = vmatpush1.bf16.msra.mxu0 0
      %1487 = vmatprep.mubr.bf16.mxu0 0
      %1488 = vmatmul.mubr.bf16.gmra.mrb[0].mxu0 %v1450
      %v1489 = vpop.f32.mrb[0].mxu0
      %v1490 = vadd.f32 0.0, %v1489
      %v1491 = vpop.f32.mrb[0].mxu0
      %v1492 = vpop.f32.mrb[0].mxu0
      %v1493 = vpop.f32.mrb[0].mxu0
      %1494 = vdwg.mxu0
      %v1496 = vsel %vm1217, %v1215, 0
      %v1499 = vsel %vm1221, %v730, 0
      %1501 = vmatprep.subr.bf16.mxu0 0
      %1502 = vmatpush1.bf16.msra.mxu0 %v1499
      %1503 = vmatprep.subr.bf16.mxu0 0
      %1504 = vmatpush1.bf16.msra.mxu0 0
      %1505 = vmatprep.subr.bf16.mxu0 0
      %1506 = vmatpush1.bf16.msra.mxu0 0
      %1507 = vmatprep.subr.bf16.mxu0 0
      %1508 = vmatpush1.bf16.msra.mxu0 0
      %1509 = vmatprep.subr.bf16.mxu0 0
      %1510 = vmatpush1.bf16.msra.mxu0 0
      %1511 = vmatprep.subr.bf16.mxu0 0
      %1512 = vmatpush1.bf16.msra.mxu0 0
      %1513 = vmatprep.subr.bf16.mxu0 0
      %1514 = vmatpush1.bf16.msra.mxu0 0
      %1515 = vmatprep.subr.bf16.mxu0 0
      %1516 = vmatpush1.bf16.msra.mxu0 0
      %1517 = vmatprep.subr.bf16.mxu0 0
      %1518 = vmatpush1.bf16.msra.mxu0 0
      %1519 = vmatprep.subr.bf16.mxu0 0
      %1520 = vmatpush1.bf16.msra.mxu0 0
      %1521 = vmatprep.subr.bf16.mxu0 0
      %1522 = vmatpush1.bf16.msra.mxu0 0
      %1523 = vmatprep.subr.bf16.mxu0 0
      %1524 = vmatpush1.bf16.msra.mxu0 0
      %1525 = vmatprep.subr.bf16.mxu0 0
      %1526 = vmatpush1.bf16.msra.mxu0 0
      %1527 = vmatprep.subr.bf16.mxu0 0
      %1528 = vmatpush1.bf16.msra.mxu0 0
      %1529 = vmatprep.subr.bf16.mxu0 0
      %1530 = vmatpush1.bf16.msra.mxu0 0
      %1531 = vmatprep.subr.bf16.mxu0 0
      %1532 = vmatpush1.bf16.msra.mxu0 0
      %1533 = vmatprep.mubr.bf16.mxu0 0
      %1534 = vmatmul.mubr.bf16.gmra.mrb[0].mxu0 %v1496
      %v1535 = vpop.f32.mrb[0].mxu0
      %v1536 = vadd.f32 0.0, %v1535
      %v1537 = vpop.f32.mrb[0].mxu0
      %v1538 = vpop.f32.mrb[0].mxu0
      %v1539 = vpop.f32.mrb[0].mxu0
      %1540 = vdwg.mxu0
      %v1542 = vsel %vm1217, %v1216, 0
      %v1545 = vsel %vm1221, %v732, 0
      %1547 = vmatprep.subr.bf16.mxu0 0
      %1548 = vmatpush1.bf16.msra.mxu0 %v1545
      %1549 = vmatprep.subr.bf16.mxu0 0
      %1550 = vmatpush1.bf16.msra.mxu0 0
      %1551 = vmatprep.subr.bf16.mxu0 0
      %1552 = vmatpush1.bf16.msra.mxu0 0
      %1553 = vmatprep.subr.bf16.mxu0 0
      %1554 = vmatpush1.bf16.msra.mxu0 0
      %1555 = vmatprep.subr.bf16.mxu0 0
      %1556 = vmatpush1.bf16.msra.mxu0 0
      %1557 = vmatprep.subr.bf16.mxu0 0
      %1558 = vmatpush1.bf16.msra.mxu0 0
      %1559 = vmatprep.subr.bf16.mxu0 0
      %1560 = vmatpush1.bf16.msra.mxu0 0
      %1561 = vmatprep.subr.bf16.mxu0 0
      %1562 = vmatpush1.bf16.msra.mxu0 0
      %1563 = vmatprep.subr.bf16.mxu0 0
      %1564 = vmatpush1.bf16.msra.mxu0 0
      %1565 = vmatprep.subr.bf16.mxu0 0
      %1566 = vmatpush1.bf16.msra.mxu0 0
      %1567 = vmatprep.subr.bf16.mxu0 0
      %1568 = vmatpush1.bf16.msra.mxu0 0
      %1569 = vmatprep.subr.bf16.mxu0 0
      %1570 = vmatpush1.bf16.msra.mxu0 0
      %1571 = vmatprep.subr.bf16.mxu0 0
      %1572 = vmatpush1.bf16.msra.mxu0 0
      %1573 = vmatprep.subr.bf16.mxu0 0
      %1574 = vmatpush1.bf16.msra.mxu0 0
      %1575 = vmatprep.subr.bf16.mxu0 0
      %1576 = vmatpush1.bf16.msra.mxu0 0
      %1577 = vmatprep.subr.bf16.mxu0 0
      %1578 = vmatpush1.bf16.msra.mxu0 0
      %1579 = vmatprep.mubr.bf16.mxu0 0
      %1580 = vmatmul.mubr.bf16.gmra.mrb[0].mxu0 %v1542
      %v1581 = vpop.f32.mrb[0].mxu0
      %v1582 = vadd.f32 0.0, %v1581
      %v1583 = vpop.f32.mrb[0].mxu0
      %v1584 = vpop.f32.mrb[0].mxu0
      %v1585 = vpop.f32.mrb[0].mxu0
      %1586 = vdwg.mxu0
      %1589 = vrot.lane.b32.xlu0 %v1352, 8
      %v1590 = vpop.permute.xlu0 %1589
      %1591 = vrot.lane.b32.xlu0 %v1398, 8
      %v1592 = vpop.permute.xlu0 %1591
      %1597 = vrot.lane.b32.xlu0 %v1444, 16
      %v1598 = vpop.permute.xlu0 %1597
      %1599 = vrot.lane.b32.xlu0 %v1490, 16
      %v1600 = vpop.permute.xlu0 %1599
      %1605 = vrot.lane.b32.xlu0 %v1536, 24
      %v1606 = vpop.permute.xlu0 %1605
      %1607 = vrot.lane.b32.xlu0 %v1582, 24
      %v1608 = vpop.permute.xlu0 %1607
      %v1611 = vsel %vm751, %v1260, %v1590
      %v1612 = vsel %vm751, %v1306, %v1592
      %vm1613 = vcmask 130048
      %v1614 = vsel %vm1613, %v1611, %v1598
      %v1615 = vsel %vm1613, %v1612, %v1600
      %vm1616 = vcmask 195584
      %v1617 = vsel %vm1616, %v1614, %v1606
      %v1618 = vsel %vm1616, %v1615, %v1608
      %v1621 = vcombine.low %v1617, %v1618
      %v1623 = vpack.c.bf16 %v1621, %v1621
      %v1624 = vld [vmem:[%s8] sm:$0xf]
      %v1625 = vld [vmem:[%s8 + $0x4] sm:$0xf]
      %v1626 = vld [vmem:[%s8 + $0x8] sm:$0xf]
      %v1627 = vld [vmem:[%s8 + $0xc] sm:$0xf]
      %v1628 = vld [vmem:[%s9] sm:$0x1]
      %v1630 = vlaneseq
      %v1631 = vshrl.u32 %v1630, 7
      %v1632 = vsub.s32 0, %v1631
      %v1633 = vrot.slane %v1628, %v1632
      %v1639 = vunpack.c.l.b16 %v1624
      %v1640 = vunpack.c.l.b16 %v1625
      %v1641 = vunpack.c.l.b16 %v1626
      %v1642 = vunpack.c.l.b16 %v1627
      %v1643 = vpack.c.b16 %v1640, %v1639
      %v1644 = vpack.c.b16 %v1642, %v1641
      %v1648 = vsel %vm506, %v1623, 0
      %1650 = vmatprep.subr.bf16.mxu0 0
      %1651 = vmatpush1.bf16.msra.mxu0 %v1643
      %1652 = vmatprep.subr.bf16.mxu0 0
      %1653 = vmatpush1.bf16.msra.mxu0 %v1644
      %1654 = vmatprep.subr.bf16.mxu0 0
      %1655 = vmatpush1.bf16.msra.mxu0 0
      %1656 = vmatprep.subr.bf16.mxu0 0
      %1657 = vmatpush1.bf16.msra.mxu0 0
      %1658 = vmatprep.subr.bf16.mxu0 0
      %1659 = vmatpush1.bf16.msra.mxu0 0
      %1660 = vmatprep.subr.bf16.mxu0 0
      %1661 = vmatpush1.bf16.msra.mxu0 0
      %1662 = vmatprep.subr.bf16.mxu0 0
      %1663 = vmatpush1.bf16.msra.mxu0 0
      %1664 = vmatprep.subr.bf16.mxu0 0
      %1665 = vmatpush1.bf16.msra.mxu0 0
      %1666 = vmatprep.subr.bf16.mxu0 0
      %1667 = vmatpush1.bf16.msra.mxu0 0
      %1668 = vmatprep.subr.bf16.mxu0 0
      %1669 = vmatpush1.bf16.msra.mxu0 0
      %1670 = vmatprep.subr.bf16.mxu0 0
      %1671 = vmatpush1.bf16.msra.mxu0 0
      %1672 = vmatprep.subr.bf16.mxu0 0
      %1673 = vmatpush1.bf16.msra.mxu0 0
      %1674 = vmatprep.subr.bf16.mxu0 0
      %1675 = vmatpush1.bf16.msra.mxu0 0
      %1676 = vmatprep.subr.bf16.mxu0 0
      %1677 = vmatpush1.bf16.msra.mxu0 0
      %1678 = vmatprep.subr.bf16.mxu0 0
      %1679 = vmatpush1.bf16.msra.mxu0 0
      %1680 = vmatprep.subr.bf16.mxu0 0
      %1681 = vmatpush1.bf16.msra.mxu0 0
      %1682 = vmatprep.mubr.bf16.mxu0 0
      %1683 = vmatmul.mubr.bf16.gmra.mrb[0].mxu0 %v1648
      %v1684 = vpop.f32.mrb[0].mxu0
      %v1685 = vadd.f32 %v1633, %v1684
      %v1686 = vpop.f32.mrb[0].mxu0
      %v1687 = vpop.f32.mrb[0].mxu0
      %v1688 = vpop.f32.mrb[0].mxu0
      %1689 = vdwg.mxu0
      %v1690 = vadd.f32 %v482, %v1685
      %v1691 = vsel %vm506, %v1690, 0.0
      %v1692 = vrot.slane %v1691, 4
      %v1693 = vadd.f32 %v1691, %v1692
      %v1694 = vrot.slane %v1693, 2
      %v1695 = vadd.f32 %v1693, %v1694
      %v1696 = vrot.slane %v1695, 1
      %v1697 = vadd.f32 %v1695, %v1696
      %v1698 = vmul.f32 %v1697, 0.125
      %v1699 = vsub.f32 %v1690, %v1698
      %v1700 = vmul.f32 %v1699, %v1699
      %v1701 = vsel %vm506, %v1700, 0.0
      %v1702 = vrot.slane %v1701, 4
      %v1703 = vadd.f32 %v1701, %v1702
      %v1704 = vrot.slane %v1703, 2
      %v1705 = vadd.f32 %v1703, %v1704
      %v1706 = vrot.slane %v1705, 1
      %v1707 = vadd.f32 %v1705, %v1706
      %v1708 = vmul.f32 %v1707, 0.125
      %v1709 = vadd.f32 %v1708, 1e-05
      %v1710 = vrsqrt.pop %v1709
      %v1711 = vmul.f32 %v1699, %v1710
      %v1712 = vpack.c.bf16 %v1711, %v1711
      %v1713 = vld [vmem:[%s10] sm:$0xf]
      %v1714 = vld [vmem:[%s10 + $0x4] sm:$0xf]
      %v1715 = vld [vmem:[%s10 + $0x8] sm:$0xf]
      %v1716 = vld [vmem:[%s10 + $0xc] sm:$0xf]
      %v1717 = vld [vmem:[%s11] sm:$0x1]
      %v1719 = vlaneseq
      %v1720 = vshrl.u32 %v1719, 7
      %v1721 = vsub.s32 0, %v1720
      %v1722 = vrot.slane %v1717, %v1721
      %v1728 = vunpack.c.l.b16 %v1713
      %v1729 = vunpack.c.l.b16 %v1714
      %v1730 = vunpack.c.l.b16 %v1715
      %v1731 = vunpack.c.l.b16 %v1716
      %v1732 = vpack.c.b16 %v1729, %v1728
      %v1733 = vpack.c.b16 %v1731, %v1730
      %v1737 = vsel %vm506, %v1712, 0
      %1739 = vmatprep.subr.bf16.mxu0 0
      %1740 = vmatpush1.bf16.msra.mxu0 %v1732
      %1741 = vmatprep.subr.bf16.mxu0 0
      %1742 = vmatpush1.bf16.msra.mxu0 %v1733
      %1743 = vmatprep.subr.bf16.mxu0 0
      %1744 = vmatpush1.bf16.msra.mxu0 0
      %1745 = vmatprep.subr.bf16.mxu0 0
      %1746 = vmatpush1.bf16.msra.mxu0 0
      %1747 = vmatprep.subr.bf16.mxu0 0
      %1748 = vmatpush1.bf16.msra.mxu0 0
      %1749 = vmatprep.subr.bf16.mxu0 0
      %1750 = vmatpush1.bf16.msra.mxu0 0
      %1751 = vmatprep.subr.bf16.mxu0 0
      %1752 = vmatpush1.bf16.msra.mxu0 0
      %1753 = vmatprep.subr.bf16.mxu0 0
      %1754 = vmatpush1.bf16.msra.mxu0 0
      %1755 = vmatprep.subr.bf16.mxu0 0
      %1756 = vmatpush1.bf16.msra.mxu0 0
      %1757 = vmatprep.subr.bf16.mxu0 0
      %1758 = vmatpush1.bf16.msra.mxu0 0
      %1759 = vmatprep.subr.bf16.mxu0 0
      %1760 = vmatpush1.bf16.msra.mxu0 0
      %1761 = vmatprep.subr.bf16.mxu0 0
      %1762 = vmatpush1.bf16.msra.mxu0 0
      %1763 = vmatprep.subr.bf16.mxu0 0
      %1764 = vmatpush1.bf16.msra.mxu0 0
      %1765 = vmatprep.subr.bf16.mxu0 0
      %1766 = vmatpush1.bf16.msra.mxu0 0
      %1767 = vmatprep.subr.bf16.mxu0 0
      %1768 = vmatpush1.bf16.msra.mxu0 0
      %1769 = vmatprep.subr.bf16.mxu0 0
      %1770 = vmatpush1.bf16.msra.mxu0 0
      %1771 = vmatprep.mubr.bf16.mxu0 0
      %1772 = vmatmul.mubr.bf16.gmra.mrb[0].mxu0 %v1737
      %v1773 = vpop.f32.mrb[0].mxu0
      %v1774 = vadd.f32 %v1722, %v1773
      %v1775 = vpop.f32.mrb[0].mxu0
      %v1776 = vpop.f32.mrb[0].mxu0
      %v1777 = vpop.f32.mrb[0].mxu0
      %1778 = vdwg.mxu0
      %v1779 = vmax.f32 %v1774, 0.0
      %v1780 = vpack.c.bf16 %v1779, %v1779
      %v1781 = vld [vmem:[%s12] sm:$0xf]
      %v1782 = vld [vmem:[%s12 + $0x4] sm:$0xf]
      %v1783 = vld [vmem:[%s12 + $0x8] sm:$0xf]
      %v1784 = vld [vmem:[%s12 + $0xc] sm:$0xf]
      %v1785 = vld [vmem:[%s12 + $0x10] sm:$0xf]
      %v1786 = vld [vmem:[%s12 + $0x14] sm:$0xf]
      %v1787 = vld [vmem:[%s12 + $0x18] sm:$0xf]
      %v1788 = vld [vmem:[%s12 + $0x1c] sm:$0xf]
      %v1789 = vld [vmem:[%s13] sm:$0x1]
      %v1791 = vlaneseq
      %v1792 = vshrl.u32 %v1791, 7
      %v1793 = vsub.s32 0, %v1792
      %v1794 = vrot.slane %v1789, %v1793
      %v1804 = vunpack.c.l.b16 %v1781
      %v1805 = vunpack.c.l.b16 %v1782
      %v1806 = vunpack.c.l.b16 %v1783
      %v1807 = vunpack.c.l.b16 %v1784
      %v1808 = vunpack.c.l.b16 %v1785
      %v1809 = vunpack.c.l.b16 %v1786
      %v1810 = vunpack.c.l.b16 %v1787
      %v1811 = vunpack.c.l.b16 %v1788
      %v1812 = vpack.c.b16 %v1805, %v1804
      %v1813 = vpack.c.b16 %v1807, %v1806
      %v1814 = vpack.c.b16 %v1809, %v1808
      %v1815 = vpack.c.b16 %v1811, %v1810
      %vm1820 = vcmask 523264
      %v1822 = vsel %vm1820, %v1780, 0
      %1824 = vmatprep.subr.bf16.mxu0 0
      %1825 = vmatpush1.bf16.msra.mxu0 %v1812
      %1826 = vmatprep.subr.bf16.mxu0 0
      %1827 = vmatpush1.bf16.msra.mxu0 %v1813
      %1828 = vmatprep.subr.bf16.mxu0 0
      %1829 = vmatpush1.bf16.msra.mxu0 %v1814
      %1830 = vmatprep.subr.bf16.mxu0 0
      %1831 = vmatpush1.bf16.msra.mxu0 %v1815
      %1832 = vmatprep.subr.bf16.mxu0 0
      %1833 = vmatpush1.bf16.msra.mxu0 0
      %1834 = vmatprep.subr.bf16.mxu0 0
      %1835 = vmatpush1.bf16.msra.mxu0 0
      %1836 = vmatprep.subr.bf16.mxu0 0
      %1837 = vmatpush1.bf16.msra.mxu0 0
      %1838 = vmatprep.subr.bf16.mxu0 0
      %1839 = vmatpush1.bf16.msra.mxu0 0
      %1840 = vmatprep.subr.bf16.mxu0 0
      %1841 = vmatpush1.bf16.msra.mxu0 0
      %1842 = vmatprep.subr.bf16.mxu0 0
      %1843 = vmatpush1.bf16.msra.mxu0 0
      %1844 = vmatprep.subr.bf16.mxu0 0
      %1845 = vmatpush1.bf16.msra.mxu0 0
      %1846 = vmatprep.subr.bf16.mxu0 0
      %1847 = vmatpush1.bf16.msra.mxu0 0
      %1848 = vmatprep.subr.bf16.mxu0 0
      %1849 = vmatpush1.bf16.msra.mxu0 0
      %1850 = vmatprep.subr.bf16.mxu0 0
      %1851 = vmatpush1.bf16.msra.mxu0 0
      %1852 = vmatprep.subr.bf16.mxu0 0
      %1853 = vmatpush1.bf16.msra.mxu0 0
      %1854 = vmatprep.subr.bf16.mxu0 0
      %1855 = vmatpush1.bf16.msra.mxu0 0
      %1856 = vmatprep.mubr.bf16.mxu0 0
      %1857 = vmatmul.mubr.bf16.gmra.mrb[0].mxu0 %v1822
      %v1858 = vpop.f32.mrb[0].mxu0
      %v1859 = vadd.f32 %v1794, %v1858
      %v1860 = vpop.f32.mrb[0].mxu0
      %v1861 = vpop.f32.mrb[0].mxu0
      %v1862 = vpop.f32.mrb[0].mxu0
      %1863 = vdwg.mxu0
      %v1864 = vadd.f32 %v1711, %v1859
      %v1865 = vsel %vm506, %v1864, 0.0
      %v1866 = vrot.slane %v1865, 4
      %v1867 = vadd.f32 %v1865, %v1866
      %v1868 = vrot.slane %v1867, 2
      %v1869 = vadd.f32 %v1867, %v1868
      %v1870 = vrot.slane %v1869, 1
      %v1871 = vadd.f32 %v1869, %v1870
      %v1872 = vmul.f32 %v1871, 0.125
      %v1873 = vsub.f32 %v1864, %v1872
      %v1874 = vmul.f32 %v1873, %v1873
      %v1875 = vsel %vm506, %v1874, 0.0
      %v1876 = vrot.slane %v1875, 4
      %v1877 = vadd.f32 %v1875, %v1876
      %v1878 = vrot.slane %v1877, 2
      %v1879 = vadd.f32 %v1877, %v1878
      %v1880 = vrot.slane %v1879, 1
      %v1881 = vadd.f32 %v1879, %v1880
      %v1882 = vmul.f32 %v1881, 0.125
      %v1883 = vadd.f32 %v1882, 1e-05
      %v1884 = vrsqrt.pop %v1883
      %v1885 = vmul.f32 %v1873, %v1884
      %v1886 = vpack.c.bf16 %v1885, %v1885
      %vm1887 = vcmask 257024
      %1888 = vst.msk [vmem:[%s479] sm:$0xf] %vm1887, %v1886
      %p1889 = scmp.lt.s32.totalorder %s25, 1
      %s1890 = scalar_select %p1889, %s25, 1
      %s1891 = smul.addr %s1890, 4
      %s1892 = scalar_lea.vmem %s14, %s1891
      // Predicated region
      $region77: #{eut_single_stage.7} parent=75 // pred_check
        %p1893 = pneg %p347
      $region78: #{eut_single_stage.7} parent=75 // pred_check_branch
        %1895 = sbr.rel (%p1893) target = $region80
      $region79: #{eut_single_stage.7} parent=75 // pred_region
        _
      $region80: #{eut_single_stage.7} parent=75 // pred_fallthru
        _
    $region76: #{eut_single_stage.7} parent=5 // pred_fallthru
      _
    %p1896 = scmp.le.s32.totalorder 2, %s20
    // Predicated region
    $region81: #{eut_single_stage.7} parent=5 // pred_check
      %p1897 = pneg %p1896
    $region82: #{eut_single_stage.7} parent=5 // pred_check_branch
      %1899 = sbr.rel (%p1897) target = $region84
    $region83: #{eut_single_stage.7} parent=5 // pred_region
      %s1900 = ssub.s32 %s20, 2
      // Predicated region
      $region85: #{eut_single_stage.7} parent=83 // pred_check
        %p1901 = pneg %p353
      $region86: #{eut_single_stage.7} parent=83 // pred_check_branch
        %1903 = sbr.rel (%p1901) target = $region88
      $region87: #{eut_single_stage.7} parent=83 // pred_region
        %p1904 = scmp.lt.s32.totalorder %s26, 1
        %s1905 = scalar_select %p1904, %s26, 1
        %s1906 = smul.addr %s1905, 4
        %s1907 = scalar_lea.vmem %s14, %s1906
      $region88: #{eut_single_stage.7} parent=83 // pred_fallthru
        _
    $region84: #{eut_single_stage.7} parent=5 // pred_fallthru
      _
  $region6: #{eut_single_stage.7} parent=0 // loop_footer
    %s24 = sadd.s32 1, %s20
  $region7: #{eut_single_stage.7} parent=0 // loop_footer_branch
    %19 = sbr.rel target = $region3
  $region8: #{eut_single_stage.7} parent=0 // loop_exit
    _

// kernel: eut_single_stage.8
$region0: #{eut_single_stage.8}
  #allocation0 [shape = 'u32[]', space=smem, size = 0x4, offset = 0x4, fixed_abs, tag = 'smem constant byte address 0x4 - core index']
  #allocation1 [shape = 'u32[144,128]{1,0:T(1,128)}', space=vmem, size = 0x12000, scoped, tag = 'internal scratch']
  %s0 = inlined_call_operand.vmem [shape: f32[2,1,1,4], index: 0, kind: input, shape index: {}]
  %s1 = inlined_call_operand.vmem [shape: bf16[2,4,32], index: 1, kind: input, shape index: {}]
  %s2 = inlined_call_operand.vmem [shape: bf16[32,32], index: 2, kind: input, shape index: {}]
  %s3 = inlined_call_operand.vmem [shape: f32[1,32], index: 3, kind: input, shape index: {}]
  %s4 = inlined_call_operand.vmem [shape: bf16[32,32], index: 4, kind: input, shape index: {}]
  %s5 = inlined_call_operand.vmem [shape: f32[1,32], index: 5, kind: input, shape index: {}]
  %s6 = inlined_call_operand.vmem [shape: bf16[32,32], index: 6, kind: input, shape index: {}]
  %s7 = inlined_call_operand.vmem [shape: f32[1,32], index: 7, kind: input, shape index: {}]
  %s8 = inlined_call_operand.vmem [shape: bf16[32,32], index: 8, kind: input, shape index: {}]
  %s9 = inlined_call_operand.vmem [shape: f32[1,32], index: 9, kind: input, shape index: {}]
  %s10 = inlined_call_operand.vmem [shape: bf16[32,64], index: 10, kind: input, shape index: {}]
  %s11 = inlined_call_operand.vmem [shape: f32[1,64], index: 11, kind: input, shape index: {}]
  %s12 = inlined_call_operand.vmem [shape: bf16[64,32], index: 12, kind: input, shape index: {}]
  %s13 = inlined_call_operand.vmem [shape: f32[1,32], index: 13, kind: input, shape index: {}]
  %s14 = inlined_call_operand.vmem [shape: bf16[2,4,32], index: 14, kind: output, shape index: {}]
  %s15 = sld [smem:[#allocation0]]
  $region89: #{eut_single_stage.8} parent=0
    _
  %s17 = ssub.s32 1, %s15
  %s18 = scalar_select 0, %s17, %s15
  loop: start=0, step=1, limit=4
  $region2: #{eut_single_stage.8} parent=0 // loop_pre_header
    _
  $region3: #{eut_single_stage.8} parent=0 // loop_header
    %s20 = sphi 0, %s24
    %p21 = scmp.ge.s32.totalorder %s20, 4
    %s30 = sphi 0, %s32
    %s33 = sphi 0, %s30
    %s34 = sphi 0, %s33
    %s50 = sphi 0, %s34
    %s56 = sphi 0, %s58
    %s59 = sphi 0, %s56
    %s60 = sphi 0, %s59
    %s76 = sphi 0, %s60
    %s80 = sphi 0, %s80
    %s82 = sphi 0, %s80
    %s83 = sphi 0, %s82
    %s97 = sphi 0, %s83
    %s101 = sphi 0, %s101
    %s103 = sphi 0, %s101
    %s104 = sphi 0, %s103
    %s118 = sphi 0, %s104
    %s122 = sphi 0, %s122
    %s124 = sphi 0, %s122
    %s125 = sphi 0, %s124
    %s139 = sphi 0, %s125
    %s143 = sphi 0, %s143
    %s145 = sphi 0, %s143
    %s146 = sphi 0, %s145
    %s160 = sphi 0, %s146
    %s164 = sphi 0, %s164
    %s166 = sphi 0, %s164
    %s167 = sphi 0, %s166
    %s181 = sphi 0, %s167
    %s185 = sphi 0, %s185
    %s187 = sphi 0, %s185
    %s188 = sphi 0, %s187
    %s202 = sphi 0, %s188
    %s206 = sphi 0, %s206
    %s208 = sphi 0, %s206
    %s209 = sphi 0, %s208
    %s223 = sphi 0, %s209
    %s227 = sphi 0, %s227
    %s229 = sphi 0, %s227
    %s230 = sphi 0, %s229
    %s244 = sphi 0, %s230
    %s248 = sphi 0, %s248
    %s250 = sphi 0, %s248
    %s251 = sphi 0, %s250
    %s265 = sphi 0, %s251
    %s269 = sphi 0, %s269
    %s271 = sphi 0, %s269
    %s272 = sphi 0, %s271
    %s286 = sphi 0, %s272
    %s290 = sphi 0, %s290
    %s292 = sphi 0, %s290
    %s293 = sphi 0, %s292
    %s307 = sphi 0, %s293
    %s311 = sphi 0, %s311
    %s313 = sphi 0, %s311
    %s314 = sphi 0, %s313
    %s328 = sphi 0, %s314
    %s334 = sphi 0, %s336
    %s337 = sphi 0, %s334
    %s338 = sphi 0, %s337
    %s354 = sphi 0, %s338
  $region4: #{eut_single_stage.8} parent=0 // loop_header_branch
    %23 = sbr.rel (%p21) target = $region8
  $region5: #{eut_single_stage.8} parent=0 // loop_body
    %s25 = ssub.s32 %s20, 1
    %s26 = ssub.s32 %s20, 2
    %s27 = sadd.s32 %s20, 1
    %s28 = ssub.s32 %s20, %s27
    %p29 = scmp.eq.s32.totalorder %s28, 0
    %s31 = sadd.s32 %s30, 1
    %s32 = scalar_select %p29, %s30, %s31
    %p35 = pneg %p29
    %p36 = scmp.eq.s32.totalorder %s20, 1
    %p37 = por %p35, %p36
    %p38 = scmp.ne.s32.totalorder %s30, %s33
    %p39 = scmp.eq.s32.totalorder %s20, 0
    %p40 = por %p38, %p39
    %p41 = scmp.ne.s32.totalorder %s30, %s33
    %p42 = scmp.eq.s32.totalorder %s25, 1
    %p43 = por %p41, %p42
    %p44 = scmp.ne.s32.totalorder %s33, %s34
    %p45 = scmp.eq.s32.totalorder %s25, 0
    %p46 = por %p44, %p45
    %p47 = scmp.ne.s32.totalorder %s33, %s34
    %p48 = scmp.eq.s32.totalorder %s26, 1
    %p49 = por %p47, %p48
    %p51 = scmp.ne.s32.totalorder %s34, %s50
    %p52 = scmp.eq.s32.totalorder %s26, 0
    %p53 = por %p51, %p52
    %s54 = ssub.s32 %s20, %s27
    %p55 = scmp.eq.s32.totalorder %s54, 0
    %s57 = sadd.s32 %s56, 1
    %s58 = scalar_select %p55, %s56, %s57
    %p61 = pneg %p55
    %p62 = scmp.eq.s32.totalorder %s20, 1
    %p63 = por %p61, %p62
    %p64 = scmp.ne.s32.totalorder %s56, %s59
    %p65 = scmp.eq.s32.totalorder %s20, 0
    %p66 = por %p64, %p65
    %p67 = scmp.ne.s32.totalorder %s56, %s59
    %p68 = scmp.eq.s32.totalorder %s25, 1
    %p69 = por %p67, %p68
    %p70 = scmp.ne.s32.totalorder %s59, %s60
    %p71 = scmp.eq.s32.totalorder %s25, 0
    %p72 = por %p70, %p71
    %p73 = scmp.ne.s32.totalorder %s59, %s60
    %p74 = scmp.eq.s32.totalorder %s26, 1
    %p75 = por %p73, %p74
    %p77 = scmp.ne.s32.totalorder %s60, %s76
    %p78 = scmp.eq.s32.totalorder %s26, 0
    %p79 = por %p77, %p78
    %s81 = sadd.s32 %s80, 1
    %p84 = scmp.eq.s32.totalorder %s20, 1
    %p85 = scmp.ne.s32.totalorder %s80, %s82
    %p86 = scmp.eq.s32.totalorder %s20, 0
    %p87 = por %p85, %p86
    %p88 = scmp.ne.s32.totalorder %s80, %s82
    %p89 = scmp.eq.s32.totalorder %s25, 1
    %p90 = por %p88, %p89
    %p91 = scmp.ne.s32.totalorder %s82, %s83
    %p92 = scmp.eq.s32.totalorder %s25, 0
    %p93 = por %p91, %p92
    %p94 = scmp.ne.s32.totalorder %s82, %s83
    %p95 = scmp.eq.s32.totalorder %s26, 1
    %p96 = por %p94, %p95
    %p98 = scmp.ne.s32.totalorder %s83, %s97
    %p99 = scmp.eq.s32.totalorder %s26, 0
    %p100 = por %p98, %p99
    %s102 = sadd.s32 %s101, 1
    %p105 = scmp.eq.s32.totalorder %s20, 1
    %p106 = scmp.ne.s32.totalorder %s101, %s103
    %p107 = scmp.eq.s32.totalorder %s20, 0
    %p108 = por %p106, %p107
    %p109 = scmp.ne.s32.totalorder %s101, %s103
    %p110 = scmp.eq.s32.totalorder %s25, 1
    %p111 = por %p109, %p110
    %p112 = scmp.ne.s32.totalorder %s103, %s104
    %p113 = scmp.eq.s32.totalorder %s25, 0
    %p114 = por %p112, %p113
    %p115 = scmp.ne.s32.totalorder %s103, %s104
    %p116 = scmp.eq.s32.totalorder %s26, 1
    %p117 = por %p115, %p116
    %p119 = scmp.ne.s32.totalorder %s104, %s118
    %p120 = scmp.eq.s32.totalorder %s26, 0
    %p121 = por %p119, %p120
    %s123 = sadd.s32 %s122, 1
    %p126 = scmp.eq.s32.totalorder %s20, 1
    %p127 = scmp.ne.s32.totalorder %s122, %s124
    %p128 = scmp.eq.s32.totalorder %s20, 0
    %p129 = por %p127, %p128
    %p130 = scmp.ne.s32.totalorder %s122, %s124
    %p131 = scmp.eq.s32.totalorder %s25, 1
    %p132 = por %p130, %p131
    %p133 = scmp.ne.s32.totalorder %s124, %s125
    %p134 = scmp.eq.s32.totalorder %s25, 0
    %p135 = por %p133, %p134
    %p136 = scmp.ne.s32.totalorder %s124, %s125
    %p137 = scmp.eq.s32.totalorder %s26, 1
    %p138 = por %p136, %p137
    %p140 = scmp.ne.s32.totalorder %s125, %s139
    %p141 = scmp.eq.s32.totalorder %s26, 0
    %p142 = por %p140, %p141
    %s144 = sadd.s32 %s143, 1
    %p147 = scmp.eq.s32.totalorder %s20, 1
    %p148 = scmp.ne.s32.totalorder %s143, %s145
    %p149 = scmp.eq.s32.totalorder %s20, 0
    %p150 = por %p148, %p149
    %p151 = scmp.ne.s32.totalorder %s143, %s145
    %p152 = scmp.eq.s32.totalorder %s25, 1
    %p153 = por %p151, %p152
    %p154 = scmp.ne.s32.totalorder %s145, %s146
    %p155 = scmp.eq.s32.totalorder %s25, 0
    %p156 = por %p154, %p155
    %p157 = scmp.ne.s32.totalorder %s145, %s146
    %p158 = scmp.eq.s32.totalorder %s26, 1
    %p159 = por %p157, %p158
    %p161 = scmp.ne.s32.totalorder %s146, %s160
    %p162 = scmp.eq.s32.totalorder %s26, 0
    %p163 = por %p161, %p162
    %s165 = sadd.s32 %s164, 1
    %p168 = scmp.eq.s32.totalorder %s20, 1
    %p169 = scmp.ne.s32.totalorder %s164, %s166
    %p170 = scmp.eq.s32.totalorder %s20, 0
    %p171 = por %p169, %p170
    %p172 = scmp.ne.s32.totalorder %s164, %s166
    %p173 = scmp.eq.s32.totalorder %s25, 1
    %p174 = por %p172, %p173
    %p175 = scmp.ne.s32.totalorder %s166, %s167
    %p176 = scmp.eq.s32.totalorder %s25, 0
    %p177 = por %p175, %p176
    %p178 = scmp.ne.s32.totalorder %s166, %s167
    %p179 = scmp.eq.s32.totalorder %s26, 1
    %p180 = por %p178, %p179
    %p182 = scmp.ne.s32.totalorder %s167, %s181
    %p183 = scmp.eq.s32.totalorder %s26, 0
    %p184 = por %p182, %p183
    %s186 = sadd.s32 %s185, 1
    %p189 = scmp.eq.s32.totalorder %s20, 1
    %p190 = scmp.ne.s32.totalorder %s185, %s187
    %p191 = scmp.eq.s32.totalorder %s20, 0
    %p192 = por %p190, %p191
    %p193 = scmp.ne.s32.totalorder %s185, %s187
    %p194 = scmp.eq.s32.totalorder %s25, 1
    %p195 = por %p193, %p194
    %p196 = scmp.ne.s32.totalorder %s187, %s188
    %p197 = scmp.eq.s32.totalorder %s25, 0
    %p198 = por %p196, %p197
    %p199 = scmp.ne.s32.totalorder %s187, %s188
    %p200 = scmp.eq.s32.totalorder %s26, 1
    %p201 = por %p199, %p200
    %p203 = scmp.ne.s32.totalorder %s188, %s202
    %p204 = scmp.eq.s32.totalorder %s26, 0
    %p205 = por %p203, %p204
    %s207 = sadd.s32 %s206, 1
    %p210 = scmp.eq.s32.totalorder %s20, 1
    %p211 = scmp.ne.s32.totalorder %s206, %s208
    %p212 = scmp.eq.s32.totalorder %s20, 0
    %p213 = por %p211, %p212
    %p214 = scmp.ne.s32.totalorder %s206, %s208
    %p215 = scmp.eq.s32.totalorder %s25, 1
    %p216 = por %p214, %p215
    %p217 = scmp.ne.s32.totalorder %s208, %s209
    %p218 = scmp.eq.s32.totalorder %s25, 0
    %p219 = por %p217, %p218
    %p220 = scmp.ne.s32.totalorder %s208, %s209
    %p221 = scmp.eq.s32.totalorder %s26, 1
    %p222 = por %p220, %p221
    %p224 = scmp.ne.s32.totalorder %s209, %s223
    %p225 = scmp.eq.s32.totalorder %s26, 0
    %p226 = por %p224, %p225
    %s228 = sadd.s32 %s227, 1
    %p231 = scmp.eq.s32.totalorder %s20, 1
    %p232 = scmp.ne.s32.totalorder %s227, %s229
    %p233 = scmp.eq.s32.totalorder %s20, 0
    %p234 = por %p232, %p233
    %p235 = scmp.ne.s32.totalorder %s227, %s229
    %p236 = scmp.eq.s32.totalorder %s25, 1
    %p237 = por %p235, %p236
    %p238 = scmp.ne.s32.totalorder %s229, %s230
    %p239 = scmp.eq.s32.totalorder %s25, 0
    %p240 = por %p238, %p239
    %p241 = scmp.ne.s32.totalorder %s229, %s230
    %p242 = scmp.eq.s32.totalorder %s26, 1
    %p243 = por %p241, %p242
    %p245 = scmp.ne.s32.totalorder %s230, %s244
    %p246 = scmp.eq.s32.totalorder %s26, 0
    %p247 = por %p245, %p246
    %s249 = sadd.s32 %s248, 1
    %p252 = scmp.eq.s32.totalorder %s20, 1
    %p253 = scmp.ne.s32.totalorder %s248, %s250
    %p254 = scmp.eq.s32.totalorder %s20, 0
    %p255 = por %p253, %p254
    %p256 = scmp.ne.s32.totalorder %s248, %s250
    %p257 = scmp.eq.s32.totalorder %s25, 1
    %p258 = por %p256, %p257
    %p259 = scmp.ne.s32.totalorder %s250, %s251
    %p260 = scmp.eq.s32.totalorder %s25, 0
    %p261 = por %p259, %p260
    %p262 = scmp.ne.s32.totalorder %s250, %s251
    %p263 = scmp.eq.s32.totalorder %s26, 1
    %p264 = por %p262, %p263
    %p266 = scmp.ne.s32.totalorder %s251, %s265
    %p267 = scmp.eq.s32.totalorder %s26, 0
    %p268 = por %p266, %p267
    %s270 = sadd.s32 %s269, 1
    %p273 = scmp.eq.s32.totalorder %s20, 1
    %p274 = scmp.ne.s32.totalorder %s269, %s271
    %p275 = scmp.eq.s32.totalorder %s20, 0
    %p276 = por %p274, %p275
    %p277 = scmp.ne.s32.totalorder %s269, %s271
    %p278 = scmp.eq.s32.totalorder %s25, 1
    %p279 = por %p277, %p278
    %p280 = scmp.ne.s32.totalorder %s271, %s272
    %p281 = scmp.eq.s32.totalorder %s25, 0
    %p282 = por %p280, %p281
    %p283 = scmp.ne.s32.totalorder %s271, %s272
    %p284 = scmp.eq.s32.totalorder %s26, 1
    %p285 = por %p283, %p284
    %p287 = scmp.ne.s32.totalorder %s272, %s286
    %p288 = scmp.eq.s32.totalorder %s26, 0
    %p289 = por %p287, %p288
    %s291 = sadd.s32 %s290, 1
    %p294 = scmp.eq.s32.totalorder %s20, 1
    %p295 = scmp.ne.s32.totalorder %s290, %s292
    %p296 = scmp.eq.s32.totalorder %s20, 0
    %p297 = por %p295, %p296
    %p298 = scmp.ne.s32.totalorder %s290, %s292
    %p299 = scmp.eq.s32.totalorder %s25, 1
    %p300 = por %p298, %p299
    %p301 = scmp.ne.s32.totalorder %s292, %s293
    %p302 = scmp.eq.s32.totalorder %s25, 0
    %p303 = por %p301, %p302
    %p304 = scmp.ne.s32.totalorder %s292, %s293
    %p305 = scmp.eq.s32.totalorder %s26, 1
    %p306 = por %p304, %p305
    %p308 = scmp.ne.s32.totalorder %s293, %s307
    %p309 = scmp.eq.s32.totalorder %s26, 0
    %p310 = por %p308, %p309
    %s312 = sadd.s32 %s311, 1
    %p315 = scmp.eq.s32.totalorder %s20, 1
    %p316 = scmp.ne.s32.totalorder %s311, %s313
    %p317 = scmp.eq.s32.totalorder %s20, 0
    %p318 = por %p316, %p317
    %p319 = scmp.ne.s32.totalorder %s311, %s313
    %p320 = scmp.eq.s32.totalorder %s25, 1
    %p321 = por %p319, %p320
    %p322 = scmp.ne.s32.totalorder %s313, %s314
    %p323 = scmp.eq.s32.totalorder %s25, 0
    %p324 = por %p322, %p323
    %p325 = scmp.ne.s32.totalorder %s313, %s314
    %p326 = scmp.eq.s32.totalorder %s26, 1
    %p327 = por %p325, %p326
    %p329 = scmp.ne.s32.totalorder %s314, %s328
    %p330 = scmp.eq.s32.totalorder %s26, 0
    %p331 = por %p329, %p330
    %s332 = ssub.s32 %s20, %s27
    %p333 = scmp.eq.s32.totalorder %s332, 0
    %s335 = sadd.s32 %s334, 1
    %s336 = scalar_select %p333, %s334, %s335
    %p339 = pneg %p333
    %p340 = scmp.eq.s32.totalorder %s20, 1
    %p341 = por %p339, %p340
    %p342 = scmp.ne.s32.totalorder %s334, %s337
    %p343 = scmp.eq.s32.totalorder %s20, 0
    %p344 = por %p342, %p343
    %p345 = scmp.ne.s32.totalorder %s334, %s337
    %p346 = scmp.eq.s32.totalorder %s25, 1
    %p347 = por %p345, %p346
    %p348 = scmp.ne.s32.totalorder %s337, %s338
    %p349 = scmp.eq.s32.totalorder %s25, 0
    %p350 = por %p348, %p349
    %p351 = scmp.ne.s32.totalorder %s337, %s338
    %p352 = scmp.eq.s32.totalorder %s26, 1
    %p353 = por %p351, %p352
    %p355 = scmp.ne.s32.totalorder %s338, %s354
    %p356 = scmp.eq.s32.totalorder %s26, 0
    %p357 = por %p355, %p356
    %p358 = scmp.le.s32.totalorder 1, %s20
    %p359 = scmp.lt.s32.totalorder %s20, 3
    %p360 = pnand %p358, %p359
    %p361 = pneg %p360
    // Predicated region
    $region9: #{eut_single_stage.8} parent=5 // pred_check
      _
    $region10: #{eut_single_stage.8} parent=5 // pred_check_branch
      %363 = sbr.rel (%p360) target = $region12
    $region11: #{eut_single_stage.8} parent=5 // pred_region
      %s364 = ssub.s32 %s20, 1
      // Predicated region
      $region13: #{eut_single_stage.8} parent=11 // pred_check
        %p365 = pneg %p93
      $region14: #{eut_single_stage.8} parent=11 // pred_check_branch
        %367 = sbr.rel (%p365) target = $region16
      $region15: #{eut_single_stage.8} parent=11 // pred_region
        _
      $region16: #{eut_single_stage.8} parent=11 // pred_fallthru
        _
      // Predicated region
      $region17: #{eut_single_stage.8} parent=11 // pred_check
        %p368 = pneg %p114
      $region18: #{eut_single_stage.8} parent=11 // pred_check_branch
        %370 = sbr.rel (%p368) target = $region20
      $region19: #{eut_single_stage.8} parent=11 // pred_region
        _
      $region20: #{eut_single_stage.8} parent=11 // pred_fallthru
        _
      // Predicated region
      $region21: #{eut_single_stage.8} parent=11 // pred_check
        %p371 = pneg %p135
      $region22: #{eut_single_stage.8} parent=11 // pred_check_branch
        %373 = sbr.rel (%p371) target = $region24
      $region23: #{eut_single_stage.8} parent=11 // pred_region
        _
      $region24: #{eut_single_stage.8} parent=11 // pred_fallthru
        _
      // Predicated region
      $region25: #{eut_single_stage.8} parent=11 // pred_check
        %p374 = pneg %p156
      $region26: #{eut_single_stage.8} parent=11 // pred_check_branch
        %376 = sbr.rel (%p374) target = $region28
      $region27: #{eut_single_stage.8} parent=11 // pred_region
        _
      $region28: #{eut_single_stage.8} parent=11 // pred_fallthru
        _
      // Predicated region
      $region29: #{eut_single_stage.8} parent=11 // pred_check
        %p377 = pneg %p177
      $region30: #{eut_single_stage.8} parent=11 // pred_check_branch
        %379 = sbr.rel (%p377) target = $region32
      $region31: #{eut_single_stage.8} parent=11 // pred_region
        _
      $region32: #{eut_single_stage.8} parent=11 // pred_fallthru
        _
      // Predicated region
      $region33: #{eut_single_stage.8} parent=11 // pred_check
        %p380 = pneg %p198
      $region34: #{eut_single_stage.8} parent=11 // pred_check_branch
        %382 = sbr.rel (%p380) target = $region36
      $region35: #{eut_single_stage.8} parent=11 // pred_region
        _
      $region36: #{eut_single_stage.8} parent=11 // pred_fallthru
        _
      // Predicated region
      $region37: #{eut_single_stage.8} parent=11 // pred_check
        %p383 = pneg %p219
      $region38: #{eut_single_stage.8} parent=11 // pred_check_branch
        %385 = sbr.rel (%p383) target = $region40
      $region39: #{eut_single_stage.8} parent=11 // pred_region
        _
      $region40: #{eut_single_stage.8} parent=11 // pred_fallthru
        _
      // Predicated region
      $region41: #{eut_single_stage.8} parent=11 // pred_check
        %p386 = pneg %p240
      $region42: #{eut_single_stage.8} parent=11 // pred_check_branch
        %388 = sbr.rel (%p386) target = $region44
      $region43: #{eut_single_stage.8} parent=11 // pred_region
        _
      $region44: #{eut_single_stage.8} parent=11 // pred_fallthru
        _
      // Predicated region
      $region45: #{eut_single_stage.8} parent=11 // pred_check
        %p389 = pneg %p261
      $region46: #{eut_single_stage.8} parent=11 // pred_check_branch
        %391 = sbr.rel (%p389) target = $region48
      $region47: #{eut_single_stage.8} parent=11 // pred_region
        _
      $region48: #{eut_single_stage.8} parent=11 // pred_fallthru
        _
      // Predicated region
      $region49: #{eut_single_stage.8} parent=11 // pred_check
        %p392 = pneg %p282
      $region50: #{eut_single_stage.8} parent=11 // pred_check_branch
        %394 = sbr.rel (%p392) target = $region52
      $region51: #{eut_single_stage.8} parent=11 // pred_region
        _
      $region52: #{eut_single_stage.8} parent=11 // pred_fallthru
        _
      // Predicated region
      $region53: #{eut_single_stage.8} parent=11 // pred_check
        %p395 = pneg %p303
      $region54: #{eut_single_stage.8} parent=11 // pred_check_branch
        %397 = sbr.rel (%p395) target = $region56
      $region55: #{eut_single_stage.8} parent=11 // pred_region
        _
      $region56: #{eut_single_stage.8} parent=11 // pred_fallthru
        _
      // Predicated region
      $region57: #{eut_single_stage.8} parent=11 // pred_check
        %p398 = pneg %p324
      $region58: #{eut_single_stage.8} parent=11 // pred_check_branch
        %400 = sbr.rel (%p398) target = $region60
      $region59: #{eut_single_stage.8} parent=11 // pred_region
        _
      $region60: #{eut_single_stage.8} parent=11 // pred_fallthru
        _
    $region12: #{eut_single_stage.8} parent=5 // pred_fallthru
      _
    %p401 = scmp.lt.s32.totalorder %s20, 2
    // Predicated region
    $region61: #{eut_single_stage.8} parent=5 // pred_check
      %p402 = pneg %p401
    $region62: #{eut_single_stage.8} parent=5 // pred_check_branch
      %404 = sbr.rel (%p402) target = $region64
    $region63: #{eut_single_stage.8} parent=5 // pred_region
      // Predicated region
      $region65: #{eut_single_stage.8} parent=63 // pred_check
        %p405 = pneg %p40
      $region66: #{eut_single_stage.8} parent=63 // pred_check_branch
        %407 = sbr.rel (%p405) target = $region68
      $region67: #{eut_single_stage.8} parent=63 // pred_region
        %p408 = scmp.lt.s32.totalorder %s20, 1
        %s409 = scalar_select %p408, %s20, 1
        %s410 = scalar_lea.vmem %s0, %s409
      $region68: #{eut_single_stage.8} parent=63 // pred_fallthru
        _
      // Predicated region
      $region69: #{eut_single_stage.8} parent=63 // pred_check
        %p411 = pneg %p66
      $region70: #{eut_single_stage.8} parent=63 // pred_check_branch
        %413 = sbr.rel (%p411) target = $region72
      $region71: #{eut_single_stage.8} parent=63 // pred_region
        %p414 = scmp.lt.s32.totalorder %s20, 1
        %s415 = scalar_select %p414, %s20, 1
        %s416 = smul.addr %s415, 2
        %s417 = scalar_lea.vmem %s1, %s416
      $region72: #{eut_single_stage.8} parent=63 // pred_fallthru
        _
    $region64: #{eut_single_stage.8} parent=5 // pred_fallthru
      _
    %p418 = scmp.le.s32.totalorder 1, %s20
    %p419 = scmp.lt.s32.totalorder %s20, 3
    %p420 = pnand %p418, %p419
    %p421 = pneg %p420
    // Predicated region
    $region73: #{eut_single_stage.8} parent=5 // pred_check
      _
    $region74: #{eut_single_stage.8} parent=5 // pred_check_branch
      %423 = sbr.rel (%p420) target = $region76
    $region75: #{eut_single_stage.8} parent=5 // pred_region
      %s424 = ssub.s32 %s20, 1
      %p425 = scmp.lt.s32.totalorder %s25, 1
      %s426 = scalar_select %p425, %s25, 1
      %s427 = scalar_lea.vmem %s0, %s426
      %p428 = pneg %p46
      %p429 = pneg %p43
      %p430 = scmp.lt.s32.totalorder %s25, 1
      %s431 = scalar_select %p430, %s25, 1
      %s432 = smul.addr %s431, 2
      %s433 = scalar_lea.vmem %s1, %s432
      %p434 = pneg %p72
      %p435 = pneg %p69
      %p436 = pneg %p93
      %p437 = pneg %p90
      %p438 = pneg %p114
      %p439 = pneg %p111
      %p440 = pneg %p135
      %p441 = pneg %p132
      %p442 = pneg %p156
      %p443 = pneg %p153
      %p444 = pneg %p177
      %p445 = pneg %p174
      %p446 = pneg %p198
      %p447 = pneg %p195
      %p448 = pneg %p219
      %p449 = pneg %p216
      %p450 = pneg %p240
      %p451 = pneg %p237
      %p452 = pneg %p261
      %p453 = pneg %p258
      %p454 = pneg %p282
      %p455 = pneg %p279
      %p456 = pneg %p303
      %p457 = pneg %p300
      %p458 = pneg %p324
      %p459 = pneg %p321
      %p460 = pneg %p350
      %p461 = pneg %p347
      %p462 = scmp.lt.s32.totalorder %s25, 1
      %s463 = scalar_select %p462, %s25, 1
      %s464 = smul.addr %s463, 2
      %s465 = scalar_lea.vmem %s14, %s464
      %p466 = scmp.lt.s32.totalorder %s25, 1
      %s467 = scalar_select %p466, %s25, 1
      %s468 = scalar_lea.vmem %s0, %s467
      %p469 = scmp.lt.s32.totalorder %s25, 1
      %s470 = scalar_select %p469, %s25, 1
      %s471 = smul.addr %s470, 2
      %s472 = scalar_lea.vmem %s1, %s471
      %p473 = scmp.lt.s32.totalorder %s25, 1
      %s474 = scalar_select %p473, %s25, 1
      %s475 = smul.addr %s474, 2
      %s476 = scalar_lea.vmem %s14, %s475
      %v478 = vld [vmem:[%s472] sm:$0x3]
      %v479 = vunpack.c.l.bf16 %v478
      %v480 = vld [vmem:[%s2] sm:$0xf]
      %v481 = vld [vmem:[%s2 + $0x4] sm:$0xf]
      %v482 = vld [vmem:[%s2 + $0x8] sm:$0xf]
      %v483 = vld [vmem:[%s2 + $0xc] sm:$0xf]
      %v484 = vld [vmem:[%s3] sm:$0x1]
      %v486 = vlaneseq
      %v487 = vshrl.u32 %v486, 7
      %v488 = vsub.s32 0, %v487
      %v489 = vrot.slane %v484, %v488
      %v495 = vunpack.c.l.b16 %v480
      %v496 = vunpack.c.l.b16 %v481
      %v497 = vunpack.c.l.b16 %v482
      %v498 = vunpack.c.l.b16 %v483
      %v499 = vpack.c.b16 %v496, %v495
      %v500 = vpack.c.b16 %v498, %v497
      %vm503 = vcmask 261120
      %v505 = vsel %vm503, %v478, 0
      %507 = vmatprep.subr.bf16.mxu0 0
      %508 = vmatpush1.bf16.msra.mxu0 %v499
      %509 = vmatprep.subr.bf16.mxu0 0
      %510 = vmatpush1.bf16.msra.mxu0 %v500
      %511 = vmatprep.subr.bf16.mxu0 0
      %512 = vmatpush1.bf16.msra.mxu0 0
      %513 = vmatprep.subr.bf16.mxu0 0
      %514 = vmatpush1.bf16.msra.mxu0 0
      %515 = vmatprep.subr.bf16.mxu0 0
      %516 = vmatpush1.bf16.msra.mxu0 0
      %517 = vmatprep.subr.bf16.mxu0 0
      %518 = vmatpush1.bf16.msra.mxu0 0
      %519 = vmatprep.subr.bf16.mxu0 0
      %520 = vmatpush1.bf16.msra.mxu0 0
      %521 = vmatprep.subr.bf16.mxu0 0
      %522 = vmatpush1.bf16.msra.mxu0 0
      %523 = vmatprep.subr.bf16.mxu0 0
      %524 = vmatpush1.bf16.msra.mxu0 0
      %525 = vmatprep.subr.bf16.mxu0 0
      %526 = vmatpush1.bf16.msra.mxu0 0
      %527 = vmatprep.subr.bf16.mxu0 0
      %528 = vmatpush1.bf16.msra.mxu0 0
      %529 = vmatprep.subr.bf16.mxu0 0
      %530 = vmatpush1.bf16.msra.mxu0 0
      %531 = vmatprep.subr.bf16.mxu0 0
      %532 = vmatpush1.bf16.msra.mxu0 0
      %533 = vmatprep.subr.bf16.mxu0 0
      %534 = vmatpush1.bf16.msra.mxu0 0
      %535 = vmatprep.subr.bf16.mxu0 0
      %536 = vmatpush1.bf16.msra.mxu0 0
      %537 = vmatprep.subr.bf16.mxu0 0
      %538 = vmatpush1.bf16.msra.mxu0 0
      %539 = vmatprep.mubr.bf16.mxu0 0
      %540 = vmatmul.mubr.bf16.gmra.mrb[0].mxu0 %v505
      %v541 = vpop.f32.mrb[0].mxu0
      %v542 = vadd.f32 %v489, %v541
      %v543 = vpop.f32.mrb[0].mxu0
      %v544 = vpop.f32.mrb[0].mxu0
      %v545 = vpop.f32.mrb[0].mxu0
      %546 = vdwg.mxu0
      %v547 = vld [vmem:[%s4] sm:$0xf]
      %v548 = vld [vmem:[%s4 + $0x4] sm:$0xf]
      %v549 = vld [vmem:[%s4 + $0x8] sm:$0xf]
      %v550 = vld [vmem:[%s4 + $0xc] sm:$0xf]
      %v551 = vld [vmem:[%s5] sm:$0x1]
      %v553 = vlaneseq
      %v554 = vshrl.u32 %v553, 7
      %v555 = vsub.s32 0, %v554
      %v556 = vrot.slane %v551, %v555
      %v562 = vunpack.c.l.b16 %v547
      %v563 = vunpack.c.l.b16 %v548
      %v564 = vunpack.c.l.b16 %v549
      %v565 = vunpack.c.l.b16 %v550
      %v566 = vpack.c.b16 %v563, %v562
      %v567 = vpack.c.b16 %v565, %v564
      %570 = vmatprep.subr.bf16.mxu0 0
      %571 = vmatpush1.bf16.msra.mxu0 %v566
      %572 = vmatprep.subr.bf16.mxu0 0
      %573 = vmatpush1.bf16.msra.mxu0 %v567
      %574 = vmatprep.subr.bf16.mxu0 0
      %575 = vmatpush1.bf16.msra.mxu0 0
      %576 = vmatprep.subr.bf16.mxu0 0
      %577 = vmatpush1.bf16.msra.mxu0 0
      %578 = vmatprep.subr.bf16.mxu0 0
      %579 = vmatpush1.bf16.msra.mxu0 0
      %580 = vmatprep.subr.bf16.mxu0 0
      %581 = vmatpush1.bf16.msra.mxu0 0
      %582 = vmatprep.subr.bf16.mxu0 0
      %583 = vmatpush1.bf16.msra.mxu0 0
      %584 = vmatprep.subr.bf16.mxu0 0
      %585 = vmatpush1.bf16.msra.mxu0 0
      %586 = vmatprep.subr.bf16.mxu0 0
      %587 = vmatpush1.bf16.msra.mxu0 0
      %588 = vmatprep.subr.bf16.mxu0 0
      %589 = vmatpush1.bf16.msra.mxu0 0
      %590 = vmatprep.subr.bf16.mxu0 0
      %591 = vmatpush1.bf16.msra.mxu0 0
      %592 = vmatprep.subr.bf16.mxu0 0
      %593 = vmatpush1.bf16.msra.mxu0 0
      %594 = vmatprep.subr.bf16.mxu0 0
      %595 = vmatpush1.bf16.msra.mxu0 0
      %596 = vmatprep.subr.bf16.mxu0 0
      %597 = vmatpush1.bf16.msra.mxu0 0
      %598 = vmatprep.subr.bf16.mxu0 0
      %599 = vmatpush1.bf16.msra.mxu0 0
      %600 = vmatprep.subr.bf16.mxu0 0
      %601 = vmatpush1.bf16.msra.mxu0 0
      %602 = vmatprep.mubr.bf16.mxu0 0
      %603 = vmatmul.mubr.bf16.gmra.mrb[0].mxu0 %v505
      %v604 = vpop.f32.mrb[0].mxu0
      %v605 = vadd.f32 %v556, %v604
      %v606 = vpop.f32.mrb[0].mxu0
      %v607 = vpop.f32.mrb[0].mxu0
      %v608 = vpop.f32.mrb[0].mxu0
      %609 = vdwg.mxu0
      %v610 = vld [vmem:[%s6] sm:$0xf]
      %v611 = vld [vmem:[%s6 + $0x4] sm:$0xf]
      %v612 = vld [vmem:[%s6 + $0x8] sm:$0xf]
      %v613 = vld [vmem:[%s6 + $0xc] sm:$0xf]
      %v614 = vld [vmem:[%s7] sm:$0x1]
      %v616 = vlaneseq
      %v617 = vshrl.u32 %v616, 7
      %v618 = vsub.s32 0, %v617
      %v619 = vrot.slane %v614, %v618
      %v625 = vunpack.c.l.b16 %v610
      %v626 = vunpack.c.l.b16 %v611
      %v627 = vunpack.c.l.b16 %v612
      %v628 = vunpack.c.l.b16 %v613
      %v629 = vpack.c.b16 %v626, %v625
      %v630 = vpack.c.b16 %v628, %v627
      %633 = vmatprep.subr.bf16.mxu0 0
      %634 = vmatpush1.bf16.msra.mxu0 %v629
      %635 = vmatprep.subr.bf16.mxu0 0
      %636 = vmatpush1.bf16.msra.mxu0 %v630
      %637 = vmatprep.subr.bf16.mxu0 0
      %638 = vmatpush1.bf16.msra.mxu0 0
      %639 = vmatprep.subr.bf16.mxu0 0
      %640 = vmatpush1.bf16.msra.mxu0 0
      %641 = vmatprep.subr.bf16.mxu0 0
      %642 = vmatpush1.bf16.msra.mxu0 0
      %643 = vmatprep.subr.bf16.mxu0 0
      %644 = vmatpush1.bf16.msra.mxu0 0
      %645 = vmatprep.subr.bf16.mxu0 0
      %646 = vmatpush1.bf16.msra.mxu0 0
      %647 = vmatprep.subr.bf16.mxu0 0
      %648 = vmatpush1.bf16.msra.mxu0 0
      %649 = vmatprep.subr.bf16.mxu0 0
      %650 = vmatpush1.bf16.msra.mxu0 0
      %651 = vmatprep.subr.bf16.mxu0 0
      %652 = vmatpush1.bf16.msra.mxu0 0
      %653 = vmatprep.subr.bf16.mxu0 0
      %654 = vmatpush1.bf16.msra.mxu0 0
      %655 = vmatprep.subr.bf16.mxu0 0
      %656 = vmatpush1.bf16.msra.mxu0 0
      %657 = vmatprep.subr.bf16.mxu0 0
      %658 = vmatpush1.bf16.msra.mxu0 0
      %659 = vmatprep.subr.bf16.mxu0 0
      %660 = vmatpush1.bf16.msra.mxu0 0
      %661 = vmatprep.subr.bf16.mxu0 0
      %662 = vmatpush1.bf16.msra.mxu0 0
      %663 = vmatprep.subr.bf16.mxu0 0
      %664 = vmatpush1.bf16.msra.mxu0 0
      %665 = vmatprep.mubr.bf16.mxu0 0
      %666 = vmatmul.mubr.bf16.gmra.mrb[0].mxu0 %v505
      %v667 = vpop.f32.mrb[0].mxu0
      %v668 = vadd.f32 %v619, %v667
      %v669 = vpop.f32.mrb[0].mxu0
      %v670 = vpop.f32.mrb[0].mxu0
      %v671 = vpop.f32.mrb[0].mxu0
      %672 = vdwg.mxu0
      %v673 = vpack.c.bf16 %v542, %v542
      %675 = vrot.lane.b32.xlu0 %v673, 120
      %v676 = vpop.permute.xlu0 %675
      %677 = vrot.lane.b32.xlu0 %v673, 112
      %v678 = vpop.permute.xlu0 %677
      %679 = vrot.lane.b32.xlu0 %v673, 104
      %v680 = vpop.permute.xlu0 %679
      %v681 = vpack.c.bf16 %v605, %v605
      %683 = vrot.lane.b32.xlu0 %v681, 120
      %v684 = vpop.permute.xlu0 %683
      %685 = vrot.lane.b32.xlu0 %v681, 112
      %v686 = vpop.permute.xlu0 %685
      %687 = vrot.lane.b32.xlu0 %v681, 104
      %v688 = vpop.permute.xlu0 %687
      %v689 = vpack.c.bf16 %v668, %v668
      %691 = vrot.lane.b32.xlu0 %v689, 120
      %v692 = vpop.permute.xlu0 %691
      %693 = vrot.lane.b32.xlu0 %v689, 112
      %v694 = vpop.permute.xlu0 %693
      %695 = vrot.lane.b32.xlu0 %v689, 104
      %v696 = vpop.permute.xlu0 %695
      %v697 = vld [vmem:[%s468] sm:$0x1]
      %vm698 = vcmp.gt.f32.partialorder %v697, 0.0
      %v699 = vsel %vm698, 0.0, -1e+09
      %v701 = vlaneseq
      %v702 = vshrl.u32 %v701, 7
      %v703 = vsub.s32 0, %v702
      %v704 = vrot.slane %v699, %v703
      %vm706 = vcmask 64512
      %v708 = vsel %vm706, %v673, 0
      %v711 = vsel %vm706, %v681, 0
      %713 = vmatprep.subr.bf16.mxu0 0
      %714 = vmatpush1.bf16.xpose.msra.mxu0 %v711
      %715 = vmatprep.subr.bf16.mxu0 0
      %716 = vmatpush1.bf16.xpose.msra.mxu0 0
      %717 = vmatprep.subr.bf16.mxu0 0
      %718 = vmatpush1.bf16.xpose.msra.mxu0 0
      %719 = vmatprep.subr.bf16.mxu0 0
      %720 = vmatpush1.bf16.xpose.msra.mxu0 0
      %721 = vmatprep.subr.bf16.mxu0 0
      %722 = vmatpush1.bf16.xpose.msra.mxu0 0
      %723 = vmatprep.subr.bf16.mxu0 0
      %724 = vmatpush1.bf16.xpose.msra.mxu0 0
      %725 = vmatprep.subr.bf16.mxu0 0
      %726 = vmatpush1.bf16.xpose.msra.mxu0 0
      %727 = vmatprep.subr.bf16.mxu0 0
      %728 = vmatpush1.bf16.xpose.msra.mxu0 0
      %729 = vmatprep.subr.bf16.mxu0 0
      %730 = vmatpush1.bf16.xpose.msra.mxu0 0
      %731 = vmatprep.subr.bf16.mxu0 0
      %732 = vmatpush1.bf16.xpose.msra.mxu0 0
      %733 = vmatprep.subr.bf16.mxu0 0
      %734 = vmatpush1.bf16.xpose.msra.mxu0 0
      %735 = vmatprep.subr.bf16.mxu0 0
      %736 = vmatpush1.bf16.xpose.msra.mxu0 0
      %737 = vmatprep.subr.bf16.mxu0 0
      %738 = vmatpush1.bf16.xpose.msra.mxu0 0
      %739 = vmatprep.subr.bf16.mxu0 0
      %740 = vmatpush1.bf16.xpose.msra.mxu0 0
      %741 = vmatprep.subr.bf16.mxu0 0
      %742 = vmatpush1.bf16.xpose.msra.mxu0 0
      %743 = vmatprep.subr.bf16.mxu0 0
      %744 = vmatpush1.bf16.xpose.msra.mxu0 0
      %745 = vmatprep.mubr.bf16.mxu0 0
      %746 = vmatmul.mubr.bf16.gmra.mrb[0].mxu0 %v708
      %v747 = vpop.f32.mrb[0].mxu0
      %v748 = vadd.f32 %v704, %v747
      %v749 = vpop.f32.mrb[0].mxu0
      %v750 = vpop.f32.mrb[0].mxu0
      %v751 = vpop.f32.mrb[0].mxu0
      %752 = vdwg.mxu0
      %v754 = vsel %vm706, %v676, 0
      %v757 = vsel %vm706, %v684, 0
      %759 = vmatprep.subr.bf16.mxu0 0
      %760 = vmatpush1.bf16.xpose.msra.mxu0 %v757
      %761 = vmatprep.subr.bf16.mxu0 0
      %762 = vmatpush1.bf16.xpose.msra.mxu0 0
      %763 = vmatprep.subr.bf16.mxu0 0
      %764 = vmatpush1.bf16.xpose.msra.mxu0 0
      %765 = vmatprep.subr.bf16.mxu0 0
      %766 = vmatpush1.bf16.xpose.msra.mxu0 0
      %767 = vmatprep.subr.bf16.mxu0 0
      %768 = vmatpush1.bf16.xpose.msra.mxu0 0
      %769 = vmatprep.subr.bf16.mxu0 0
      %770 = vmatpush1.bf16.xpose.msra.mxu0 0
      %771 = vmatprep.subr.bf16.mxu0 0
      %772 = vmatpush1.bf16.xpose.msra.mxu0 0
      %773 = vmatprep.subr.bf16.mxu0 0
      %774 = vmatpush1.bf16.xpose.msra.mxu0 0
      %775 = vmatprep.subr.bf16.mxu0 0
      %776 = vmatpush1.bf16.xpose.msra.mxu0 0
      %777 = vmatprep.subr.bf16.mxu0 0
      %778 = vmatpush1.bf16.xpose.msra.mxu0 0
      %779 = vmatprep.subr.bf16.mxu0 0
      %780 = vmatpush1.bf16.xpose.msra.mxu0 0
      %781 = vmatprep.subr.bf16.mxu0 0
      %782 = vmatpush1.bf16.xpose.msra.mxu0 0
      %783 = vmatprep.subr.bf16.mxu0 0
      %784 = vmatpush1.bf16.xpose.msra.mxu0 0
      %785 = vmatprep.subr.bf16.mxu0 0
      %786 = vmatpush1.bf16.xpose.msra.mxu0 0
      %787 = vmatprep.subr.bf16.mxu0 0
      %788 = vmatpush1.bf16.xpose.msra.mxu0 0
      %789 = vmatprep.subr.bf16.mxu0 0
      %790 = vmatpush1.bf16.xpose.msra.mxu0 0
      %791 = vmatprep.mubr.bf16.mxu0 0
      %792 = vmatmul.mubr.bf16.gmra.mrb[0].mxu0 %v754
      %v793 = vpop.f32.mrb[0].mxu0
      %v794 = vadd.f32 %v704, %v793
      %v795 = vpop.f32.mrb[0].mxu0
      %v796 = vpop.f32.mrb[0].mxu0
      %v797 = vpop.f32.mrb[0].mxu0
      %798 = vdwg.mxu0
      %v800 = vsel %vm706, %v678, 0
      %v803 = vsel %vm706, %v686, 0
      %805 = vmatprep.subr.bf16.mxu0 0
      %806 = vmatpush1.bf16.xpose.msra.mxu0 %v803
      %807 = vmatprep.subr.bf16.mxu0 0
      %808 = vmatpush1.bf16.xpose.msra.mxu0 0
      %809 = vmatprep.subr.bf16.mxu0 0
      %810 = vmatpush1.bf16.xpose.msra.mxu0 0
      %811 = vmatprep.subr.bf16.mxu0 0
      %812 = vmatpush1.bf16.xpose.msra.mxu0 0
      %813 = vmatprep.subr.bf16.mxu0 0
      %814 = vmatpush1.bf16.xpose.msra.mxu0 0
      %815 = vmatprep.subr.bf16.mxu0 0
      %816 = vmatpush1.bf16.xpose.msra.mxu0 0
      %817 = vmatprep.subr.bf16.mxu0 0
      %818 = vmatpush1.bf16.xpose.msra.mxu0 0
      %819 = vmatprep.subr.bf16.mxu0 0
      %820 = vmatpush1.bf16.xpose.msra.mxu0 0
      %821 = vmatprep.subr.bf16.mxu0 0
      %822 = vmatpush1.bf16.xpose.msra.mxu0 0
      %823 = vmatprep.subr.bf16.mxu0 0
      %824 = vmatpush1.bf16.xpose.msra.mxu0 0
      %825 = vmatprep.subr.bf16.mxu0 0
      %826 = vmatpush1.bf16.xpose.msra.mxu0 0
      %827 = vmatprep.subr.bf16.mxu0 0
      %828 = vmatpush1.bf16.xpose.msra.mxu0 0
      %829 = vmatprep.subr.bf16.mxu0 0
      %830 = vmatpush1.bf16.xpose.msra.mxu0 0
      %831 = vmatprep.subr.bf16.mxu0 0
      %832 = vmatpush1.bf16.xpose.msra.mxu0 0
      %833 = vmatprep.subr.bf16.mxu0 0
      %834 = vmatpush1.bf16.xpose.msra.mxu0 0
      %835 = vmatprep.subr.bf16.mxu0 0
      %836 = vmatpush1.bf16.xpose.msra.mxu0 0
      %837 = vmatprep.mubr.bf16.mxu0 0
      %838 = vmatmul.mubr.bf16.gmra.mrb[0].mxu0 %v800
      %v839 = vpop.f32.mrb[0].mxu0
      %v840 = vadd.f32 %v704, %v839
      %v841 = vpop.f32.mrb[0].mxu0
      %v842 = vpop.f32.mrb[0].mxu0
      %v843 = vpop.f32.mrb[0].mxu0
      %844 = vdwg.mxu0
      %v846 = vsel %vm706, %v680, 0
      %v849 = vsel %vm706, %v688, 0
      %851 = vmatprep.subr.bf16.mxu0 0
      %852 = vmatpush1.bf16.xpose.msra.mxu0 %v849
      %853 = vmatprep.subr.bf16.mxu0 0
      %854 = vmatpush1.bf16.xpose.msra.mxu0 0
      %855 = vmatprep.subr.bf16.mxu0 0
      %856 = vmatpush1.bf16.xpose.msra.mxu0 0
      %857 = vmatprep.subr.bf16.mxu0 0
      %858 = vmatpush1.bf16.xpose.msra.mxu0 0
      %859 = vmatprep.subr.bf16.mxu0 0
      %860 = vmatpush1.bf16.xpose.msra.mxu0 0
      %861 = vmatprep.subr.bf16.mxu0 0
      %862 = vmatpush1.bf16.xpose.msra.mxu0 0
      %863 = vmatprep.subr.bf16.mxu0 0
      %864 = vmatpush1.bf16.xpose.msra.mxu0 0
      %865 = vmatprep.subr.bf16.mxu0 0
      %866 = vmatpush1.bf16.xpose.msra.mxu0 0
      %867 = vmatprep.subr.bf16.mxu0 0
      %868 = vmatpush1.bf16.xpose.msra.mxu0 0
      %869 = vmatprep.subr.bf16.mxu0 0
      %870 = vmatpush1.bf16.xpose.msra.mxu0 0
      %871 = vmatprep.subr.bf16.mxu0 0
      %872 = vmatpush1.bf16.xpose.msra.mxu0 0
      %873 = vmatprep.subr.bf16.mxu0 0
      %874 = vmatpush1.bf16.xpose.msra.mxu0 0
      %875 = vmatprep.subr.bf16.mxu0 0
      %876 = vmatpush1.bf16.xpose.msra.mxu0 0
      %877 = vmatprep.subr.bf16.mxu0 0
      %878 = vmatpush1.bf16.xpose.msra.mxu0 0
      %879 = vmatprep.subr.bf16.mxu0 0
      %880 = vmatpush1.bf16.xpose.msra.mxu0 0
      %881 = vmatprep.subr.bf16.mxu0 0
      %882 = vmatpush1.bf16.xpose.msra.mxu0 0
      %883 = vmatprep.mubr.bf16.mxu0 0
      %884 = vmatmul.mubr.bf16.gmra.mrb[0].mxu0 %v846
      %v885 = vpop.f32.mrb[0].mxu0
      %v886 = vadd.f32 %v704, %v885
      %v887 = vpop.f32.mrb[0].mxu0
      %v888 = vpop.f32.mrb[0].mxu0
      %v889 = vpop.f32.mrb[0].mxu0
      %890 = vdwg.mxu0
      %vm891 = vcmask 27648
      %v892 = vsel %vm891, %v748, -inf
      %893 = vmax.xlane.f32.xlu0 %v892
      %v894 = vpop.xlane.xlu0 %893
      %v895 = vsel %vm891, %v794, -inf
      %896 = vmax.xlane.f32.xlu0 %v895
      %v897 = vpop.xlane.xlu0 %896
      %v898 = vsel %vm891, %v840, -inf
      %899 = vmax.xlane.f32.xlu0 %v898
      %v900 = vpop.xlane.xlu0 %899
      %v901 = vsel %vm891, %v886, -inf
      %902 = vmax.xlane.f32.xlu0 %v901
      %v903 = vpop.xlane.xlu0 %902
      %v904 = vsub.f32 %v748, %v894
      %v905 = vsub.f32 %v794, %v897
      %v906 = vsub.f32 %v840, %v900
      %v907 = vsub.f32 %v886, %v903
      %v908 = vmul.f32 %v904, 1.442695
      %v909 = vpow.pop %v908
      %v910 = vmul.f32 %v905, 1.442695
      %v911 = vpow.pop %v910
      %v912 = vmul.f32 %v906, 1.442695
      %v913 = vpow.pop %v912
      %v914 = vmul.f32 %v907, 1.442695
      %v915 = vpow.pop %v914
      %v916 = vsel %vm891, %v909, 0.0
      %917 = vadd.xlane.f32.xlu0 %v916
      %v918 = vpop.xlane.xlu0 %917
      %v919 = vsel %vm891, %v911, 0.0
      %920 = vadd.xlane.f32.xlu0 %v919
      %v921 = vpop.xlane.xlu0 %920
      %v922 = vsel %vm891, %v913, 0.0
      %923 = vadd.xlane.f32.xlu0 %v922
      %v924 = vpop.xlane.xlu0 %923
      %v925 = vsel %vm891, %v915, 0.0
      %926 = vadd.xlane.f32.xlu0 %v925
      %v927 = vpop.xlane.xlu0 %926
      %v928 = vrcp.pop %v918
      %v929 = vrcp.pop %v921
      %v930 = vrcp.pop %v924
      %v931 = vrcp.pop %v927
      %v932 = vmul.f32 %v909, %v928
      %v933 = vmul.f32 %v911, %v929
      %v934 = vmul.f32 %v913, %v930
      %v935 = vmul.f32 %v915, %v931
      %v936 = vpack.c.bf16 %v932, %v932
      %v937 = vpack.c.bf16 %v933, %v933
      %v938 = vpack.c.bf16 %v934, %v934
      %v939 = vpack.c.bf16 %v935, %v935
      %vm940 = vcmask 31744
      %v942 = vsel %vm940, %v936, 0
      %vm944 = vcmask 1041408
      %v946 = vsel %vm944, %v689, 0
      %948 = vmatprep.subr.bf16.mxu0 0
      %949 = vmatpush1.bf16.msra.mxu0 %v946
      %950 = vmatprep.subr.bf16.mxu0 0
      %951 = vmatpush1.bf16.msra.mxu0 0
      %952 = vmatprep.subr.bf16.mxu0 0
      %953 = vmatpush1.bf16.msra.mxu0 0
      %954 = vmatprep.subr.bf16.mxu0 0
      %955 = vmatpush1.bf16.msra.mxu0 0
      %956 = vmatprep.subr.bf16.mxu0 0
      %957 = vmatpush1.bf16.msra.mxu0 0
      %958 = vmatprep.subr.bf16.mxu0 0
      %959 = vmatpush1.bf16.msra.mxu0 0
      %960 = vmatprep.subr.bf16.mxu0 0
      %961 = vmatpush1.bf16.msra.mxu0 0
      %962 = vmatprep.subr.bf16.mxu0 0
      %963 = vmatpush1.bf16.msra.mxu0 0
      %964 = vmatprep.subr.bf16.mxu0 0
      %965 = vmatpush1.bf16.msra.mxu0 0
      %966 = vmatprep.subr.bf16.mxu0 0
      %967 = vmatpush1.bf16.msra.mxu0 0
      %968 = vmatprep.subr.bf16.mxu0 0
      %969 = vmatpush1.bf16.msra.mxu0 0
      %970 = vmatprep.subr.bf16.mxu0 0
      %971 = vmatpush1.bf16.msra.mxu0 0
      %972 = vmatprep.subr.bf16.mxu0 0
      %973 = vmatpush1.bf16.msra.mxu0 0
      %974 = vmatprep.subr.bf16.mxu0 0
      %975 = vmatpush1.bf16.msra.mxu0 0
      %976 = vmatprep.subr.bf16.mxu0 0
      %977 = vmatpush1.bf16.msra.mxu0 0
      %978 = vmatprep.subr.bf16.mxu0 0
      %979 = vmatpush1.bf16.msra.mxu0 0
      %980 = vmatprep.mubr.bf16.mxu0 0
      %981 = vmatmul.mubr.bf16.gmra.mrb[0].mxu0 %v942
      %v982 = vpop.f32.mrb[0].mxu0
      %v983 = vadd.f32 0.0, %v982
      %v984 = vpop.f32.mrb[0].mxu0
      %v985 = vpop.f32.mrb[0].mxu0
      %v986 = vpop.f32.mrb[0].mxu0
      %987 = vdwg.mxu0
      %v989 = vsel %vm940, %v937, 0
      %v992 = vsel %vm944, %v692, 0
      %994 = vmatprep.subr.bf16.mxu0 0
      %995 = vmatpush1.bf16.msra.mxu0 %v992
      %996 = vmatprep.subr.bf16.mxu0 0
      %997 = vmatpush1.bf16.msra.mxu0 0
      %998 = vmatprep.subr.bf16.mxu0 0
      %999 = vmatpush1.bf16.msra.mxu0 0
      %1000 = vmatprep.subr.bf16.mxu0 0
      %1001 = vmatpush1.bf16.msra.mxu0 0
      %1002 = vmatprep.subr.bf16.mxu0 0
      %1003 = vmatpush1.bf16.msra.mxu0 0
      %1004 = vmatprep.subr.bf16.mxu0 0
      %1005 = vmatpush1.bf16.msra.mxu0 0
      %1006 = vmatprep.subr.bf16.mxu0 0
      %1007 = vmatpush1.bf16.msra.mxu0 0
      %1008 = vmatprep.subr.bf16.mxu0 0
      %1009 = vmatpush1.bf16.msra.mxu0 0
      %1010 = vmatprep.subr.bf16.mxu0 0
      %1011 = vmatpush1.bf16.msra.mxu0 0
      %1012 = vmatprep.subr.bf16.mxu0 0
      %1013 = vmatpush1.bf16.msra.mxu0 0
      %1014 = vmatprep.subr.bf16.mxu0 0
      %1015 = vmatpush1.bf16.msra.mxu0 0
      %1016 = vmatprep.subr.bf16.mxu0 0
      %1017 = vmatpush1.bf16.msra.mxu0 0
      %1018 = vmatprep.subr.bf16.mxu0 0
      %1019 = vmatpush1.bf16.msra.mxu0 0
      %1020 = vmatprep.subr.bf16.mxu0 0
      %1021 = vmatpush1.bf16.msra.mxu0 0
      %1022 = vmatprep.subr.bf16.mxu0 0
      %1023 = vmatpush1.bf16.msra.mxu0 0
      %1024 = vmatprep.subr.bf16.mxu0 0
      %1025 = vmatpush1.bf16.msra.mxu0 0
      %1026 = vmatprep.mubr.bf16.mxu0 0
      %1027 = vmatmul.mubr.bf16.gmra.mrb[0].mxu0 %v989
      %v1028 = vpop.f32.mrb[0].mxu0
      %v1029 = vadd.f32 0.0, %v1028
      %v1030 = vpop.f32.mrb[0].mxu0
      %v1031 = vpop.f32.mrb[0].mxu0
      %v1032 = vpop.f32.mrb[0].mxu0
      %1033 = vdwg.mxu0
      %v1035 = vsel %vm940, %v938, 0
      %v1038 = vsel %vm944, %v694, 0
      %1040 = vmatprep.subr.bf16.mxu0 0
      %1041 = vmatpush1.bf16.msra.mxu0 %v1038
      %1042 = vmatprep.subr.bf16.mxu0 0
      %1043 = vmatpush1.bf16.msra.mxu0 0
      %1044 = vmatprep.subr.bf16.mxu0 0
      %1045 = vmatpush1.bf16.msra.mxu0 0
      %1046 = vmatprep.subr.bf16.mxu0 0
      %1047 = vmatpush1.bf16.msra.mxu0 0
      %1048 = vmatprep.subr.bf16.mxu0 0
      %1049 = vmatpush1.bf16.msra.mxu0 0
      %1050 = vmatprep.subr.bf16.mxu0 0
      %1051 = vmatpush1.bf16.msra.mxu0 0
      %1052 = vmatprep.subr.bf16.mxu0 0
      %1053 = vmatpush1.bf16.msra.mxu0 0
      %1054 = vmatprep.subr.bf16.mxu0 0
      %1055 = vmatpush1.bf16.msra.mxu0 0
      %1056 = vmatprep.subr.bf16.mxu0 0
      %1057 = vmatpush1.bf16.msra.mxu0 0
      %1058 = vmatprep.subr.bf16.mxu0 0
      %1059 = vmatpush1.bf16.msra.mxu0 0
      %1060 = vmatprep.subr.bf16.mxu0 0
      %1061 = vmatpush1.bf16.msra.mxu0 0
      %1062 = vmatprep.subr.bf16.mxu0 0
      %1063 = vmatpush1.bf16.msra.mxu0 0
      %1064 = vmatprep.subr.bf16.mxu0 0
      %1065 = vmatpush1.bf16.msra.mxu0 0
      %1066 = vmatprep.subr.bf16.mxu0 0
      %1067 = vmatpush1.bf16.msra.mxu0 0
      %1068 = vmatprep.subr.bf16.mxu0 0
      %1069 = vmatpush1.bf16.msra.mxu0 0
      %1070 = vmatprep.subr.bf16.mxu0 0
      %1071 = vmatpush1.bf16.msra.mxu0 0
      %1072 = vmatprep.mubr.bf16.mxu0 0
      %1073 = vmatmul.mubr.bf16.gmra.mrb[0].mxu0 %v1035
      %v1074 = vpop.f32.mrb[0].mxu0
      %v1075 = vadd.f32 0.0, %v1074
      %v1076 = vpop.f32.mrb[0].mxu0
      %v1077 = vpop.f32.mrb[0].mxu0
      %v1078 = vpop.f32.mrb[0].mxu0
      %1079 = vdwg.mxu0
      %v1081 = vsel %vm940, %v939, 0
      %v1084 = vsel %vm944, %v696, 0
      %1086 = vmatprep.subr.bf16.mxu0 0
      %1087 = vmatpush1.bf16.msra.mxu0 %v1084
      %1088 = vmatprep.subr.bf16.mxu0 0
      %1089 = vmatpush1.bf16.msra.mxu0 0
      %1090 = vmatprep.subr.bf16.mxu0 0
      %1091 = vmatpush1.bf16.msra.mxu0 0
      %1092 = vmatprep.subr.bf16.mxu0 0
      %1093 = vmatpush1.bf16.msra.mxu0 0
      %1094 = vmatprep.subr.bf16.mxu0 0
      %1095 = vmatpush1.bf16.msra.mxu0 0
      %1096 = vmatprep.subr.bf16.mxu0 0
      %1097 = vmatpush1.bf16.msra.mxu0 0
      %1098 = vmatprep.subr.bf16.mxu0 0
      %1099 = vmatpush1.bf16.msra.mxu0 0
      %1100 = vmatprep.subr.bf16.mxu0 0
      %1101 = vmatpush1.bf16.msra.mxu0 0
      %1102 = vmatprep.subr.bf16.mxu0 0
      %1103 = vmatpush1.bf16.msra.mxu0 0
      %1104 = vmatprep.subr.bf16.mxu0 0
      %1105 = vmatpush1.bf16.msra.mxu0 0
      %1106 = vmatprep.subr.bf16.mxu0 0
      %1107 = vmatpush1.bf16.msra.mxu0 0
      %1108 = vmatprep.subr.bf16.mxu0 0
      %1109 = vmatpush1.bf16.msra.mxu0 0
      %1110 = vmatprep.subr.bf16.mxu0 0
      %1111 = vmatpush1.bf16.msra.mxu0 0
      %1112 = vmatprep.subr.bf16.mxu0 0
      %1113 = vmatpush1.bf16.msra.mxu0 0
      %1114 = vmatprep.subr.bf16.mxu0 0
      %1115 = vmatpush1.bf16.msra.mxu0 0
      %1116 = vmatprep.subr.bf16.mxu0 0
      %1117 = vmatpush1.bf16.msra.mxu0 0
      %1118 = vmatprep.mubr.bf16.mxu0 0
      %1119 = vmatmul.mubr.bf16.gmra.mrb[0].mxu0 %v1081
      %v1120 = vpop.f32.mrb[0].mxu0
      %v1121 = vadd.f32 0.0, %v1120
      %v1122 = vpop.f32.mrb[0].mxu0
      %v1123 = vpop.f32.mrb[0].mxu0
      %v1124 = vpop.f32.mrb[0].mxu0
      %1125 = vdwg.mxu0
      %1127 = vrot.lane.b32.xlu0 %v1029, 8
      %v1128 = vpop.permute.xlu0 %1127
      %1131 = vrot.lane.b32.xlu0 %v1075, 16
      %v1132 = vpop.permute.xlu0 %1131
      %1135 = vrot.lane.b32.xlu0 %v1121, 24
      %v1136 = vpop.permute.xlu0 %1135
      %v1138 = vsel %vm706, %v983, %v1128
      %vm1139 = vcmask 130048
      %v1140 = vsel %vm1139, %v1138, %v1132
      %vm1141 = vcmask 195584
      %v1142 = vsel %vm1141, %v1140, %v1136
      %v1143 = vpack.c.bf16 %v1142, %v1142
      %v1144 = vld [vmem:[%s8] sm:$0xf]
      %v1145 = vld [vmem:[%s8 + $0x4] sm:$0xf]
      %v1146 = vld [vmem:[%s8 + $0x8] sm:$0xf]
      %v1147 = vld [vmem:[%s8 + $0xc] sm:$0xf]
      %v1148 = vld [vmem:[%s9] sm:$0x1]
      %v1150 = vlaneseq
      %v1151 = vshrl.u32 %v1150, 7
      %v1152 = vsub.s32 0, %v1151
      %v1153 = vrot.slane %v1148, %v1152
      %v1159 = vunpack.c.l.b16 %v1144
      %v1160 = vunpack.c.l.b16 %v1145
      %v1161 = vunpack.c.l.b16 %v1146
      %v1162 = vunpack.c.l.b16 %v1147
      %v1163 = vpack.c.b16 %v1160, %v1159
      %v1164 = vpack.c.b16 %v1162, %v1161
      %v1168 = vsel %vm503, %v1143, 0
      %1170 = vmatprep.subr.bf16.mxu0 0
      %1171 = vmatpush1.bf16.msra.mxu0 %v1163
      %1172 = vmatprep.subr.bf16.mxu0 0
      %1173 = vmatpush1.bf16.msra.mxu0 %v1164
      %1174 = vmatprep.subr.bf16.mxu0 0
      %1175 = vmatpush1.bf16.msra.mxu0 0
      %1176 = vmatprep.subr.bf16.mxu0 0
      %1177 = vmatpush1.bf16.msra.mxu0 0
      %1178 = vmatprep.subr.bf16.mxu0 0
      %1179 = vmatpush1.bf16.msra.mxu0 0
      %1180 = vmatprep.subr.bf16.mxu0 0
      %1181 = vmatpush1.bf16.msra.mxu0 0
      %1182 = vmatprep.subr.bf16.mxu0 0
      %1183 = vmatpush1.bf16.msra.mxu0 0
      %1184 = vmatprep.subr.bf16.mxu0 0
      %1185 = vmatpush1.bf16.msra.mxu0 0
      %1186 = vmatprep.subr.bf16.mxu0 0
      %1187 = vmatpush1.bf16.msra.mxu0 0
      %1188 = vmatprep.subr.bf16.mxu0 0
      %1189 = vmatpush1.bf16.msra.mxu0 0
      %1190 = vmatprep.subr.bf16.mxu0 0
      %1191 = vmatpush1.bf16.msra.mxu0 0
      %1192 = vmatprep.subr.bf16.mxu0 0
      %1193 = vmatpush1.bf16.msra.mxu0 0
      %1194 = vmatprep.subr.bf16.mxu0 0
      %1195 = vmatpush1.bf16.msra.mxu0 0
      %1196 = vmatprep.subr.bf16.mxu0 0
      %1197 = vmatpush1.bf16.msra.mxu0 0
      %1198 = vmatprep.subr.bf16.mxu0 0
      %1199 = vmatpush1.bf16.msra.mxu0 0
      %1200 = vmatprep.subr.bf16.mxu0 0
      %1201 = vmatpush1.bf16.msra.mxu0 0
      %1202 = vmatprep.mubr.bf16.mxu0 0
      %1203 = vmatmul.mubr.bf16.gmra.mrb[0].mxu0 %v1168
      %v1204 = vpop.f32.mrb[0].mxu0
      %v1205 = vadd.f32 %v1153, %v1204
      %v1206 = vpop.f32.mrb[0].mxu0
      %v1207 = vpop.f32.mrb[0].mxu0
      %v1208 = vpop.f32.mrb[0].mxu0
      %1209 = vdwg.mxu0
      %v1210 = vadd.f32 %v479, %v1205
      %vm1211 = vcmask 257024
      %v1212 = vsel %vm1211, %v1210, 0.0
      %v1213 = vrot.slane %v1212, 4
      %v1214 = vadd.f32 %v1212, %v1213
      %v1215 = vrot.slane %v1214, 2
      %v1216 = vadd.f32 %v1214, %v1215
      %v1217 = vrot.slane %v1216, 1
      %v1218 = vadd.f32 %v1216, %v1217
      %v1219 = vmul.f32 %v1218, 0.25
      %v1220 = vsub.f32 %v1210, %v1219
      %v1221 = vmul.f32 %v1220, %v1220
      %v1222 = vsel %vm1211, %v1221, 0.0
      %v1223 = vrot.slane %v1222, 4
      %v1224 = vadd.f32 %v1222, %v1223
      %v1225 = vrot.slane %v1224, 2
      %v1226 = vadd.f32 %v1224, %v1225
      %v1227 = vrot.slane %v1226, 1
      %v1228 = vadd.f32 %v1226, %v1227
      %v1229 = vmul.f32 %v1228, 0.25
      %v1230 = vadd.f32 %v1229, 1e-05
      %v1231 = vrsqrt.pop %v1230
      %v1232 = vmul.f32 %v1220, %v1231
      %v1233 = vpack.c.bf16 %v1232, %v1232
      %v1234 = vld [vmem:[%s10] sm:$0xf]
      %v1235 = vld [vmem:[%s10 + $0x4] sm:$0xf]
      %v1236 = vld [vmem:[%s10 + $0x8] sm:$0xf]
      %v1237 = vld [vmem:[%s10 + $0xc] sm:$0xf]
      %v1238 = vld [vmem:[%s11] sm:$0x1]
      %v1240 = vlaneseq
      %v1241 = vshrl.u32 %v1240, 7
      %v1242 = vsub.s32 0, %v1241
      %v1243 = vrot.slane %v1238, %v1242
      %v1249 = vunpack.c.l.b16 %v1234
      %v1250 = vunpack.c.l.b16 %v1235
      %v1251 = vunpack.c.l.b16 %v1236
      %v1252 = vunpack.c.l.b16 %v1237
      %v1253 = vpack.c.b16 %v1250, %v1249
      %v1254 = vpack.c.b16 %v1252, %v1251
      %v1258 = vsel %vm503, %v1233, 0
      %1260 = vmatprep.subr.bf16.mxu0 0
      %1261 = vmatpush1.bf16.msra.mxu0 %v1253
      %1262 = vmatprep.subr.bf16.mxu0 0
      %1263 = vmatpush1.bf16.msra.mxu0 %v1254
      %1264 = vmatprep.subr.bf16.mxu0 0
      %1265 = vmatpush1.bf16.msra.mxu0 0
      %1266 = vmatprep.subr.bf16.mxu0 0
      %1267 = vmatpush1.bf16.msra.mxu0 0
      %1268 = vmatprep.subr.bf16.mxu0 0
      %1269 = vmatpush1.bf16.msra.mxu0 0
      %1270 = vmatprep.subr.bf16.mxu0 0
      %1271 = vmatpush1.bf16.msra.mxu0 0
      %1272 = vmatprep.subr.bf16.mxu0 0
      %1273 = vmatpush1.bf16.msra.mxu0 0
      %1274 = vmatprep.subr.bf16.mxu0 0
      %1275 = vmatpush1.bf16.msra.mxu0 0
      %1276 = vmatprep.subr.bf16.mxu0 0
      %1277 = vmatpush1.bf16.msra.mxu0 0
      %1278 = vmatprep.subr.bf16.mxu0 0
      %1279 = vmatpush1.bf16.msra.mxu0 0
      %1280 = vmatprep.subr.bf16.mxu0 0
      %1281 = vmatpush1.bf16.msra.mxu0 0
      %1282 = vmatprep.subr.bf16.mxu0 0
      %1283 = vmatpush1.bf16.msra.mxu0 0
      %1284 = vmatprep.subr.bf16.mxu0 0
      %1285 = vmatpush1.bf16.msra.mxu0 0
      %1286 = vmatprep.subr.bf16.mxu0 0
      %1287 = vmatpush1.bf16.msra.mxu0 0
      %1288 = vmatprep.subr.bf16.mxu0 0
      %1289 = vmatpush1.bf16.msra.mxu0 0
      %1290 = vmatprep.subr.bf16.mxu0 0
      %1291 = vmatpush1.bf16.msra.mxu0 0
      %1292 = vmatprep.mubr.bf16.mxu0 0
      %1293 = vmatmul.mubr.bf16.gmra.mrb[0].mxu0 %v1258
      %v1294 = vpop.f32.mrb[0].mxu0
      %v1295 = vadd.f32 %v1243, %v1294
      %v1296 = vpop.f32.mrb[0].mxu0
      %v1297 = vpop.f32.mrb[0].mxu0
      %v1298 = vpop.f32.mrb[0].mxu0
      %1299 = vdwg.mxu0
      %v1300 = vmax.f32 %v1295, 0.0
      %v1301 = vpack.c.bf16 %v1300, %v1300
      %v1302 = vld [vmem:[%s12] sm:$0xf]
      %v1303 = vld [vmem:[%s12 + $0x4] sm:$0xf]
      %v1304 = vld [vmem:[%s12 + $0x8] sm:$0xf]
      %v1305 = vld [vmem:[%s12 + $0xc] sm:$0xf]
      %v1306 = vld [vmem:[%s12 + $0x10] sm:$0xf]
      %v1307 = vld [vmem:[%s12 + $0x14] sm:$0xf]
      %v1308 = vld [vmem:[%s12 + $0x18] sm:$0xf]
      %v1309 = vld [vmem:[%s12 + $0x1c] sm:$0xf]
      %v1310 = vld [vmem:[%s13] sm:$0x1]
      %v1312 = vlaneseq
      %v1313 = vshrl.u32 %v1312, 7
      %v1314 = vsub.s32 0, %v1313
      %v1315 = vrot.slane %v1310, %v1314
      %v1325 = vunpack.c.l.b16 %v1302
      %v1326 = vunpack.c.l.b16 %v1303
      %v1327 = vunpack.c.l.b16 %v1304
      %v1328 = vunpack.c.l.b16 %v1305
      %v1329 = vunpack.c.l.b16 %v1306
      %v1330 = vunpack.c.l.b16 %v1307
      %v1331 = vunpack.c.l.b16 %v1308
      %v1332 = vunpack.c.l.b16 %v1309
      %v1333 = vpack.c.b16 %v1326, %v1325
      %v1334 = vpack.c.b16 %v1328, %v1327
      %v1335 = vpack.c.b16 %v1330, %v1329
      %v1336 = vpack.c.b16 %v1332, %v1331
      %vm1341 = vcmask 523264
      %v1343 = vsel %vm1341, %v1301, 0
      %1345 = vmatprep.subr.bf16.mxu0 0
      %1346 = vmatpush1.bf16.msra.mxu0 %v1333
      %1347 = vmatprep.subr.bf16.mxu0 0
      %1348 = vmatpush1.bf16.msra.mxu0 %v1334
      %1349 = vmatprep.subr.bf16.mxu0 0
      %1350 = vmatpush1.bf16.msra.mxu0 %v1335
      %1351 = vmatprep.subr.bf16.mxu0 0
      %1352 = vmatpush1.bf16.msra.mxu0 %v1336
      %1353 = vmatprep.subr.bf16.mxu0 0
      %1354 = vmatpush1.bf16.msra.mxu0 0
      %1355 = vmatprep.subr.bf16.mxu0 0
      %1356 = vmatpush1.bf16.msra.mxu0 0
      %1357 = vmatprep.subr.bf16.mxu0 0
      %1358 = vmatpush1.bf16.msra.mxu0 0
      %1359 = vmatprep.subr.bf16.mxu0 0
      %1360 = vmatpush1.bf16.msra.mxu0 0
      %1361 = vmatprep.subr.bf16.mxu0 0
      %1362 = vmatpush1.bf16.msra.mxu0 0
      %1363 = vmatprep.subr.bf16.mxu0 0
      %1364 = vmatpush1.bf16.msra.mxu0 0
      %1365 = vmatprep.subr.bf16.mxu0 0
      %1366 = vmatpush1.bf16.msra.mxu0 0
      %1367 = vmatprep.subr.bf16.mxu0 0
      %1368 = vmatpush1.bf16.msra.mxu0 0
      %1369 = vmatprep.subr.bf16.mxu0 0
      %1370 = vmatpush1.bf16.msra.mxu0 0
      %1371 = vmatprep.subr.bf16.mxu0 0
      %1372 = vmatpush1.bf16.msra.mxu0 0
      %1373 = vmatprep.subr.bf16.mxu0 0
      %1374 = vmatpush1.bf16.msra.mxu0 0
      %1375 = vmatprep.subr.bf16.mxu0 0
      %1376 = vmatpush1.bf16.msra.mxu0 0
      %1377 = vmatprep.mubr.bf16.mxu0 0
      %1378 = vmatmul.mubr.bf16.gmra.mrb[0].mxu0 %v1343
      %v1379 = vpop.f32.mrb[0].mxu0
      %v1380 = vadd.f32 %v1315, %v1379
      %v1381 = vpop.f32.mrb[0].mxu0
      %v1382 = vpop.f32.mrb[0].mxu0
      %v1383 = vpop.f32.mrb[0].mxu0
      %1384 = vdwg.mxu0
      %v1385 = vadd.f32 %v1232, %v1380
      %v1386 = vsel %vm1211, %v1385, 0.0
      %v1387 = vrot.slane %v1386, 4
      %v1388 = vadd.f32 %v1386, %v1387
      %v1389 = vrot.slane %v1388, 2
      %v1390 = vadd.f32 %v1388, %v1389
      %v1391 = vrot.slane %v1390, 1
      %v1392 = vadd.f32 %v1390, %v1391
      %v1393 = vmul.f32 %v1392, 0.25
      %v1394 = vsub.f32 %v1385, %v1393
      %v1395 = vmul.f32 %v1394, %v1394
      %v1396 = vsel %vm1211, %v1395, 0.0
      %v1397 = vrot.slane %v1396, 4
      %v1398 = vadd.f32 %v1396, %v1397
      %v1399 = vrot.slane %v1398, 2
      %v1400 = vadd.f32 %v1398, %v1399
      %v1401 = vrot.slane %v1400, 1
      %v1402 = vadd.f32 %v1400, %v1401
      %v1403 = vmul.f32 %v1402, 0.25
      %v1404 = vadd.f32 %v1403, 1e-05
      %v1405 = vrsqrt.pop %v1404
      %v1406 = vmul.f32 %v1394, %v1405
      %v1407 = vpack.c.bf16 %v1406, %v1406
      %vm1408 = vcmask 254976
      %1409 = vst.msk [vmem:[%s476] sm:$0x3] %vm1408, %v1407
      %p1410 = scmp.lt.s32.totalorder %s25, 1
      %s1411 = scalar_select %p1410, %s25, 1
      %s1412 = smul.addr %s1411, 2
      %s1413 = scalar_lea.vmem %s14, %s1412
      // Predicated region
      $region77: #{eut_single_stage.8} parent=75 // pred_check
        %p1414 = pneg %p347
      $region78: #{eut_single_stage.8} parent=75 // pred_check_branch
        %1416 = sbr.rel (%p1414) target = $region80
      $region79: #{eut_single_stage.8} parent=75 // pred_region
        _
      $region80: #{eut_single_stage.8} parent=75 // pred_fallthru
        _
    $region76: #{eut_single_stage.8} parent=5 // pred_fallthru
      _
    %p1417 = scmp.le.s32.totalorder 2, %s20
    // Predicated region
    $region81: #{eut_single_stage.8} parent=5 // pred_check
      %p1418 = pneg %p1417
    $region82: #{eut_single_stage.8} parent=5 // pred_check_branch
      %1420 = sbr.rel (%p1418) target = $region84
    $region83: #{eut_single_stage.8} parent=5 // pred_region
      %s1421 = ssub.s32 %s20, 2
      // Predicated region
      $region85: #{eut_single_stage.8} parent=83 // pred_check
        %p1422 = pneg %p353
      $region86: #{eut_single_stage.8} parent=83 // pred_check_branch
        %1424 = sbr.rel (%p1422) target = $region88
      $region87: #{eut_single_stage.8} parent=83 // pred_region
        %p1425 = scmp.lt.s32.totalorder %s26, 1
        %s1426 = scalar_select %p1425, %s26, 1
        %s1427 = smul.addr %s1426, 2
        %s1428 = scalar_lea.vmem %s14, %s1427
      $region88: #{eut_single_stage.8} parent=83 // pred_fallthru
        _
    $region84: #{eut_single_stage.8} parent=5 // pred_fallthru
      _
  $region6: #{eut_single_stage.8} parent=0 // loop_footer
    %s24 = sadd.s32 1, %s20
  $region7: #{eut_single_stage.8} parent=0 // loop_footer_branch
    %19 = sbr.rel target = $region3
  $region8: #{eut_single_stage.8} parent=0 // loop_exit
    _

// kernel: eut_single_stage.9
$region0: #{eut_single_stage.9}
  #allocation0 [shape = 'u32[]', space=smem, size = 0x4, offset = 0x4, fixed_abs, tag = 'smem constant byte address 0x4 - core index']
  #allocation1 [shape = 'u32[144,128]{1,0:T(1,128)}', space=vmem, size = 0x12000, scoped, tag = 'internal scratch']
  %s0 = inlined_call_operand.vmem [shape: f32[2,2,1,4], index: 0, kind: input, shape index: {}]
  %s1 = inlined_call_operand.vmem [shape: bf16[2,8,32], index: 1, kind: input, shape index: {}]
  %s2 = inlined_call_operand.vmem [shape: bf16[2,8,32], index: 2, kind: input, shape index: {}]
  %s3 = inlined_call_operand.vmem [shape: bf16[32,32], index: 3, kind: input, shape index: {}]
  %s4 = inlined_call_operand.vmem [shape: f32[1,32], index: 4, kind: input, shape index: {}]
  %s5 = inlined_call_operand.vmem [shape: bf16[32,32], index: 5, kind: input, shape index: {}]
  %s6 = inlined_call_operand.vmem [shape: f32[1,32], index: 6, kind: input, shape index: {}]
  %s7 = inlined_call_operand.vmem [shape: bf16[32,32], index: 7, kind: input, shape index: {}]
  %s8 = inlined_call_operand.vmem [shape: f32[1,32], index: 8, kind: input, shape index: {}]
  %s9 = inlined_call_operand.vmem [shape: bf16[32,32], index: 9, kind: input, shape index: {}]
  %s10 = inlined_call_operand.vmem [shape: f32[1,32], index: 10, kind: input, shape index: {}]
  %s11 = inlined_call_operand.vmem [shape: bf16[32,64], index: 11, kind: input, shape index: {}]
  %s12 = inlined_call_operand.vmem [shape: f32[1,64], index: 12, kind: input, shape index: {}]
  %s13 = inlined_call_operand.vmem [shape: bf16[64,32], index: 13, kind: input, shape index: {}]
  %s14 = inlined_call_operand.vmem [shape: f32[1,32], index: 14, kind: input, shape index: {}]
  %s15 = inlined_call_operand.vmem [shape: bf16[2,8,32], index: 15, kind: output, shape index: {}]
  %s16 = sld [smem:[#allocation0]]
  $region93: #{eut_single_stage.9} parent=0
    _
  %s18 = ssub.s32 1, %s16
  %s19 = scalar_select 0, %s18, %s16
  loop: start=0, step=1, limit=4
  $region2: #{eut_single_stage.9} parent=0 // loop_pre_header
    _
  $region3: #{eut_single_stage.9} parent=0 // loop_header
    %s21 = sphi 0, %s25
    %p22 = scmp.ge.s32.totalorder %s21, 4
    %s31 = sphi 0, %s33
    %s34 = sphi 0, %s31
    %s35 = sphi 0, %s34
    %s51 = sphi 0, %s35
    %s57 = sphi 0, %s59
    %s60 = sphi 0, %s57
    %s61 = sphi 0, %s60
    %s77 = sphi 0, %s61
    %s83 = sphi 0, %s85
    %s86 = sphi 0, %s83
    %s87 = sphi 0, %s86
    %s103 = sphi 0, %s87
    %s107 = sphi 0, %s107
    %s109 = sphi 0, %s107
    %s110 = sphi 0, %s109
    %s124 = sphi 0, %s110
    %s128 = sphi 0, %s128
    %s130 = sphi 0, %s128
    %s131 = sphi 0, %s130
    %s145 = sphi 0, %s131
    %s149 = sphi 0, %s149
    %s151 = sphi 0, %s149
    %s152 = sphi 0, %s151
    %s166 = sphi 0, %s152
    %s170 = sphi 0, %s170
    %s172 = sphi 0, %s170
    %s173 = sphi 0, %s172
    %s187 = sphi 0, %s173
    %s191 = sphi 0, %s191
    %s193 = sphi 0, %s191
    %s194 = sphi 0, %s193
    %s208 = sphi 0, %s194
    %s212 = sphi 0, %s212
    %s214 = sphi 0, %s212
    %s215 = sphi 0, %s214
    %s229 = sphi 0, %s215
    %s233 = sphi 0, %s233
    %s235 = sphi 0, %s233
    %s236 = sphi 0, %s235
    %s250 = sphi 0, %s236
    %s254 = sphi 0, %s254
    %s256 = sphi 0, %s254
    %s257 = sphi 0, %s256
    %s271 = sphi 0, %s257
    %s275 = sphi 0, %s275
    %s277 = sphi 0, %s275
    %s278 = sphi 0, %s277
    %s292 = sphi 0, %s278
    %s296 = sphi 0, %s296
    %s298 = sphi 0, %s296
    %s299 = sphi 0, %s298
    %s313 = sphi 0, %s299
    %s317 = sphi 0, %s317
    %s319 = sphi 0, %s317
    %s320 = sphi 0, %s319
    %s334 = sphi 0, %s320
    %s338 = sphi 0, %s338
    %s340 = sphi 0, %s338
    %s341 = sphi 0, %s340
    %s355 = sphi 0, %s341
    %s361 = sphi 0, %s363
    %s364 = sphi 0, %s361
    %s365 = sphi 0, %s364
    %s381 = sphi 0, %s365
  $region4: #{eut_single_stage.9} parent=0 // loop_header_branch
    %24 = sbr.rel (%p22) target = $region8
  $region5: #{eut_single_stage.9} parent=0 // loop_body
    %s26 = ssub.s32 %s21, 1
    %s27 = ssub.s32 %s21, 2
    %s28 = sadd.s32 %s21, 1
    %s29 = ssub.s32 %s21, %s28
    %p30 = scmp.eq.s32.totalorder %s29, 0
    %s32 = sadd.s32 %s31, 1
    %s33 = scalar_select %p30, %s31, %s32
    %p36 = pneg %p30
    %p37 = scmp.eq.s32.totalorder %s21, 1
    %p38 = por %p36, %p37
    %p39 = scmp.ne.s32.totalorder %s31, %s34
    %p40 = scmp.eq.s32.totalorder %s21, 0
    %p41 = por %p39, %p40
    %p42 = scmp.ne.s32.totalorder %s31, %s34
    %p43 = scmp.eq.s32.totalorder %s26, 1
    %p44 = por %p42, %p43
    %p45 = scmp.ne.s32.totalorder %s34, %s35
    %p46 = scmp.eq.s32.totalorder %s26, 0
    %p47 = por %p45, %p46
    %p48 = scmp.ne.s32.totalorder %s34, %s35
    %p49 = scmp.eq.s32.totalorder %s27, 1
    %p50 = por %p48, %p49
    %p52 = scmp.ne.s32.totalorder %s35, %s51
    %p53 = scmp.eq.s32.totalorder %s27, 0
    %p54 = por %p52, %p53
    %s55 = ssub.s32 %s21, %s28
    %p56 = scmp.eq.s32.totalorder %s55, 0
    %s58 = sadd.s32 %s57, 1
    %s59 = scalar_select %p56, %s57, %s58
    %p62 = pneg %p56
    %p63 = scmp.eq.s32.totalorder %s21, 1
    %p64 = por %p62, %p63
    %p65 = scmp.ne.s32.totalorder %s57, %s60
    %p66 = scmp.eq.s32.totalorder %s21, 0
    %p67 = por %p65, %p66
    %p68 = scmp.ne.s32.totalorder %s57, %s60
    %p69 = scmp.eq.s32.totalorder %s26, 1
    %p70 = por %p68, %p69
    %p71 = scmp.ne.s32.totalorder %s60, %s61
    %p72 = scmp.eq.s32.totalorder %s26, 0
    %p73 = por %p71, %p72
    %p74 = scmp.ne.s32.totalorder %s60, %s61
    %p75 = scmp.eq.s32.totalorder %s27, 1
    %p76 = por %p74, %p75
    %p78 = scmp.ne.s32.totalorder %s61, %s77
    %p79 = scmp.eq.s32.totalorder %s27, 0
    %p80 = por %p78, %p79
    %s81 = ssub.s32 %s21, %s28
    %p82 = scmp.eq.s32.totalorder %s81, 0
    %s84 = sadd.s32 %s83, 1
    %s85 = scalar_select %p82, %s83, %s84
    %p88 = pneg %p82
    %p89 = scmp.eq.s32.totalorder %s21, 1
    %p90 = por %p88, %p89
    %p91 = scmp.ne.s32.totalorder %s83, %s86
    %p92 = scmp.eq.s32.totalorder %s21, 0
    %p93 = por %p91, %p92
    %p94 = scmp.ne.s32.totalorder %s83, %s86
    %p95 = scmp.eq.s32.totalorder %s26, 1
    %p96 = por %p94, %p95
    %p97 = scmp.ne.s32.totalorder %s86, %s87
    %p98 = scmp.eq.s32.totalorder %s26, 0
    %p99 = por %p97, %p98
    %p100 = scmp.ne.s32.totalorder %s86, %s87
    %p101 = scmp.eq.s32.totalorder %s27, 1
    %p102 = por %p100, %p101
    %p104 = scmp.ne.s32.totalorder %s87, %s103
    %p105 = scmp.eq.s32.totalorder %s27, 0
    %p106 = por %p104, %p105
    %s108 = sadd.s32 %s107, 1
    %p111 = scmp.eq.s32.totalorder %s21, 1
    %p112 = scmp.ne.s32.totalorder %s107, %s109
    %p113 = scmp.eq.s32.totalorder %s21, 0
    %p114 = por %p112, %p113
    %p115 = scmp.ne.s32.totalorder %s107, %s109
    %p116 = scmp.eq.s32.totalorder %s26, 1
    %p117 = por %p115, %p116
    %p118 = scmp.ne.s32.totalorder %s109, %s110
    %p119 = scmp.eq.s32.totalorder %s26, 0
    %p120 = por %p118, %p119
    %p121 = scmp.ne.s32.totalorder %s109, %s110
    %p122 = scmp.eq.s32.totalorder %s27, 1
    %p123 = por %p121, %p122
    %p125 = scmp.ne.s32.totalorder %s110, %s124
    %p126 = scmp.eq.s32.totalorder %s27, 0
    %p127 = por %p125, %p126
    %s129 = sadd.s32 %s128, 1
    %p132 = scmp.eq.s32.totalorder %s21, 1
    %p133 = scmp.ne.s32.totalorder %s128, %s130
    %p134 = scmp.eq.s32.totalorder %s21, 0
    %p135 = por %p133, %p134
    %p136 = scmp.ne.s32.totalorder %s128, %s130
    %p137 = scmp.eq.s32.totalorder %s26, 1
    %p138 = por %p136, %p137
    %p139 = scmp.ne.s32.totalorder %s130, %s131
    %p140 = scmp.eq.s32.totalorder %s26, 0
    %p141 = por %p139, %p140
    %p142 = scmp.ne.s32.totalorder %s130, %s131
    %p143 = scmp.eq.s32.totalorder %s27, 1
    %p144 = por %p142, %p143
    %p146 = scmp.ne.s32.totalorder %s131, %s145
    %p147 = scmp.eq.s32.totalorder %s27, 0
    %p148 = por %p146, %p147
    %s150 = sadd.s32 %s149, 1
    %p153 = scmp.eq.s32.totalorder %s21, 1
    %p154 = scmp.ne.s32.totalorder %s149, %s151
    %p155 = scmp.eq.s32.totalorder %s21, 0
    %p156 = por %p154, %p155
    %p157 = scmp.ne.s32.totalorder %s149, %s151
    %p158 = scmp.eq.s32.totalorder %s26, 1
    %p159 = por %p157, %p158
    %p160 = scmp.ne.s32.totalorder %s151, %s152
    %p161 = scmp.eq.s32.totalorder %s26, 0
    %p162 = por %p160, %p161
    %p163 = scmp.ne.s32.totalorder %s151, %s152
    %p164 = scmp.eq.s32.totalorder %s27, 1
    %p165 = por %p163, %p164
    %p167 = scmp.ne.s32.totalorder %s152, %s166
    %p168 = scmp.eq.s32.totalorder %s27, 0
    %p169 = por %p167, %p168
    %s171 = sadd.s32 %s170, 1
    %p174 = scmp.eq.s32.totalorder %s21, 1
    %p175 = scmp.ne.s32.totalorder %s170, %s172
    %p176 = scmp.eq.s32.totalorder %s21, 0
    %p177 = por %p175, %p176
    %p178 = scmp.ne.s32.totalorder %s170, %s172
    %p179 = scmp.eq.s32.totalorder %s26, 1
    %p180 = por %p178, %p179
    %p181 = scmp.ne.s32.totalorder %s172, %s173
    %p182 = scmp.eq.s32.totalorder %s26, 0
    %p183 = por %p181, %p182
    %p184 = scmp.ne.s32.totalorder %s172, %s173
    %p185 = scmp.eq.s32.totalorder %s27, 1
    %p186 = por %p184, %p185
    %p188 = scmp.ne.s32.totalorder %s173, %s187
    %p189 = scmp.eq.s32.totalorder %s27, 0
    %p190 = por %p188, %p189
    %s192 = sadd.s32 %s191, 1
    %p195 = scmp.eq.s32.totalorder %s21, 1
    %p196 = scmp.ne.s32.totalorder %s191, %s193
    %p197 = scmp.eq.s32.totalorder %s21, 0
    %p198 = por %p196, %p197
    %p199 = scmp.ne.s32.totalorder %s191, %s193
    %p200 = scmp.eq.s32.totalorder %s26, 1
    %p201 = por %p199, %p200
    %p202 = scmp.ne.s32.totalorder %s193, %s194
    %p203 = scmp.eq.s32.totalorder %s26, 0
    %p204 = por %p202, %p203
    %p205 = scmp.ne.s32.totalorder %s193, %s194
    %p206 = scmp.eq.s32.totalorder %s27, 1
    %p207 = por %p205, %p206
    %p209 = scmp.ne.s32.totalorder %s194, %s208
    %p210 = scmp.eq.s32.totalorder %s27, 0
    %p211 = por %p209, %p210
    %s213 = sadd.s32 %s212, 1
    %p216 = scmp.eq.s32.totalorder %s21, 1
    %p217 = scmp.ne.s32.totalorder %s212, %s214
    %p218 = scmp.eq.s32.totalorder %s21, 0
    %p219 = por %p217, %p218
    %p220 = scmp.ne.s32.totalorder %s212, %s214
    %p221 = scmp.eq.s32.totalorder %s26, 1
    %p222 = por %p220, %p221
    %p223 = scmp.ne.s32.totalorder %s214, %s215
    %p224 = scmp.eq.s32.totalorder %s26, 0
    %p225 = por %p223, %p224
    %p226 = scmp.ne.s32.totalorder %s214, %s215
    %p227 = scmp.eq.s32.totalorder %s27, 1
    %p228 = por %p226, %p227
    %p230 = scmp.ne.s32.totalorder %s215, %s229
    %p231 = scmp.eq.s32.totalorder %s27, 0
    %p232 = por %p230, %p231
    %s234 = sadd.s32 %s233, 1
    %p237 = scmp.eq.s32.totalorder %s21, 1
    %p238 = scmp.ne.s32.totalorder %s233, %s235
    %p239 = scmp.eq.s32.totalorder %s21, 0
    %p240 = por %p238, %p239
    %p241 = scmp.ne.s32.totalorder %s233, %s235
    %p242 = scmp.eq.s32.totalorder %s26, 1
    %p243 = por %p241, %p242
    %p244 = scmp.ne.s32.totalorder %s235, %s236
    %p245 = scmp.eq.s32.totalorder %s26, 0
    %p246 = por %p244, %p245
    %p247 = scmp.ne.s32.totalorder %s235, %s236
    %p248 = scmp.eq.s32.totalorder %s27, 1
    %p249 = por %p247, %p248
    %p251 = scmp.ne.s32.totalorder %s236, %s250
    %p252 = scmp.eq.s32.totalorder %s27, 0
    %p253 = por %p251, %p252
    %s255 = sadd.s32 %s254, 1
    %p258 = scmp.eq.s32.totalorder %s21, 1
    %p259 = scmp.ne.s32.totalorder %s254, %s256
    %p260 = scmp.eq.s32.totalorder %s21, 0
    %p261 = por %p259, %p260
    %p262 = scmp.ne.s32.totalorder %s254, %s256
    %p263 = scmp.eq.s32.totalorder %s26, 1
    %p264 = por %p262, %p263
    %p265 = scmp.ne.s32.totalorder %s256, %s257
    %p266 = scmp.eq.s32.totalorder %s26, 0
    %p267 = por %p265, %p266
    %p268 = scmp.ne.s32.totalorder %s256, %s257
    %p269 = scmp.eq.s32.totalorder %s27, 1
    %p270 = por %p268, %p269
    %p272 = scmp.ne.s32.totalorder %s257, %s271
    %p273 = scmp.eq.s32.totalorder %s27, 0
    %p274 = por %p272, %p273
    %s276 = sadd.s32 %s275, 1
    %p279 = scmp.eq.s32.totalorder %s21, 1
    %p280 = scmp.ne.s32.totalorder %s275, %s277
    %p281 = scmp.eq.s32.totalorder %s21, 0
    %p282 = por %p280, %p281
    %p283 = scmp.ne.s32.totalorder %s275, %s277
    %p284 = scmp.eq.s32.totalorder %s26, 1
    %p285 = por %p283, %p284
    %p286 = scmp.ne.s32.totalorder %s277, %s278
    %p287 = scmp.eq.s32.totalorder %s26, 0
    %p288 = por %p286, %p287
    %p289 = scmp.ne.s32.totalorder %s277, %s278
    %p290 = scmp.eq.s32.totalorder %s27, 1
    %p291 = por %p289, %p290
    %p293 = scmp.ne.s32.totalorder %s278, %s292
    %p294 = scmp.eq.s32.totalorder %s27, 0
    %p295 = por %p293, %p294
    %s297 = sadd.s32 %s296, 1
    %p300 = scmp.eq.s32.totalorder %s21, 1
    %p301 = scmp.ne.s32.totalorder %s296, %s298
    %p302 = scmp.eq.s32.totalorder %s21, 0
    %p303 = por %p301, %p302
    %p304 = scmp.ne.s32.totalorder %s296, %s298
    %p305 = scmp.eq.s32.totalorder %s26, 1
    %p306 = por %p304, %p305
    %p307 = scmp.ne.s32.totalorder %s298, %s299
    %p308 = scmp.eq.s32.totalorder %s26, 0
    %p309 = por %p307, %p308
    %p310 = scmp.ne.s32.totalorder %s298, %s299
    %p311 = scmp.eq.s32.totalorder %s27, 1
    %p312 = por %p310, %p311
    %p314 = scmp.ne.s32.totalorder %s299, %s313
    %p315 = scmp.eq.s32.totalorder %s27, 0
    %p316 = por %p314, %p315
    %s318 = sadd.s32 %s317, 1
    %p321 = scmp.eq.s32.totalorder %s21, 1
    %p322 = scmp.ne.s32.totalorder %s317, %s319
    %p323 = scmp.eq.s32.totalorder %s21, 0
    %p324 = por %p322, %p323
    %p325 = scmp.ne.s32.totalorder %s317, %s319
    %p326 = scmp.eq.s32.totalorder %s26, 1
    %p327 = por %p325, %p326
    %p328 = scmp.ne.s32.totalorder %s319, %s320
    %p329 = scmp.eq.s32.totalorder %s26, 0
    %p330 = por %p328, %p329
    %p331 = scmp.ne.s32.totalorder %s319, %s320
    %p332 = scmp.eq.s32.totalorder %s27, 1
    %p333 = por %p331, %p332
    %p335 = scmp.ne.s32.totalorder %s320, %s334
    %p336 = scmp.eq.s32.totalorder %s27, 0
    %p337 = por %p335, %p336
    %s339 = sadd.s32 %s338, 1
    %p342 = scmp.eq.s32.totalorder %s21, 1
    %p343 = scmp.ne.s32.totalorder %s338, %s340
    %p344 = scmp.eq.s32.totalorder %s21, 0
    %p345 = por %p343, %p344
    %p346 = scmp.ne.s32.totalorder %s338, %s340
    %p347 = scmp.eq.s32.totalorder %s26, 1
    %p348 = por %p346, %p347
    %p349 = scmp.ne.s32.totalorder %s340, %s341
    %p350 = scmp.eq.s32.totalorder %s26, 0
    %p351 = por %p349, %p350
    %p352 = scmp.ne.s32.totalorder %s340, %s341
    %p353 = scmp.eq.s32.totalorder %s27, 1
    %p354 = por %p352, %p353
    %p356 = scmp.ne.s32.totalorder %s341, %s355
    %p357 = scmp.eq.s32.totalorder %s27, 0
    %p358 = por %p356, %p357
    %s359 = ssub.s32 %s21, %s28
    %p360 = scmp.eq.s32.totalorder %s359, 0
    %s362 = sadd.s32 %s361, 1
    %s363 = scalar_select %p360, %s361, %s362
    %p366 = pneg %p360
    %p367 = scmp.eq.s32.totalorder %s21, 1
    %p368 = por %p366, %p367
    %p369 = scmp.ne.s32.totalorder %s361, %s364
    %p370 = scmp.eq.s32.totalorder %s21, 0
    %p371 = por %p369, %p370
    %p372 = scmp.ne.s32.totalorder %s361, %s364
    %p373 = scmp.eq.s32.totalorder %s26, 1
    %p374 = por %p372, %p373
    %p375 = scmp.ne.s32.totalorder %s364, %s365
    %p376 = scmp.eq.s32.totalorder %s26, 0
    %p377 = por %p375, %p376
    %p378 = scmp.ne.s32.totalorder %s364, %s365
    %p379 = scmp.eq.s32.totalorder %s27, 1
    %p380 = por %p378, %p379
    %p382 = scmp.ne.s32.totalorder %s365, %s381
    %p383 = scmp.eq.s32.totalorder %s27, 0
    %p384 = por %p382, %p383
    %p385 = scmp.le.s32.totalorder 1, %s21
    %p386 = scmp.lt.s32.totalorder %s21, 3
    %p387 = pnand %p385, %p386
    %p388 = pneg %p387
    // Predicated region
    $region9: #{eut_single_stage.9} parent=5 // pred_check
      _
    $region10: #{eut_single_stage.9} parent=5 // pred_check_branch
      %390 = sbr.rel (%p387) target = $region12
    $region11: #{eut_single_stage.9} parent=5 // pred_region
      %s391 = ssub.s32 %s21, 1
      // Predicated region
      $region13: #{eut_single_stage.9} parent=11 // pred_check
        %p392 = pneg %p120
      $region14: #{eut_single_stage.9} parent=11 // pred_check_branch
        %394 = sbr.rel (%p392) target = $region16
      $region15: #{eut_single_stage.9} parent=11 // pred_region
        _
      $region16: #{eut_single_stage.9} parent=11 // pred_fallthru
        _
      // Predicated region
      $region17: #{eut_single_stage.9} parent=11 // pred_check
        %p395 = pneg %p141
      $region18: #{eut_single_stage.9} parent=11 // pred_check_branch
        %397 = sbr.rel (%p395) target = $region20
      $region19: #{eut_single_stage.9} parent=11 // pred_region
        _
      $region20: #{eut_single_stage.9} parent=11 // pred_fallthru
        _
      // Predicated region
      $region21: #{eut_single_stage.9} parent=11 // pred_check
        %p398 = pneg %p162
      $region22: #{eut_single_stage.9} parent=11 // pred_check_branch
        %400 = sbr.rel (%p398) target = $region24
      $region23: #{eut_single_stage.9} parent=11 // pred_region
        _
      $region24: #{eut_single_stage.9} parent=11 // pred_fallthru
        _
      // Predicated region
      $region25: #{eut_single_stage.9} parent=11 // pred_check
        %p401 = pneg %p183
      $region26: #{eut_single_stage.9} parent=11 // pred_check_branch
        %403 = sbr.rel (%p401) target = $region28
      $region27: #{eut_single_stage.9} parent=11 // pred_region
        _
      $region28: #{eut_single_stage.9} parent=11 // pred_fallthru
        _
      // Predicated region
      $region29: #{eut_single_stage.9} parent=11 // pred_check
        %p404 = pneg %p204
      $region30: #{eut_single_stage.9} parent=11 // pred_check_branch
        %406 = sbr.rel (%p404) target = $region32
      $region31: #{eut_single_stage.9} parent=11 // pred_region
        _
      $region32: #{eut_single_stage.9} parent=11 // pred_fallthru
        _
      // Predicated region
      $region33: #{eut_single_stage.9} parent=11 // pred_check
        %p407 = pneg %p225
      $region34: #{eut_single_stage.9} parent=11 // pred_check_branch
        %409 = sbr.rel (%p407) target = $region36
      $region35: #{eut_single_stage.9} parent=11 // pred_region
        _
      $region36: #{eut_single_stage.9} parent=11 // pred_fallthru
        _
      // Predicated region
      $region37: #{eut_single_stage.9} parent=11 // pred_check
        %p410 = pneg %p246
      $region38: #{eut_single_stage.9} parent=11 // pred_check_branch
        %412 = sbr.rel (%p410) target = $region40
      $region39: #{eut_single_stage.9} parent=11 // pred_region
        _
      $region40: #{eut_single_stage.9} parent=11 // pred_fallthru
        _
      // Predicated region
      $region41: #{eut_single_stage.9} parent=11 // pred_check
        %p413 = pneg %p267
      $region42: #{eut_single_stage.9} parent=11 // pred_check_branch
        %415 = sbr.rel (%p413) target = $region44
      $region43: #{eut_single_stage.9} parent=11 // pred_region
        _
      $region44: #{eut_single_stage.9} parent=11 // pred_fallthru
        _
      // Predicated region
      $region45: #{eut_single_stage.9} parent=11 // pred_check
        %p416 = pneg %p288
      $region46: #{eut_single_stage.9} parent=11 // pred_check_branch
        %418 = sbr.rel (%p416) target = $region48
      $region47: #{eut_single_stage.9} parent=11 // pred_region
        _
      $region48: #{eut_single_stage.9} parent=11 // pred_fallthru
        _
      // Predicated region
      $region49: #{eut_single_stage.9} parent=11 // pred_check
        %p419 = pneg %p309
      $region50: #{eut_single_stage.9} parent=11 // pred_check_branch
        %421 = sbr.rel (%p419) target = $region52
      $region51: #{eut_single_stage.9} parent=11 // pred_region
        _
      $region52: #{eut_single_stage.9} parent=11 // pred_fallthru
        _
      // Predicated region
      $region53: #{eut_single_stage.9} parent=11 // pred_check
        %p422 = pneg %p330
      $region54: #{eut_single_stage.9} parent=11 // pred_check_branch
        %424 = sbr.rel (%p422) target = $region56
      $region55: #{eut_single_stage.9} parent=11 // pred_region
        _
      $region56: #{eut_single_stage.9} parent=11 // pred_fallthru
        _
      // Predicated region
      $region57: #{eut_single_stage.9} parent=11 // pred_check
        %p425 = pneg %p351
      $region58: #{eut_single_stage.9} parent=11 // pred_check_branch
        %427 = sbr.rel (%p425) target = $region60
      $region59: #{eut_single_stage.9} parent=11 // pred_region
        _
      $region60: #{eut_single_stage.9} parent=11 // pred_fallthru
        _
    $region12: #{eut_single_stage.9} parent=5 // pred_fallthru
      _
    %p428 = scmp.lt.s32.totalorder %s21, 2
    // Predicated region
    $region61: #{eut_single_stage.9} parent=5 // pred_check
      %p429 = pneg %p428
    $region62: #{eut_single_stage.9} parent=5 // pred_check_branch
      %431 = sbr.rel (%p429) target = $region64
    $region63: #{eut_single_stage.9} parent=5 // pred_region
      // Predicated region
      $region65: #{eut_single_stage.9} parent=63 // pred_check
        %p432 = pneg %p41
      $region66: #{eut_single_stage.9} parent=63 // pred_check_branch
        %434 = sbr.rel (%p432) target = $region68
      $region67: #{eut_single_stage.9} parent=63 // pred_region
        %p435 = scmp.lt.s32.totalorder %s21, 1
        %s436 = scalar_select %p435, %s21, 1
        %s437 = smul.addr %s436, 2
        %s438 = scalar_lea.vmem %s0, %s437
      $region68: #{eut_single_stage.9} parent=63 // pred_fallthru
        _
      // Predicated region
      $region69: #{eut_single_stage.9} parent=63 // pred_check
        %p439 = pneg %p67
      $region70: #{eut_single_stage.9} parent=63 // pred_check_branch
        %441 = sbr.rel (%p439) target = $region72
      $region71: #{eut_single_stage.9} parent=63 // pred_region
        %p442 = scmp.lt.s32.totalorder %s21, 1
        %s443 = scalar_select %p442, %s21, 1
        %s444 = smul.addr %s443, 4
        %s445 = scalar_lea.vmem %s1, %s444
      $region72: #{eut_single_stage.9} parent=63 // pred_fallthru
        _
      // Predicated region
      $region73: #{eut_single_stage.9} parent=63 // pred_check
        %p446 = pneg %p93
      $region74: #{eut_single_stage.9} parent=63 // pred_check_branch
        %448 = sbr.rel (%p446) target = $region76
      $region75: #{eut_single_stage.9} parent=63 // pred_region
        %p449 = scmp.lt.s32.totalorder %s21, 1
        %s450 = scalar_select %p449, %s21, 1
        %s451 = smul.addr %s450, 4
        %s452 = scalar_lea.vmem %s2, %s451
      $region76: #{eut_single_stage.9} parent=63 // pred_fallthru
        _
    $region64: #{eut_single_stage.9} parent=5 // pred_fallthru
      _
    %p453 = scmp.le.s32.totalorder 1, %s21
    %p454 = scmp.lt.s32.totalorder %s21, 3
    %p455 = pnand %p453, %p454
    %p456 = pneg %p455
    // Predicated region
    $region77: #{eut_single_stage.9} parent=5 // pred_check
      _
    $region78: #{eut_single_stage.9} parent=5 // pred_check_branch
      %458 = sbr.rel (%p455) target = $region80
    $region79: #{eut_single_stage.9} parent=5 // pred_region
      %s459 = ssub.s32 %s21, 1
      %p460 = scmp.lt.s32.totalorder %s26, 1
      %s461 = scalar_select %p460, %s26, 1
      %s462 = smul.addr %s461, 2
      %s463 = scalar_lea.vmem %s0, %s462
      %p464 = pneg %p47
      %p465 = pneg %p44
      %p466 = scmp.lt.s32.totalorder %s26, 1
      %s467 = scalar_select %p466, %s26, 1
      %s468 = smul.addr %s467, 4
      %s469 = scalar_lea.vmem %s1, %s468
      %p470 = pneg %p73
      %p471 = pneg %p70
      %p472 = scmp.lt.s32.totalorder %s26, 1
      %s473 = scalar_select %p472, %s26, 1
      %s474 = smul.addr %s473, 4
      %s475 = scalar_lea.vmem %s2, %s474
      %p476 = pneg %p99
      %p477 = pneg %p96
      %p478 = pneg %p120
      %p479 = pneg %p117
      %p480 = pneg %p141
      %p481 = pneg %p138
      %p482 = pneg %p162
      %p483 = pneg %p159
      %p484 = pneg %p183
      %p485 = pneg %p180
      %p486 = pneg %p204
      %p487 = pneg %p201
      %p488 = pneg %p225
      %p489 = pneg %p222
      %p490 = pneg %p246
      %p491 = pneg %p243
      %p492 = pneg %p267
      %p493 = pneg %p264
      %p494 = pneg %p288
      %p495 = pneg %p285
      %p496 = pneg %p309
      %p497 = pneg %p306
      %p498 = pneg %p330
      %p499 = pneg %p327
      %p500 = pneg %p351
      %p501 = pneg %p348
      %p502 = pneg %p377
      %p503 = pneg %p374
      %p504 = scmp.lt.s32.totalorder %s26, 1
      %s505 = scalar_select %p504, %s26, 1
      %s506 = smul.addr %s505, 4
      %s507 = scalar_lea.vmem %s15, %s506
      %p508 = scmp.lt.s32.totalorder %s26, 1
      %s509 = scalar_select %p508, %s26, 1
      %s510 = smul.addr %s509, 2
      %s511 = scalar_lea.vmem %s0, %s510
      %p512 = scmp.lt.s32.totalorder %s26, 1
      %s513 = scalar_select %p512, %s26, 1
      %s514 = smul.addr %s513, 4
      %s515 = scalar_lea.vmem %s1, %s514
      %p516 = scmp.lt.s32.totalorder %s26, 1
      %s517 = scalar_select %p516, %s26, 1
      %s518 = smul.addr %s517, 4
      %s519 = scalar_lea.vmem %s2, %s518
      %p520 = scmp.lt.s32.totalorder %s26, 1
      %s521 = scalar_select %p520, %s26, 1
      %s522 = smul.addr %s521, 4
      %s523 = scalar_lea.vmem %s15, %s522
      %v525 = vld [vmem:[%s515] sm:$0xf]
      %v526 = vunpack.c.l.bf16 %v525
      %v527 = vld [vmem:[%s519] sm:$0xf]
      %v528 = vld [vmem:[%s3] sm:$0xf]
      %v529 = vld [vmem:[%s3 + $0x4] sm:$0xf]
      %v530 = vld [vmem:[%s3 + $0x8] sm:$0xf]
      %v531 = vld [vmem:[%s3 + $0xc] sm:$0xf]
      %v532 = vld [vmem:[%s4] sm:$0x1]
      %v534 = vlaneseq
      %v535 = vshrl.u32 %v534, 7
      %v536 = vsub.s32 0, %v535
      %v537 = vrot.slane %v532, %v536
      %v543 = vunpack.c.l.b16 %v528
      %v544 = vunpack.c.l.b16 %v529
      %v545 = vunpack.c.l.b16 %v530
      %v546 = vunpack.c.l.b16 %v531
      %v547 = vpack.c.b16 %v544, %v543
      %v548 = vpack.c.b16 %v546, %v545
      %vm551 = vcmask 261120
      %v553 = vsel %vm551, %v525, 0
      %555 = vmatprep.subr.bf16.mxu0 0
      %556 = vmatpush1.bf16.msra.mxu0 %v547
      %557 = vmatprep.subr.bf16.mxu0 0
      %558 = vmatpush1.bf16.msra.mxu0 %v548
      %559 = vmatprep.subr.bf16.mxu0 0
      %560 = vmatpush1.bf16.msra.mxu0 0
      %561 = vmatprep.subr.bf16.mxu0 0
      %562 = vmatpush1.bf16.msra.mxu0 0
      %563 = vmatprep.subr.bf16.mxu0 0
      %564 = vmatpush1.bf16.msra.mxu0 0
      %565 = vmatprep.subr.bf16.mxu0 0
      %566 = vmatpush1.bf16.msra.mxu0 0
      %567 = vmatprep.subr.bf16.mxu0 0
      %568 = vmatpush1.bf16.msra.mxu0 0
      %569 = vmatprep.subr.bf16.mxu0 0
      %570 = vmatpush1.bf16.msra.mxu0 0
      %571 = vmatprep.subr.bf16.mxu0 0
      %572 = vmatpush1.bf16.msra.mxu0 0
      %573 = vmatprep.subr.bf16.mxu0 0
      %574 = vmatpush1.bf16.msra.mxu0 0
      %575 = vmatprep.subr.bf16.mxu0 0
      %576 = vmatpush1.bf16.msra.mxu0 0
      %577 = vmatprep.subr.bf16.mxu0 0
      %578 = vmatpush1.bf16.msra.mxu0 0
      %579 = vmatprep.subr.bf16.mxu0 0
      %580 = vmatpush1.bf16.msra.mxu0 0
      %581 = vmatprep.subr.bf16.mxu0 0
      %582 = vmatpush1.bf16.msra.mxu0 0
      %583 = vmatprep.subr.bf16.mxu0 0
      %584 = vmatpush1.bf16.msra.mxu0 0
      %585 = vmatprep.subr.bf16.mxu0 0
      %586 = vmatpush1.bf16.msra.mxu0 0
      %587 = vmatprep.mubr.bf16.mxu0 0
      %588 = vmatmul.mubr.bf16.gmra.mrb[0].mxu0 %v553
      %v589 = vpop.f32.mrb[0].mxu0
      %v590 = vadd.f32 %v537, %v589
      %v591 = vpop.f32.mrb[0].mxu0
      %v592 = vpop.f32.mrb[0].mxu0
      %v593 = vpop.f32.mrb[0].mxu0
      %594 = vdwg.mxu0
      %v595 = vld [vmem:[%s5] sm:$0xf]
      %v596 = vld [vmem:[%s5 + $0x4] sm:$0xf]
      %v597 = vld [vmem:[%s5 + $0x8] sm:$0xf]
      %v598 = vld [vmem:[%s5 + $0xc] sm:$0xf]
      %v599 = vld [vmem:[%s6] sm:$0x1]
      %v601 = vlaneseq
      %v602 = vshrl.u32 %v601, 7
      %v603 = vsub.s32 0, %v602
      %v604 = vrot.slane %v599, %v603
      %v610 = vunpack.c.l.b16 %v595
      %v611 = vunpack.c.l.b16 %v596
      %v612 = vunpack.c.l.b16 %v597
      %v613 = vunpack.c.l.b16 %v598
      %v614 = vpack.c.b16 %v611, %v610
      %v615 = vpack.c.b16 %v613, %v612
      %618 = vmatprep.subr.bf16.mxu0 0
      %619 = vmatpush1.bf16.msra.mxu0 %v614
      %620 = vmatprep.subr.bf16.mxu0 0
      %621 = vmatpush1.bf16.msra.mxu0 %v615
      %622 = vmatprep.subr.bf16.mxu0 0
      %623 = vmatpush1.bf16.msra.mxu0 0
      %624 = vmatprep.subr.bf16.mxu0 0
      %625 = vmatpush1.bf16.msra.mxu0 0
      %626 = vmatprep.subr.bf16.mxu0 0
      %627 = vmatpush1.bf16.msra.mxu0 0
      %628 = vmatprep.subr.bf16.mxu0 0
      %629 = vmatpush1.bf16.msra.mxu0 0
      %630 = vmatprep.subr.bf16.mxu0 0
      %631 = vmatpush1.bf16.msra.mxu0 0
      %632 = vmatprep.subr.bf16.mxu0 0
      %633 = vmatpush1.bf16.msra.mxu0 0
      %634 = vmatprep.subr.bf16.mxu0 0
      %635 = vmatpush1.bf16.msra.mxu0 0
      %636 = vmatprep.subr.bf16.mxu0 0
      %637 = vmatpush1.bf16.msra.mxu0 0
      %638 = vmatprep.subr.bf16.mxu0 0
      %639 = vmatpush1.bf16.msra.mxu0 0
      %640 = vmatprep.subr.bf16.mxu0 0
      %641 = vmatpush1.bf16.msra.mxu0 0
      %642 = vmatprep.subr.bf16.mxu0 0
      %643 = vmatpush1.bf16.msra.mxu0 0
      %644 = vmatprep.subr.bf16.mxu0 0
      %645 = vmatpush1.bf16.msra.mxu0 0
      %646 = vmatprep.subr.bf16.mxu0 0
      %647 = vmatpush1.bf16.msra.mxu0 0
      %648 = vmatprep.subr.bf16.mxu0 0
      %649 = vmatpush1.bf16.msra.mxu0 0
      %650 = vmatprep.mubr.bf16.mxu0 0
      %651 = vmatmul.mubr.bf16.gmra.mrb[0].mxu0 %v553
      %v652 = vpop.f32.mrb[0].mxu0
      %v653 = vadd.f32 %v604, %v652
      %v654 = vpop.f32.mrb[0].mxu0
      %v655 = vpop.f32.mrb[0].mxu0
      %v656 = vpop.f32.mrb[0].mxu0
      %657 = vdwg.mxu0
      %v658 = vld [vmem:[%s7] sm:$0xf]
      %v659 = vld [vmem:[%s7 + $0x4] sm:$0xf]
      %v660 = vld [vmem:[%s7 + $0x8] sm:$0xf]
      %v661 = vld [vmem:[%s7 + $0xc] sm:$0xf]
      %v662 = vld [vmem:[%s8] sm:$0x1]
      %v664 = vlaneseq
      %v665 = vshrl.u32 %v664, 7
      %v666 = vsub.s32 0, %v665
      %v667 = vrot.slane %v662, %v666
      %v673 = vunpack.c.l.b16 %v658
      %v674 = vunpack.c.l.b16 %v659
      %v675 = vunpack.c.l.b16 %v660
      %v676 = vunpack.c.l.b16 %v661
      %v677 = vpack.c.b16 %v674, %v673
      %v678 = vpack.c.b16 %v676, %v675
      %v682 = vsel %vm551, %v527, 0
      %684 = vmatprep.subr.bf16.mxu0 0
      %685 = vmatpush1.bf16.msra.mxu0 %v677
      %686 = vmatprep.subr.bf16.mxu0 0
      %687 = vmatpush1.bf16.msra.mxu0 %v678
      %688 = vmatprep.subr.bf16.mxu0 0
      %689 = vmatpush1.bf16.msra.mxu0 0
      %690 = vmatprep.subr.bf16.mxu0 0
      %691 = vmatpush1.bf16.msra.mxu0 0
      %692 = vmatprep.subr.bf16.mxu0 0
      %693 = vmatpush1.bf16.msra.mxu0 0
      %694 = vmatprep.subr.bf16.mxu0 0
      %695 = vmatpush1.bf16.msra.mxu0 0
      %696 = vmatprep.subr.bf16.mxu0 0
      %697 = vmatpush1.bf16.msra.mxu0 0
      %698 = vmatprep.subr.bf16.mxu0 0
      %699 = vmatpush1.bf16.msra.mxu0 0
      %700 = vmatprep.subr.bf16.mxu0 0
      %701 = vmatpush1.bf16.msra.mxu0 0
      %702 = vmatprep.subr.bf16.mxu0 0
      %703 = vmatpush1.bf16.msra.mxu0 0
      %704 = vmatprep.subr.bf16.mxu0 0
      %705 = vmatpush1.bf16.msra.mxu0 0
      %706 = vmatprep.subr.bf16.mxu0 0
      %707 = vmatpush1.bf16.msra.mxu0 0
      %708 = vmatprep.subr.bf16.mxu0 0
      %709 = vmatpush1.bf16.msra.mxu0 0
      %710 = vmatprep.subr.bf16.mxu0 0
      %711 = vmatpush1.bf16.msra.mxu0 0
      %712 = vmatprep.subr.bf16.mxu0 0
      %713 = vmatpush1.bf16.msra.mxu0 0
      %714 = vmatprep.subr.bf16.mxu0 0
      %715 = vmatpush1.bf16.msra.mxu0 0
      %716 = vmatprep.mubr.bf16.mxu0 0
      %717 = vmatmul.mubr.bf16.gmra.mrb[0].mxu0 %v682
      %v718 = vpop.f32.mrb[0].mxu0
      %v719 = vadd.f32 %v667, %v718
      %v720 = vpop.f32.mrb[0].mxu0
      %v721 = vpop.f32.mrb[0].mxu0
      %v722 = vpop.f32.mrb[0].mxu0
      %723 = vdwg.mxu0
      %v725 = vcombine.high %v590, %v590
      %v727 = vpack.c.bf16 %v590, %v590
      %v728 = vpack.c.bf16 %v725, %v725
      %731 = vrot.lane.b32.xlu0 %v727, 120
      %v732 = vpop.permute.xlu0 %731
      %733 = vrot.lane.b32.xlu0 %v728, 120
      %v734 = vpop.permute.xlu0 %733
      %735 = vrot.lane.b32.xlu0 %v727, 112
      %v736 = vpop.permute.xlu0 %735
      %737 = vrot.lane.b32.xlu0 %v728, 112
      %v738 = vpop.permute.xlu0 %737
      %739 = vrot.lane.b32.xlu0 %v727, 104
      %v740 = vpop.permute.xlu0 %739
      %741 = vrot.lane.b32.xlu0 %v728, 104
      %v742 = vpop.permute.xlu0 %741
      %v744 = vcombine.high %v653, %v653
      %v746 = vpack.c.bf16 %v653, %v653
      %v747 = vpack.c.bf16 %v744, %v744
      %750 = vrot.lane.b32.xlu0 %v746, 120
      %v751 = vpop.permute.xlu0 %750
      %752 = vrot.lane.b32.xlu0 %v747, 120
      %v753 = vpop.permute.xlu0 %752
      %754 = vrot.lane.b32.xlu0 %v746, 112
      %v755 = vpop.permute.xlu0 %754
      %756 = vrot.lane.b32.xlu0 %v747, 112
      %v757 = vpop.permute.xlu0 %756
      %758 = vrot.lane.b32.xlu0 %v746, 104
      %v759 = vpop.permute.xlu0 %758
      %760 = vrot.lane.b32.xlu0 %v747, 104
      %v761 = vpop.permute.xlu0 %760
      %v763 = vcombine.high %v719, %v719
      %v765 = vpack.c.bf16 %v719, %v719
      %v766 = vpack.c.bf16 %v763, %v763
      %769 = vrot.lane.b32.xlu0 %v765, 120
      %v770 = vpop.permute.xlu0 %769
      %771 = vrot.lane.b32.xlu0 %v766, 120
      %v772 = vpop.permute.xlu0 %771
      %773 = vrot.lane.b32.xlu0 %v765, 112
      %v774 = vpop.permute.xlu0 %773
      %775 = vrot.lane.b32.xlu0 %v766, 112
      %v776 = vpop.permute.xlu0 %775
      %777 = vrot.lane.b32.xlu0 %v765, 104
      %v778 = vpop.permute.xlu0 %777
      %779 = vrot.lane.b32.xlu0 %v766, 104
      %v780 = vpop.permute.xlu0 %779
      %v781 = vld [vmem:[%s511] sm:$0x1]
      %v782 = vld [vmem:[%s511 + $0x1] sm:$0x1]
      %vm783 = vcmp.gt.f32.partialorder %v781, 0.0
      %vm784 = vcmp.gt.f32.partialorder %v782, 0.0
      %v785 = vsel %vm783, 0.0, -1e+09
      %v786 = vsel %vm784, 0.0, -1e+09
      %v789 = vlaneseq
      %v790 = vshrl.u32 %v789, 7
      %v791 = vsub.s32 0, %v790
      %v792 = vrot.slane %v785, %v791
      %v793 = vlaneseq
      %v794 = vshrl.u32 %v793, 7
      %v795 = vsub.s32 0, %v794
      %v796 = vrot.slane %v786, %v795
      %vm799 = vcmask 64512
      %v801 = vsel %vm799, %v727, 0
      %v804 = vsel %vm799, %v746, 0
      %806 = vmatprep.subr.bf16.mxu0 0
      %807 = vmatpush1.bf16.xpose.msra.mxu0 %v804
      %808 = vmatprep.subr.bf16.mxu0 0
      %809 = vmatpush1.bf16.xpose.msra.mxu0 0
      %810 = vmatprep.subr.bf16.mxu0 0
      %811 = vmatpush1.bf16.xpose.msra.mxu0 0
      %812 = vmatprep.subr.bf16.mxu0 0
      %813 = vmatpush1.bf16.xpose.msra.mxu0 0
      %814 = vmatprep.subr.bf16.mxu0 0
      %815 = vmatpush1.bf16.xpose.msra.mxu0 0
      %816 = vmatprep.subr.bf16.mxu0 0
      %817 = vmatpush1.bf16.xpose.msra.mxu0 0
      %818 = vmatprep.subr.bf16.mxu0 0
      %819 = vmatpush1.bf16.xpose.msra.mxu0 0
      %820 = vmatprep.subr.bf16.mxu0 0
      %821 = vmatpush1.bf16.xpose.msra.mxu0 0
      %822 = vmatprep.subr.bf16.mxu0 0
      %823 = vmatpush1.bf16.xpose.msra.mxu0 0
      %824 = vmatprep.subr.bf16.mxu0 0
      %825 = vmatpush1.bf16.xpose.msra.mxu0 0
      %826 = vmatprep.subr.bf16.mxu0 0
      %827 = vmatpush1.bf16.xpose.msra.mxu0 0
      %828 = vmatprep.subr.bf16.mxu0 0
      %829 = vmatpush1.bf16.xpose.msra.mxu0 0
      %830 = vmatprep.subr.bf16.mxu0 0
      %831 = vmatpush1.bf16.xpose.msra.mxu0 0
      %832 = vmatprep.subr.bf16.mxu0 0
      %833 = vmatpush1.bf16.xpose.msra.mxu0 0
      %834 = vmatprep.subr.bf16.mxu0 0
      %835 = vmatpush1.bf16.xpose.msra.mxu0 0
      %836 = vmatprep.subr.bf16.mxu0 0
      %837 = vmatpush1.bf16.xpose.msra.mxu0 0
      %838 = vmatprep.mubr.bf16.mxu0 0
      %839 = vmatmul.mubr.bf16.gmra.mrb[0].mxu0 %v801
      %v840 = vpop.f32.mrb[0].mxu0
      %v841 = vadd.f32 %v792, %v840
      %v842 = vpop.f32.mrb[0].mxu0
      %v843 = vpop.f32.mrb[0].mxu0
      %v844 = vpop.f32.mrb[0].mxu0
      %845 = vdwg.mxu0
      %v847 = vsel %vm799, %v728, 0
      %v850 = vsel %vm799, %v747, 0
      %852 = vmatprep.subr.bf16.mxu0 0
      %853 = vmatpush1.bf16.xpose.msra.mxu0 %v850
      %854 = vmatprep.subr.bf16.mxu0 0
      %855 = vmatpush1.bf16.xpose.msra.mxu0 0
      %856 = vmatprep.subr.bf16.mxu0 0
      %857 = vmatpush1.bf16.xpose.msra.mxu0 0
      %858 = vmatprep.subr.bf16.mxu0 0
      %859 = vmatpush1.bf16.xpose.msra.mxu0 0
      %860 = vmatprep.subr.bf16.mxu0 0
      %861 = vmatpush1.bf16.xpose.msra.mxu0 0
      %862 = vmatprep.subr.bf16.mxu0 0
      %863 = vmatpush1.bf16.xpose.msra.mxu0 0
      %864 = vmatprep.subr.bf16.mxu0 0
      %865 = vmatpush1.bf16.xpose.msra.mxu0 0
      %866 = vmatprep.subr.bf16.mxu0 0
      %867 = vmatpush1.bf16.xpose.msra.mxu0 0
      %868 = vmatprep.subr.bf16.mxu0 0
      %869 = vmatpush1.bf16.xpose.msra.mxu0 0
      %870 = vmatprep.subr.bf16.mxu0 0
      %871 = vmatpush1.bf16.xpose.msra.mxu0 0
      %872 = vmatprep.subr.bf16.mxu0 0
      %873 = vmatpush1.bf16.xpose.msra.mxu0 0
      %874 = vmatprep.subr.bf16.mxu0 0
      %875 = vmatpush1.bf16.xpose.msra.mxu0 0
      %876 = vmatprep.subr.bf16.mxu0 0
      %877 = vmatpush1.bf16.xpose.msra.mxu0 0
      %878 = vmatprep.subr.bf16.mxu0 0
      %879 = vmatpush1.bf16.xpose.msra.mxu0 0
      %880 = vmatprep.subr.bf16.mxu0 0
      %881 = vmatpush1.bf16.xpose.msra.mxu0 0
      %882 = vmatprep.subr.bf16.mxu0 0
      %883 = vmatpush1.bf16.xpose.msra.mxu0 0
      %884 = vmatprep.mubr.bf16.mxu0 0
      %885 = vmatmul.mubr.bf16.gmra.mrb[0].mxu0 %v847
      %v886 = vpop.f32.mrb[0].mxu0
      %v887 = vadd.f32 %v796, %v886
      %v888 = vpop.f32.mrb[0].mxu0
      %v889 = vpop.f32.mrb[0].mxu0
      %v890 = vpop.f32.mrb[0].mxu0
      %891 = vdwg.mxu0
      %v893 = vsel %vm799, %v732, 0
      %v896 = vsel %vm799, %v751, 0
      %898 = vmatprep.subr.bf16.mxu0 0
      %899 = vmatpush1.bf16.xpose.msra.mxu0 %v896
      %900 = vmatprep.subr.bf16.mxu0 0
      %901 = vmatpush1.bf16.xpose.msra.mxu0 0
      %902 = vmatprep.subr.bf16.mxu0 0
      %903 = vmatpush1.bf16.xpose.msra.mxu0 0
      %904 = vmatprep.subr.bf16.mxu0 0
      %905 = vmatpush1.bf16.xpose.msra.mxu0 0
      %906 = vmatprep.subr.bf16.mxu0 0
      %907 = vmatpush1.bf16.xpose.msra.mxu0 0
      %908 = vmatprep.subr.bf16.mxu0 0
      %909 = vmatpush1.bf16.xpose.msra.mxu0 0
      %910 = vmatprep.subr.bf16.mxu0 0
      %911 = vmatpush1.bf16.xpose.msra.mxu0 0
      %912 = vmatprep.subr.bf16.mxu0 0
      %913 = vmatpush1.bf16.xpose.msra.mxu0 0
      %914 = vmatprep.subr.bf16.mxu0 0
      %915 = vmatpush1.bf16.xpose.msra.mxu0 0
      %916 = vmatprep.subr.bf16.mxu0 0
      %917 = vmatpush1.bf16.xpose.msra.mxu0 0
      %918 = vmatprep.subr.bf16.mxu0 0
      %919 = vmatpush1.bf16.xpose.msra.mxu0 0
      %920 = vmatprep.subr.bf16.mxu0 0
      %921 = vmatpush1.bf16.xpose.msra.mxu0 0
      %922 = vmatprep.subr.bf16.mxu0 0
      %923 = vmatpush1.bf16.xpose.msra.mxu0 0
      %924 = vmatprep.subr.bf16.mxu0 0
      %925 = vmatpush1.bf16.xpose.msra.mxu0 0
      %926 = vmatprep.subr.bf16.mxu0 0
      %927 = vmatpush1.bf16.xpose.msra.mxu0 0
      %928 = vmatprep.subr.bf16.mxu0 0
      %929 = vmatpush1.bf16.xpose.msra.mxu0 0
      %930 = vmatprep.mubr.bf16.mxu0 0
      %931 = vmatmul.mubr.bf16.gmra.mrb[0].mxu0 %v893
      %v932 = vpop.f32.mrb[0].mxu0
      %v933 = vadd.f32 %v792, %v932
      %v934 = vpop.f32.mrb[0].mxu0
      %v935 = vpop.f32.mrb[0].mxu0
      %v936 = vpop.f32.mrb[0].mxu0
      %937 = vdwg.mxu0
      %v939 = vsel %vm799, %v734, 0
      %v942 = vsel %vm799, %v753, 0
      %944 = vmatprep.subr.bf16.mxu0 0
      %945 = vmatpush1.bf16.xpose.msra.mxu0 %v942
      %946 = vmatprep.subr.bf16.mxu0 0
      %947 = vmatpush1.bf16.xpose.msra.mxu0 0
      %948 = vmatprep.subr.bf16.mxu0 0
      %949 = vmatpush1.bf16.xpose.msra.mxu0 0
      %950 = vmatprep.subr.bf16.mxu0 0
      %951 = vmatpush1.bf16.xpose.msra.mxu0 0
      %952 = vmatprep.subr.bf16.mxu0 0
      %953 = vmatpush1.bf16.xpose.msra.mxu0 0
      %954 = vmatprep.subr.bf16.mxu0 0
      %955 = vmatpush1.bf16.xpose.msra.mxu0 0
      %956 = vmatprep.subr.bf16.mxu0 0
      %957 = vmatpush1.bf16.xpose.msra.mxu0 0
      %958 = vmatprep.subr.bf16.mxu0 0
      %959 = vmatpush1.bf16.xpose.msra.mxu0 0
      %960 = vmatprep.subr.bf16.mxu0 0
      %961 = vmatpush1.bf16.xpose.msra.mxu0 0
      %962 = vmatprep.subr.bf16.mxu0 0
      %963 = vmatpush1.bf16.xpose.msra.mxu0 0
      %964 = vmatprep.subr.bf16.mxu0 0
      %965 = vmatpush1.bf16.xpose.msra.mxu0 0
      %966 = vmatprep.subr.bf16.mxu0 0
      %967 = vmatpush1.bf16.xpose.msra.mxu0 0
      %968 = vmatprep.subr.bf16.mxu0 0
      %969 = vmatpush1.bf16.xpose.msra.mxu0 0
      %970 = vmatprep.subr.bf16.mxu0 0
      %971 = vmatpush1.bf16.xpose.msra.mxu0 0
      %972 = vmatprep.subr.bf16.mxu0 0
      %973 = vmatpush1.bf16.xpose.msra.mxu0 0
      %974 = vmatprep.subr.bf16.mxu0 0
      %975 = vmatpush1.bf16.xpose.msra.mxu0 0
      %976 = vmatprep.mubr.bf16.mxu0 0
      %977 = vmatmul.mubr.bf16.gmra.mrb[0].mxu0 %v939
      %v978 = vpop.f32.mrb[0].mxu0
      %v979 = vadd.f32 %v796, %v978
      %v980 = vpop.f32.mrb[0].mxu0
      %v981 = vpop.f32.mrb[0].mxu0
      %v982 = vpop.f32.mrb[0].mxu0
      %983 = vdwg.mxu0
      %v985 = vsel %vm799, %v736, 0
      %v988 = vsel %vm799, %v755, 0
      %990 = vmatprep.subr.bf16.mxu0 0
      %991 = vmatpush1.bf16.xpose.msra.mxu0 %v988
      %992 = vmatprep.subr.bf16.mxu0 0
      %993 = vmatpush1.bf16.xpose.msra.mxu0 0
      %994 = vmatprep.subr.bf16.mxu0 0
      %995 = vmatpush1.bf16.xpose.msra.mxu0 0
      %996 = vmatprep.subr.bf16.mxu0 0
      %997 = vmatpush1.bf16.xpose.msra.mxu0 0
      %998 = vmatprep.subr.bf16.mxu0 0
      %999 = vmatpush1.bf16.xpose.msra.mxu0 0
      %1000 = vmatprep.subr.bf16.mxu0 0
      %1001 = vmatpush1.bf16.xpose.msra.mxu0 0
      %1002 = vmatprep.subr.bf16.mxu0 0
      %1003 = vmatpush1.bf16.xpose.msra.mxu0 0
      %1004 = vmatprep.subr.bf16.mxu0 0
      %1005 = vmatpush1.bf16.xpose.msra.mxu0 0
      %1006 = vmatprep.subr.bf16.mxu0 0
      %1007 = vmatpush1.bf16.xpose.msra.mxu0 0
      %1008 = vmatprep.subr.bf16.mxu0 0
      %1009 = vmatpush1.bf16.xpose.msra.mxu0 0
      %1010 = vmatprep.subr.bf16.mxu0 0
      %1011 = vmatpush1.bf16.xpose.msra.mxu0 0
      %1012 = vmatprep.subr.bf16.mxu0 0
      %1013 = vmatpush1.bf16.xpose.msra.mxu0 0
      %1014 = vmatprep.subr.bf16.mxu0 0
      %1015 = vmatpush1.bf16.xpose.msra.mxu0 0
      %1016 = vmatprep.subr.bf16.mxu0 0
      %1017 = vmatpush1.bf16.xpose.msra.mxu0 0
      %1018 = vmatprep.subr.bf16.mxu0 0
      %1019 = vmatpush1.bf16.xpose.msra.mxu0 0
      %1020 = vmatprep.subr.bf16.mxu0 0
      %1021 = vmatpush1.bf16.xpose.msra.mxu0 0
      %1022 = vmatprep.mubr.bf16.mxu0 0
      %1023 = vmatmul.mubr.bf16.gmra.mrb[0].mxu0 %v985
      %v1024 = vpop.f32.mrb[0].mxu0
      %v1025 = vadd.f32 %v792, %v1024
      %v1026 = vpop.f32.mrb[0].mxu0
      %v1027 = vpop.f32.mrb[0].mxu0
      %v1028 = vpop.f32.mrb[0].mxu0
      %1029 = vdwg.mxu0
      %v1031 = vsel %vm799, %v738, 0
      %v1034 = vsel %vm799, %v757, 0
      %1036 = vmatprep.subr.bf16.mxu0 0
      %1037 = vmatpush1.bf16.xpose.msra.mxu0 %v1034
      %1038 = vmatprep.subr.bf16.mxu0 0
      %1039 = vmatpush1.bf16.xpose.msra.mxu0 0
      %1040 = vmatprep.subr.bf16.mxu0 0
      %1041 = vmatpush1.bf16.xpose.msra.mxu0 0
      %1042 = vmatprep.subr.bf16.mxu0 0
      %1043 = vmatpush1.bf16.xpose.msra.mxu0 0
      %1044 = vmatprep.subr.bf16.mxu0 0
      %1045 = vmatpush1.bf16.xpose.msra.mxu0 0
      %1046 = vmatprep.subr.bf16.mxu0 0
      %1047 = vmatpush1.bf16.xpose.msra.mxu0 0
      %1048 = vmatprep.subr.bf16.mxu0 0
      %1049 = vmatpush1.bf16.xpose.msra.mxu0 0
      %1050 = vmatprep.subr.bf16.mxu0 0
      %1051 = vmatpush1.bf16.xpose.msra.mxu0 0
      %1052 = vmatprep.subr.bf16.mxu0 0
      %1053 = vmatpush1.bf16.xpose.msra.mxu0 0
      %1054 = vmatprep.subr.bf16.mxu0 0
      %1055 = vmatpush1.bf16.xpose.msra.mxu0 0
      %1056 = vmatprep.subr.bf16.mxu0 0
      %1057 = vmatpush1.bf16.xpose.msra.mxu0 0
      %1058 = vmatprep.subr.bf16.mxu0 0
      %1059 = vmatpush1.bf16.xpose.msra.mxu0 0
      %1060 = vmatprep.subr.bf16.mxu0 0
      %1061 = vmatpush1.bf16.xpose.msra.mxu0 0
      %1062 = vmatprep.subr.bf16.mxu0 0
      %1063 = vmatpush1.bf16.xpose.msra.mxu0 0
      %1064 = vmatprep.subr.bf16.mxu0 0
      %1065 = vmatpush1.bf16.xpose.msra.mxu0 0
      %1066 = vmatprep.subr.bf16.mxu0 0
      %1067 = vmatpush1.bf16.xpose.msra.mxu0 0
      %1068 = vmatprep.mubr.bf16.mxu0 0
      %1069 = vmatmul.mubr.bf16.gmra.mrb[0].mxu0 %v1031
      %v1070 = vpop.f32.mrb[0].mxu0
      %v1071 = vadd.f32 %v796, %v1070
      %v1072 = vpop.f32.mrb[0].mxu0
      %v1073 = vpop.f32.mrb[0].mxu0
      %v1074 = vpop.f32.mrb[0].mxu0
      %1075 = vdwg.mxu0
      %v1077 = vsel %vm799, %v740, 0
      %v1080 = vsel %vm799, %v759, 0
      %1082 = vmatprep.subr.bf16.mxu0 0
      %1083 = vmatpush1.bf16.xpose.msra.mxu0 %v1080
      %1084 = vmatprep.subr.bf16.mxu0 0
      %1085 = vmatpush1.bf16.xpose.msra.mxu0 0
      %1086 = vmatprep.subr.bf16.mxu0 0
      %1087 = vmatpush1.bf16.xpose.msra.mxu0 0
      %1088 = vmatprep.subr.bf16.mxu0 0
      %1089 = vmatpush1.bf16.xpose.msra.mxu0 0
      %1090 = vmatprep.subr.bf16.mxu0 0
      %1091 = vmatpush1.bf16.xpose.msra.mxu0 0
      %1092 = vmatprep.subr.bf16.mxu0 0
      %1093 = vmatpush1.bf16.xpose.msra.mxu0 0
      %1094 = vmatprep.subr.bf16.mxu0 0
      %1095 = vmatpush1.bf16.xpose.msra.mxu0 0
      %1096 = vmatprep.subr.bf16.mxu0 0
      %1097 = vmatpush1.bf16.xpose.msra.mxu0 0
      %1098 = vmatprep.subr.bf16.mxu0 0
      %1099 = vmatpush1.bf16.xpose.msra.mxu0 0
      %1100 = vmatprep.subr.bf16.mxu0 0
      %1101 = vmatpush1.bf16.xpose.msra.mxu0 0
      %1102 = vmatprep.subr.bf16.mxu0 0
      %1103 = vmatpush1.bf16.xpose.msra.mxu0 0
      %1104 = vmatprep.subr.bf16.mxu0 0
      %1105 = vmatpush1.bf16.xpose.msra.mxu0 0
      %1106 = vmatprep.subr.bf16.mxu0 0
      %1107 = vmatpush1.bf16.xpose.msra.mxu0 0
      %1108 = vmatprep.subr.bf16.mxu0 0
      %1109 = vmatpush1.bf16.xpose.msra.mxu0 0
      %1110 = vmatprep.subr.bf16.mxu0 0
      %1111 = vmatpush1.bf16.xpose.msra.mxu0 0
      %1112 = vmatprep.subr.bf16.mxu0 0
      %1113 = vmatpush1.bf16.xpose.msra.mxu0 0
      %1114 = vmatprep.mubr.bf16.mxu0 0
      %1115 = vmatmul.mubr.bf16.gmra.mrb[0].mxu0 %v1077
      %v1116 = vpop.f32.mrb[0].mxu0
      %v1117 = vadd.f32 %v792, %v1116
      %v1118 = vpop.f32.mrb[0].mxu0
      %v1119 = vpop.f32.mrb[0].mxu0
      %v1120 = vpop.f32.mrb[0].mxu0
      %1121 = vdwg.mxu0
      %v1123 = vsel %vm799, %v742, 0
      %v1126 = vsel %vm799, %v761, 0
      %1128 = vmatprep.subr.bf16.mxu0 0
      %1129 = vmatpush1.bf16.xpose.msra.mxu0 %v1126
      %1130 = vmatprep.subr.bf16.mxu0 0
      %1131 = vmatpush1.bf16.xpose.msra.mxu0 0
      %1132 = vmatprep.subr.bf16.mxu0 0
      %1133 = vmatpush1.bf16.xpose.msra.mxu0 0
      %1134 = vmatprep.subr.bf16.mxu0 0
      %1135 = vmatpush1.bf16.xpose.msra.mxu0 0
      %1136 = vmatprep.subr.bf16.mxu0 0
      %1137 = vmatpush1.bf16.xpose.msra.mxu0 0
      %1138 = vmatprep.subr.bf16.mxu0 0
      %1139 = vmatpush1.bf16.xpose.msra.mxu0 0
      %1140 = vmatprep.subr.bf16.mxu0 0
      %1141 = vmatpush1.bf16.xpose.msra.mxu0 0
      %1142 = vmatprep.subr.bf16.mxu0 0
      %1143 = vmatpush1.bf16.xpose.msra.mxu0 0
      %1144 = vmatprep.subr.bf16.mxu0 0
      %1145 = vmatpush1.bf16.xpose.msra.mxu0 0
      %1146 = vmatprep.subr.bf16.mxu0 0
      %1147 = vmatpush1.bf16.xpose.msra.mxu0 0
      %1148 = vmatprep.subr.bf16.mxu0 0
      %1149 = vmatpush1.bf16.xpose.msra.mxu0 0
      %1150 = vmatprep.subr.bf16.mxu0 0
      %1151 = vmatpush1.bf16.xpose.msra.mxu0 0
      %1152 = vmatprep.subr.bf16.mxu0 0
      %1153 = vmatpush1.bf16.xpose.msra.mxu0 0
      %1154 = vmatprep.subr.bf16.mxu0 0
      %1155 = vmatpush1.bf16.xpose.msra.mxu0 0
      %1156 = vmatprep.subr.bf16.mxu0 0
      %1157 = vmatpush1.bf16.xpose.msra.mxu0 0
      %1158 = vmatprep.subr.bf16.mxu0 0
      %1159 = vmatpush1.bf16.xpose.msra.mxu0 0
      %1160 = vmatprep.mubr.bf16.mxu0 0
      %1161 = vmatmul.mubr.bf16.gmra.mrb[0].mxu0 %v1123
      %v1162 = vpop.f32.mrb[0].mxu0
      %v1163 = vadd.f32 %v796, %v1162
      %v1164 = vpop.f32.mrb[0].mxu0
      %v1165 = vpop.f32.mrb[0].mxu0
      %v1166 = vpop.f32.mrb[0].mxu0
      %1167 = vdwg.mxu0
      %vm1168 = vcmask 27648
      %v1169 = vsel %vm1168, %v841, -inf
      %1170 = vmax.xlane.f32.xlu0 %v1169
      %v1171 = vpop.xlane.xlu0 %1170
      %v1172 = vsel %vm1168, %v887, -inf
      %1173 = vmax.xlane.f32.xlu0 %v1172
      %v1174 = vpop.xlane.xlu0 %1173
      %v1175 = vsel %vm1168, %v933, -inf
      %1176 = vmax.xlane.f32.xlu0 %v1175
      %v1177 = vpop.xlane.xlu0 %1176
      %v1178 = vsel %vm1168, %v979, -inf
      %1179 = vmax.xlane.f32.xlu0 %v1178
      %v1180 = vpop.xlane.xlu0 %1179
      %v1181 = vsel %vm1168, %v1025, -inf
      %1182 = vmax.xlane.f32.xlu0 %v1181
      %v1183 = vpop.xlane.xlu0 %1182
      %v1184 = vsel %vm1168, %v1071, -inf
      %1185 = vmax.xlane.f32.xlu0 %v1184
      %v1186 = vpop.xlane.xlu0 %1185
      %v1187 = vsel %vm1168, %v1117, -inf
      %1188 = vmax.xlane.f32.xlu0 %v1187
      %v1189 = vpop.xlane.xlu0 %1188
      %v1190 = vsel %vm1168, %v1163, -inf
      %1191 = vmax.xlane.f32.xlu0 %v1190
      %v1192 = vpop.xlane.xlu0 %1191
      %v1193 = vsub.f32 %v841, %v1171
      %v1194 = vsub.f32 %v887, %v1174
      %v1195 = vsub.f32 %v933, %v1177
      %v1196 = vsub.f32 %v979, %v1180
      %v1197 = vsub.f32 %v1025, %v1183
      %v1198 = vsub.f32 %v1071, %v1186
      %v1199 = vsub.f32 %v1117, %v1189
      %v1200 = vsub.f32 %v1163, %v1192
      %v1201 = vmul.f32 %v1193, 1.442695
      %v1202 = vpow.pop %v1201
      %v1203 = vmul.f32 %v1194, 1.442695
      %v1204 = vpow.pop %v1203
      %v1205 = vmul.f32 %v1195, 1.442695
      %v1206 = vpow.pop %v1205
      %v1207 = vmul.f32 %v1196, 1.442695
      %v1208 = vpow.pop %v1207
      %v1209 = vmul.f32 %v1197, 1.442695
      %v1210 = vpow.pop %v1209
      %v1211 = vmul.f32 %v1198, 1.442695
      %v1212 = vpow.pop %v1211
      %v1213 = vmul.f32 %v1199, 1.442695
      %v1214 = vpow.pop %v1213
      %v1215 = vmul.f32 %v1200, 1.442695
      %v1216 = vpow.pop %v1215
      %v1217 = vsel %vm1168, %v1202, 0.0
      %1218 = vadd.xlane.f32.xlu0 %v1217
      %v1219 = vpop.xlane.xlu0 %1218
      %v1220 = vsel %vm1168, %v1204, 0.0
      %1221 = vadd.xlane.f32.xlu0 %v1220
      %v1222 = vpop.xlane.xlu0 %1221
      %v1223 = vsel %vm1168, %v1206, 0.0
      %1224 = vadd.xlane.f32.xlu0 %v1223
      %v1225 = vpop.xlane.xlu0 %1224
      %v1226 = vsel %vm1168, %v1208, 0.0
      %1227 = vadd.xlane.f32.xlu0 %v1226
      %v1228 = vpop.xlane.xlu0 %1227
      %v1229 = vsel %vm1168, %v1210, 0.0
      %1230 = vadd.xlane.f32.xlu0 %v1229
      %v1231 = vpop.xlane.xlu0 %1230
      %v1232 = vsel %vm1168, %v1212, 0.0
      %1233 = vadd.xlane.f32.xlu0 %v1232
      %v1234 = vpop.xlane.xlu0 %1233
      %v1235 = vsel %vm1168, %v1214, 0.0
      %1236 = vadd.xlane.f32.xlu0 %v1235
      %v1237 = vpop.xlane.xlu0 %1236
      %v1238 = vsel %vm1168, %v1216, 0.0
      %1239 = vadd.xlane.f32.xlu0 %v1238
      %v1240 = vpop.xlane.xlu0 %1239
      %v1241 = vrcp.pop %v1219
      %v1242 = vrcp.pop %v1222
      %v1243 = vrcp.pop %v1225
      %v1244 = vrcp.pop %v1228
      %v1245 = vrcp.pop %v1231
      %v1246 = vrcp.pop %v1234
      %v1247 = vrcp.pop %v1237
      %v1248 = vrcp.pop %v1240
      %v1249 = vmul.f32 %v1202, %v1241
      %v1250 = vmul.f32 %v1204, %v1242
      %v1251 = vmul.f32 %v1206, %v1243
      %v1252 = vmul.f32 %v1208, %v1244
      %v1253 = vmul.f32 %v1210, %v1245
      %v1254 = vmul.f32 %v1212, %v1246
      %v1255 = vmul.f32 %v1214, %v1247
      %v1256 = vmul.f32 %v1216, %v1248
      %v1257 = vpack.c.bf16 %v1249, %v1249
      %v1258 = vpack.c.bf16 %v1250, %v1250
      %v1259 = vpack.c.bf16 %v1251, %v1251
      %v1260 = vpack.c.bf16 %v1252, %v1252
      %v1261 = vpack.c.bf16 %v1253, %v1253
      %v1262 = vpack.c.bf16 %v1254, %v1254
      %v1263 = vpack.c.bf16 %v1255, %v1255
      %v1264 = vpack.c.bf16 %v1256, %v1256
      %vm1265 = vcmask 31744
      %v1267 = vsel %vm1265, %v1257, 0
      %vm1269 = vcmask 1041408
      %v1271 = vsel %vm1269, %v765, 0
      %1273 = vmatprep.subr.bf16.mxu0 0
      %1274 = vmatpush1.bf16.msra.mxu0 %v1271
      %1275 = vmatprep.subr.bf16.mxu0 0
      %1276 = vmatpush1.bf16.msra.mxu0 0
      %1277 = vmatprep.subr.bf16.mxu0 0
      %1278 = vmatpush1.bf16.msra.mxu0 0
      %1279 = vmatprep.subr.bf16.mxu0 0
      %1280 = vmatpush1.bf16.msra.mxu0 0
      %1281 = vmatprep.subr.bf16.mxu0 0
      %1282 = vmatpush1.bf16.msra.mxu0 0
      %1283 = vmatprep.subr.bf16.mxu0 0
      %1284 = vmatpush1.bf16.msra.mxu0 0
      %1285 = vmatprep.subr.bf16.mxu0 0
      %1286 = vmatpush1.bf16.msra.mxu0 0
      %1287 = vmatprep.subr.bf16.mxu0 0
      %1288 = vmatpush1.bf16.msra.mxu0 0
      %1289 = vmatprep.subr.bf16.mxu0 0
      %1290 = vmatpush1.bf16.msra.mxu0 0
      %1291 = vmatprep.subr.bf16.mxu0 0
      %1292 = vmatpush1.bf16.msra.mxu0 0
      %1293 = vmatprep.subr.bf16.mxu0 0
      %1294 = vmatpush1.bf16.msra.mxu0 0
      %1295 = vmatprep.subr.bf16.mxu0 0
      %1296 = vmatpush1.bf16.msra.mxu0 0
      %1297 = vmatprep.subr.bf16.mxu0 0
      %1298 = vmatpush1.bf16.msra.mxu0 0
      %1299 = vmatprep.subr.bf16.mxu0 0
      %1300 = vmatpush1.bf16.msra.mxu0 0
      %1301 = vmatprep.subr.bf16.mxu0 0
      %1302 = vmatpush1.bf16.msra.mxu0 0
      %1303 = vmatprep.subr.bf16.mxu0 0
      %1304 = vmatpush1.bf16.msra.mxu0 0
      %1305 = vmatprep.mubr.bf16.mxu0 0
      %1306 = vmatmul.mubr.bf16.gmra.mrb[0].mxu0 %v1267
      %v1307 = vpop.f32.mrb[0].mxu0
      %v1308 = vadd.f32 0.0, %v1307
      %v1309 = vpop.f32.mrb[0].mxu0
      %v1310 = vpop.f32.mrb[0].mxu0
      %v1311 = vpop.f32.mrb[0].mxu0
      %1312 = vdwg.mxu0
      %v1314 = vsel %vm1265, %v1258, 0
      %v1317 = vsel %vm1269, %v766, 0
      %1319 = vmatprep.subr.bf16.mxu0 0
      %1320 = vmatpush1.bf16.msra.mxu0 %v1317
      %1321 = vmatprep.subr.bf16.mxu0 0
      %1322 = vmatpush1.bf16.msra.mxu0 0
      %1323 = vmatprep.subr.bf16.mxu0 0
      %1324 = vmatpush1.bf16.msra.mxu0 0
      %1325 = vmatprep.subr.bf16.mxu0 0
      %1326 = vmatpush1.bf16.msra.mxu0 0
      %1327 = vmatprep.subr.bf16.mxu0 0
      %1328 = vmatpush1.bf16.msra.mxu0 0
      %1329 = vmatprep.subr.bf16.mxu0 0
      %1330 = vmatpush1.bf16.msra.mxu0 0
      %1331 = vmatprep.subr.bf16.mxu0 0
      %1332 = vmatpush1.bf16.msra.mxu0 0
      %1333 = vmatprep.subr.bf16.mxu0 0
      %1334 = vmatpush1.bf16.msra.mxu0 0
      %1335 = vmatprep.subr.bf16.mxu0 0
      %1336 = vmatpush1.bf16.msra.mxu0 0
      %1337 = vmatprep.subr.bf16.mxu0 0
      %1338 = vmatpush1.bf16.msra.mxu0 0
      %1339 = vmatprep.subr.bf16.mxu0 0
      %1340 = vmatpush1.bf16.msra.mxu0 0
      %1341 = vmatprep.subr.bf16.mxu0 0
      %1342 = vmatpush1.bf16.msra.mxu0 0
      %1343 = vmatprep.subr.bf16.mxu0 0
      %1344 = vmatpush1.bf16.msra.mxu0 0
      %1345 = vmatprep.subr.bf16.mxu0 0
      %1346 = vmatpush1.bf16.msra.mxu0 0
      %1347 = vmatprep.subr.bf16.mxu0 0
      %1348 = vmatpush1.bf16.msra.mxu0 0
      %1349 = vmatprep.subr.bf16.mxu0 0
      %1350 = vmatpush1.bf16.msra.mxu0 0
      %1351 = vmatprep.mubr.bf16.mxu0 0
      %1352 = vmatmul.mubr.bf16.gmra.mrb[0].mxu0 %v1314
      %v1353 = vpop.f32.mrb[0].mxu0
      %v1354 = vadd.f32 0.0, %v1353
      %v1355 = vpop.f32.mrb[0].mxu0
      %v1356 = vpop.f32.mrb[0].mxu0
      %v1357 = vpop.f32.mrb[0].mxu0
      %1358 = vdwg.mxu0
      %v1360 = vsel %vm1265, %v1259, 0
      %v1363 = vsel %vm1269, %v770, 0
      %1365 = vmatprep.subr.bf16.mxu0 0
      %1366 = vmatpush1.bf16.msra.mxu0 %v1363
      %1367 = vmatprep.subr.bf16.mxu0 0
      %1368 = vmatpush1.bf16.msra.mxu0 0
      %1369 = vmatprep.subr.bf16.mxu0 0
      %1370 = vmatpush1.bf16.msra.mxu0 0
      %1371 = vmatprep.subr.bf16.mxu0 0
      %1372 = vmatpush1.bf16.msra.mxu0 0
      %1373 = vmatprep.subr.bf16.mxu0 0
      %1374 = vmatpush1.bf16.msra.mxu0 0
      %1375 = vmatprep.subr.bf16.mxu0 0
      %1376 = vmatpush1.bf16.msra.mxu0 0
      %1377 = vmatprep.subr.bf16.mxu0 0
      %1378 = vmatpush1.bf16.msra.mxu0 0
      %1379 = vmatprep.subr.bf16.mxu0 0
      %1380 = vmatpush1.bf16.msra.mxu0 0
      %1381 = vmatprep.subr.bf16.mxu0 0
      %1382 = vmatpush1.bf16.msra.mxu0 0
      %1383 = vmatprep.subr.bf16.mxu0 0
      %1384 = vmatpush1.bf16.msra.mxu0 0
      %1385 = vmatprep.subr.bf16.mxu0 0
      %1386 = vmatpush1.bf16.msra.mxu0 0
      %1387 = vmatprep.subr.bf16.mxu0 0
      %1388 = vmatpush1.bf16.msra.mxu0 0
      %1389 = vmatprep.subr.bf16.mxu0 0
      %1390 = vmatpush1.bf16.msra.mxu0 0
      %1391 = vmatprep.subr.bf16.mxu0 0
      %1392 = vmatpush1.bf16.msra.mxu0 0
      %1393 = vmatprep.subr.bf16.mxu0 0
      %1394 = vmatpush1.bf16.msra.mxu0 0
      %1395 = vmatprep.subr.bf16.mxu0 0
      %1396 = vmatpush1.bf16.msra.mxu0 0
      %1397 = vmatprep.mubr.bf16.mxu0 0
      %1398 = vmatmul.mubr.bf16.gmra.mrb[0].mxu0 %v1360
      %v1399 = vpop.f32.mrb[0].mxu0
      %v1400 = vadd.f32 0.0, %v1399
      %v1401 = vpop.f32.mrb[0].mxu0
      %v1402 = vpop.f32.mrb[0].mxu0
      %v1403 = vpop.f32.mrb[0].mxu0
      %1404 = vdwg.mxu0
      %v1406 = vsel %vm1265, %v1260, 0
      %v1409 = vsel %vm1269, %v772, 0
      %1411 = vmatprep.subr.bf16.mxu0 0
      %1412 = vmatpush1.bf16.msra.mxu0 %v1409
      %1413 = vmatprep.subr.bf16.mxu0 0
      %1414 = vmatpush1.bf16.msra.mxu0 0
      %1415 = vmatprep.subr.bf16.mxu0 0
      %1416 = vmatpush1.bf16.msra.mxu0 0
      %1417 = vmatprep.subr.bf16.mxu0 0
      %1418 = vmatpush1.bf16.msra.mxu0 0
      %1419 = vmatprep.subr.bf16.mxu0 0
      %1420 = vmatpush1.bf16.msra.mxu0 0
      %1421 = vmatprep.subr.bf16.mxu0 0
      %1422 = vmatpush1.bf16.msra.mxu0 0
      %1423 = vmatprep.subr.bf16.mxu0 0
      %1424 = vmatpush1.bf16.msra.mxu0 0
      %1425 = vmatprep.subr.bf16.mxu0 0
      %1426 = vmatpush1.bf16.msra.mxu0 0
      %1427 = vmatprep.subr.bf16.mxu0 0
      %1428 = vmatpush1.bf16.msra.mxu0 0
      %1429 = vmatprep.subr.bf16.mxu0 0
      %1430 = vmatpush1.bf16.msra.mxu0 0
      %1431 = vmatprep.subr.bf16.mxu0 0
      %1432 = vmatpush1.bf16.msra.mxu0 0
      %1433 = vmatprep.subr.bf16.mxu0 0
      %1434 = vmatpush1.bf16.msra.mxu0 0
      %1435 = vmatprep.subr.bf16.mxu0 0
      %1436 = vmatpush1.bf16.msra.mxu0 0
      %1437 = vmatprep.subr.bf16.mxu0 0
      %1438 = vmatpush1.bf16.msra.mxu0 0
      %1439 = vmatprep.subr.bf16.mxu0 0
      %1440 = vmatpush1.bf16.msra.mxu0 0
      %1441 = vmatprep.subr.bf16.mxu0 0
      %1442 = vmatpush1.bf16.msra.mxu0 0
      %1443 = vmatprep.mubr.bf16.mxu0 0
      %1444 = vmatmul.mubr.bf16.gmra.mrb[0].mxu0 %v1406
      %v1445 = vpop.f32.mrb[0].mxu0
      %v1446 = vadd.f32 0.0, %v1445
      %v1447 = vpop.f32.mrb[0].mxu0
      %v1448 = vpop.f32.mrb[0].mxu0
      %v1449 = vpop.f32.mrb[0].mxu0
      %1450 = vdwg.mxu0
      %v1452 = vsel %vm1265, %v1261, 0
      %v1455 = vsel %vm1269, %v774, 0
      %1457 = vmatprep.subr.bf16.mxu0 0
      %1458 = vmatpush1.bf16.msra.mxu0 %v1455
      %1459 = vmatprep.subr.bf16.mxu0 0
      %1460 = vmatpush1.bf16.msra.mxu0 0
      %1461 = vmatprep.subr.bf16.mxu0 0
      %1462 = vmatpush1.bf16.msra.mxu0 0
      %1463 = vmatprep.subr.bf16.mxu0 0
      %1464 = vmatpush1.bf16.msra.mxu0 0
      %1465 = vmatprep.subr.bf16.mxu0 0
      %1466 = vmatpush1.bf16.msra.mxu0 0
      %1467 = vmatprep.subr.bf16.mxu0 0
      %1468 = vmatpush1.bf16.msra.mxu0 0
      %1469 = vmatprep.subr.bf16.mxu0 0
      %1470 = vmatpush1.bf16.msra.mxu0 0
      %1471 = vmatprep.subr.bf16.mxu0 0
      %1472 = vmatpush1.bf16.msra.mxu0 0
      %1473 = vmatprep.subr.bf16.mxu0 0
      %1474 = vmatpush1.bf16.msra.mxu0 0
      %1475 = vmatprep.subr.bf16.mxu0 0
      %1476 = vmatpush1.bf16.msra.mxu0 0
      %1477 = vmatprep.subr.bf16.mxu0 0
      %1478 = vmatpush1.bf16.msra.mxu0 0
      %1479 = vmatprep.subr.bf16.mxu0 0
      %1480 = vmatpush1.bf16.msra.mxu0 0
      %1481 = vmatprep.subr.bf16.mxu0 0
      %1482 = vmatpush1.bf16.msra.mxu0 0
      %1483 = vmatprep.subr.bf16.mxu0 0
      %1484 = vmatpush1.bf16.msra.mxu0 0
      %1485 = vmatprep.subr.bf16.mxu0 0
      %1486 = vmatpush1.bf16.msra.mxu0 0
      %1487 = vmatprep.subr.bf16.mxu0 0
      %1488 = vmatpush1.bf16.msra.mxu0 0
      %1489 = vmatprep.mubr.bf16.mxu0 0
      %1490 = vmatmul.mubr.bf16.gmra.mrb[0].mxu0 %v1452
      %v1491 = vpop.f32.mrb[0].mxu0
      %v1492 = vadd.f32 0.0, %v1491
      %v1493 = vpop.f32.mrb[0].mxu0
      %v1494 = vpop.f32.mrb[0].mxu0
      %v1495 = vpop.f32.mrb[0].mxu0
      %1496 = vdwg.mxu0
      %v1498 = vsel %vm1265, %v1262, 0
      %v1501 = vsel %vm1269, %v776, 0
      %1503 = vmatprep.subr.bf16.mxu0 0
      %1504 = vmatpush1.bf16.msra.mxu0 %v1501
      %1505 = vmatprep.subr.bf16.mxu0 0
      %1506 = vmatpush1.bf16.msra.mxu0 0
      %1507 = vmatprep.subr.bf16.mxu0 0
      %1508 = vmatpush1.bf16.msra.mxu0 0
      %1509 = vmatprep.subr.bf16.mxu0 0
      %1510 = vmatpush1.bf16.msra.mxu0 0
      %1511 = vmatprep.subr.bf16.mxu0 0
      %1512 = vmatpush1.bf16.msra.mxu0 0
      %1513 = vmatprep.subr.bf16.mxu0 0
      %1514 = vmatpush1.bf16.msra.mxu0 0
      %1515 = vmatprep.subr.bf16.mxu0 0
      %1516 = vmatpush1.bf16.msra.mxu0 0
      %1517 = vmatprep.subr.bf16.mxu0 0
      %1518 = vmatpush1.bf16.msra.mxu0 0
      %1519 = vmatprep.subr.bf16.mxu0 0
      %1520 = vmatpush1.bf16.msra.mxu0 0
      %1521 = vmatprep.subr.bf16.mxu0 0
      %1522 = vmatpush1.bf16.msra.mxu0 0
      %1523 = vmatprep.subr.bf16.mxu0 0
      %1524 = vmatpush1.bf16.msra.mxu0 0
      %1525 = vmatprep.subr.bf16.mxu0 0
      %1526 = vmatpush1.bf16.msra.mxu0 0
      %1527 = vmatprep.subr.bf16.mxu0 0
      %1528 = vmatpush1.bf16.msra.mxu0 0
      %1529 = vmatprep.subr.bf16.mxu0 0
      %1530 = vmatpush1.bf16.msra.mxu0 0
      %1531 = vmatprep.subr.bf16.mxu0 0
      %1532 = vmatpush1.bf16.msra.mxu0 0
      %1533 = vmatprep.subr.bf16.mxu0 0
      %1534 = vmatpush1.bf16.msra.mxu0 0
      %1535 = vmatprep.mubr.bf16.mxu0 0
      %1536 = vmatmul.mubr.bf16.gmra.mrb[0].mxu0 %v1498
      %v1537 = vpop.f32.mrb[0].mxu0
      %v1538 = vadd.f32 0.0, %v1537
      %v1539 = vpop.f32.mrb[0].mxu0
      %v1540 = vpop.f32.mrb[0].mxu0
      %v1541 = vpop.f32.mrb[0].mxu0
      %1542 = vdwg.mxu0
      %v1544 = vsel %vm1265, %v1263, 0
      %v1547 = vsel %vm1269, %v778, 0
      %1549 = vmatprep.subr.bf16.mxu0 0
      %1550 = vmatpush1.bf16.msra.mxu0 %v1547
      %1551 = vmatprep.subr.bf16.mxu0 0
      %1552 = vmatpush1.bf16.msra.mxu0 0
      %1553 = vmatprep.subr.bf16.mxu0 0
      %1554 = vmatpush1.bf16.msra.mxu0 0
      %1555 = vmatprep.subr.bf16.mxu0 0
      %1556 = vmatpush1.bf16.msra.mxu0 0
      %1557 = vmatprep.subr.bf16.mxu0 0
      %1558 = vmatpush1.bf16.msra.mxu0 0
      %1559 = vmatprep.subr.bf16.mxu0 0
      %1560 = vmatpush1.bf16.msra.mxu0 0
      %1561 = vmatprep.subr.bf16.mxu0 0
      %1562 = vmatpush1.bf16.msra.mxu0 0
      %1563 = vmatprep.subr.bf16.mxu0 0
      %1564 = vmatpush1.bf16.msra.mxu0 0
      %1565 = vmatprep.subr.bf16.mxu0 0
      %1566 = vmatpush1.bf16.msra.mxu0 0
      %1567 = vmatprep.subr.bf16.mxu0 0
      %1568 = vmatpush1.bf16.msra.mxu0 0
      %1569 = vmatprep.subr.bf16.mxu0 0
      %1570 = vmatpush1.bf16.msra.mxu0 0
      %1571 = vmatprep.subr.bf16.mxu0 0
      %1572 = vmatpush1.bf16.msra.mxu0 0
      %1573 = vmatprep.subr.bf16.mxu0 0
      %1574 = vmatpush1.bf16.msra.mxu0 0
      %1575 = vmatprep.subr.bf16.mxu0 0
      %1576 = vmatpush1.bf16.msra.mxu0 0
      %1577 = vmatprep.subr.bf16.mxu0 0
      %1578 = vmatpush1.bf16.msra.mxu0 0
      %1579 = vmatprep.subr.bf16.mxu0 0
      %1580 = vmatpush1.bf16.msra.mxu0 0
      %1581 = vmatprep.mubr.bf16.mxu0 0
      %1582 = vmatmul.mubr.bf16.gmra.mrb[0].mxu0 %v1544
      %v1583 = vpop.f32.mrb[0].mxu0
      %v1584 = vadd.f32 0.0, %v1583
      %v1585 = vpop.f32.mrb[0].mxu0
      %v1586 = vpop.f32.mrb[0].mxu0
      %v1587 = vpop.f32.mrb[0].mxu0
      %1588 = vdwg.mxu0
      %v1590 = vsel %vm1265, %v1264, 0
      %v1593 = vsel %vm1269, %v780, 0
      %1595 = vmatprep.subr.bf16.mxu0 0
      %1596 = vmatpush1.bf16.msra.mxu0 %v1593
      %1597 = vmatprep.subr.bf16.mxu0 0
      %1598 = vmatpush1.bf16.msra.mxu0 0
      %1599 = vmatprep.subr.bf16.mxu0 0
      %1600 = vmatpush1.bf16.msra.mxu0 0
      %1601 = vmatprep.subr.bf16.mxu0 0
      %1602 = vmatpush1.bf16.msra.mxu0 0
      %1603 = vmatprep.subr.bf16.mxu0 0
      %1604 = vmatpush1.bf16.msra.mxu0 0
      %1605 = vmatprep.subr.bf16.mxu0 0
      %1606 = vmatpush1.bf16.msra.mxu0 0
      %1607 = vmatprep.subr.bf16.mxu0 0
      %1608 = vmatpush1.bf16.msra.mxu0 0
      %1609 = vmatprep.subr.bf16.mxu0 0
      %1610 = vmatpush1.bf16.msra.mxu0 0
      %1611 = vmatprep.subr.bf16.mxu0 0
      %1612 = vmatpush1.bf16.msra.mxu0 0
      %1613 = vmatprep.subr.bf16.mxu0 0
      %1614 = vmatpush1.bf16.msra.mxu0 0
      %1615 = vmatprep.subr.bf16.mxu0 0
      %1616 = vmatpush1.bf16.msra.mxu0 0
      %1617 = vmatprep.subr.bf16.mxu0 0
      %1618 = vmatpush1.bf16.msra.mxu0 0
      %1619 = vmatprep.subr.bf16.mxu0 0
      %1620 = vmatpush1.bf16.msra.mxu0 0
      %1621 = vmatprep.subr.bf16.mxu0 0
      %1622 = vmatpush1.bf16.msra.mxu0 0
      %1623 = vmatprep.subr.bf16.mxu0 0
      %1624 = vmatpush1.bf16.msra.mxu0 0
      %1625 = vmatprep.subr.bf16.mxu0 0
      %1626 = vmatpush1.bf16.msra.mxu0 0
      %1627 = vmatprep.mubr.bf16.mxu0 0
      %1628 = vmatmul.mubr.bf16.gmra.mrb[0].mxu0 %v1590
      %v1629 = vpop.f32.mrb[0].mxu0
      %v1630 = vadd.f32 0.0, %v1629
      %v1631 = vpop.f32.mrb[0].mxu0
      %v1632 = vpop.f32.mrb[0].mxu0
      %v1633 = vpop.f32.mrb[0].mxu0
      %1634 = vdwg.mxu0
      %1637 = vrot.lane.b32.xlu0 %v1400, 8
      %v1638 = vpop.permute.xlu0 %1637
      %1639 = vrot.lane.b32.xlu0 %v1446, 8
      %v1640 = vpop.permute.xlu0 %1639
      %1645 = vrot.lane.b32.xlu0 %v1492, 16
      %v1646 = vpop.permute.xlu0 %1645
      %1647 = vrot.lane.b32.xlu0 %v1538, 16
      %v1648 = vpop.permute.xlu0 %1647
      %1653 = vrot.lane.b32.xlu0 %v1584, 24
      %v1654 = vpop.permute.xlu0 %1653
      %1655 = vrot.lane.b32.xlu0 %v1630, 24
      %v1656 = vpop.permute.xlu0 %1655
      %v1659 = vsel %vm799, %v1308, %v1638
      %v1660 = vsel %vm799, %v1354, %v1640
      %vm1661 = vcmask 130048
      %v1662 = vsel %vm1661, %v1659, %v1646
      %v1663 = vsel %vm1661, %v1660, %v1648
      %vm1664 = vcmask 195584
      %v1665 = vsel %vm1664, %v1662, %v1654
      %v1666 = vsel %vm1664, %v1663, %v1656
      %v1669 = vcombine.low %v1665, %v1666
      %v1671 = vpack.c.bf16 %v1669, %v1669
      %v1672 = vld [vmem:[%s9] sm:$0xf]
      %v1673 = vld [vmem:[%s9 + $0x4] sm:$0xf]
      %v1674 = vld [vmem:[%s9 + $0x8] sm:$0xf]
      %v1675 = vld [vmem:[%s9 + $0xc] sm:$0xf]
      %v1676 = vld [vmem:[%s10] sm:$0x1]
      %v1678 = vlaneseq
      %v1679 = vshrl.u32 %v1678, 7
      %v1680 = vsub.s32 0, %v1679
      %v1681 = vrot.slane %v1676, %v1680
      %v1687 = vunpack.c.l.b16 %v1672
      %v1688 = vunpack.c.l.b16 %v1673
      %v1689 = vunpack.c.l.b16 %v1674
      %v1690 = vunpack.c.l.b16 %v1675
      %v1691 = vpack.c.b16 %v1688, %v1687
      %v1692 = vpack.c.b16 %v1690, %v1689
      %v1696 = vsel %vm551, %v1671, 0
      %1698 = vmatprep.subr.bf16.mxu0 0
      %1699 = vmatpush1.bf16.msra.mxu0 %v1691
      %1700 = vmatprep.subr.bf16.mxu0 0
      %1701 = vmatpush1.bf16.msra.mxu0 %v1692
      %1702 = vmatprep.subr.bf16.mxu0 0
      %1703 = vmatpush1.bf16.msra.mxu0 0
      %1704 = vmatprep.subr.bf16.mxu0 0
      %1705 = vmatpush1.bf16.msra.mxu0 0
      %1706 = vmatprep.subr.bf16.mxu0 0
      %1707 = vmatpush1.bf16.msra.mxu0 0
      %1708 = vmatprep.subr.bf16.mxu0 0
      %1709 = vmatpush1.bf16.msra.mxu0 0
      %1710 = vmatprep.subr.bf16.mxu0 0
      %1711 = vmatpush1.bf16.msra.mxu0 0
      %1712 = vmatprep.subr.bf16.mxu0 0
      %1713 = vmatpush1.bf16.msra.mxu0 0
      %1714 = vmatprep.subr.bf16.mxu0 0
      %1715 = vmatpush1.bf16.msra.mxu0 0
      %1716 = vmatprep.subr.bf16.mxu0 0
      %1717 = vmatpush1.bf16.msra.mxu0 0
      %1718 = vmatprep.subr.bf16.mxu0 0
      %1719 = vmatpush1.bf16.msra.mxu0 0
      %1720 = vmatprep.subr.bf16.mxu0 0
      %1721 = vmatpush1.bf16.msra.mxu0 0
      %1722 = vmatprep.subr.bf16.mxu0 0
      %1723 = vmatpush1.bf16.msra.mxu0 0
      %1724 = vmatprep.subr.bf16.mxu0 0
      %1725 = vmatpush1.bf16.msra.mxu0 0
      %1726 = vmatprep.subr.bf16.mxu0 0
      %1727 = vmatpush1.bf16.msra.mxu0 0
      %1728 = vmatprep.subr.bf16.mxu0 0
      %1729 = vmatpush1.bf16.msra.mxu0 0
      %1730 = vmatprep.mubr.bf16.mxu0 0
      %1731 = vmatmul.mubr.bf16.gmra.mrb[0].mxu0 %v1696
      %v1732 = vpop.f32.mrb[0].mxu0
      %v1733 = vadd.f32 %v1681, %v1732
      %v1734 = vpop.f32.mrb[0].mxu0
      %v1735 = vpop.f32.mrb[0].mxu0
      %v1736 = vpop.f32.mrb[0].mxu0
      %1737 = vdwg.mxu0
      %v1738 = vadd.f32 %v526, %v1733
      %v1739 = vsel %vm551, %v1738, 0.0
      %v1740 = vrot.slane %v1739, 4
      %v1741 = vadd.f32 %v1739, %v1740
      %v1742 = vrot.slane %v1741, 2
      %v1743 = vadd.f32 %v1741, %v1742
      %v1744 = vrot.slane %v1743, 1
      %v1745 = vadd.f32 %v1743, %v1744
      %v1746 = vmul.f32 %v1745, 0.125
      %v1747 = vsub.f32 %v1738, %v1746
      %v1748 = vmul.f32 %v1747, %v1747
      %v1749 = vsel %vm551, %v1748, 0.0
      %v1750 = vrot.slane %v1749, 4
      %v1751 = vadd.f32 %v1749, %v1750
      %v1752 = vrot.slane %v1751, 2
      %v1753 = vadd.f32 %v1751, %v1752
      %v1754 = vrot.slane %v1753, 1
      %v1755 = vadd.f32 %v1753, %v1754
      %v1756 = vmul.f32 %v1755, 0.125
      %v1757 = vadd.f32 %v1756, 1e-05
      %v1758 = vrsqrt.pop %v1757
      %v1759 = vmul.f32 %v1747, %v1758
      %v1760 = vpack.c.bf16 %v1759, %v1759
      %v1761 = vld [vmem:[%s11] sm:$0xf]
      %v1762 = vld [vmem:[%s11 + $0x4] sm:$0xf]
      %v1763 = vld [vmem:[%s11 + $0x8] sm:$0xf]
      %v1764 = vld [vmem:[%s11 + $0xc] sm:$0xf]
      %v1765 = vld [vmem:[%s12] sm:$0x1]
      %v1767 = vlaneseq
      %v1768 = vshrl.u32 %v1767, 7
      %v1769 = vsub.s32 0, %v1768
      %v1770 = vrot.slane %v1765, %v1769
      %v1776 = vunpack.c.l.b16 %v1761
      %v1777 = vunpack.c.l.b16 %v1762
      %v1778 = vunpack.c.l.b16 %v1763
      %v1779 = vunpack.c.l.b16 %v1764
      %v1780 = vpack.c.b16 %v1777, %v1776
      %v1781 = vpack.c.b16 %v1779, %v1778
      %v1785 = vsel %vm551, %v1760, 0
      %1787 = vmatprep.subr.bf16.mxu0 0
      %1788 = vmatpush1.bf16.msra.mxu0 %v1780
      %1789 = vmatprep.subr.bf16.mxu0 0
      %1790 = vmatpush1.bf16.msra.mxu0 %v1781
      %1791 = vmatprep.subr.bf16.mxu0 0
      %1792 = vmatpush1.bf16.msra.mxu0 0
      %1793 = vmatprep.subr.bf16.mxu0 0
      %1794 = vmatpush1.bf16.msra.mxu0 0
      %1795 = vmatprep.subr.bf16.mxu0 0
      %1796 = vmatpush1.bf16.msra.mxu0 0
      %1797 = vmatprep.subr.bf16.mxu0 0
      %1798 = vmatpush1.bf16.msra.mxu0 0
      %1799 = vmatprep.subr.bf16.mxu0 0
      %1800 = vmatpush1.bf16.msra.mxu0 0
      %1801 = vmatprep.subr.bf16.mxu0 0
      %1802 = vmatpush1.bf16.msra.mxu0 0
      %1803 = vmatprep.subr.bf16.mxu0 0
      %1804 = vmatpush1.bf16.msra.mxu0 0
      %1805 = vmatprep.subr.bf16.mxu0 0
      %1806 = vmatpush1.bf16.msra.mxu0 0
      %1807 = vmatprep.subr.bf16.mxu0 0
      %1808 = vmatpush1.bf16.msra.mxu0 0
      %1809 = vmatprep.subr.bf16.mxu0 0
      %1810 = vmatpush1.bf16.msra.mxu0 0
      %1811 = vmatprep.subr.bf16.mxu0 0
      %1812 = vmatpush1.bf16.msra.mxu0 0
      %1813 = vmatprep.subr.bf16.mxu0 0
      %1814 = vmatpush1.bf16.msra.mxu0 0
      %1815 = vmatprep.subr.bf16.mxu0 0
      %1816 = vmatpush1.bf16.msra.mxu0 0
      %1817 = vmatprep.subr.bf16.mxu0 0
      %1818 = vmatpush1.bf16.msra.mxu0 0
      %1819 = vmatprep.mubr.bf16.mxu0 0
      %1820 = vmatmul.mubr.bf16.gmra.mrb[0].mxu0 %v1785
      %v1821 = vpop.f32.mrb[0].mxu0
      %v1822 = vadd.f32 %v1770, %v1821
      %v1823 = vpop.f32.mrb[0].mxu0
      %v1824 = vpop.f32.mrb[0].mxu0
      %v1825 = vpop.f32.mrb[0].mxu0
      %1826 = vdwg.mxu0
      %v1827 = vmax.f32 %v1822, 0.0
      %v1828 = vpack.c.bf16 %v1827, %v1827
      %v1829 = vld [vmem:[%s13] sm:$0xf]
      %v1830 = vld [vmem:[%s13 + $0x4] sm:$0xf]
      %v1831 = vld [vmem:[%s13 + $0x8] sm:$0xf]
      %v1832 = vld [vmem:[%s13 + $0xc] sm:$0xf]
      %v1833 = vld [vmem:[%s13 + $0x10] sm:$0xf]
      %v1834 = vld [vmem:[%s13 + $0x14] sm:$0xf]
      %v1835 = vld [vmem:[%s13 + $0x18] sm:$0xf]
      %v1836 = vld [vmem:[%s13 + $0x1c] sm:$0xf]
      %v1837 = vld [vmem:[%s14] sm:$0x1]
      %v1839 = vlaneseq
      %v1840 = vshrl.u32 %v1839, 7
      %v1841 = vsub.s32 0, %v1840
      %v1842 = vrot.slane %v1837, %v1841
      %v1852 = vunpack.c.l.b16 %v1829
      %v1853 = vunpack.c.l.b16 %v1830
      %v1854 = vunpack.c.l.b16 %v1831
      %v1855 = vunpack.c.l.b16 %v1832
      %v1856 = vunpack.c.l.b16 %v1833
      %v1857 = vunpack.c.l.b16 %v1834
      %v1858 = vunpack.c.l.b16 %v1835
      %v1859 = vunpack.c.l.b16 %v1836
      %v1860 = vpack.c.b16 %v1853, %v1852
      %v1861 = vpack.c.b16 %v1855, %v1854
      %v1862 = vpack.c.b16 %v1857, %v1856
      %v1863 = vpack.c.b16 %v1859, %v1858
      %vm1868 = vcmask 523264
      %v1870 = vsel %vm1868, %v1828, 0
      %1872 = vmatprep.subr.bf16.mxu0 0
      %1873 = vmatpush1.bf16.msra.mxu0 %v1860
      %1874 = vmatprep.subr.bf16.mxu0 0
      %1875 = vmatpush1.bf16.msra.mxu0 %v1861
      %1876 = vmatprep.subr.bf16.mxu0 0
      %1877 = vmatpush1.bf16.msra.mxu0 %v1862
      %1878 = vmatprep.subr.bf16.mxu0 0
      %1879 = vmatpush1.bf16.msra.mxu0 %v1863
      %1880 = vmatprep.subr.bf16.mxu0 0
      %1881 = vmatpush1.bf16.msra.mxu0 0
      %1882 = vmatprep.subr.bf16.mxu0 0
      %1883 = vmatpush1.bf16.msra.mxu0 0
      %1884 = vmatprep.subr.bf16.mxu0 0
      %1885 = vmatpush1.bf16.msra.mxu0 0
      %1886 = vmatprep.subr.bf16.mxu0 0
      %1887 = vmatpush1.bf16.msra.mxu0 0
      %1888 = vmatprep.subr.bf16.mxu0 0
      %1889 = vmatpush1.bf16.msra.mxu0 0
      %1890 = vmatprep.subr.bf16.mxu0 0
      %1891 = vmatpush1.bf16.msra.mxu0 0
      %1892 = vmatprep.subr.bf16.mxu0 0
      %1893 = vmatpush1.bf16.msra.mxu0 0
      %1894 = vmatprep.subr.bf16.mxu0 0
      %1895 = vmatpush1.bf16.msra.mxu0 0
      %1896 = vmatprep.subr.bf16.mxu0 0
      %1897 = vmatpush1.bf16.msra.mxu0 0
      %1898 = vmatprep.subr.bf16.mxu0 0
      %1899 = vmatpush1.bf16.msra.mxu0 0
      %1900 = vmatprep.subr.bf16.mxu0 0
      %1901 = vmatpush1.bf16.msra.mxu0 0
      %1902 = vmatprep.subr.bf16.mxu0 0
      %1903 = vmatpush1.bf16.msra.mxu0 0
      %1904 = vmatprep.mubr.bf16.mxu0 0
      %1905 = vmatmul.mubr.bf16.gmra.mrb[0].mxu0 %v1870
      %v1906 = vpop.f32.mrb[0].mxu0
      %v1907 = vadd.f32 %v1842, %v1906
      %v1908 = vpop.f32.mrb[0].mxu0
      %v1909 = vpop.f32.mrb[0].mxu0
      %v1910 = vpop.f32.mrb[0].mxu0
      %1911 = vdwg.mxu0
      %v1912 = vadd.f32 %v1759, %v1907
      %v1913 = vsel %vm551, %v1912, 0.0
      %v1914 = vrot.slane %v1913, 4
      %v1915 = vadd.f32 %v1913, %v1914
      %v1916 = vrot.slane %v1915, 2
      %v1917 = vadd.f32 %v1915, %v1916
      %v1918 = vrot.slane %v1917, 1
      %v1919 = vadd.f32 %v1917, %v1918
      %v1920 = vmul.f32 %v1919, 0.125
      %v1921 = vsub.f32 %v1912, %v1920
      %v1922 = vmul.f32 %v1921, %v1921
      %v1923 = vsel %vm551, %v1922, 0.0
      %v1924 = vrot.slane %v1923, 4
      %v1925 = vadd.f32 %v1923, %v1924
      %v1926 = vrot.slane %v1925, 2
      %v1927 = vadd.f32 %v1925, %v1926
      %v1928 = vrot.slane %v1927, 1
      %v1929 = vadd.f32 %v1927, %v1928
      %v1930 = vmul.f32 %v1929, 0.125
      %v1931 = vadd.f32 %v1930, 1e-05
      %v1932 = vrsqrt.pop %v1931
      %v1933 = vmul.f32 %v1921, %v1932
      %v1934 = vpack.c.bf16 %v1933, %v1933
      %vm1935 = vcmask 257024
      %1936 = vst.msk [vmem:[%s523] sm:$0xf] %vm1935, %v1934
      %p1937 = scmp.lt.s32.totalorder %s26, 1
      %s1938 = scalar_select %p1937, %s26, 1
      %s1939 = smul.addr %s1938, 4
      %s1940 = scalar_lea.vmem %s15, %s1939
      // Predicated region
      $region81: #{eut_single_stage.9} parent=79 // pred_check
        %p1941 = pneg %p374
      $region82: #{eut_single_stage.9} parent=79 // pred_check_branch
        %1943 = sbr.rel (%p1941) target = $region84
      $region83: #{eut_single_stage.9} parent=79 // pred_region
        _
      $region84: #{eut_single_stage.9} parent=79 // pred_fallthru
        _
    $region80: #{eut_single_stage.9} parent=5 // pred_fallthru
      _
    %p1944 = scmp.le.s32.totalorder 2, %s21
    // Predicated region
    $region85: #{eut_single_stage.9} parent=5 // pred_check
      %p1945 = pneg %p1944
    $region86: #{eut_single_stage.9} parent=5 // pred_check_branch
      %1947 = sbr.rel (%p1945) target = $region88
    $region87: #{eut_single_stage.9} parent=5 // pred_region
      %s1948 = ssub.s32 %s21, 2
      // Predicated region
      $region89: #{eut_single_stage.9} parent=87 // pred_check
        %p1949 = pneg %p380
      $region90: #{eut_single_stage.9} parent=87 // pred_check_branch
        %1951 = sbr.rel (%p1949) target = $region92
      $region91: #{eut_single_stage.9} parent=87 // pred_region
        %p1952 = scmp.lt.s32.totalorder %s27, 1
        %s1953 = scalar_select %p1952, %s27, 1
        %s1954 = smul.addr %s1953, 4
        %s1955 = scalar_lea.vmem %s15, %s1954
      $region92: #{eut_single_stage.9} parent=87 // pred_fallthru
        _
    $region88: #{eut_single_stage.9} parent=5 // pred_fallthru
      _
  $region6: #{eut_single_stage.9} parent=0 // loop_footer
    %s25 = sadd.s32 1, %s21
  $region7: #{eut_single_stage.9} parent=0 // loop_footer_branch
    %20 = sbr.rel target = $region3
  $region8: #{eut_single_stage.9} parent=0 // loop_exit
    _

// kernel: eut_single_stage.11
$region0: #{eut_single_stage.11}
  #allocation0 [shape = 'u32[]', space=smem, size = 0x4, offset = 0x4, fixed_abs, tag = 'smem constant byte address 0x4 - core index']
  #allocation1 [shape = 'u32[144,128]{1,0:T(1,128)}', space=vmem, size = 0x12000, scoped, tag = 'internal scratch']
  %s0 = inlined_call_operand.vmem [shape: bf16[2,16,32], index: 0, kind: input, shape index: {}]
  %s1 = inlined_call_operand.vmem [shape: bf16[32,128], index: 1, kind: input, shape index: {}]
  %s2 = inlined_call_operand.vmem [shape: f32[1,128], index: 2, kind: input, shape index: {}]
  %s3 = inlined_call_operand.vmem [shape: f32[2,16,1], index: 3, kind: input, shape index: {}]
  %s4 = inlined_call_operand.vmem [shape: f32[2,16,128], index: 4, kind: output, shape index: {}]
  %s5 = sld [smem:[#allocation0]]
  $region49: #{eut_single_stage.11} parent=0
    _
  %s7 = ssub.s32 1, %s5
  %s8 = scalar_select 0, %s7, %s5
  loop: start=0, step=1, limit=4
  $region2: #{eut_single_stage.11} parent=0 // loop_pre_header
    _
  $region3: #{eut_single_stage.11} parent=0 // loop_header
    %s10 = sphi 0, %s14
    %p11 = scmp.ge.s32.totalorder %s10, 4
    %s17 = sphi 0, %s29
    %s18 = sphi 0, %s25
    %s19 = sphi 0, %s17
    %s20 = sphi 0, %s18
    %s21 = sphi 0, %s19
    %s22 = sphi 0, %s20
    %s34 = sphi 0, %s36
    %s37 = sphi 0, %s34
    %s38 = sphi 0, %s37
    %s54 = sphi 0, %s38
    %s58 = sphi 0, %s58
    %s60 = sphi 0, %s58
    %s61 = sphi 0, %s60
    %s75 = sphi 0, %s61
    %s79 = sphi 0, %s79
    %s81 = sphi 0, %s79
    %s82 = sphi 0, %s81
    %s96 = sphi 0, %s82
    %s104 = sphi 0, %s106
    %s107 = sphi 0, %s104
    %s108 = sphi 0, %s107
    %s124 = sphi 0, %s108
    %s132 = sphi 0, %s134
    %s135 = sphi 0, %s132
    %s136 = sphi 0, %s135
    %s152 = sphi 0, %s136
  $region4: #{eut_single_stage.11} parent=0 // loop_header_branch
    %13 = sbr.rel (%p11) target = $region8
  $region5: #{eut_single_stage.11} parent=0 // loop_body
    %s15 = ssub.s32 %s10, 1
    %s16 = ssub.s32 %s10, 2
    %s23 = sadd.s32 1, %s18
    %p24 = scmp.ge.s32.totalorder %s23, 1
    %s25 = scalar_select %p24, 0, %s23
    %s26 = sadd.s32 1, %s17
    %s27 = scalar_select %p24, %s26, %s17
    %p28 = scmp.ge.s32.totalorder %s27, 2
    %s29 = scalar_select %p28, 0, %s27
    %s30 = ssub.s32 %s17, %s29
    %s31 = ssub.s32 %s18, %s25
    %s32 = sor.u32 %s30, %s31
    %p33 = scmp.eq.s32.totalorder %s32, 0
    %s35 = sadd.s32 %s34, 1
    %s36 = scalar_select %p33, %s34, %s35
    %p39 = pneg %p33
    %p40 = scmp.eq.s32.totalorder %s10, 1
    %p41 = por %p39, %p40
    %p42 = scmp.ne.s32.totalorder %s34, %s37
    %p43 = scmp.eq.s32.totalorder %s10, 0
    %p44 = por %p42, %p43
    %p45 = scmp.ne.s32.totalorder %s34, %s37
    %p46 = scmp.eq.s32.totalorder %s15, 1
    %p47 = por %p45, %p46
    %p48 = scmp.ne.s32.totalorder %s37, %s38
    %p49 = scmp.eq.s32.totalorder %s15, 0
    %p50 = por %p48, %p49
    %p51 = scmp.ne.s32.totalorder %s37, %s38
    %p52 = scmp.eq.s32.totalorder %s16, 1
    %p53 = por %p51, %p52
    %p55 = scmp.ne.s32.totalorder %s38, %s54
    %p56 = scmp.eq.s32.totalorder %s16, 0
    %p57 = por %p55, %p56
    %s59 = sadd.s32 %s58, 1
    %p62 = scmp.eq.s32.totalorder %s10, 1
    %p63 = scmp.ne.s32.totalorder %s58, %s60
    %p64 = scmp.eq.s32.totalorder %s10, 0
    %p65 = por %p63, %p64
    %p66 = scmp.ne.s32.totalorder %s58, %s60
    %p67 = scmp.eq.s32.totalorder %s15, 1
    %p68 = por %p66, %p67
    %p69 = scmp.ne.s32.totalorder %s60, %s61
    %p70 = scmp.eq.s32.totalorder %s15, 0
    %p71 = por %p69, %p70
    %p72 = scmp.ne.s32.totalorder %s60, %s61
    %p73 = scmp.eq.s32.totalorder %s16, 1
    %p74 = por %p72, %p73
    %p76 = scmp.ne.s32.totalorder %s61, %s75
    %p77 = scmp.eq.s32.totalorder %s16, 0
    %p78 = por %p76, %p77
    %s80 = sadd.s32 %s79, 1
    %p83 = scmp.eq.s32.totalorder %s10, 1
    %p84 = scmp.ne.s32.totalorder %s79, %s81
    %p85 = scmp.eq.s32.totalorder %s10, 0
    %p86 = por %p84, %p85
    %p87 = scmp.ne.s32.totalorder %s79, %s81
    %p88 = scmp.eq.s32.totalorder %s15, 1
    %p89 = por %p87, %p88
    %p90 = scmp.ne.s32.totalorder %s81, %s82
    %p91 = scmp.eq.s32.totalorder %s15, 0
    %p92 = por %p90, %p91
    %p93 = scmp.ne.s32.totalorder %s81, %s82
    %p94 = scmp.eq.s32.totalorder %s16, 1
    %p95 = por %p93, %p94
    %p97 = scmp.ne.s32.totalorder %s82, %s96
    %p98 = scmp.eq.s32.totalorder %s16, 0
    %p99 = por %p97, %p98
    %s100 = ssub.s32 %s17, %s29
    %s101 = ssub.s32 %s18, %s25
    %s102 = sor.u32 %s100, %s101
    %p103 = scmp.eq.s32.totalorder %s102, 0
    %s105 = sadd.s32 %s104, 1
    %s106 = scalar_select %p103, %s104, %s105
    %p109 = pneg %p103
    %p110 = scmp.eq.s32.totalorder %s10, 1
    %p111 = por %p109, %p110
    %p112 = scmp.ne.s32.totalorder %s104, %s107
    %p113 = scmp.eq.s32.totalorder %s10, 0
    %p114 = por %p112, %p113
    %p115 = scmp.ne.s32.totalorder %s104, %s107
    %p116 = scmp.eq.s32.totalorder %s15, 1
    %p117 = por %p115, %p116
    %p118 = scmp.ne.s32.totalorder %s107, %s108
    %p119 = scmp.eq.s32.totalorder %s15, 0
    %p120 = por %p118, %p119
    %p121 = scmp.ne.s32.totalorder %s107, %s108
    %p122 = scmp.eq.s32.totalorder %s16, 1
    %p123 = por %p121, %p122
    %p125 = scmp.ne.s32.totalorder %s108, %s124
    %p126 = scmp.eq.s32.totalorder %s16, 0
    %p127 = por %p125, %p126
    %s128 = ssub.s32 %s17, %s29
    %s129 = ssub.s32 %s18, %s25
    %s130 = sor.u32 %s128, %s129
    %p131 = scmp.eq.s32.totalorder %s130, 0
    %s133 = sadd.s32 %s132, 1
    %s134 = scalar_select %p131, %s132, %s133
    %p137 = pneg %p131
    %p138 = scmp.eq.s32.totalorder %s10, 1
    %p139 = por %p137, %p138
    %p140 = scmp.ne.s32.totalorder %s132, %s135
    %p141 = scmp.eq.s32.totalorder %s10, 0
    %p142 = por %p140, %p141
    %p143 = scmp.ne.s32.totalorder %s132, %s135
    %p144 = scmp.eq.s32.totalorder %s15, 1
    %p145 = por %p143, %p144
    %p146 = scmp.ne.s32.totalorder %s135, %s136
    %p147 = scmp.eq.s32.totalorder %s15, 0
    %p148 = por %p146, %p147
    %p149 = scmp.ne.s32.totalorder %s135, %s136
    %p150 = scmp.eq.s32.totalorder %s16, 1
    %p151 = por %p149, %p150
    %p153 = scmp.ne.s32.totalorder %s136, %s152
    %p154 = scmp.eq.s32.totalorder %s16, 0
    %p155 = por %p153, %p154
    %p156 = scmp.le.s32.totalorder 1, %s10
    %p157 = scmp.lt.s32.totalorder %s10, 3
    %p158 = pnand %p156, %p157
    %p159 = pneg %p158
    // Predicated region
    $region9: #{eut_single_stage.11} parent=5 // pred_check
      _
    $region10: #{eut_single_stage.11} parent=5 // pred_check_branch
      %161 = sbr.rel (%p158) target = $region12
    $region11: #{eut_single_stage.11} parent=5 // pred_region
      %s162 = ssub.s32 %s10, 1
      // Predicated region
      $region13: #{eut_single_stage.11} parent=11 // pred_check
        %p163 = pneg %p71
      $region14: #{eut_single_stage.11} parent=11 // pred_check_branch
        %165 = sbr.rel (%p163) target = $region16
      $region15: #{eut_single_stage.11} parent=11 // pred_region
        _
      $region16: #{eut_single_stage.11} parent=11 // pred_fallthru
        _
      // Predicated region
      $region17: #{eut_single_stage.11} parent=11 // pred_check
        %p166 = pneg %p92
      $region18: #{eut_single_stage.11} parent=11 // pred_check_branch
        %168 = sbr.rel (%p166) target = $region20
      $region19: #{eut_single_stage.11} parent=11 // pred_region
        _
      $region20: #{eut_single_stage.11} parent=11 // pred_fallthru
        _
    $region12: #{eut_single_stage.11} parent=5 // pred_fallthru
      _
    %p169 = scmp.lt.s32.totalorder %s10, 2
    // Predicated region
    $region21: #{eut_single_stage.11} parent=5 // pred_check
      %p170 = pneg %p169
    $region22: #{eut_single_stage.11} parent=5 // pred_check_branch
      %172 = sbr.rel (%p170) target = $region24
    $region23: #{eut_single_stage.11} parent=5 // pred_region
      // Predicated region
      $region25: #{eut_single_stage.11} parent=23 // pred_check
        %p173 = pneg %p44
      $region26: #{eut_single_stage.11} parent=23 // pred_check_branch
        %175 = sbr.rel (%p173) target = $region28
      $region27: #{eut_single_stage.11} parent=23 // pred_region
        %s176 = smul.u32 2, %s18
        %p177 = scmp.lt.s32.totalorder %s17, 1
        %s178 = scalar_select %p177, %s17, 1
        %p179 = scmp.lt.s32.totalorder %s176, 1
        %s180 = scalar_select %p179, %s176, 1
        %s181 = smul.addr %s178, 2
        %s182 = sadd.s32 %s180, %s181
        %s183 = smul.addr %s182, 4
        %s184 = scalar_lea.vmem %s0, %s183
        %s185 = smul.u32 2, %s18
      $region28: #{eut_single_stage.11} parent=23 // pred_fallthru
        _
      // Predicated region
      $region29: #{eut_single_stage.11} parent=23 // pred_check
        %p186 = pneg %p114
      $region30: #{eut_single_stage.11} parent=23 // pred_check_branch
        %188 = sbr.rel (%p186) target = $region32
      $region31: #{eut_single_stage.11} parent=23 // pred_region
        %s189 = smul.u32 2, %s18
        %p190 = scmp.lt.s32.totalorder %s17, 1
        %s191 = scalar_select %p190, %s17, 1
        %p192 = scmp.lt.s32.totalorder %s189, 1
        %s193 = scalar_select %p192, %s189, 1
        %s194 = smul.addr %s191, 2
        %s195 = sadd.s32 %s193, %s194
        %s196 = smul.addr %s195, 8
        %s197 = scalar_lea.vmem %s3, %s196
        %s198 = smul.u32 2, %s18
      $region32: #{eut_single_stage.11} parent=23 // pred_fallthru
        _
    $region24: #{eut_single_stage.11} parent=5 // pred_fallthru
      _
    %p199 = scmp.le.s32.totalorder 1, %s10
    %p200 = scmp.lt.s32.totalorder %s10, 3
    %p201 = pnand %p199, %p200
    %p202 = pneg %p201
    // Predicated region
    $region33: #{eut_single_stage.11} parent=5 // pred_check
      _
    $region34: #{eut_single_stage.11} parent=5 // pred_check_branch
      %204 = sbr.rel (%p201) target = $region36
    $region35: #{eut_single_stage.11} parent=5 // pred_region
      %s205 = ssub.s32 %s10, 1
      %s206 = smul.u32 2, %s20
      %p207 = scmp.lt.s32.totalorder %s19, 1
      %s208 = scalar_select %p207, %s19, 1
      %p209 = scmp.lt.s32.totalorder %s206, 1
      %s210 = scalar_select %p209, %s206, 1
      %s211 = smul.addr %s208, 2
      %s212 = sadd.s32 %s210, %s211
      %s213 = smul.addr %s212, 4
      %s214 = scalar_lea.vmem %s0, %s213
      %p215 = pneg %p50
      %p216 = pneg %p47
      %p217 = pneg %p71
      %p218 = pneg %p68
      %p219 = pneg %p92
      %p220 = pneg %p89
      %s221 = smul.u32 2, %s20
      %p222 = scmp.lt.s32.totalorder %s19, 1
      %s223 = scalar_select %p222, %s19, 1
      %p224 = scmp.lt.s32.totalorder %s221, 1
      %s225 = scalar_select %p224, %s221, 1
      %s226 = smul.addr %s223, 2
      %s227 = sadd.s32 %s225, %s226
      %s228 = smul.addr %s227, 8
      %s229 = scalar_lea.vmem %s3, %s228
      %p230 = pneg %p120
      %p231 = pneg %p117
      %p232 = pneg %p148
      %p233 = pneg %p145
      %s234 = smul.u32 2, %s20
      %p235 = scmp.lt.s32.totalorder %s19, 1
      %s236 = scalar_select %p235, %s19, 1
      %p237 = scmp.lt.s32.totalorder %s234, 1
      %s238 = scalar_select %p237, %s234, 1
      %s239 = smul.addr %s236, 2
      %s240 = sadd.s32 %s238, %s239
      %s241 = smul.addr %s240, 8
      %s242 = scalar_lea.vmem %s4, %s241
      %s243 = smul.u32 2, %s20
      %p244 = scmp.lt.s32.totalorder %s19, 1
      %s245 = scalar_select %p244, %s19, 1
      %p246 = scmp.lt.s32.totalorder %s243, 1
      %s247 = scalar_select %p246, %s243, 1
      %s248 = smul.addr %s245, 2
      %s249 = sadd.s32 %s247, %s248
      %s250 = smul.addr %s249, 4
      %s251 = scalar_lea.vmem %s0, %s250
      %s252 = smul.u32 2, %s20
      %s253 = smul.u32 2, %s20
      %p254 = scmp.lt.s32.totalorder %s19, 1
      %s255 = scalar_select %p254, %s19, 1
      %p256 = scmp.lt.s32.totalorder %s253, 1
      %s257 = scalar_select %p256, %s253, 1
      %s258 = smul.addr %s255, 2
      %s259 = sadd.s32 %s257, %s258
      %s260 = smul.addr %s259, 8
      %s261 = scalar_lea.vmem %s3, %s260
      %s262 = smul.u32 2, %s20
      %s263 = smul.u32 2, %s20
      %p264 = scmp.lt.s32.totalorder %s19, 1
      %s265 = scalar_select %p264, %s19, 1
      %p266 = scmp.lt.s32.totalorder %s263, 1
      %s267 = scalar_select %p266, %s263, 1
      %s268 = smul.addr %s265, 2
      %s269 = sadd.s32 %s267, %s268
      %s270 = smul.addr %s269, 8
      %s271 = scalar_lea.vmem %s4, %s270
      %s272 = smul.u32 2, %s20
      %v274 = vld [vmem:[%s251] sm:$0xf]
      %v275 = vld [vmem:[%s251 + $0x4] sm:$0xf]
      %v276 = vld [vmem:[%s1] sm:$0xf]
      %v277 = vld [vmem:[%s1 + $0x4] sm:$0xf]
      %v278 = vld [vmem:[%s1 + $0x8] sm:$0xf]
      %v279 = vld [vmem:[%s1 + $0xc] sm:$0xf]
      %v280 = vld [vmem:[%s2] sm:$0x1]
      %v282 = vlaneseq
      %v283 = vshrl.u32 %v282, 7
      %v284 = vsub.s32 0, %v283
      %v285 = vrot.slane %v280, %v284
      %v289 = vunpack.c.l.b16 %v274
      %v290 = vunpack.c.l.b16 %v275
      %v291 = vpack.c.b16 %v290, %v289
      %v296 = vunpack.c.l.b16 %v276
      %v297 = vunpack.c.l.b16 %v277
      %v298 = vunpack.c.l.b16 %v278
      %v299 = vunpack.c.l.b16 %v279
      %v300 = vpack.c.b16 %v297, %v296
      %v301 = vpack.c.b16 %v299, %v298
      %vm304 = vcmask 261120
      %v306 = vsel %vm304, %v291, 0
      %308 = vmatprep.subr.bf16.mxu0 0
      %309 = vmatpush1.bf16.msra.mxu0 %v300
      %310 = vmatprep.subr.bf16.mxu0 0
      %311 = vmatpush1.bf16.msra.mxu0 %v301
      %312 = vmatprep.subr.bf16.mxu0 0
      %313 = vmatpush1.bf16.msra.mxu0 0
      %314 = vmatprep.subr.bf16.mxu0 0
      %315 = vmatpush1.bf16.msra.mxu0 0
      %316 = vmatprep.subr.bf16.mxu0 0
      %317 = vmatpush1.bf16.msra.mxu0 0
      %318 = vmatprep.subr.bf16.mxu0 0
      %319 = vmatpush1.bf16.msra.mxu0 0
      %320 = vmatprep.subr.bf16.mxu0 0
      %321 = vmatpush1.bf16.msra.mxu0 0
      %322 = vmatprep.subr.bf16.mxu0 0
      %323 = vmatpush1.bf16.msra.mxu0 0
      %324 = vmatprep.subr.bf16.mxu0 0
      %325 = vmatpush1.bf16.msra.mxu0 0
      %326 = vmatprep.subr.bf16.mxu0 0
      %327 = vmatpush1.bf16.msra.mxu0 0
      %328 = vmatprep.subr.bf16.mxu0 0
      %329 = vmatpush1.bf16.msra.mxu0 0
      %330 = vmatprep.subr.bf16.mxu0 0
      %331 = vmatpush1.bf16.msra.mxu0 0
      %332 = vmatprep.subr.bf16.mxu0 0
      %333 = vmatpush1.bf16.msra.mxu0 0
      %334 = vmatprep.subr.bf16.mxu0 0
      %335 = vmatpush1.bf16.msra.mxu0 0
      %336 = vmatprep.subr.bf16.mxu0 0
      %337 = vmatpush1.bf16.msra.mxu0 0
      %338 = vmatprep.subr.bf16.mxu0 0
      %339 = vmatpush1.bf16.msra.mxu0 0
      %340 = vmatprep.mubr.bf16.mxu0 0
      %341 = vmatmul.mubr.bf16.gmra.mrb[0].mxu0 %v306
      %v342 = vpop.f32.mrb[0].mxu0
      %v343 = vadd.f32 %v285, %v342
      %v344 = vpop.f32.mrb[0].mxu0
      %v345 = vpop.f32.mrb[0].mxu0
      %v346 = vadd.f32 %v285, %v345
      %v347 = vpop.f32.mrb[0].mxu0
      %348 = vdwg.mxu0
      %v349 = vld [vmem:[%s261] sm:$0xff]
      %v350 = vld [vmem:[%s261 + $0x8] sm:$0xff]
      %352 = vset.pattern.permute.xlu0 0
      %353 = vperm.xlu0 %352, %v349
      %v354 = vpop.permute.xlu0 %353
      %357 = vset.pattern.permute.xlu0 0
      %358 = vperm.xlu0 %357, %v350
      %v359 = vpop.permute.xlu0 %358
      %v361 = vmul.f32 %v343, %v354
      %v362 = vmul.f32 %v346, %v359
      %363 = vst [vmem:[%s271] sm:$0xff] %v361
      %364 = vst [vmem:[%s271 + $0x8] sm:$0xff] %v362
      %s365 = smul.u32 2, %s20
      %p366 = scmp.lt.s32.totalorder %s19, 1
      %s367 = scalar_select %p366, %s19, 1
      %p368 = scmp.lt.s32.totalorder %s365, 1
      %s369 = scalar_select %p368, %s365, 1
      %s370 = smul.addr %s367, 2
      %s371 = sadd.s32 %s369, %s370
      %s372 = smul.addr %s371, 8
      %s373 = scalar_lea.vmem %s4, %s372
      // Predicated region
      $region37: #{eut_single_stage.11} parent=35 // pred_check
        %p374 = pneg %p145
      $region38: #{eut_single_stage.11} parent=35 // pred_check_branch
        %376 = sbr.rel (%p374) target = $region40
      $region39: #{eut_single_stage.11} parent=35 // pred_region
        %s377 = smul.u32 2, %s20
      $region40: #{eut_single_stage.11} parent=35 // pred_fallthru
        _
    $region36: #{eut_single_stage.11} parent=5 // pred_fallthru
      _
    %p378 = scmp.le.s32.totalorder 2, %s10
    // Predicated region
    $region41: #{eut_single_stage.11} parent=5 // pred_check
      %p379 = pneg %p378
    $region42: #{eut_single_stage.11} parent=5 // pred_check_branch
      %381 = sbr.rel (%p379) target = $region44
    $region43: #{eut_single_stage.11} parent=5 // pred_region
      %s382 = ssub.s32 %s10, 2
      // Predicated region
      $region45: #{eut_single_stage.11} parent=43 // pred_check
        %p383 = pneg %p151
      $region46: #{eut_single_stage.11} parent=43 // pred_check_branch
        %385 = sbr.rel (%p383) target = $region48
      $region47: #{eut_single_stage.11} parent=43 // pred_region
        %s386 = smul.u32 2, %s22
        %p387 = scmp.lt.s32.totalorder %s21, 1
        %s388 = scalar_select %p387, %s21, 1
        %p389 = scmp.lt.s32.totalorder %s386, 1
        %s390 = scalar_select %p389, %s386, 1
        %s391 = smul.addr %s388, 2
        %s392 = sadd.s32 %s390, %s391
        %s393 = smul.addr %s392, 8
        %s394 = scalar_lea.vmem %s4, %s393
      $region48: #{eut_single_stage.11} parent=43 // pred_fallthru
        _
    $region44: #{eut_single_stage.11} parent=5 // pred_fallthru
      _
  $region6: #{eut_single_stage.11} parent=0 // loop_footer
    %s14 = sadd.s32 1, %s10
  $region7: #{eut_single_stage.11} parent=0 // loop_footer_branch
    %9 = sbr.rel target = $region3
  $region8: #{eut_single_stage.11} parent=0 // loop_exit
    _

// kernel: eut_single_stage.10
$region0: #{eut_single_stage.10}
  #allocation0 [shape = 'u32[]', space=smem, size = 0x4, offset = 0x4, fixed_abs, tag = 'smem constant byte address 0x4 - core index']
  #allocation1 [shape = 'u32[144,128]{1,0:T(1,128)}', space=vmem, size = 0x12000, scoped, tag = 'internal scratch']
  %s0 = inlined_call_operand.vmem [shape: f32[2,4,1,4], index: 0, kind: input, shape index: {}]
  %s1 = inlined_call_operand.vmem [shape: bf16[2,16,32], index: 1, kind: input, shape index: {}]
  %s2 = inlined_call_operand.vmem [shape: bf16[2,16,32], index: 2, kind: input, shape index: {}]
  %s3 = inlined_call_operand.vmem [shape: bf16[32,32], index: 3, kind: input, shape index: {}]
  %s4 = inlined_call_operand.vmem [shape: f32[1,32], index: 4, kind: input, shape index: {}]
  %s5 = inlined_call_operand.vmem [shape: bf16[32,32], index: 5, kind: input, shape index: {}]
  %s6 = inlined_call_operand.vmem [shape: f32[1,32], index: 6, kind: input, shape index: {}]
  %s7 = inlined_call_operand.vmem [shape: bf16[32,32], index: 7, kind: input, shape index: {}]
  %s8 = inlined_call_operand.vmem [shape: f32[1,32], index: 8, kind: input, shape index: {}]
  %s9 = inlined_call_operand.vmem [shape: bf16[32,32], index: 9, kind: input, shape index: {}]
  %s10 = inlined_call_operand.vmem [shape: f32[1,32], index: 10, kind: input, shape index: {}]
  %s11 = inlined_call_operand.vmem [shape: bf16[32,64], index: 11, kind: input, shape index: {}]
  %s12 = inlined_call_operand.vmem [shape: f32[1,64], index: 12, kind: input, shape index: {}]
  %s13 = inlined_call_operand.vmem [shape: bf16[64,32], index: 13, kind: input, shape index: {}]
  %s14 = inlined_call_operand.vmem [shape: f32[1,32], index: 14, kind: input, shape index: {}]
  %s15 = inlined_call_operand.vmem [shape: bf16[2,16,32], index: 15, kind: output, shape index: {}]
  %s16 = sld [smem:[#allocation0]]
  $region93: #{eut_single_stage.10} parent=0
    _
  %s18 = ssub.s32 1, %s16
  %s19 = scalar_select 0, %s18, %s16
  loop: start=0, step=1, limit=4
  $region2: #{eut_single_stage.10} parent=0 // loop_pre_header
    _
  $region3: #{eut_single_stage.10} parent=0 // loop_header
    %s21 = sphi 0, %s25
    %p22 = scmp.ge.s32.totalorder %s21, 4
    %s31 = sphi 0, %s33
    %s34 = sphi 0, %s31
    %s35 = sphi 0, %s34
    %s51 = sphi 0, %s35
    %s57 = sphi 0, %s59
    %s60 = sphi 0, %s57
    %s61 = sphi 0, %s60
    %s77 = sphi 0, %s61
    %s83 = sphi 0, %s85
    %s86 = sphi 0, %s83
    %s87 = sphi 0, %s86
    %s103 = sphi 0, %s87
    %s107 = sphi 0, %s107
    %s109 = sphi 0, %s107
    %s110 = sphi 0, %s109
    %s124 = sphi 0, %s110
    %s128 = sphi 0, %s128
    %s130 = sphi 0, %s128
    %s131 = sphi 0, %s130
    %s145 = sphi 0, %s131
    %s149 = sphi 0, %s149
    %s151 = sphi 0, %s149
    %s152 = sphi 0, %s151
    %s166 = sphi 0, %s152
    %s170 = sphi 0, %s170
    %s172 = sphi 0, %s170
    %s173 = sphi 0, %s172
    %s187 = sphi 0, %s173
    %s191 = sphi 0, %s191
    %s193 = sphi 0, %s191
    %s194 = sphi 0, %s193
    %s208 = sphi 0, %s194
    %s212 = sphi 0, %s212
    %s214 = sphi 0, %s212
    %s215 = sphi 0, %s214
    %s229 = sphi 0, %s215
    %s233 = sphi 0, %s233
    %s235 = sphi 0, %s233
    %s236 = sphi 0, %s235
    %s250 = sphi 0, %s236
    %s254 = sphi 0, %s254
    %s256 = sphi 0, %s254
    %s257 = sphi 0, %s256
    %s271 = sphi 0, %s257
    %s275 = sphi 0, %s275
    %s277 = sphi 0, %s275
    %s278 = sphi 0, %s277
    %s292 = sphi 0, %s278
    %s296 = sphi 0, %s296
    %s298 = sphi 0, %s296
    %s299 = sphi 0, %s298
    %s313 = sphi 0, %s299
    %s317 = sphi 0, %s317
    %s319 = sphi 0, %s317
    %s320 = sphi 0, %s319
    %s334 = sphi 0, %s320
    %s338 = sphi 0, %s338
    %s340 = sphi 0, %s338
    %s341 = sphi 0, %s340
    %s355 = sphi 0, %s341
    %s361 = sphi 0, %s363
    %s364 = sphi 0, %s361
    %s365 = sphi 0, %s364
    %s381 = sphi 0, %s365
  $region4: #{eut_single_stage.10} parent=0 // loop_header_branch
    %24 = sbr.rel (%p22) target = $region8
  $region5: #{eut_single_stage.10} parent=0 // loop_body
    %s26 = ssub.s32 %s21, 1
    %s27 = ssub.s32 %s21, 2
    %s28 = sadd.s32 %s21, 1
    %s29 = ssub.s32 %s21, %s28
    %p30 = scmp.eq.s32.totalorder %s29, 0
    %s32 = sadd.s32 %s31, 1
    %s33 = scalar_select %p30, %s31, %s32
    %p36 = pneg %p30
    %p37 = scmp.eq.s32.totalorder %s21, 1
    %p38 = por %p36, %p37
    %p39 = scmp.ne.s32.totalorder %s31, %s34
    %p40 = scmp.eq.s32.totalorder %s21, 0
    %p41 = por %p39, %p40
    %p42 = scmp.ne.s32.totalorder %s31, %s34
    %p43 = scmp.eq.s32.totalorder %s26, 1
    %p44 = por %p42, %p43
    %p45 = scmp.ne.s32.totalorder %s34, %s35
    %p46 = scmp.eq.s32.totalorder %s26, 0
    %p47 = por %p45, %p46
    %p48 = scmp.ne.s32.totalorder %s34, %s35
    %p49 = scmp.eq.s32.totalorder %s27, 1
    %p50 = por %p48, %p49
    %p52 = scmp.ne.s32.totalorder %s35, %s51
    %p53 = scmp.eq.s32.totalorder %s27, 0
    %p54 = por %p52, %p53
    %s55 = ssub.s32 %s21, %s28
    %p56 = scmp.eq.s32.totalorder %s55, 0
    %s58 = sadd.s32 %s57, 1
    %s59 = scalar_select %p56, %s57, %s58
    %p62 = pneg %p56
    %p63 = scmp.eq.s32.totalorder %s21, 1
    %p64 = por %p62, %p63
    %p65 = scmp.ne.s32.totalorder %s57, %s60
    %p66 = scmp.eq.s32.totalorder %s21, 0
    %p67 = por %p65, %p66
    %p68 = scmp.ne.s32.totalorder %s57, %s60
    %p69 = scmp.eq.s32.totalorder %s26, 1
    %p70 = por %p68, %p69
    %p71 = scmp.ne.s32.totalorder %s60, %s61
    %p72 = scmp.eq.s32.totalorder %s26, 0
    %p73 = por %p71, %p72
    %p74 = scmp.ne.s32.totalorder %s60, %s61
    %p75 = scmp.eq.s32.totalorder %s27, 1
    %p76 = por %p74, %p75
    %p78 = scmp.ne.s32.totalorder %s61, %s77
    %p79 = scmp.eq.s32.totalorder %s27, 0
    %p80 = por %p78, %p79
    %s81 = ssub.s32 %s21, %s28
    %p82 = scmp.eq.s32.totalorder %s81, 0
    %s84 = sadd.s32 %s83, 1
    %s85 = scalar_select %p82, %s83, %s84
    %p88 = pneg %p82
    %p89 = scmp.eq.s32.totalorder %s21, 1
    %p90 = por %p88, %p89
    %p91 = scmp.ne.s32.totalorder %s83, %s86
    %p92 = scmp.eq.s32.totalorder %s21, 0
    %p93 = por %p91, %p92
    %p94 = scmp.ne.s32.totalorder %s83, %s86
    %p95 = scmp.eq.s32.totalorder %s26, 1
    %p96 = por %p94, %p95
    %p97 = scmp.ne.s32.totalorder %s86, %s87
    %p98 = scmp.eq.s32.totalorder %s26, 0
    %p99 = por %p97, %p98
    %p100 = scmp.ne.s32.totalorder %s86, %s87
    %p101 = scmp.eq.s32.totalorder %s27, 1
    %p102 = por %p100, %p101
    %p104 = scmp.ne.s32.totalorder %s87, %s103
    %p105 = scmp.eq.s32.totalorder %s27, 0
    %p106 = por %p104, %p105
    %s108 = sadd.s32 %s107, 1
    %p111 = scmp.eq.s32.totalorder %s21, 1
    %p112 = scmp.ne.s32.totalorder %s107, %s109
    %p113 = scmp.eq.s32.totalorder %s21, 0
    %p114 = por %p112, %p113
    %p115 = scmp.ne.s32.totalorder %s107, %s109
    %p116 = scmp.eq.s32.totalorder %s26, 1
    %p117 = por %p115, %p116
    %p118 = scmp.ne.s32.totalorder %s109, %s110
    %p119 = scmp.eq.s32.totalorder %s26, 0
    %p120 = por %p118, %p119
    %p121 = scmp.ne.s32.totalorder %s109, %s110
    %p122 = scmp.eq.s32.totalorder %s27, 1
    %p123 = por %p121, %p122
    %p125 = scmp.ne.s32.totalorder %s110, %s124
    %p126 = scmp.eq.s32.totalorder %s27, 0
    %p127 = por %p125, %p126
    %s129 = sadd.s32 %s128, 1
    %p132 = scmp.eq.s32.totalorder %s21, 1
    %p133 = scmp.ne.s32.totalorder %s128, %s130
    %p134 = scmp.eq.s32.totalorder %s21, 0
    %p135 = por %p133, %p134
    %p136 = scmp.ne.s32.totalorder %s128, %s130
    %p137 = scmp.eq.s32.totalorder %s26, 1
    %p138 = por %p136, %p137
    %p139 = scmp.ne.s32.totalorder %s130, %s131
    %p140 = scmp.eq.s32.totalorder %s26, 0
    %p141 = por %p139, %p140
    %p142 = scmp.ne.s32.totalorder %s130, %s131
    %p143 = scmp.eq.s32.totalorder %s27, 1
    %p144 = por %p142, %p143
    %p146 = scmp.ne.s32.totalorder %s131, %s145
    %p147 = scmp.eq.s32.totalorder %s27, 0
    %p148 = por %p146, %p147
    %s150 = sadd.s32 %s149, 1
    %p153 = scmp.eq.s32.totalorder %s21, 1
    %p154 = scmp.ne.s32.totalorder %s149, %s151
    %p155 = scmp.eq.s32.totalorder %s21, 0
    %p156 = por %p154, %p155
    %p157 = scmp.ne.s32.totalorder %s149, %s151
    %p158 = scmp.eq.s32.totalorder %s26, 1
    %p159 = por %p157, %p158
    %p160 = scmp.ne.s32.totalorder %s151, %s152
    %p161 = scmp.eq.s32.totalorder %s26, 0
    %p162 = por %p160, %p161
    %p163 = scmp.ne.s32.totalorder %s151, %s152
    %p164 = scmp.eq.s32.totalorder %s27, 1
    %p165 = por %p163, %p164
    %p167 = scmp.ne.s32.totalorder %s152, %s166
    %p168 = scmp.eq.s32.totalorder %s27, 0
    %p169 = por %p167, %p168
    %s171 = sadd.s32 %s170, 1
    %p174 = scmp.eq.s32.totalorder %s21, 1
    %p175 = scmp.ne.s32.totalorder %s170, %s172
    %p176 = scmp.eq.s32.totalorder %s21, 0
    %p177 = por %p175, %p176
    %p178 = scmp.ne.s32.totalorder %s170, %s172
    %p179 = scmp.eq.s32.totalorder %s26, 1
    %p180 = por %p178, %p179
    %p181 = scmp.ne.s32.totalorder %s172, %s173
    %p182 = scmp.eq.s32.totalorder %s26, 0
    %p183 = por %p181, %p182
    %p184 = scmp.ne.s32.totalorder %s172, %s173
    %p185 = scmp.eq.s32.totalorder %s27, 1
    %p186 = por %p184, %p185
    %p188 = scmp.ne.s32.totalorder %s173, %s187
    %p189 = scmp.eq.s32.totalorder %s27, 0
    %p190 = por %p188, %p189
    %s192 = sadd.s32 %s191, 1
    %p195 = scmp.eq.s32.totalorder %s21, 1
    %p196 = scmp.ne.s32.totalorder %s191, %s193
    %p197 = scmp.eq.s32.totalorder %s21, 0
    %p198 = por %p196, %p197
    %p199 = scmp.ne.s32.totalorder %s191, %s193
    %p200 = scmp.eq.s32.totalorder %s26, 1
    %p201 = por %p199, %p200
    %p202 = scmp.ne.s32.totalorder %s193, %s194
    %p203 = scmp.eq.s32.totalorder %s26, 0
    %p204 = por %p202, %p203
    %p205 = scmp.ne.s32.totalorder %s193, %s194
    %p206 = scmp.eq.s32.totalorder %s27, 1
    %p207 = por %p205, %p206
    %p209 = scmp.ne.s32.totalorder %s194, %s208
    %p210 = scmp.eq.s32.totalorder %s27, 0
    %p211 = por %p209, %p210
    %s213 = sadd.s32 %s212, 1
    %p216 = scmp.eq.s32.totalorder %s21, 1
    %p217 = scmp.ne.s32.totalorder %s212, %s214
    %p218 = scmp.eq.s32.totalorder %s21, 0
    %p219 = por %p217, %p218
    %p220 = scmp.ne.s32.totalorder %s212, %s214
    %p221 = scmp.eq.s32.totalorder %s26, 1
    %p222 = por %p220, %p221
    %p223 = scmp.ne.s32.totalorder %s214, %s215
    %p224 = scmp.eq.s32.totalorder %s26, 0
    %p225 = por %p223, %p224
    %p226 = scmp.ne.s32.totalorder %s214, %s215
    %p227 = scmp.eq.s32.totalorder %s27, 1
    %p228 = por %p226, %p227
    %p230 = scmp.ne.s32.totalorder %s215, %s229
    %p231 = scmp.eq.s32.totalorder %s27, 0
    %p232 = por %p230, %p231
    %s234 = sadd.s32 %s233, 1
    %p237 = scmp.eq.s32.totalorder %s21, 1
    %p238 = scmp.ne.s32.totalorder %s233, %s235
    %p239 = scmp.eq.s32.totalorder %s21, 0
    %p240 = por %p238, %p239
    %p241 = scmp.ne.s32.totalorder %s233, %s235
    %p242 = scmp.eq.s32.totalorder %s26, 1
    %p243 = por %p241, %p242
    %p244 = scmp.ne.s32.totalorder %s235, %s236
    %p245 = scmp.eq.s32.totalorder %s26, 0
    %p246 = por %p244, %p245
    %p247 = scmp.ne.s32.totalorder %s235, %s236
    %p248 = scmp.eq.s32.totalorder %s27, 1
    %p249 = por %p247, %p248
    %p251 = scmp.ne.s32.totalorder %s236, %s250
    %p252 = scmp.eq.s32.totalorder %s27, 0
    %p253 = por %p251, %p252
    %s255 = sadd.s32 %s254, 1
    %p258 = scmp.eq.s32.totalorder %s21, 1
    %p259 = scmp.ne.s32.totalorder %s254, %s256
    %p260 = scmp.eq.s32.totalorder %s21, 0
    %p261 = por %p259, %p260
    %p262 = scmp.ne.s32.totalorder %s254, %s256
    %p263 = scmp.eq.s32.totalorder %s26, 1
    %p264 = por %p262, %p263
    %p265 = scmp.ne.s32.totalorder %s256, %s257
    %p266 = scmp.eq.s32.totalorder %s26, 0
    %p267 = por %p265, %p266
    %p268 = scmp.ne.s32.totalorder %s256, %s257
    %p269 = scmp.eq.s32.totalorder %s27, 1
    %p270 = por %p268, %p269
    %p272 = scmp.ne.s32.totalorder %s257, %s271
    %p273 = scmp.eq.s32.totalorder %s27, 0
    %p274 = por %p272, %p273
    %s276 = sadd.s32 %s275, 1
    %p279 = scmp.eq.s32.totalorder %s21, 1
    %p280 = scmp.ne.s32.totalorder %s275, %s277
    %p281 = scmp.eq.s32.totalorder %s21, 0
    %p282 = por %p280, %p281
    %p283 = scmp.ne.s32.totalorder %s275, %s277
    %p284 = scmp.eq.s32.totalorder %s26, 1
    %p285 = por %p283, %p284
    %p286 = scmp.ne.s32.totalorder %s277, %s278
    %p287 = scmp.eq.s32.totalorder %s26, 0
    %p288 = por %p286, %p287
    %p289 = scmp.ne.s32.totalorder %s277, %s278
    %p290 = scmp.eq.s32.totalorder %s27, 1
    %p291 = por %p289, %p290
    %p293 = scmp.ne.s32.totalorder %s278, %s292
    %p294 = scmp.eq.s32.totalorder %s27, 0
    %p295 = por %p293, %p294
    %s297 = sadd.s32 %s296, 1
    %p300 = scmp.eq.s32.totalorder %s21, 1
    %p301 = scmp.ne.s32.totalorder %s296, %s298
    %p302 = scmp.eq.s32.totalorder %s21, 0
    %p303 = por %p301, %p302
    %p304 = scmp.ne.s32.totalorder %s296, %s298
    %p305 = scmp.eq.s32.totalorder %s26, 1
    %p306 = por %p304, %p305
    %p307 = scmp.ne.s32.totalorder %s298, %s299
    %p308 = scmp.eq.s32.totalorder %s26, 0
    %p309 = por %p307, %p308
    %p310 = scmp.ne.s32.totalorder %s298, %s299
    %p311 = scmp.eq.s32.totalorder %s27, 1
    %p312 = por %p310, %p311
    %p314 = scmp.ne.s32.totalorder %s299, %s313
    %p315 = scmp.eq.s32.totalorder %s27, 0
    %p316 = por %p314, %p315
    %s318 = sadd.s32 %s317, 1
    %p321 = scmp.eq.s32.totalorder %s21, 1
    %p322 = scmp.ne.s32.totalorder %s317, %s319
    %p323 = scmp.eq.s32.totalorder %s21, 0
    %p324 = por %p322, %p323
    %p325 = scmp.ne.s32.totalorder %s317, %s319
    %p326 = scmp.eq.s32.totalorder %s26, 1
    %p327 = por %p325, %p326
    %p328 = scmp.ne.s32.totalorder %s319, %s320
    %p329 = scmp.eq.s32.totalorder %s26, 0
    %p330 = por %p328, %p329
    %p331 = scmp.ne.s32.totalorder %s319, %s320
    %p332 = scmp.eq.s32.totalorder %s27, 1
    %p333 = por %p331, %p332
    %p335 = scmp.ne.s32.totalorder %s320, %s334
    %p336 = scmp.eq.s32.totalorder %s27, 0
    %p337 = por %p335, %p336
    %s339 = sadd.s32 %s338, 1
    %p342 = scmp.eq.s32.totalorder %s21, 1
    %p343 = scmp.ne.s32.totalorder %s338, %s340
    %p344 = scmp.eq.s32.totalorder %s21, 0
    %p345 = por %p343, %p344
    %p346 = scmp.ne.s32.totalorder %s338, %s340
    %p347 = scmp.eq.s32.totalorder %s26, 1
    %p348 = por %p346, %p347
    %p349 = scmp.ne.s32.totalorder %s340, %s341
    %p350 = scmp.eq.s32.totalorder %s26, 0
    %p351 = por %p349, %p350
    %p352 = scmp.ne.s32.totalorder %s340, %s341
    %p353 = scmp.eq.s32.totalorder %s27, 1
    %p354 = por %p352, %p353
    %p356 = scmp.ne.s32.totalorder %s341, %s355
    %p357 = scmp.eq.s32.totalorder %s27, 0
    %p358 = por %p356, %p357
    %s359 = ssub.s32 %s21, %s28
    %p360 = scmp.eq.s32.totalorder %s359, 0
    %s362 = sadd.s32 %s361, 1
    %s363 = scalar_select %p360, %s361, %s362
    %p366 = pneg %p360
    %p367 = scmp.eq.s32.totalorder %s21, 1
    %p368 = por %p366, %p367
    %p369 = scmp.ne.s32.totalorder %s361, %s364
    %p370 = scmp.eq.s32.totalorder %s21, 0
    %p371 = por %p369, %p370
    %p372 = scmp.ne.s32.totalorder %s361, %s364
    %p373 = scmp.eq.s32.totalorder %s26, 1
    %p374 = por %p372, %p373
    %p375 = scmp.ne.s32.totalorder %s364, %s365
    %p376 = scmp.eq.s32.totalorder %s26, 0
    %p377 = por %p375, %p376
    %p378 = scmp.ne.s32.totalorder %s364, %s365
    %p379 = scmp.eq.s32.totalorder %s27, 1
    %p380 = por %p378, %p379
    %p382 = scmp.ne.s32.totalorder %s365, %s381
    %p383 = scmp.eq.s32.totalorder %s27, 0
    %p384 = por %p382, %p383
    %p385 = scmp.le.s32.totalorder 1, %s21
    %p386 = scmp.lt.s32.totalorder %s21, 3
    %p387 = pnand %p385, %p386
    %p388 = pneg %p387
    // Predicated region
    $region9: #{eut_single_stage.10} parent=5 // pred_check
      _
    $region10: #{eut_single_stage.10} parent=5 // pred_check_branch
      %390 = sbr.rel (%p387) target = $region12
    $region11: #{eut_single_stage.10} parent=5 // pred_region
      %s391 = ssub.s32 %s21, 1
      // Predicated region
      $region13: #{eut_single_stage.10} parent=11 // pred_check
        %p392 = pneg %p120
      $region14: #{eut_single_stage.10} parent=11 // pred_check_branch
        %394 = sbr.rel (%p392) target = $region16
      $region15: #{eut_single_stage.10} parent=11 // pred_region
        _
      $region16: #{eut_single_stage.10} parent=11 // pred_fallthru
        _
      // Predicated region
      $region17: #{eut_single_stage.10} parent=11 // pred_check
        %p395 = pneg %p141
      $region18: #{eut_single_stage.10} parent=11 // pred_check_branch
        %397 = sbr.rel (%p395) target = $region20
      $region19: #{eut_single_stage.10} parent=11 // pred_region
        _
      $region20: #{eut_single_stage.10} parent=11 // pred_fallthru
        _
      // Predicated region
      $region21: #{eut_single_stage.10} parent=11 // pred_check
        %p398 = pneg %p162
      $region22: #{eut_single_stage.10} parent=11 // pred_check_branch
        %400 = sbr.rel (%p398) target = $region24
      $region23: #{eut_single_stage.10} parent=11 // pred_region
        _
      $region24: #{eut_single_stage.10} parent=11 // pred_fallthru
        _
      // Predicated region
      $region25: #{eut_single_stage.10} parent=11 // pred_check
        %p401 = pneg %p183
      $region26: #{eut_single_stage.10} parent=11 // pred_check_branch
        %403 = sbr.rel (%p401) target = $region28
      $region27: #{eut_single_stage.10} parent=11 // pred_region
        _
      $region28: #{eut_single_stage.10} parent=11 // pred_fallthru
        _
      // Predicated region
      $region29: #{eut_single_stage.10} parent=11 // pred_check
        %p404 = pneg %p204
      $region30: #{eut_single_stage.10} parent=11 // pred_check_branch
        %406 = sbr.rel (%p404) target = $region32
      $region31: #{eut_single_stage.10} parent=11 // pred_region
        _
      $region32: #{eut_single_stage.10} parent=11 // pred_fallthru
        _
      // Predicated region
      $region33: #{eut_single_stage.10} parent=11 // pred_check
        %p407 = pneg %p225
      $region34: #{eut_single_stage.10} parent=11 // pred_check_branch
        %409 = sbr.rel (%p407) target = $region36
      $region35: #{eut_single_stage.10} parent=11 // pred_region
        _
      $region36: #{eut_single_stage.10} parent=11 // pred_fallthru
        _
      // Predicated region
      $region37: #{eut_single_stage.10} parent=11 // pred_check
        %p410 = pneg %p246
      $region38: #{eut_single_stage.10} parent=11 // pred_check_branch
        %412 = sbr.rel (%p410) target = $region40
      $region39: #{eut_single_stage.10} parent=11 // pred_region
        _
      $region40: #{eut_single_stage.10} parent=11 // pred_fallthru
        _
      // Predicated region
      $region41: #{eut_single_stage.10} parent=11 // pred_check
        %p413 = pneg %p267
      $region42: #{eut_single_stage.10} parent=11 // pred_check_branch
        %415 = sbr.rel (%p413) target = $region44
      $region43: #{eut_single_stage.10} parent=11 // pred_region
        _
      $region44: #{eut_single_stage.10} parent=11 // pred_fallthru
        _
      // Predicated region
      $region45: #{eut_single_stage.10} parent=11 // pred_check
        %p416 = pneg %p288
      $region46: #{eut_single_stage.10} parent=11 // pred_check_branch
        %418 = sbr.rel (%p416) target = $region48
      $region47: #{eut_single_stage.10} parent=11 // pred_region
        _
      $region48: #{eut_single_stage.10} parent=11 // pred_fallthru
        _
      // Predicated region
      $region49: #{eut_single_stage.10} parent=11 // pred_check
        %p419 = pneg %p309
      $region50: #{eut_single_stage.10} parent=11 // pred_check_branch
        %421 = sbr.rel (%p419) target = $region52
      $region51: #{eut_single_stage.10} parent=11 // pred_region
        _
      $region52: #{eut_single_stage.10} parent=11 // pred_fallthru
        _
      // Predicated region
      $region53: #{eut_single_stage.10} parent=11 // pred_check
        %p422 = pneg %p330
      $region54: #{eut_single_stage.10} parent=11 // pred_check_branch
        %424 = sbr.rel (%p422) target = $region56
      $region55: #{eut_single_stage.10} parent=11 // pred_region
        _
      $region56: #{eut_single_stage.10} parent=11 // pred_fallthru
        _
      // Predicated region
      $region57: #{eut_single_stage.10} parent=11 // pred_check
        %p425 = pneg %p351
      $region58: #{eut_single_stage.10} parent=11 // pred_check_branch
        %427 = sbr.rel (%p425) target = $region60
      $region59: #{eut_single_stage.10} parent=11 // pred_region
        _
      $region60: #{eut_single_stage.10} parent=11 // pred_fallthru
        _
    $region12: #{eut_single_stage.10} parent=5 // pred_fallthru
      _
    %p428 = scmp.lt.s32.totalorder %s21, 2
    // Predicated region
    $region61: #{eut_single_stage.10} parent=5 // pred_check
      %p429 = pneg %p428
    $region62: #{eut_single_stage.10} parent=5 // pred_check_branch
      %431 = sbr.rel (%p429) target = $region64
    $region63: #{eut_single_stage.10} parent=5 // pred_region
      // Predicated region
      $region65: #{eut_single_stage.10} parent=63 // pred_check
        %p432 = pneg %p41
      $region66: #{eut_single_stage.10} parent=63 // pred_check_branch
        %434 = sbr.rel (%p432) target = $region68
      $region67: #{eut_single_stage.10} parent=63 // pred_region
        %p435 = scmp.lt.s32.totalorder %s21, 1
        %s436 = scalar_select %p435, %s21, 1
        %s437 = smul.addr %s436, 4
        %s438 = scalar_lea.vmem %s0, %s437
      $region68: #{eut_single_stage.10} parent=63 // pred_fallthru
        _
      // Predicated region
      $region69: #{eut_single_stage.10} parent=63 // pred_check
        %p439 = pneg %p67
      $region70: #{eut_single_stage.10} parent=63 // pred_check_branch
        %441 = sbr.rel (%p439) target = $region72
      $region71: #{eut_single_stage.10} parent=63 // pred_region
        %p442 = scmp.lt.s32.totalorder %s21, 1
        %s443 = scalar_select %p442, %s21, 1
        %s444 = smul.addr %s443, 2
        %s445 = smul.addr %s444, 4
        %s446 = scalar_lea.vmem %s1, %s445
      $region72: #{eut_single_stage.10} parent=63 // pred_fallthru
        _
      // Predicated region
      $region73: #{eut_single_stage.10} parent=63 // pred_check
        %p447 = pneg %p93
      $region74: #{eut_single_stage.10} parent=63 // pred_check_branch
        %449 = sbr.rel (%p447) target = $region76
      $region75: #{eut_single_stage.10} parent=63 // pred_region
        %p450 = scmp.lt.s32.totalorder %s21, 1
        %s451 = scalar_select %p450, %s21, 1
        %s452 = smul.addr %s451, 2
        %s453 = smul.addr %s452, 4
        %s454 = scalar_lea.vmem %s2, %s453
      $region76: #{eut_single_stage.10} parent=63 // pred_fallthru
        _
    $region64: #{eut_single_stage.10} parent=5 // pred_fallthru
      _
    %p455 = scmp.le.s32.totalorder 1, %s21
    %p456 = scmp.lt.s32.totalorder %s21, 3
    %p457 = pnand %p455, %p456
    %p458 = pneg %p457
    // Predicated region
    $region77: #{eut_single_stage.10} parent=5 // pred_check
      _
    $region78: #{eut_single_stage.10} parent=5 // pred_check_branch
      %460 = sbr.rel (%p457) target = $region80
    $region79: #{eut_single_stage.10} parent=5 // pred_region
      %s461 = ssub.s32 %s21, 1
      %p462 = scmp.lt.s32.totalorder %s26, 1
      %s463 = scalar_select %p462, %s26, 1
      %s464 = smul.addr %s463, 4
      %s465 = scalar_lea.vmem %s0, %s464
      %p466 = pneg %p47
      %p467 = pneg %p44
      %p468 = scmp.lt.s32.totalorder %s26, 1
      %s469 = scalar_select %p468, %s26, 1
      %s470 = smul.addr %s469, 2
      %s471 = smul.addr %s470, 4
      %s472 = scalar_lea.vmem %s1, %s471
      %p473 = pneg %p73
      %p474 = pneg %p70
      %p475 = scmp.lt.s32.totalorder %s26, 1
      %s476 = scalar_select %p475, %s26, 1
      %s477 = smul.addr %s476, 2
      %s478 = smul.addr %s477, 4
      %s479 = scalar_lea.vmem %s2, %s478
      %p480 = pneg %p99
      %p481 = pneg %p96
      %p482 = pneg %p120
      %p483 = pneg %p117
      %p484 = pneg %p141
      %p485 = pneg %p138
      %p486 = pneg %p162
      %p487 = pneg %p159
      %p488 = pneg %p183
      %p489 = pneg %p180
      %p490 = pneg %p204
      %p491 = pneg %p201
      %p492 = pneg %p225
      %p493 = pneg %p222
      %p494 = pneg %p246
      %p495 = pneg %p243
      %p496 = pneg %p267
      %p497 = pneg %p264
      %p498 = pneg %p288
      %p499 = pneg %p285
      %p500 = pneg %p309
      %p501 = pneg %p306
      %p502 = pneg %p330
      %p503 = pneg %p327
      %p504 = pneg %p351
      %p505 = pneg %p348
      %p506 = pneg %p377
      %p507 = pneg %p374
      %p508 = scmp.lt.s32.totalorder %s26, 1
      %s509 = scalar_select %p508, %s26, 1
      %s510 = smul.addr %s509, 2
      %s511 = smul.addr %s510, 4
      %s512 = scalar_lea.vmem %s15, %s511
      %p513 = scmp.lt.s32.totalorder %s26, 1
      %s514 = scalar_select %p513, %s26, 1
      %s515 = smul.addr %s514, 4
      %s516 = scalar_lea.vmem %s0, %s515
      %p517 = scmp.lt.s32.totalorder %s26, 1
      %s518 = scalar_select %p517, %s26, 1
      %s519 = smul.addr %s518, 2
      %s520 = smul.addr %s519, 4
      %s521 = scalar_lea.vmem %s1, %s520
      %p522 = scmp.lt.s32.totalorder %s26, 1
      %s523 = scalar_select %p522, %s26, 1
      %s524 = smul.addr %s523, 2
      %s525 = smul.addr %s524, 4
      %s526 = scalar_lea.vmem %s2, %s525
      %p527 = scmp.lt.s32.totalorder %s26, 1
      %s528 = scalar_select %p527, %s26, 1
      %s529 = smul.addr %s528, 2
      %s530 = smul.addr %s529, 4
      %s531 = scalar_lea.vmem %s15, %s530
      %v533 = vld [vmem:[%s521] sm:$0xf]
      %v534 = vld [vmem:[%s521 + $0x4] sm:$0xf]
      %v535 = vunpack.c.l.bf16 %v533
      %v536 = vunpack.c.l.bf16 %v534
      %v537 = vld [vmem:[%s526] sm:$0xf]
      %v538 = vld [vmem:[%s526 + $0x4] sm:$0xf]
      %v539 = vld [vmem:[%s3] sm:$0xf]
      %v540 = vld [vmem:[%s3 + $0x4] sm:$0xf]
      %v541 = vld [vmem:[%s3 + $0x8] sm:$0xf]
      %v542 = vld [vmem:[%s3 + $0xc] sm:$0xf]
      %v543 = vld [vmem:[%s4] sm:$0x1]
      %v545 = vlaneseq
      %v546 = vshrl.u32 %v545, 7
      %v547 = vsub.s32 0, %v546
      %v548 = vrot.slane %v543, %v547
      %v552 = vunpack.c.l.b16 %v533
      %v553 = vunpack.c.l.b16 %v534
      %v554 = vpack.c.b16 %v553, %v552
      %v559 = vunpack.c.l.b16 %v539
      %v560 = vunpack.c.l.b16 %v540
      %v561 = vunpack.c.l.b16 %v541
      %v562 = vunpack.c.l.b16 %v542
      %v563 = vpack.c.b16 %v560, %v559
      %v564 = vpack.c.b16 %v562, %v561
      %vm567 = vcmask 261120
      %v569 = vsel %vm567, %v554, 0
      %571 = vmatprep.subr.bf16.mxu0 0
      %572 = vmatpush1.bf16.msra.mxu0 %v563
      %573 = vmatprep.subr.bf16.mxu0 0
      %574 = vmatpush1.bf16.msra.mxu0 %v564
      %575 = vmatprep.subr.bf16.mxu0 0
      %576 = vmatpush1.bf16.msra.mxu0 0
      %577 = vmatprep.subr.bf16.mxu0 0
      %578 = vmatpush1.bf16.msra.mxu0 0
      %579 = vmatprep.subr.bf16.mxu0 0
      %580 = vmatpush1.bf16.msra.mxu0 0
      %581 = vmatprep.subr.bf16.mxu0 0
      %582 = vmatpush1.bf16.msra.mxu0 0
      %583 = vmatprep.subr.bf16.mxu0 0
      %584 = vmatpush1.bf16.msra.mxu0 0
      %585 = vmatprep.subr.bf16.mxu0 0
      %586 = vmatpush1.bf16.msra.mxu0 0
      %587 = vmatprep.subr.bf16.mxu0 0
      %588 = vmatpush1.bf16.msra.mxu0 0
      %589 = vmatprep.subr.bf16.mxu0 0
      %590 = vmatpush1.bf16.msra.mxu0 0
      %591 = vmatprep.subr.bf16.mxu0 0
      %592 = vmatpush1.bf16.msra.mxu0 0
      %593 = vmatprep.subr.bf16.mxu0 0
      %594 = vmatpush1.bf16.msra.mxu0 0
      %595 = vmatprep.subr.bf16.mxu0 0
      %596 = vmatpush1.bf16.msra.mxu0 0
      %597 = vmatprep.subr.bf16.mxu0 0
      %598 = vmatpush1.bf16.msra.mxu0 0
      %599 = vmatprep.subr.bf16.mxu0 0
      %600 = vmatpush1.bf16.msra.mxu0 0
      %601 = vmatprep.subr.bf16.mxu0 0
      %602 = vmatpush1.bf16.msra.mxu0 0
      %603 = vmatprep.mubr.bf16.mxu0 0
      %604 = vmatmul.mubr.bf16.gmra.mrb[0].mxu0 %v569
      %v605 = vpop.f32.mrb[0].mxu0
      %v606 = vadd.f32 %v548, %v605
      %v607 = vpop.f32.mrb[0].mxu0
      %v608 = vpop.f32.mrb[0].mxu0
      %v609 = vadd.f32 %v548, %v608
      %v610 = vpop.f32.mrb[0].mxu0
      %611 = vdwg.mxu0
      %v612 = vld [vmem:[%s5] sm:$0xf]
      %v613 = vld [vmem:[%s5 + $0x4] sm:$0xf]
      %v614 = vld [vmem:[%s5 + $0x8] sm:$0xf]
      %v615 = vld [vmem:[%s5 + $0xc] sm:$0xf]
      %v616 = vld [vmem:[%s6] sm:$0x1]
      %v618 = vlaneseq
      %v619 = vshrl.u32 %v618, 7
      %v620 = vsub.s32 0, %v619
      %v621 = vrot.slane %v616, %v620
      %v627 = vunpack.c.l.b16 %v612
      %v628 = vunpack.c.l.b16 %v613
      %v629 = vunpack.c.l.b16 %v614
      %v630 = vunpack.c.l.b16 %v615
      %v631 = vpack.c.b16 %v628, %v627
      %v632 = vpack.c.b16 %v630, %v629
      %635 = vmatprep.subr.bf16.mxu0 0
      %636 = vmatpush1.bf16.msra.mxu0 %v631
      %637 = vmatprep.subr.bf16.mxu0 0
      %638 = vmatpush1.bf16.msra.mxu0 %v632
      %639 = vmatprep.subr.bf16.mxu0 0
      %640 = vmatpush1.bf16.msra.mxu0 0
      %641 = vmatprep.subr.bf16.mxu0 0
      %642 = vmatpush1.bf16.msra.mxu0 0
      %643 = vmatprep.subr.bf16.mxu0 0
      %644 = vmatpush1.bf16.msra.mxu0 0
      %645 = vmatprep.subr.bf16.mxu0 0
      %646 = vmatpush1.bf16.msra.mxu0 0
      %647 = vmatprep.subr.bf16.mxu0 0
      %648 = vmatpush1.bf16.msra.mxu0 0
      %649 = vmatprep.subr.bf16.mxu0 0
      %650 = vmatpush1.bf16.msra.mxu0 0
      %651 = vmatprep.subr.bf16.mxu0 0
      %652 = vmatpush1.bf16.msra.mxu0 0
      %653 = vmatprep.subr.bf16.mxu0 0
      %654 = vmatpush1.bf16.msra.mxu0 0
      %655 = vmatprep.subr.bf16.mxu0 0
      %656 = vmatpush1.bf16.msra.mxu0 0
      %657 = vmatprep.subr.bf16.mxu0 0
      %658 = vmatpush1.bf16.msra.mxu0 0
      %659 = vmatprep.subr.bf16.mxu0 0
      %660 = vmatpush1.bf16.msra.mxu0 0
      %661 = vmatprep.subr.bf16.mxu0 0
      %662 = vmatpush1.bf16.msra.mxu0 0
      %663 = vmatprep.subr.bf16.mxu0 0
      %664 = vmatpush1.bf16.msra.mxu0 0
      %665 = vmatprep.subr.bf16.mxu0 0
      %666 = vmatpush1.bf16.msra.mxu0 0
      %667 = vmatprep.mubr.bf16.mxu0 0
      %668 = vmatmul.mubr.bf16.gmra.mrb[0].mxu0 %v569
      %v669 = vpop.f32.mrb[0].mxu0
      %v670 = vadd.f32 %v621, %v669
      %v671 = vpop.f32.mrb[0].mxu0
      %v672 = vpop.f32.mrb[0].mxu0
      %v673 = vadd.f32 %v621, %v672
      %v674 = vpop.f32.mrb[0].mxu0
      %675 = vdwg.mxu0
      %v676 = vld [vmem:[%s7] sm:$0xf]
      %v677 = vld [vmem:[%s7 + $0x4] sm:$0xf]
      %v678 = vld [vmem:[%s7 + $0x8] sm:$0xf]
      %v679 = vld [vmem:[%s7 + $0xc] sm:$0xf]
      %v680 = vld [vmem:[%s8] sm:$0x1]
      %v682 = vlaneseq
      %v683 = vshrl.u32 %v682, 7
      %v684 = vsub.s32 0, %v683
      %v685 = vrot.slane %v680, %v684
      %v689 = vunpack.c.l.b16 %v537
      %v690 = vunpack.c.l.b16 %v538
      %v691 = vpack.c.b16 %v690, %v689
      %v696 = vunpack.c.l.b16 %v676
      %v697 = vunpack.c.l.b16 %v677
      %v698 = vunpack.c.l.b16 %v678
      %v699 = vunpack.c.l.b16 %v679
      %v700 = vpack.c.b16 %v697, %v696
      %v701 = vpack.c.b16 %v699, %v698
      %v705 = vsel %vm567, %v691, 0
      %707 = vmatprep.subr.bf16.mxu0 0
      %708 = vmatpush1.bf16.msra.mxu0 %v700
      %709 = vmatprep.subr.bf16.mxu0 0
      %710 = vmatpush1.bf16.msra.mxu0 %v701
      %711 = vmatprep.subr.bf16.mxu0 0
      %712 = vmatpush1.bf16.msra.mxu0 0
      %713 = vmatprep.subr.bf16.mxu0 0
      %714 = vmatpush1.bf16.msra.mxu0 0
      %715 = vmatprep.subr.bf16.mxu0 0
      %716 = vmatpush1.bf16.msra.mxu0 0
      %717 = vmatprep.subr.bf16.mxu0 0
      %718 = vmatpush1.bf16.msra.mxu0 0
      %719 = vmatprep.subr.bf16.mxu0 0
      %720 = vmatpush1.bf16.msra.mxu0 0
      %721 = vmatprep.subr.bf16.mxu0 0
      %722 = vmatpush1.bf16.msra.mxu0 0
      %723 = vmatprep.subr.bf16.mxu0 0
      %724 = vmatpush1.bf16.msra.mxu0 0
      %725 = vmatprep.subr.bf16.mxu0 0
      %726 = vmatpush1.bf16.msra.mxu0 0
      %727 = vmatprep.subr.bf16.mxu0 0
      %728 = vmatpush1.bf16.msra.mxu0 0
      %729 = vmatprep.subr.bf16.mxu0 0
      %730 = vmatpush1.bf16.msra.mxu0 0
      %731 = vmatprep.subr.bf16.mxu0 0
      %732 = vmatpush1.bf16.msra.mxu0 0
      %733 = vmatprep.subr.bf16.mxu0 0
      %734 = vmatpush1.bf16.msra.mxu0 0
      %735 = vmatprep.subr.bf16.mxu0 0
      %736 = vmatpush1.bf16.msra.mxu0 0
      %737 = vmatprep.subr.bf16.mxu0 0
      %738 = vmatpush1.bf16.msra.mxu0 0
      %739 = vmatprep.mubr.bf16.mxu0 0
      %740 = vmatmul.mubr.bf16.gmra.mrb[0].mxu0 %v705
      %v741 = vpop.f32.mrb[0].mxu0
      %v742 = vadd.f32 %v685, %v741
      %v743 = vpop.f32.mrb[0].mxu0
      %v744 = vpop.f32.mrb[0].mxu0
      %v745 = vadd.f32 %v685, %v744
      %v746 = vpop.f32.mrb[0].mxu0
      %747 = vdwg.mxu0
      %v750 = vcombine.high %v606, %v606
      %v751 = vcombine.high %v609, %v609
      %v754 = vpack.c.bf16 %v606, %v606
      %v755 = vpack.c.bf16 %v750, %v750
      %v756 = vpack.c.bf16 %v609, %v609
      %v757 = vpack.c.bf16 %v751, %v751
      %762 = vrot.lane.b32.xlu0 %v754, 120
      %v763 = vpop.permute.xlu0 %762
      %764 = vrot.lane.b32.xlu0 %v755, 120
      %v765 = vpop.permute.xlu0 %764
      %766 = vrot.lane.b32.xlu0 %v756, 120
      %v767 = vpop.permute.xlu0 %766
      %768 = vrot.lane.b32.xlu0 %v757, 120
      %v769 = vpop.permute.xlu0 %768
      %770 = vrot.lane.b32.xlu0 %v754, 112
      %v771 = vpop.permute.xlu0 %770
      %772 = vrot.lane.b32.xlu0 %v755, 112
      %v773 = vpop.permute.xlu0 %772
      %774 = vrot.lane.b32.xlu0 %v756, 112
      %v775 = vpop.permute.xlu0 %774
      %776 = vrot.lane.b32.xlu0 %v757, 112
      %v777 = vpop.permute.xlu0 %776
      %778 = vrot.lane.b32.xlu0 %v754, 104
      %v779 = vpop.permute.xlu0 %778
      %780 = vrot.lane.b32.xlu0 %v755, 104
      %v781 = vpop.permute.xlu0 %780
      %782 = vrot.lane.b32.xlu0 %v756, 104
      %v783 = vpop.permute.xlu0 %782
      %784 = vrot.lane.b32.xlu0 %v757, 104
      %v785 = vpop.permute.xlu0 %784
      %v788 = vcombine.high %v670, %v670
      %v789 = vcombine.high %v673, %v673
      %v792 = vpack.c.bf16 %v670, %v670
      %v793 = vpack.c.bf16 %v788, %v788
      %v794 = vpack.c.bf16 %v673, %v673
      %v795 = vpack.c.bf16 %v789, %v789
      %800 = vrot.lane.b32.xlu0 %v792, 120
      %v801 = vpop.permute.xlu0 %800
      %802 = vrot.lane.b32.xlu0 %v793, 120
      %v803 = vpop.permute.xlu0 %802
      %804 = vrot.lane.b32.xlu0 %v794, 120
      %v805 = vpop.permute.xlu0 %804
      %806 = vrot.lane.b32.xlu0 %v795, 120
      %v807 = vpop.permute.xlu0 %806
      %808 = vrot.lane.b32.xlu0 %v792, 112
      %v809 = vpop.permute.xlu0 %808
      %810 = vrot.lane.b32.xlu0 %v793, 112
      %v811 = vpop.permute.xlu0 %810
      %812 = vrot.lane.b32.xlu0 %v794, 112
      %v813 = vpop.permute.xlu0 %812
      %814 = vrot.lane.b32.xlu0 %v795, 112
      %v815 = vpop.permute.xlu0 %814
      %816 = vrot.lane.b32.xlu0 %v792, 104
      %v817 = vpop.permute.xlu0 %816
      %818 = vrot.lane.b32.xlu0 %v793, 104
      %v819 = vpop.permute.xlu0 %818
      %820 = vrot.lane.b32.xlu0 %v794, 104
      %v821 = vpop.permute.xlu0 %820
      %822 = vrot.lane.b32.xlu0 %v795, 104
      %v823 = vpop.permute.xlu0 %822
      %v826 = vcombine.high %v742, %v742
      %v827 = vcombine.high %v745, %v745
      %v830 = vpack.c.bf16 %v742, %v742
      %v831 = vpack.c.bf16 %v826, %v826
      %v832 = vpack.c.bf16 %v745, %v745
      %v833 = vpack.c.bf16 %v827, %v827
      %838 = vrot.lane.b32.xlu0 %v830, 120
      %v839 = vpop.permute.xlu0 %838
      %840 = vrot.lane.b32.xlu0 %v831, 120
      %v841 = vpop.permute.xlu0 %840
      %842 = vrot.lane.b32.xlu0 %v832, 120
      %v843 = vpop.permute.xlu0 %842
      %844 = vrot.lane.b32.xlu0 %v833, 120
      %v845 = vpop.permute.xlu0 %844
      %846 = vrot.lane.b32.xlu0 %v830, 112
      %v847 = vpop.permute.xlu0 %846
      %848 = vrot.lane.b32.xlu0 %v831, 112
      %v849 = vpop.permute.xlu0 %848
      %850 = vrot.lane.b32.xlu0 %v832, 112
      %v851 = vpop.permute.xlu0 %850
      %852 = vrot.lane.b32.xlu0 %v833, 112
      %v853 = vpop.permute.xlu0 %852
      %854 = vrot.lane.b32.xlu0 %v830, 104
      %v855 = vpop.permute.xlu0 %854
      %856 = vrot.lane.b32.xlu0 %v831, 104
      %v857 = vpop.permute.xlu0 %856
      %858 = vrot.lane.b32.xlu0 %v832, 104
      %v859 = vpop.permute.xlu0 %858
      %860 = vrot.lane.b32.xlu0 %v833, 104
      %v861 = vpop.permute.xlu0 %860
      %v862 = vld [vmem:[%s516] sm:$0x1]
      %v863 = vld [vmem:[%s516 + $0x1] sm:$0x1]
      %v864 = vld [vmem:[%s516 + $0x2] sm:$0x1]
      %v865 = vld [vmem:[%s516 + $0x3] sm:$0x1]
      %vm866 = vcmp.gt.f32.partialorder %v862, 0.0
      %vm867 = vcmp.gt.f32.partialorder %v863, 0.0
      %vm868 = vcmp.gt.f32.partialorder %v864, 0.0
      %vm869 = vcmp.gt.f32.partialorder %v865, 0.0
      %v870 = vsel %vm866, 0.0, -1e+09
      %v871 = vsel %vm867, 0.0, -1e+09
      %v872 = vsel %vm868, 0.0, -1e+09
      %v873 = vsel %vm869, 0.0, -1e+09
      %v878 = vlaneseq
      %v879 = vshrl.u32 %v878, 7
      %v880 = vsub.s32 0, %v879
      %v881 = vrot.slane %v870, %v880
      %v882 = vlaneseq
      %v883 = vshrl.u32 %v882, 7
      %v884 = vsub.s32 0, %v883
      %v885 = vrot.slane %v871, %v884
      %v886 = vlaneseq
      %v887 = vshrl.u32 %v886, 7
      %v888 = vsub.s32 0, %v887
      %v889 = vrot.slane %v872, %v888
      %v890 = vlaneseq
      %v891 = vshrl.u32 %v890, 7
      %v892 = vsub.s32 0, %v891
      %v893 = vrot.slane %v873, %v892
      %vm898 = vcmask 64512
      %v900 = vsel %vm898, %v754, 0
      %v903 = vsel %vm898, %v792, 0
      %905 = vmatprep.subr.bf16.mxu0 0
      %906 = vmatpush1.bf16.xpose.msra.mxu0 %v903
      %907 = vmatprep.subr.bf16.mxu0 0
      %908 = vmatpush1.bf16.xpose.msra.mxu0 0
      %909 = vmatprep.subr.bf16.mxu0 0
      %910 = vmatpush1.bf16.xpose.msra.mxu0 0
      %911 = vmatprep.subr.bf16.mxu0 0
      %912 = vmatpush1.bf16.xpose.msra.mxu0 0
      %913 = vmatprep.subr.bf16.mxu0 0
      %914 = vmatpush1.bf16.xpose.msra.mxu0 0
      %915 = vmatprep.subr.bf16.mxu0 0
      %916 = vmatpush1.bf16.xpose.msra.mxu0 0
      %917 = vmatprep.subr.bf16.mxu0 0
      %918 = vmatpush1.bf16.xpose.msra.mxu0 0
      %919 = vmatprep.subr.bf16.mxu0 0
      %920 = vmatpush1.bf16.xpose.msra.mxu0 0
      %921 = vmatprep.subr.bf16.mxu0 0
      %922 = vmatpush1.bf16.xpose.msra.mxu0 0
      %923 = vmatprep.subr.bf16.mxu0 0
      %924 = vmatpush1.bf16.xpose.msra.mxu0 0
      %925 = vmatprep.subr.bf16.mxu0 0
      %926 = vmatpush1.bf16.xpose.msra.mxu0 0
      %927 = vmatprep.subr.bf16.mxu0 0
      %928 = vmatpush1.bf16.xpose.msra.mxu0 0
      %929 = vmatprep.subr.bf16.mxu0 0
      %930 = vmatpush1.bf16.xpose.msra.mxu0 0
      %931 = vmatprep.subr.bf16.mxu0 0
      %932 = vmatpush1.bf16.xpose.msra.mxu0 0
      %933 = vmatprep.subr.bf16.mxu0 0
      %934 = vmatpush1.bf16.xpose.msra.mxu0 0
      %935 = vmatprep.subr.bf16.mxu0 0
      %936 = vmatpush1.bf16.xpose.msra.mxu0 0
      %937 = vmatprep.mubr.bf16.mxu0 0
      %938 = vmatmul.mubr.bf16.gmra.mrb[0].mxu0 %v900
      %v939 = vpop.f32.mrb[0].mxu0
      %v940 = vadd.f32 %v881, %v939
      %v941 = vpop.f32.mrb[0].mxu0
      %v942 = vpop.f32.mrb[0].mxu0
      %v943 = vpop.f32.mrb[0].mxu0
      %944 = vdwg.mxu0
      %v946 = vsel %vm898, %v755, 0
      %v949 = vsel %vm898, %v793, 0
      %951 = vmatprep.subr.bf16.mxu0 0
      %952 = vmatpush1.bf16.xpose.msra.mxu0 %v949
      %953 = vmatprep.subr.bf16.mxu0 0
      %954 = vmatpush1.bf16.xpose.msra.mxu0 0
      %955 = vmatprep.subr.bf16.mxu0 0
      %956 = vmatpush1.bf16.xpose.msra.mxu0 0
      %957 = vmatprep.subr.bf16.mxu0 0
      %958 = vmatpush1.bf16.xpose.msra.mxu0 0
      %959 = vmatprep.subr.bf16.mxu0 0
      %960 = vmatpush1.bf16.xpose.msra.mxu0 0
      %961 = vmatprep.subr.bf16.mxu0 0
      %962 = vmatpush1.bf16.xpose.msra.mxu0 0
      %963 = vmatprep.subr.bf16.mxu0 0
      %964 = vmatpush1.bf16.xpose.msra.mxu0 0
      %965 = vmatprep.subr.bf16.mxu0 0
      %966 = vmatpush1.bf16.xpose.msra.mxu0 0
      %967 = vmatprep.subr.bf16.mxu0 0
      %968 = vmatpush1.bf16.xpose.msra.mxu0 0
      %969 = vmatprep.subr.bf16.mxu0 0
      %970 = vmatpush1.bf16.xpose.msra.mxu0 0
      %971 = vmatprep.subr.bf16.mxu0 0
      %972 = vmatpush1.bf16.xpose.msra.mxu0 0
      %973 = vmatprep.subr.bf16.mxu0 0
      %974 = vmatpush1.bf16.xpose.msra.mxu0 0
      %975 = vmatprep.subr.bf16.mxu0 0
      %976 = vmatpush1.bf16.xpose.msra.mxu0 0
      %977 = vmatprep.subr.bf16.mxu0 0
      %978 = vmatpush1.bf16.xpose.msra.mxu0 0
      %979 = vmatprep.subr.bf16.mxu0 0
      %980 = vmatpush1.bf16.xpose.msra.mxu0 0
      %981 = vmatprep.subr.bf16.mxu0 0
      %982 = vmatpush1.bf16.xpose.msra.mxu0 0
      %983 = vmatprep.mubr.bf16.mxu0 0
      %984 = vmatmul.mubr.bf16.gmra.mrb[0].mxu0 %v946
      %v985 = vpop.f32.mrb[0].mxu0
      %v986 = vadd.f32 %v885, %v985
      %v987 = vpop.f32.mrb[0].mxu0
      %v988 = vpop.f32.mrb[0].mxu0
      %v989 = vpop.f32.mrb[0].mxu0
      %990 = vdwg.mxu0
      %v992 = vsel %vm898, %v756, 0
      %v995 = vsel %vm898, %v794, 0
      %997 = vmatprep.subr.bf16.mxu0 0
      %998 = vmatpush1.bf16.xpose.msra.mxu0 %v995
      %999 = vmatprep.subr.bf16.mxu0 0
      %1000 = vmatpush1.bf16.xpose.msra.mxu0 0
      %1001 = vmatprep.subr.bf16.mxu0 0
      %1002 = vmatpush1.bf16.xpose.msra.mxu0 0
      %1003 = vmatprep.subr.bf16.mxu0 0
      %1004 = vmatpush1.bf16.xpose.msra.mxu0 0
      %1005 = vmatprep.subr.bf16.mxu0 0
      %1006 = vmatpush1.bf16.xpose.msra.mxu0 0
      %1007 = vmatprep.subr.bf16.mxu0 0
      %1008 = vmatpush1.bf16.xpose.msra.mxu0 0
      %1009 = vmatprep.subr.bf16.mxu0 0
      %1010 = vmatpush1.bf16.xpose.msra.mxu0 0
      %1011 = vmatprep.subr.bf16.mxu0 0
      %1012 = vmatpush1.bf16.xpose.msra.mxu0 0
      %1013 = vmatprep.subr.bf16.mxu0 0
      %1014 = vmatpush1.bf16.xpose.msra.mxu0 0
      %1015 = vmatprep.subr.bf16.mxu0 0
      %1016 = vmatpush1.bf16.xpose.msra.mxu0 0
      %1017 = vmatprep.subr.bf16.mxu0 0
      %1018 = vmatpush1.bf16.xpose.msra.mxu0 0
      %1019 = vmatprep.subr.bf16.mxu0 0
      %1020 = vmatpush1.bf16.xpose.msra.mxu0 0
      %1021 = vmatprep.subr.bf16.mxu0 0
      %1022 = vmatpush1.bf16.xpose.msra.mxu0 0
      %1023 = vmatprep.subr.bf16.mxu0 0
      %1024 = vmatpush1.bf16.xpose.msra.mxu0 0
      %1025 = vmatprep.subr.bf16.mxu0 0
      %1026 = vmatpush1.bf16.xpose.msra.mxu0 0
      %1027 = vmatprep.subr.bf16.mxu0 0
      %1028 = vmatpush1.bf16.xpose.msra.mxu0 0
      %1029 = vmatprep.mubr.bf16.mxu0 0
      %1030 = vmatmul.mubr.bf16.gmra.mrb[0].mxu0 %v992
      %v1031 = vpop.f32.mrb[0].mxu0
      %v1032 = vadd.f32 %v889, %v1031
      %v1033 = vpop.f32.mrb[0].mxu0
      %v1034 = vpop.f32.mrb[0].mxu0
      %v1035 = vpop.f32.mrb[0].mxu0
      %1036 = vdwg.mxu0
      %v1038 = vsel %vm898, %v757, 0
      %v1041 = vsel %vm898, %v795, 0
      %1043 = vmatprep.subr.bf16.mxu0 0
      %1044 = vmatpush1.bf16.xpose.msra.mxu0 %v1041
      %1045 = vmatprep.subr.bf16.mxu0 0
      %1046 = vmatpush1.bf16.xpose.msra.mxu0 0
      %1047 = vmatprep.subr.bf16.mxu0 0
      %1048 = vmatpush1.bf16.xpose.msra.mxu0 0
      %1049 = vmatprep.subr.bf16.mxu0 0
      %1050 = vmatpush1.bf16.xpose.msra.mxu0 0
      %1051 = vmatprep.subr.bf16.mxu0 0
      %1052 = vmatpush1.bf16.xpose.msra.mxu0 0
      %1053 = vmatprep.subr.bf16.mxu0 0
      %1054 = vmatpush1.bf16.xpose.msra.mxu0 0
      %1055 = vmatprep.subr.bf16.mxu0 0
      %1056 = vmatpush1.bf16.xpose.msra.mxu0 0
      %1057 = vmatprep.subr.bf16.mxu0 0
      %1058 = vmatpush1.bf16.xpose.msra.mxu0 0
      %1059 = vmatprep.subr.bf16.mxu0 0
      %1060 = vmatpush1.bf16.xpose.msra.mxu0 0
      %1061 = vmatprep.subr.bf16.mxu0 0
      %1062 = vmatpush1.bf16.xpose.msra.mxu0 0
      %1063 = vmatprep.subr.bf16.mxu0 0
      %1064 = vmatpush1.bf16.xpose.msra.mxu0 0
      %1065 = vmatprep.subr.bf16.mxu0 0
      %1066 = vmatpush1.bf16.xpose.msra.mxu0 0
      %1067 = vmatprep.subr.bf16.mxu0 0
      %1068 = vmatpush1.bf16.xpose.msra.mxu0 0
      %1069 = vmatprep.subr.bf16.mxu0 0
      %1070 = vmatpush1.bf16.xpose.msra.mxu0 0
      %1071 = vmatprep.subr.bf16.mxu0 0
      %1072 = vmatpush1.bf16.xpose.msra.mxu0 0
      %1073 = vmatprep.subr.bf16.mxu0 0
      %1074 = vmatpush1.bf16.xpose.msra.mxu0 0
      %1075 = vmatprep.mubr.bf16.mxu0 0
      %1076 = vmatmul.mubr.bf16.gmra.mrb[0].mxu0 %v1038
      %v1077 = vpop.f32.mrb[0].mxu0
      %v1078 = vadd.f32 %v893, %v1077
      %v1079 = vpop.f32.mrb[0].mxu0
      %v1080 = vpop.f32.mrb[0].mxu0
      %v1081 = vpop.f32.mrb[0].mxu0
      %1082 = vdwg.mxu0
      %v1084 = vsel %vm898, %v763, 0
      %v1087 = vsel %vm898, %v801, 0
      %1089 = vmatprep.subr.bf16.mxu0 0
      %1090 = vmatpush1.bf16.xpose.msra.mxu0 %v1087
      %1091 = vmatprep.subr.bf16.mxu0 0
      %1092 = vmatpush1.bf16.xpose.msra.mxu0 0
      %1093 = vmatprep.subr.bf16.mxu0 0
      %1094 = vmatpush1.bf16.xpose.msra.mxu0 0
      %1095 = vmatprep.subr.bf16.mxu0 0
      %1096 = vmatpush1.bf16.xpose.msra.mxu0 0
      %1097 = vmatprep.subr.bf16.mxu0 0
      %1098 = vmatpush1.bf16.xpose.msra.mxu0 0
      %1099 = vmatprep.subr.bf16.mxu0 0
      %1100 = vmatpush1.bf16.xpose.msra.mxu0 0
      %1101 = vmatprep.subr.bf16.mxu0 0
      %1102 = vmatpush1.bf16.xpose.msra.mxu0 0
      %1103 = vmatprep.subr.bf16.mxu0 0
      %1104 = vmatpush1.bf16.xpose.msra.mxu0 0
      %1105 = vmatprep.subr.bf16.mxu0 0
      %1106 = vmatpush1.bf16.xpose.msra.mxu0 0
      %1107 = vmatprep.subr.bf16.mxu0 0
      %1108 = vmatpush1.bf16.xpose.msra.mxu0 0
      %1109 = vmatprep.subr.bf16.mxu0 0
      %1110 = vmatpush1.bf16.xpose.msra.mxu0 0
      %1111 = vmatprep.subr.bf16.mxu0 0
      %1112 = vmatpush1.bf16.xpose.msra.mxu0 0
      %1113 = vmatprep.subr.bf16.mxu0 0
      %1114 = vmatpush1.bf16.xpose.msra.mxu0 0
      %1115 = vmatprep.subr.bf16.mxu0 0
      %1116 = vmatpush1.bf16.xpose.msra.mxu0 0
      %1117 = vmatprep.subr.bf16.mxu0 0
      %1118 = vmatpush1.bf16.xpose.msra.mxu0 0
      %1119 = vmatprep.subr.bf16.mxu0 0
      %1120 = vmatpush1.bf16.xpose.msra.mxu0 0
      %1121 = vmatprep.mubr.bf16.mxu0 0
      %1122 = vmatmul.mubr.bf16.gmra.mrb[0].mxu0 %v1084
      %v1123 = vpop.f32.mrb[0].mxu0
      %v1124 = vadd.f32 %v881, %v1123
      %v1125 = vpop.f32.mrb[0].mxu0
      %v1126 = vpop.f32.mrb[0].mxu0
      %v1127 = vpop.f32.mrb[0].mxu0
      %1128 = vdwg.mxu0
      %v1130 = vsel %vm898, %v765, 0
      %v1133 = vsel %vm898, %v803, 0
      %1135 = vmatprep.subr.bf16.mxu0 0
      %1136 = vmatpush1.bf16.xpose.msra.mxu0 %v1133
      %1137 = vmatprep.subr.bf16.mxu0 0
      %1138 = vmatpush1.bf16.xpose.msra.mxu0 0
      %1139 = vmatprep.subr.bf16.mxu0 0
      %1140 = vmatpush1.bf16.xpose.msra.mxu0 0
      %1141 = vmatprep.subr.bf16.mxu0 0
      %1142 = vmatpush1.bf16.xpose.msra.mxu0 0
      %1143 = vmatprep.subr.bf16.mxu0 0
      %1144 = vmatpush1.bf16.xpose.msra.mxu0 0
      %1145 = vmatprep.subr.bf16.mxu0 0
      %1146 = vmatpush1.bf16.xpose.msra.mxu0 0
      %1147 = vmatprep.subr.bf16.mxu0 0
      %1148 = vmatpush1.bf16.xpose.msra.mxu0 0
      %1149 = vmatprep.subr.bf16.mxu0 0
      %1150 = vmatpush1.bf16.xpose.msra.mxu0 0
      %1151 = vmatprep.subr.bf16.mxu0 0
      %1152 = vmatpush1.bf16.xpose.msra.mxu0 0
      %1153 = vmatprep.subr.bf16.mxu0 0
      %1154 = vmatpush1.bf16.xpose.msra.mxu0 0
      %1155 = vmatprep.subr.bf16.mxu0 0
      %1156 = vmatpush1.bf16.xpose.msra.mxu0 0
      %1157 = vmatprep.subr.bf16.mxu0 0
      %1158 = vmatpush1.bf16.xpose.msra.mxu0 0
      %1159 = vmatprep.subr.bf16.mxu0 0
      %1160 = vmatpush1.bf16.xpose.msra.mxu0 0
      %1161 = vmatprep.subr.bf16.mxu0 0
      %1162 = vmatpush1.bf16.xpose.msra.mxu0 0
      %1163 = vmatprep.subr.bf16.mxu0 0
      %1164 = vmatpush1.bf16.xpose.msra.mxu0 0
      %1165 = vmatprep.subr.bf16.mxu0 0
      %1166 = vmatpush1.bf16.xpose.msra.mxu0 0
      %1167 = vmatprep.mubr.bf16.mxu0 0
      %1168 = vmatmul.mubr.bf16.gmra.mrb[0].mxu0 %v1130
      %v1169 = vpop.f32.mrb[0].mxu0
      %v1170 = vadd.f32 %v885, %v1169
      %v1171 = vpop.f32.mrb[0].mxu0
      %v1172 = vpop.f32.mrb[0].mxu0
      %v1173 = vpop.f32.mrb[0].mxu0
      %1174 = vdwg.mxu0
      %v1176 = vsel %vm898, %v767, 0
      %v1179 = vsel %vm898, %v805, 0
      %1181 = vmatprep.subr.bf16.mxu0 0
      %1182 = vmatpush1.bf16.xpose.msra.mxu0 %v1179
      %1183 = vmatprep.subr.bf16.mxu0 0
      %1184 = vmatpush1.bf16.xpose.msra.mxu0 0
      %1185 = vmatprep.subr.bf16.mxu0 0
      %1186 = vmatpush1.bf16.xpose.msra.mxu0 0
      %1187 = vmatprep.subr.bf16.mxu0 0
      %1188 = vmatpush1.bf16.xpose.msra.mxu0 0
      %1189 = vmatprep.subr.bf16.mxu0 0
      %1190 = vmatpush1.bf16.xpose.msra.mxu0 0
      %1191 = vmatprep.subr.bf16.mxu0 0
      %1192 = vmatpush1.bf16.xpose.msra.mxu0 0
      %1193 = vmatprep.subr.bf16.mxu0 0
      %1194 = vmatpush1.bf16.xpose.msra.mxu0 0
      %1195 = vmatprep.subr.bf16.mxu0 0
      %1196 = vmatpush1.bf16.xpose.msra.mxu0 0
      %1197 = vmatprep.subr.bf16.mxu0 0
      %1198 = vmatpush1.bf16.xpose.msra.mxu0 0
      %1199 = vmatprep.subr.bf16.mxu0 0
      %1200 = vmatpush1.bf16.xpose.msra.mxu0 0
      %1201 = vmatprep.subr.bf16.mxu0 0
      %1202 = vmatpush1.bf16.xpose.msra.mxu0 0
      %1203 = vmatprep.subr.bf16.mxu0 0
      %1204 = vmatpush1.bf16.xpose.msra.mxu0 0
      %1205 = vmatprep.subr.bf16.mxu0 0
      %1206 = vmatpush1.bf16.xpose.msra.mxu0 0
      %1207 = vmatprep.subr.bf16.mxu0 0
      %1208 = vmatpush1.bf16.xpose.msra.mxu0 0
      %1209 = vmatprep.subr.bf16.mxu0 0
      %1210 = vmatpush1.bf16.xpose.msra.mxu0 0
      %1211 = vmatprep.subr.bf16.mxu0 0
      %1212 = vmatpush1.bf16.xpose.msra.mxu0 0
      %1213 = vmatprep.mubr.bf16.mxu0 0
      %1214 = vmatmul.mubr.bf16.gmra.mrb[0].mxu0 %v1176
      %v1215 = vpop.f32.mrb[0].mxu0
      %v1216 = vadd.f32 %v889, %v1215
      %v1217 = vpop.f32.mrb[0].mxu0
      %v1218 = vpop.f32.mrb[0].mxu0
      %v1219 = vpop.f32.mrb[0].mxu0
      %1220 = vdwg.mxu0
      %v1222 = vsel %vm898, %v769, 0
      %v1225 = vsel %vm898, %v807, 0
      %1227 = vmatprep.subr.bf16.mxu0 0
      %1228 = vmatpush1.bf16.xpose.msra.mxu0 %v1225
      %1229 = vmatprep.subr.bf16.mxu0 0
      %1230 = vmatpush1.bf16.xpose.msra.mxu0 0
      %1231 = vmatprep.subr.bf16.mxu0 0
      %1232 = vmatpush1.bf16.xpose.msra.mxu0 0
      %1233 = vmatprep.subr.bf16.mxu0 0
      %1234 = vmatpush1.bf16.xpose.msra.mxu0 0
      %1235 = vmatprep.subr.bf16.mxu0 0
      %1236 = vmatpush1.bf16.xpose.msra.mxu0 0
      %1237 = vmatprep.subr.bf16.mxu0 0
      %1238 = vmatpush1.bf16.xpose.msra.mxu0 0
      %1239 = vmatprep.subr.bf16.mxu0 0
      %1240 = vmatpush1.bf16.xpose.msra.mxu0 0
      %1241 = vmatprep.subr.bf16.mxu0 0
      %1242 = vmatpush1.bf16.xpose.msra.mxu0 0
      %1243 = vmatprep.subr.bf16.mxu0 0
      %1244 = vmatpush1.bf16.xpose.msra.mxu0 0
      %1245 = vmatprep.subr.bf16.mxu0 0
      %1246 = vmatpush1.bf16.xpose.msra.mxu0 0
      %1247 = vmatprep.subr.bf16.mxu0 0
      %1248 = vmatpush1.bf16.xpose.msra.mxu0 0
      %1249 = vmatprep.subr.bf16.mxu0 0
      %1250 = vmatpush1.bf16.xpose.msra.mxu0 0
      %1251 = vmatprep.subr.bf16.mxu0 0
      %1252 = vmatpush1.bf16.xpose.msra.mxu0 0
      %1253 = vmatprep.subr.bf16.mxu0 0
      %1254 = vmatpush1.bf16.xpose.msra.mxu0 0
      %1255 = vmatprep.subr.bf16.mxu0 0
      %1256 = vmatpush1.bf16.xpose.msra.mxu0 0
      %1257 = vmatprep.subr.bf16.mxu0 0
      %1258 = vmatpush1.bf16.xpose.msra.mxu0 0
      %1259 = vmatprep.mubr.bf16.mxu0 0
      %1260 = vmatmul.mubr.bf16.gmra.mrb[0].mxu0 %v1222
      %v1261 = vpop.f32.mrb[0].mxu0
      %v1262 = vadd.f32 %v893, %v1261
      %v1263 = vpop.f32.mrb[0].mxu0
      %v1264 = vpop.f32.mrb[0].mxu0
      %v1265 = vpop.f32.mrb[0].mxu0
      %1266 = vdwg.mxu0
      %v1268 = vsel %vm898, %v771, 0
      %v1271 = vsel %vm898, %v809, 0
      %1273 = vmatprep.subr.bf16.mxu0 0
      %1274 = vmatpush1.bf16.xpose.msra.mxu0 %v1271
      %1275 = vmatprep.subr.bf16.mxu0 0
      %1276 = vmatpush1.bf16.xpose.msra.mxu0 0
      %1277 = vmatprep.subr.bf16.mxu0 0
      %1278 = vmatpush1.bf16.xpose.msra.mxu0 0
      %1279 = vmatprep.subr.bf16.mxu0 0
      %1280 = vmatpush1.bf16.xpose.msra.mxu0 0
      %1281 = vmatprep.subr.bf16.mxu0 0
      %1282 = vmatpush1.bf16.xpose.msra.mxu0 0
      %1283 = vmatprep.subr.bf16.mxu0 0
      %1284 = vmatpush1.bf16.xpose.msra.mxu0 0
      %1285 = vmatprep.subr.bf16.mxu0 0
      %1286 = vmatpush1.bf16.xpose.msra.mxu0 0
      %1287 = vmatprep.subr.bf16.mxu0 0
      %1288 = vmatpush1.bf16.xpose.msra.mxu0 0
      %1289 = vmatprep.subr.bf16.mxu0 0
      %1290 = vmatpush1.bf16.xpose.msra.mxu0 0
      %1291 = vmatprep.subr.bf16.mxu0 0
      %1292 = vmatpush1.bf16.xpose.msra.mxu0 0
      %1293 = vmatprep.subr.bf16.mxu0 0
      %1294 = vmatpush1.bf16.xpose.msra.mxu0 0
      %1295 = vmatprep.subr.bf16.mxu0 0
      %1296 = vmatpush1.bf16.xpose.msra.mxu0 0
      %1297 = vmatprep.subr.bf16.mxu0 0
      %1298 = vmatpush1.bf16.xpose.msra.mxu0 0
      %1299 = vmatprep.subr.bf16.mxu0 0
      %1300 = vmatpush1.bf16.xpose.msra.mxu0 0
      %1301 = vmatprep.subr.bf16.mxu0 0
      %1302 = vmatpush1.bf16.xpose.msra.mxu0 0
      %1303 = vmatprep.subr.bf16.mxu0 0
      %1304 = vmatpush1.bf16.xpose.msra.mxu0 0
      %1305 = vmatprep.mubr.bf16.mxu0 0
      %1306 = vmatmul.mubr.bf16.gmra.mrb[0].mxu0 %v1268
      %v1307 = vpop.f32.mrb[0].mxu0
      %v1308 = vadd.f32 %v881, %v1307
      %v1309 = vpop.f32.mrb[0].mxu0
      %v1310 = vpop.f32.mrb[0].mxu0
      %v1311 = vpop.f32.mrb[0].mxu0
      %1312 = vdwg.mxu0
      %v1314 = vsel %vm898, %v773, 0
      %v1317 = vsel %vm898, %v811, 0
      %1319 = vmatprep.subr.bf16.mxu0 0
      %1320 = vmatpush1.bf16.xpose.msra.mxu0 %v1317
      %1321 = vmatprep.subr.bf16.mxu0 0
      %1322 = vmatpush1.bf16.xpose.msra.mxu0 0
      %1323 = vmatprep.subr.bf16.mxu0 0
      %1324 = vmatpush1.bf16.xpose.msra.mxu0 0
      %1325 = vmatprep.subr.bf16.mxu0 0
      %1326 = vmatpush1.bf16.xpose.msra.mxu0 0
      %1327 = vmatprep.subr.bf16.mxu0 0
      %1328 = vmatpush1.bf16.xpose.msra.mxu0 0
      %1329 = vmatprep.subr.bf16.mxu0 0
      %1330 = vmatpush1.bf16.xpose.msra.mxu0 0
      %1331 = vmatprep.subr.bf16.mxu0 0
      %1332 = vmatpush1.bf16.xpose.msra.mxu0 0
      %1333 = vmatprep.subr.bf16.mxu0 0
      %1334 = vmatpush1.bf16.xpose.msra.mxu0 0
      %1335 = vmatprep.subr.bf16.mxu0 0
      %1336 = vmatpush1.bf16.xpose.msra.mxu0 0
      %1337 = vmatprep.subr.bf16.mxu0 0
      %1338 = vmatpush1.bf16.xpose.msra.mxu0 0
      %1339 = vmatprep.subr.bf16.mxu0 0
      %1340 = vmatpush1.bf16.xpose.msra.mxu0 0
      %1341 = vmatprep.subr.bf16.mxu0 0
      %1342 = vmatpush1.bf16.xpose.msra.mxu0 0
      %1343 = vmatprep.subr.bf16.mxu0 0
      %1344 = vmatpush1.bf16.xpose.msra.mxu0 0
      %1345 = vmatprep.subr.bf16.mxu0 0
      %1346 = vmatpush1.bf16.xpose.msra.mxu0 0
      %1347 = vmatprep.subr.bf16.mxu0 0
      %1348 = vmatpush1.bf16.xpose.msra.mxu0 0
      %1349 = vmatprep.subr.bf16.mxu0 0
      %1350 = vmatpush1.bf16.xpose.msra.mxu0 0
      %1351 = vmatprep.mubr.bf16.mxu0 0
      %1352 = vmatmul.mubr.bf16.gmra.mrb[0].mxu0 %v1314
      %v1353 = vpop.f32.mrb[0].mxu0
      %v1354 = vadd.f32 %v885, %v1353
      %v1355 = vpop.f32.mrb[0].mxu0
      %v1356 = vpop.f32.mrb[0].mxu0
      %v1357 = vpop.f32.mrb[0].mxu0
      %1358 = vdwg.mxu0
      %v1360 = vsel %vm898, %v775, 0
      %v1363 = vsel %vm898, %v813, 0
      %1365 = vmatprep.subr.bf16.mxu0 0
      %1366 = vmatpush1.bf16.xpose.msra.mxu0 %v1363
      %1367 = vmatprep.subr.bf16.mxu0 0
      %1368 = vmatpush1.bf16.xpose.msra.mxu0 0
      %1369 = vmatprep.subr.bf16.mxu0 0
      %1370 = vmatpush1.bf16.xpose.msra.mxu0 0
      %1371 = vmatprep.subr.bf16.mxu0 0
      %1372 = vmatpush1.bf16.xpose.msra.mxu0 0
      %1373 = vmatprep.subr.bf16.mxu0 0
      %1374 = vmatpush1.bf16.xpose.msra.mxu0 0
      %1375 = vmatprep.subr.bf16.mxu0 0
      %1376 = vmatpush1.bf16.xpose.msra.mxu0 0
      %1377 = vmatprep.subr.bf16.mxu0 0
      %1378 = vmatpush1.bf16.xpose.msra.mxu0 0
      %1379 = vmatprep.subr.bf16.mxu0 0
      %1380 = vmatpush1.bf16.xpose.msra.mxu0 0
      %1381 = vmatprep.subr.bf16.mxu0 0
      %1382 = vmatpush1.bf16.xpose.msra.mxu0 0
      %1383 = vmatprep.subr.bf16.mxu0 0
      %1384 = vmatpush1.bf16.xpose.msra.mxu0 0
      %1385 = vmatprep.subr.bf16.mxu0 0
      %1386 = vmatpush1.bf16.xpose.msra.mxu0 0
      %1387 = vmatprep.subr.bf16.mxu0 0
      %1388 = vmatpush1.bf16.xpose.msra.mxu0 0
      %1389 = vmatprep.subr.bf16.mxu0 0
      %1390 = vmatpush1.bf16.xpose.msra.mxu0 0
      %1391 = vmatprep.subr.bf16.mxu0 0
      %1392 = vmatpush1.bf16.xpose.msra.mxu0 0
      %1393 = vmatprep.subr.bf16.mxu0 0
      %1394 = vmatpush1.bf16.xpose.msra.mxu0 0
      %1395 = vmatprep.subr.bf16.mxu0 0
      %1396 = vmatpush1.bf16.xpose.msra.mxu0 0
      %1397 = vmatprep.mubr.bf16.mxu0 0
      %1398 = vmatmul.mubr.bf16.gmra.mrb[0].mxu0 %v1360
      %v1399 = vpop.f32.mrb[0].mxu0
      %v1400 = vadd.f32 %v889, %v1399
      %v1401 = vpop.f32.mrb[0].mxu0
      %v1402 = vpop.f32.mrb[0].mxu0
      %v1403 = vpop.f32.mrb[0].mxu0
      %1404 = vdwg.mxu0
      %v1406 = vsel %vm898, %v777, 0
      %v1409 = vsel %vm898, %v815, 0
      %1411 = vmatprep.subr.bf16.mxu0 0
      %1412 = vmatpush1.bf16.xpose.msra.mxu0 %v1409
      %1413 = vmatprep.subr.bf16.mxu0 0
      %1414 = vmatpush1.bf16.xpose.msra.mxu0 0
      %1415 = vmatprep.subr.bf16.mxu0 0
      %1416 = vmatpush1.bf16.xpose.msra.mxu0 0
      %1417 = vmatprep.subr.bf16.mxu0 0
      %1418 = vmatpush1.bf16.xpose.msra.mxu0 0
      %1419 = vmatprep.subr.bf16.mxu0 0
      %1420 = vmatpush1.bf16.xpose.msra.mxu0 0
      %1421 = vmatprep.subr.bf16.mxu0 0
      %1422 = vmatpush1.bf16.xpose.msra.mxu0 0
      %1423 = vmatprep.subr.bf16.mxu0 0
      %1424 = vmatpush1.bf16.xpose.msra.mxu0 0
      %1425 = vmatprep.subr.bf16.mxu0 0
      %1426 = vmatpush1.bf16.xpose.msra.mxu0 0
      %1427 = vmatprep.subr.bf16.mxu0 0
      %1428 = vmatpush1.bf16.xpose.msra.mxu0 0
      %1429 = vmatprep.subr.bf16.mxu0 0
      %1430 = vmatpush1.bf16.xpose.msra.mxu0 0
      %1431 = vmatprep.subr.bf16.mxu0 0
      %1432 = vmatpush1.bf16.xpose.msra.mxu0 0
      %1433 = vmatprep.subr.bf16.mxu0 0
      %1434 = vmatpush1.bf16.xpose.msra.mxu0 0
      %1435 = vmatprep.subr.bf16.mxu0 0
      %1436 = vmatpush1.bf16.xpose.msra.mxu0 0
      %1437 = vmatprep.subr.bf16.mxu0 0
      %1438 = vmatpush1.bf16.xpose.msra.mxu0 0
      %1439 = vmatprep.subr.bf16.mxu0 0
      %1440 = vmatpush1.bf16.xpose.msra.mxu0 0
      %1441 = vmatprep.subr.bf16.mxu0 0
      %1442 = vmatpush1.bf16.xpose.msra.mxu0 0
      %1443 = vmatprep.mubr.bf16.mxu0 0
      %1444 = vmatmul.mubr.bf16.gmra.mrb[0].mxu0 %v1406
      %v1445 = vpop.f32.mrb[0].mxu0
      %v1446 = vadd.f32 %v893, %v1445
      %v1447 = vpop.f32.mrb[0].mxu0
      %v1448 = vpop.f32.mrb[0].mxu0
      %v1449 = vpop.f32.mrb[0].mxu0
      %1450 = vdwg.mxu0
      %v1452 = vsel %vm898, %v779, 0
      %v1455 = vsel %vm898, %v817, 0
      %1457 = vmatprep.subr.bf16.mxu0 0
      %1458 = vmatpush1.bf16.xpose.msra.mxu0 %v1455
      %1459 = vmatprep.subr.bf16.mxu0 0
      %1460 = vmatpush1.bf16.xpose.msra.mxu0 0
      %1461 = vmatprep.subr.bf16.mxu0 0
      %1462 = vmatpush1.bf16.xpose.msra.mxu0 0
      %1463 = vmatprep.subr.bf16.mxu0 0
      %1464 = vmatpush1.bf16.xpose.msra.mxu0 0
      %1465 = vmatprep.subr.bf16.mxu0 0
      %1466 = vmatpush1.bf16.xpose.msra.mxu0 0
      %1467 = vmatprep.subr.bf16.mxu0 0
      %1468 = vmatpush1.bf16.xpose.msra.mxu0 0
      %1469 = vmatprep.subr.bf16.mxu0 0
      %1470 = vmatpush1.bf16.xpose.msra.mxu0 0
      %1471 = vmatprep.subr.bf16.mxu0 0
      %1472 = vmatpush1.bf16.xpose.msra.mxu0 0
      %1473 = vmatprep.subr.bf16.mxu0 0
      %1474 = vmatpush1.bf16.xpose.msra.mxu0 0
      %1475 = vmatprep.subr.bf16.mxu0 0
      %1476 = vmatpush1.bf16.xpose.msra.mxu0 0
      %1477 = vmatprep.subr.bf16.mxu0 0
      %1478 = vmatpush1.bf16.xpose.msra.mxu0 0
      %1479 = vmatprep.subr.bf16.mxu0 0
      %1480 = vmatpush1.bf16.xpose.msra.mxu0 0
      %1481 = vmatprep.subr.bf16.mxu0 0
      %1482 = vmatpush1.bf16.xpose.msra.mxu0 0
      %1483 = vmatprep.subr.bf16.mxu0 0
      %1484 = vmatpush1.bf16.xpose.msra.mxu0 0
      %1485 = vmatprep.subr.bf16.mxu0 0
      %1486 = vmatpush1.bf16.xpose.msra.mxu0 0
      %1487 = vmatprep.subr.bf16.mxu0 0
      %1488 = vmatpush1.bf16.xpose.msra.mxu0 0
      %1489 = vmatprep.mubr.bf16.mxu0 0
      %1490 = vmatmul.mubr.bf16.gmra.mrb[0].mxu0 %v1452
      %v1491 = vpop.f32.mrb[0].mxu0
      %v1492 = vadd.f32 %v881, %v1491
      %v1493 = vpop.f32.mrb[0].mxu0
      %v1494 = vpop.f32.mrb[0].mxu0
      %v1495 = vpop.f32.mrb[0].mxu0
      %1496 = vdwg.mxu0
      %v1498 = vsel %vm898, %v781, 0
      %v1501 = vsel %vm898, %v819, 0
      %1503 = vmatprep.subr.bf16.mxu0 0
      %1504 = vmatpush1.bf16.xpose.msra.mxu0 %v1501
      %1505 = vmatprep.subr.bf16.mxu0 0
      %1506 = vmatpush1.bf16.xpose.msra.mxu0 0
      %1507 = vmatprep.subr.bf16.mxu0 0
      %1508 = vmatpush1.bf16.xpose.msra.mxu0 0
      %1509 = vmatprep.subr.bf16.mxu0 0
      %1510 = vmatpush1.bf16.xpose.msra.mxu0 0
      %1511 = vmatprep.subr.bf16.mxu0 0
      %1512 = vmatpush1.bf16.xpose.msra.mxu0 0
      %1513 = vmatprep.subr.bf16.mxu0 0
      %1514 = vmatpush1.bf16.xpose.msra.mxu0 0
      %1515 = vmatprep.subr.bf16.mxu0 0
      %1516 = vmatpush1.bf16.xpose.msra.mxu0 0
      %1517 = vmatprep.subr.bf16.mxu0 0
      %1518 = vmatpush1.bf16.xpose.msra.mxu0 0
      %1519 = vmatprep.subr.bf16.mxu0 0
      %1520 = vmatpush1.bf16.xpose.msra.mxu0 0
      %1521 = vmatprep.subr.bf16.mxu0 0
      %1522 = vmatpush1.bf16.xpose.msra.mxu0 0
      %1523 = vmatprep.subr.bf16.mxu0 0
      %1524 = vmatpush1.bf16.xpose.msra.mxu0 0
      %1525 = vmatprep.subr.bf16.mxu0 0
      %1526 = vmatpush1.bf16.xpose.msra.mxu0 0
      %1527 = vmatprep.subr.bf16.mxu0 0
      %1528 = vmatpush1.bf16.xpose.msra.mxu0 0
      %1529 = vmatprep.subr.bf16.mxu0 0
      %1530 = vmatpush1.bf16.xpose.msra.mxu0 0
      %1531 = vmatprep.subr.bf16.mxu0 0
      %1532 = vmatpush1.bf16.xpose.msra.mxu0 0
      %1533 = vmatprep.subr.bf16.mxu0 0
      %1534 = vmatpush1.bf16.xpose.msra.mxu0 0
      %1535 = vmatprep.mubr.bf16.mxu0 0
      %1536 = vmatmul.mubr.bf16.gmra.mrb[0].mxu0 %v1498
      %v1537 = vpop.f32.mrb[0].mxu0
      %v1538 = vadd.f32 %v885, %v1537
      %v1539 = vpop.f32.mrb[0].mxu0
      %v1540 = vpop.f32.mrb[0].mxu0
      %v1541 = vpop.f32.mrb[0].mxu0
      %1542 = vdwg.mxu0
      %v1544 = vsel %vm898, %v783, 0
      %v1547 = vsel %vm898, %v821, 0
      %1549 = vmatprep.subr.bf16.mxu0 0
      %1550 = vmatpush1.bf16.xpose.msra.mxu0 %v1547
      %1551 = vmatprep.subr.bf16.mxu0 0
      %1552 = vmatpush1.bf16.xpose.msra.mxu0 0
      %1553 = vmatprep.subr.bf16.mxu0 0
      %1554 = vmatpush1.bf16.xpose.msra.mxu0 0
      %1555 = vmatprep.subr.bf16.mxu0 0
      %1556 = vmatpush1.bf16.xpose.msra.mxu0 0
      %1557 = vmatprep.subr.bf16.mxu0 0
      %1558 = vmatpush1.bf16.xpose.msra.mxu0 0
      %1559 = vmatprep.subr.bf16.mxu0 0
      %1560 = vmatpush1.bf16.xpose.msra.mxu0 0
      %1561 = vmatprep.subr.bf16.mxu0 0
      %1562 = vmatpush1.bf16.xpose.msra.mxu0 0
      %1563 = vmatprep.subr.bf16.mxu0 0
      %1564 = vmatpush1.bf16.xpose.msra.mxu0 0
      %1565 = vmatprep.subr.bf16.mxu0 0
      %1566 = vmatpush1.bf16.xpose.msra.mxu0 0
      %1567 = vmatprep.subr.bf16.mxu0 0
      %1568 = vmatpush1.bf16.xpose.msra.mxu0 0
      %1569 = vmatprep.subr.bf16.mxu0 0
      %1570 = vmatpush1.bf16.xpose.msra.mxu0 0
      %1571 = vmatprep.subr.bf16.mxu0 0
      %1572 = vmatpush1.bf16.xpose.msra.mxu0 0
      %1573 = vmatprep.subr.bf16.mxu0 0
      %1574 = vmatpush1.bf16.xpose.msra.mxu0 0
      %1575 = vmatprep.subr.bf16.mxu0 0
      %1576 = vmatpush1.bf16.xpose.msra.mxu0 0
      %1577 = vmatprep.subr.bf16.mxu0 0
      %1578 = vmatpush1.bf16.xpose.msra.mxu0 0
      %1579 = vmatprep.subr.bf16.mxu0 0
      %1580 = vmatpush1.bf16.xpose.msra.mxu0 0
      %1581 = vmatprep.mubr.bf16.mxu0 0
      %1582 = vmatmul.mubr.bf16.gmra.mrb[0].mxu0 %v1544
      %v1583 = vpop.f32.mrb[0].mxu0
      %v1584 = vadd.f32 %v889, %v1583
      %v1585 = vpop.f32.mrb[0].mxu0
      %v1586 = vpop.f32.mrb[0].mxu0
      %v1587 = vpop.f32.mrb[0].mxu0
      %1588 = vdwg.mxu0
      %v1590 = vsel %vm898, %v785, 0
      %v1593 = vsel %vm898, %v823, 0
      %1595 = vmatprep.subr.bf16.mxu0 0
      %1596 = vmatpush1.bf16.xpose.msra.mxu0 %v1593
      %1597 = vmatprep.subr.bf16.mxu0 0
      %1598 = vmatpush1.bf16.xpose.msra.mxu0 0
      %1599 = vmatprep.subr.bf16.mxu0 0
      %1600 = vmatpush1.bf16.xpose.msra.mxu0 0
      %1601 = vmatprep.subr.bf16.mxu0 0
      %1602 = vmatpush1.bf16.xpose.msra.mxu0 0
      %1603 = vmatprep.subr.bf16.mxu0 0
      %1604 = vmatpush1.bf16.xpose.msra.mxu0 0
      %1605 = vmatprep.subr.bf16.mxu0 0
      %1606 = vmatpush1.bf16.xpose.msra.mxu0 0
      %1607 = vmatprep.subr.bf16.mxu0 0
      %1608 = vmatpush1.bf16.xpose.msra.mxu0 0
      %1609 = vmatprep.subr.bf16.mxu0 0
      %1610 = vmatpush1.bf16.xpose.msra.mxu0 0
      %1611 = vmatprep.subr.bf16.mxu0 0
      %1612 = vmatpush1.bf16.xpose.msra.mxu0 0
      %1613 = vmatprep.subr.bf16.mxu0 0
      %1614 = vmatpush1.bf16.xpose.msra.mxu0 0
      %1615 = vmatprep.subr.bf16.mxu0 0
      %1616 = vmatpush1.bf16.xpose.msra.mxu0 0
      %1617 = vmatprep.subr.bf16.mxu0 0
      %1618 = vmatpush1.bf16.xpose.msra.mxu0 0
      %1619 = vmatprep.subr.bf16.mxu0 0
      %1620 = vmatpush1.bf16.xpose.msra.mxu0 0
      %1621 = vmatprep.subr.bf16.mxu0 0
      %1622 = vmatpush1.bf16.xpose.msra.mxu0 0
      %1623 = vmatprep.subr.bf16.mxu0 0
      %1624 = vmatpush1.bf16.xpose.msra.mxu0 0
      %1625 = vmatprep.subr.bf16.mxu0 0
      %1626 = vmatpush1.bf16.xpose.msra.mxu0 0
      %1627 = vmatprep.mubr.bf16.mxu0 0
      %1628 = vmatmul.mubr.bf16.gmra.mrb[0].mxu0 %v1590
      %v1629 = vpop.f32.mrb[0].mxu0
      %v1630 = vadd.f32 %v893, %v1629
      %v1631 = vpop.f32.mrb[0].mxu0
      %v1632 = vpop.f32.mrb[0].mxu0
      %v1633 = vpop.f32.mrb[0].mxu0
      %1634 = vdwg.mxu0
      %vm1635 = vcmask 27648
      %v1636 = vsel %vm1635, %v940, -inf
      %1637 = vmax.xlane.f32.xlu0 %v1636
      %v1638 = vpop.xlane.xlu0 %1637
      %v1639 = vsel %vm1635, %v986, -inf
      %1640 = vmax.xlane.f32.xlu0 %v1639
      %v1641 = vpop.xlane.xlu0 %1640
      %v1642 = vsel %vm1635, %v1032, -inf
      %1643 = vmax.xlane.f32.xlu0 %v1642
      %v1644 = vpop.xlane.xlu0 %1643
      %v1645 = vsel %vm1635, %v1078, -inf
      %1646 = vmax.xlane.f32.xlu0 %v1645
      %v1647 = vpop.xlane.xlu0 %1646
      %v1648 = vsel %vm1635, %v1124, -inf
      %1649 = vmax.xlane.f32.xlu0 %v1648
      %v1650 = vpop.xlane.xlu0 %1649
      %v1651 = vsel %vm1635, %v1170, -inf
      %1652 = vmax.xlane.f32.xlu0 %v1651
      %v1653 = vpop.xlane.xlu0 %1652
      %v1654 = vsel %vm1635, %v1216, -inf
      %1655 = vmax.xlane.f32.xlu0 %v1654
      %v1656 = vpop.xlane.xlu0 %1655
      %v1657 = vsel %vm1635, %v1262, -inf
      %1658 = vmax.xlane.f32.xlu0 %v1657
      %v1659 = vpop.xlane.xlu0 %1658
      %v1660 = vsel %vm1635, %v1308, -inf
      %1661 = vmax.xlane.f32.xlu0 %v1660
      %v1662 = vpop.xlane.xlu0 %1661
      %v1663 = vsel %vm1635, %v1354, -inf
      %1664 = vmax.xlane.f32.xlu0 %v1663
      %v1665 = vpop.xlane.xlu0 %1664
      %v1666 = vsel %vm1635, %v1400, -inf
      %1667 = vmax.xlane.f32.xlu0 %v1666
      %v1668 = vpop.xlane.xlu0 %1667
      %v1669 = vsel %vm1635, %v1446, -inf
      %1670 = vmax.xlane.f32.xlu0 %v1669
      %v1671 = vpop.xlane.xlu0 %1670
      %v1672 = vsel %vm1635, %v1492, -inf
      %1673 = vmax.xlane.f32.xlu0 %v1672
      %v1674 = vpop.xlane.xlu0 %1673
      %v1675 = vsel %vm1635, %v1538, -inf
      %1676 = vmax.xlane.f32.xlu0 %v1675
      %v1677 = vpop.xlane.xlu0 %1676
      %v1678 = vsel %vm1635, %v1584, -inf
      %1679 = vmax.xlane.f32.xlu0 %v1678
      %v1680 = vpop.xlane.xlu0 %1679
      %v1681 = vsel %vm1635, %v1630, -inf
      %1682 = vmax.xlane.f32.xlu0 %v1681
      %v1683 = vpop.xlane.xlu0 %1682
      %v1684 = vsub.f32 %v940, %v1638
      %v1685 = vsub.f32 %v986, %v1641
      %v1686 = vsub.f32 %v1032, %v1644
      %v1687 = vsub.f32 %v1078, %v1647
      %v1688 = vsub.f32 %v1124, %v1650
      %v1689 = vsub.f32 %v1170, %v1653
      %v1690 = vsub.f32 %v1216, %v1656
      %v1691 = vsub.f32 %v1262, %v1659
      %v1692 = vsub.f32 %v1308, %v1662
      %v1693 = vsub.f32 %v1354, %v1665
      %v1694 = vsub.f32 %v1400, %v1668
      %v1695 = vsub.f32 %v1446, %v1671
      %v1696 = vsub.f32 %v1492, %v1674
      %v1697 = vsub.f32 %v1538, %v1677
      %v1698 = vsub.f32 %v1584, %v1680
      %v1699 = vsub.f32 %v1630, %v1683
      %v1700 = vmul.f32 %v1684, 1.442695
      %v1701 = vpow.pop %v1700
      %v1702 = vmul.f32 %v1685, 1.442695
      %v1703 = vpow.pop %v1702
      %v1704 = vmul.f32 %v1686, 1.442695
      %v1705 = vpow.pop %v1704
      %v1706 = vmul.f32 %v1687, 1.442695
      %v1707 = vpow.pop %v1706
      %v1708 = vmul.f32 %v1688, 1.442695
      %v1709 = vpow.pop %v1708
      %v1710 = vmul.f32 %v1689, 1.442695
      %v1711 = vpow.pop %v1710
      %v1712 = vmul.f32 %v1690, 1.442695
      %v1713 = vpow.pop %v1712
      %v1714 = vmul.f32 %v1691, 1.442695
      %v1715 = vpow.pop %v1714
      %v1716 = vmul.f32 %v1692, 1.442695
      %v1717 = vpow.pop %v1716
      %v1718 = vmul.f32 %v1693, 1.442695
      %v1719 = vpow.pop %v1718
      %v1720 = vmul.f32 %v1694, 1.442695
      %v1721 = vpow.pop %v1720
      %v1722 = vmul.f32 %v1695, 1.442695
      %v1723 = vpow.pop %v1722
      %v1724 = vmul.f32 %v1696, 1.442695
      %v1725 = vpow.pop %v1724
      %v1726 = vmul.f32 %v1697, 1.442695
      %v1727 = vpow.pop %v1726
      %v1728 = vmul.f32 %v1698, 1.442695
      %v1729 = vpow.pop %v1728
      %v1730 = vmul.f32 %v1699, 1.442695
      %v1731 = vpow.pop %v1730
      %v1732 = vsel %vm1635, %v1701, 0.0
      %1733 = vadd.xlane.f32.xlu0 %v1732
      %v1734 = vpop.xlane.xlu0 %1733
      %v1735 = vsel %vm1635, %v1703, 0.0
      %1736 = vadd.xlane.f32.xlu0 %v1735
      %v1737 = vpop.xlane.xlu0 %1736
      %v1738 = vsel %vm1635, %v1705, 0.0
      %1739 = vadd.xlane.f32.xlu0 %v1738
      %v1740 = vpop.xlane.xlu0 %1739
      %v1741 = vsel %vm1635, %v1707, 0.0
      %1742 = vadd.xlane.f32.xlu0 %v1741
      %v1743 = vpop.xlane.xlu0 %1742
      %v1744 = vsel %vm1635, %v1709, 0.0
      %1745 = vadd.xlane.f32.xlu0 %v1744
      %v1746 = vpop.xlane.xlu0 %1745
      %v1747 = vsel %vm1635, %v1711, 0.0
      %1748 = vadd.xlane.f32.xlu0 %v1747
      %v1749 = vpop.xlane.xlu0 %1748
      %v1750 = vsel %vm1635, %v1713, 0.0
      %1751 = vadd.xlane.f32.xlu0 %v1750
      %v1752 = vpop.xlane.xlu0 %1751
      %v1753 = vsel %vm1635, %v1715, 0.0
      %1754 = vadd.xlane.f32.xlu0 %v1753
      %v1755 = vpop.xlane.xlu0 %1754
      %v1756 = vsel %vm1635, %v1717, 0.0
      %1757 = vadd.xlane.f32.xlu0 %v1756
      %v1758 = vpop.xlane.xlu0 %1757
      %v1759 = vsel %vm1635, %v1719, 0.0
      %1760 = vadd.xlane.f32.xlu0 %v1759
      %v1761 = vpop.xlane.xlu0 %1760
      %v1762 = vsel %vm1635, %v1721, 0.0
      %1763 = vadd.xlane.f32.xlu0 %v1762
      %v1764 = vpop.xlane.xlu0 %1763
      %v1765 = vsel %vm1635, %v1723, 0.0
      %1766 = vadd.xlane.f32.xlu0 %v1765
      %v1767 = vpop.xlane.xlu0 %1766
      %v1768 = vsel %vm1635, %v1725, 0.0
      %1769 = vadd.xlane.f32.xlu0 %v1768
      %v1770 = vpop.xlane.xlu0 %1769
      %v1771 = vsel %vm1635, %v1727, 0.0
      %1772 = vadd.xlane.f32.xlu0 %v1771
      %v1773 = vpop.xlane.xlu0 %1772
      %v1774 = vsel %vm1635, %v1729, 0.0
      %1775 = vadd.xlane.f32.xlu0 %v1774
      %v1776 = vpop.xlane.xlu0 %1775
      %v1777 = vsel %vm1635, %v1731, 0.0
      %1778 = vadd.xlane.f32.xlu0 %v1777
      %v1779 = vpop.xlane.xlu0 %1778
      %v1780 = vrcp.pop %v1734
      %v1781 = vrcp.pop %v1737
      %v1782 = vrcp.pop %v1740
      %v1783 = vrcp.pop %v1743
      %v1784 = vrcp.pop %v1746
      %v1785 = vrcp.pop %v1749
      %v1786 = vrcp.pop %v1752
      %v1787 = vrcp.pop %v1755
      %v1788 = vrcp.pop %v1758
      %v1789 = vrcp.pop %v1761
      %v1790 = vrcp.pop %v1764
      %v1791 = vrcp.pop %v1767
      %v1792 = vrcp.pop %v1770
      %v1793 = vrcp.pop %v1773
      %v1794 = vrcp.pop %v1776
      %v1795 = vrcp.pop %v1779
      %v1796 = vmul.f32 %v1701, %v1780
      %v1797 = vmul.f32 %v1703, %v1781
      %v1798 = vmul.f32 %v1705, %v1782
      %v1799 = vmul.f32 %v1707, %v1783
      %v1800 = vmul.f32 %v1709, %v1784
      %v1801 = vmul.f32 %v1711, %v1785
      %v1802 = vmul.f32 %v1713, %v1786
      %v1803 = vmul.f32 %v1715, %v1787
      %v1804 = vmul.f32 %v1717, %v1788
      %v1805 = vmul.f32 %v1719, %v1789
      %v1806 = vmul.f32 %v1721, %v1790
      %v1807 = vmul.f32 %v1723, %v1791
      %v1808 = vmul.f32 %v1725, %v1792
      %v1809 = vmul.f32 %v1727, %v1793
      %v1810 = vmul.f32 %v1729, %v1794
      %v1811 = vmul.f32 %v1731, %v1795
      %v1812 = vpack.c.bf16 %v1796, %v1796
      %v1813 = vpack.c.bf16 %v1797, %v1797
      %v1814 = vpack.c.bf16 %v1798, %v1798
      %v1815 = vpack.c.bf16 %v1799, %v1799
      %v1816 = vpack.c.bf16 %v1800, %v1800
      %v1817 = vpack.c.bf16 %v1801, %v1801
      %v1818 = vpack.c.bf16 %v1802, %v1802
      %v1819 = vpack.c.bf16 %v1803, %v1803
      %v1820 = vpack.c.bf16 %v1804, %v1804
      %v1821 = vpack.c.bf16 %v1805, %v1805
      %v1822 = vpack.c.bf16 %v1806, %v1806
      %v1823 = vpack.c.bf16 %v1807, %v1807
      %v1824 = vpack.c.bf16 %v1808, %v1808
      %v1825 = vpack.c.bf16 %v1809, %v1809
      %v1826 = vpack.c.bf16 %v1810, %v1810
      %v1827 = vpack.c.bf16 %v1811, %v1811
      %vm1828 = vcmask 31744
      %v1830 = vsel %vm1828, %v1812, 0
      %vm1832 = vcmask 1041408
      %v1834 = vsel %vm1832, %v830, 0
      %1836 = vmatprep.subr.bf16.mxu0 0
      %1837 = vmatpush1.bf16.msra.mxu0 %v1834
      %1838 = vmatprep.subr.bf16.mxu0 0
      %1839 = vmatpush1.bf16.msra.mxu0 0
      %1840 = vmatprep.subr.bf16.mxu0 0
      %1841 = vmatpush1.bf16.msra.mxu0 0
      %1842 = vmatprep.subr.bf16.mxu0 0
      %1843 = vmatpush1.bf16.msra.mxu0 0
      %1844 = vmatprep.subr.bf16.mxu0 0
      %1845 = vmatpush1.bf16.msra.mxu0 0
      %1846 = vmatprep.subr.bf16.mxu0 0
      %1847 = vmatpush1.bf16.msra.mxu0 0
      %1848 = vmatprep.subr.bf16.mxu0 0
      %1849 = vmatpush1.bf16.msra.mxu0 0
      %1850 = vmatprep.subr.bf16.mxu0 0
      %1851 = vmatpush1.bf16.msra.mxu0 0
      %1852 = vmatprep.subr.bf16.mxu0 0
      %1853 = vmatpush1.bf16.msra.mxu0 0
      %1854 = vmatprep.subr.bf16.mxu0 0
      %1855 = vmatpush1.bf16.msra.mxu0 0
      %1856 = vmatprep.subr.bf16.mxu0 0
      %1857 = vmatpush1.bf16.msra.mxu0 0
      %1858 = vmatprep.subr.bf16.mxu0 0
      %1859 = vmatpush1.bf16.msra.mxu0 0
      %1860 = vmatprep.subr.bf16.mxu0 0
      %1861 = vmatpush1.bf16.msra.mxu0 0
      %1862 = vmatprep.subr.bf16.mxu0 0
      %1863 = vmatpush1.bf16.msra.mxu0 0
      %1864 = vmatprep.subr.bf16.mxu0 0
      %1865 = vmatpush1.bf16.msra.mxu0 0
      %1866 = vmatprep.subr.bf16.mxu0 0
      %1867 = vmatpush1.bf16.msra.mxu0 0
      %1868 = vmatprep.mubr.bf16.mxu0 0
      %1869 = vmatmul.mubr.bf16.gmra.mrb[0].mxu0 %v1830
      %v1870 = vpop.f32.mrb[0].mxu0
      %v1871 = vadd.f32 0.0, %v1870
      %v1872 = vpop.f32.mrb[0].mxu0
      %v1873 = vpop.f32.mrb[0].mxu0
      %v1874 = vpop.f32.mrb[0].mxu0
      %1875 = vdwg.mxu0
      %v1877 = vsel %vm1828, %v1813, 0
      %v1880 = vsel %vm1832, %v831, 0
      %1882 = vmatprep.subr.bf16.mxu0 0
      %1883 = vmatpush1.bf16.msra.mxu0 %v1880
      %1884 = vmatprep.subr.bf16.mxu0 0
      %1885 = vmatpush1.bf16.msra.mxu0 0
      %1886 = vmatprep.subr.bf16.mxu0 0
      %1887 = vmatpush1.bf16.msra.mxu0 0
      %1888 = vmatprep.subr.bf16.mxu0 0
      %1889 = vmatpush1.bf16.msra.mxu0 0
      %1890 = vmatprep.subr.bf16.mxu0 0
      %1891 = vmatpush1.bf16.msra.mxu0 0
      %1892 = vmatprep.subr.bf16.mxu0 0
      %1893 = vmatpush1.bf16.msra.mxu0 0
      %1894 = vmatprep.subr.bf16.mxu0 0
      %1895 = vmatpush1.bf16.msra.mxu0 0
      %1896 = vmatprep.subr.bf16.mxu0 0
      %1897 = vmatpush1.bf16.msra.mxu0 0
      %1898 = vmatprep.subr.bf16.mxu0 0
      %1899 = vmatpush1.bf16.msra.mxu0 0
      %1900 = vmatprep.subr.bf16.mxu0 0
      %1901 = vmatpush1.bf16.msra.mxu0 0
      %1902 = vmatprep.subr.bf16.mxu0 0
      %1903 = vmatpush1.bf16.msra.mxu0 0
      %1904 = vmatprep.subr.bf16.mxu0 0
      %1905 = vmatpush1.bf16.msra.mxu0 0
      %1906 = vmatprep.subr.bf16.mxu0 0
      %1907 = vmatpush1.bf16.msra.mxu0 0
      %1908 = vmatprep.subr.bf16.mxu0 0
      %1909 = vmatpush1.bf16.msra.mxu0 0
      %1910 = vmatprep.subr.bf16.mxu0 0
      %1911 = vmatpush1.bf16.msra.mxu0 0
      %1912 = vmatprep.subr.bf16.mxu0 0
      %1913 = vmatpush1.bf16.msra.mxu0 0
      %1914 = vmatprep.mubr.bf16.mxu0 0
      %1915 = vmatmul.mubr.bf16.gmra.mrb[0].mxu0 %v1877
      %v1916 = vpop.f32.mrb[0].mxu0
      %v1917 = vadd.f32 0.0, %v1916
      %v1918 = vpop.f32.mrb[0].mxu0
      %v1919 = vpop.f32.mrb[0].mxu0
      %v1920 = vpop.f32.mrb[0].mxu0
      %1921 = vdwg.mxu0
      %v1923 = vsel %vm1828, %v1814, 0
      %v1926 = vsel %vm1832, %v832, 0
      %1928 = vmatprep.subr.bf16.mxu0 0
      %1929 = vmatpush1.bf16.msra.mxu0 %v1926
      %1930 = vmatprep.subr.bf16.mxu0 0
      %1931 = vmatpush1.bf16.msra.mxu0 0
      %1932 = vmatprep.subr.bf16.mxu0 0
      %1933 = vmatpush1.bf16.msra.mxu0 0
      %1934 = vmatprep.subr.bf16.mxu0 0
      %1935 = vmatpush1.bf16.msra.mxu0 0
      %1936 = vmatprep.subr.bf16.mxu0 0
      %1937 = vmatpush1.bf16.msra.mxu0 0
      %1938 = vmatprep.subr.bf16.mxu0 0
      %1939 = vmatpush1.bf16.msra.mxu0 0
      %1940 = vmatprep.subr.bf16.mxu0 0
      %1941 = vmatpush1.bf16.msra.mxu0 0
      %1942 = vmatprep.subr.bf16.mxu0 0
      %1943 = vmatpush1.bf16.msra.mxu0 0
      %1944 = vmatprep.subr.bf16.mxu0 0
      %1945 = vmatpush1.bf16.msra.mxu0 0
      %1946 = vmatprep.subr.bf16.mxu0 0
      %1947 = vmatpush1.bf16.msra.mxu0 0
      %1948 = vmatprep.subr.bf16.mxu0 0
      %1949 = vmatpush1.bf16.msra.mxu0 0
      %1950 = vmatprep.subr.bf16.mxu0 0
      %1951 = vmatpush1.bf16.msra.mxu0 0
      %1952 = vmatprep.subr.bf16.mxu0 0
      %1953 = vmatpush1.bf16.msra.mxu0 0
      %1954 = vmatprep.subr.bf16.mxu0 0
      %1955 = vmatpush1.bf16.msra.mxu0 0
      %1956 = vmatprep.subr.bf16.mxu0 0
      %1957 = vmatpush1.bf16.msra.mxu0 0
      %1958 = vmatprep.subr.bf16.mxu0 0
      %1959 = vmatpush1.bf16.msra.mxu0 0
      %1960 = vmatprep.mubr.bf16.mxu0 0
      %1961 = vmatmul.mubr.bf16.gmra.mrb[0].mxu0 %v1923
      %v1962 = vpop.f32.mrb[0].mxu0
      %v1963 = vadd.f32 0.0, %v1962
      %v1964 = vpop.f32.mrb[0].mxu0
      %v1965 = vpop.f32.mrb[0].mxu0
      %v1966 = vpop.f32.mrb[0].mxu0
      %1967 = vdwg.mxu0
      %v1969 = vsel %vm1828, %v1815, 0
      %v1972 = vsel %vm1832, %v833, 0
      %1974 = vmatprep.subr.bf16.mxu0 0
      %1975 = vmatpush1.bf16.msra.mxu0 %v1972
      %1976 = vmatprep.subr.bf16.mxu0 0
      %1977 = vmatpush1.bf16.msra.mxu0 0
      %1978 = vmatprep.subr.bf16.mxu0 0
      %1979 = vmatpush1.bf16.msra.mxu0 0
      %1980 = vmatprep.subr.bf16.mxu0 0
      %1981 = vmatpush1.bf16.msra.mxu0 0
      %1982 = vmatprep.subr.bf16.mxu0 0
      %1983 = vmatpush1.bf16.msra.mxu0 0
      %1984 = vmatprep.subr.bf16.mxu0 0
      %1985 = vmatpush1.bf16.msra.mxu0 0
      %1986 = vmatprep.subr.bf16.mxu0 0
      %1987 = vmatpush1.bf16.msra.mxu0 0
      %1988 = vmatprep.subr.bf16.mxu0 0
      %1989 = vmatpush1.bf16.msra.mxu0 0
      %1990 = vmatprep.subr.bf16.mxu0 0
      %1991 = vmatpush1.bf16.msra.mxu0 0
      %1992 = vmatprep.subr.bf16.mxu0 0
      %1993 = vmatpush1.bf16.msra.mxu0 0
      %1994 = vmatprep.subr.bf16.mxu0 0
      %1995 = vmatpush1.bf16.msra.mxu0 0
      %1996 = vmatprep.subr.bf16.mxu0 0
      %1997 = vmatpush1.bf16.msra.mxu0 0
      %1998 = vmatprep.subr.bf16.mxu0 0
      %1999 = vmatpush1.bf16.msra.mxu0 0
      %2000 = vmatprep.subr.bf16.mxu0 0
      %2001 = vmatpush1.bf16.msra.mxu0 0
      %2002 = vmatprep.subr.bf16.mxu0 0
      %2003 = vmatpush1.bf16.msra.mxu0 0
      %2004 = vmatprep.subr.bf16.mxu0 0
      %2005 = vmatpush1.bf16.msra.mxu0 0
      %2006 = vmatprep.mubr.bf16.mxu0 0
      %2007 = vmatmul.mubr.bf16.gmra.mrb[0].mxu0 %v1969
      %v2008 = vpop.f32.mrb[0].mxu0
      %v2009 = vadd.f32 0.0, %v2008
      %v2010 = vpop.f32.mrb[0].mxu0
      %v2011 = vpop.f32.mrb[0].mxu0
      %v2012 = vpop.f32.mrb[0].mxu0
      %2013 = vdwg.mxu0
      %v2015 = vsel %vm1828, %v1816, 0
      %v2018 = vsel %vm1832, %v839, 0
      %2020 = vmatprep.subr.bf16.mxu0 0
      %2021 = vmatpush1.bf16.msra.mxu0 %v2018
      %2022 = vmatprep.subr.bf16.mxu0 0
      %2023 = vmatpush1.bf16.msra.mxu0 0
      %2024 = vmatprep.subr.bf16.mxu0 0
      %2025 = vmatpush1.bf16.msra.mxu0 0
      %2026 = vmatprep.subr.bf16.mxu0 0
      %2027 = vmatpush1.bf16.msra.mxu0 0
      %2028 = vmatprep.subr.bf16.mxu0 0
      %2029 = vmatpush1.bf16.msra.mxu0 0
      %2030 = vmatprep.subr.bf16.mxu0 0
      %2031 = vmatpush1.bf16.msra.mxu0 0
      %2032 = vmatprep.subr.bf16.mxu0 0
      %2033 = vmatpush1.bf16.msra.mxu0 0
      %2034 = vmatprep.subr.bf16.mxu0 0
      %2035 = vmatpush1.bf16.msra.mxu0 0
      %2036 = vmatprep.subr.bf16.mxu0 0
      %2037 = vmatpush1.bf16.msra.mxu0 0
      %2038 = vmatprep.subr.bf16.mxu0 0
      %2039 = vmatpush1.bf16.msra.mxu0 0
      %2040 = vmatprep.subr.bf16.mxu0 0
      %2041 = vmatpush1.bf16.msra.mxu0 0
      %2042 = vmatprep.subr.bf16.mxu0 0
      %2043 = vmatpush1.bf16.msra.mxu0 0
      %2044 = vmatprep.subr.bf16.mxu0 0
      %2045 = vmatpush1.bf16.msra.mxu0 0
      %2046 = vmatprep.subr.bf16.mxu0 0
      %2047 = vmatpush1.bf16.msra.mxu0 0
      %2048 = vmatprep.subr.bf16.mxu0 0
      %2049 = vmatpush1.bf16.msra.mxu0 0
      %2050 = vmatprep.subr.bf16.mxu0 0
      %2051 = vmatpush1.bf16.msra.mxu0 0
      %2052 = vmatprep.mubr.bf16.mxu0 0
      %2053 = vmatmul.mubr.bf16.gmra.mrb[0].mxu0 %v2015
      %v2054 = vpop.f32.mrb[0].mxu0
      %v2055 = vadd.f32 0.0, %v2054
      %v2056 = vpop.f32.mrb[0].mxu0
      %v2057 = vpop.f32.mrb[0].mxu0
      %v2058 = vpop.f32.mrb[0].mxu0
      %2059 = vdwg.mxu0
      %v2061 = vsel %vm1828, %v1817, 0
      %v2064 = vsel %vm1832, %v841, 0
      %2066 = vmatprep.subr.bf16.mxu0 0
      %2067 = vmatpush1.bf16.msra.mxu0 %v2064
      %2068 = vmatprep.subr.bf16.mxu0 0
      %2069 = vmatpush1.bf16.msra.mxu0 0
      %2070 = vmatprep.subr.bf16.mxu0 0
      %2071 = vmatpush1.bf16.msra.mxu0 0
      %2072 = vmatprep.subr.bf16.mxu0 0
      %2073 = vmatpush1.bf16.msra.mxu0 0
      %2074 = vmatprep.subr.bf16.mxu0 0
      %2075 = vmatpush1.bf16.msra.mxu0 0
      %2076 = vmatprep.subr.bf16.mxu0 0
      %2077 = vmatpush1.bf16.msra.mxu0 0
      %2078 = vmatprep.subr.bf16.mxu0 0
      %2079 = vmatpush1.bf16.msra.mxu0 0
      %2080 = vmatprep.subr.bf16.mxu0 0
      %2081 = vmatpush1.bf16.msra.mxu0 0
      %2082 = vmatprep.subr.bf16.mxu0 0
      %2083 = vmatpush1.bf16.msra.mxu0 0
      %2084 = vmatprep.subr.bf16.mxu0 0
      %2085 = vmatpush1.bf16.msra.mxu0 0
      %2086 = vmatprep.subr.bf16.mxu0 0
      %2087 = vmatpush1.bf16.msra.mxu0 0
      %2088 = vmatprep.subr.bf16.mxu0 0
      %2089 = vmatpush1.bf16.msra.mxu0 0
      %2090 = vmatprep.subr.bf16.mxu0 0
      %2091 = vmatpush1.bf16.msra.mxu0 0
      %2092 = vmatprep.subr.bf16.mxu0 0
      %2093 = vmatpush1.bf16.msra.mxu0 0
      %2094 = vmatprep.subr.bf16.mxu0 0
      %2095 = vmatpush1.bf16.msra.mxu0 0
      %2096 = vmatprep.subr.bf16.mxu0 0
      %2097 = vmatpush1.bf16.msra.mxu0 0
      %2098 = vmatprep.mubr.bf16.mxu0 0
      %2099 = vmatmul.mubr.bf16.gmra.mrb[0].mxu0 %v2061
      %v2100 = vpop.f32.mrb[0].mxu0
      %v2101 = vadd.f32 0.0, %v2100
      %v2102 = vpop.f32.mrb[0].mxu0
      %v2103 = vpop.f32.mrb[0].mxu0
      %v2104 = vpop.f32.mrb[0].mxu0
      %2105 = vdwg.mxu0
      %v2107 = vsel %vm1828, %v1818, 0
      %v2110 = vsel %vm1832, %v843, 0
      %2112 = vmatprep.subr.bf16.mxu0 0
      %2113 = vmatpush1.bf16.msra.mxu0 %v2110
      %2114 = vmatprep.subr.bf16.mxu0 0
      %2115 = vmatpush1.bf16.msra.mxu0 0
      %2116 = vmatprep.subr.bf16.mxu0 0
      %2117 = vmatpush1.bf16.msra.mxu0 0
      %2118 = vmatprep.subr.bf16.mxu0 0
      %2119 = vmatpush1.bf16.msra.mxu0 0
      %2120 = vmatprep.subr.bf16.mxu0 0
      %2121 = vmatpush1.bf16.msra.mxu0 0
      %2122 = vmatprep.subr.bf16.mxu0 0
      %2123 = vmatpush1.bf16.msra.mxu0 0
      %2124 = vmatprep.subr.bf16.mxu0 0
      %2125 = vmatpush1.bf16.msra.mxu0 0
      %2126 = vmatprep.subr.bf16.mxu0 0
      %2127 = vmatpush1.bf16.msra.mxu0 0
      %2128 = vmatprep.subr.bf16.mxu0 0
      %2129 = vmatpush1.bf16.msra.mxu0 0
      %2130 = vmatprep.subr.bf16.mxu0 0
      %2131 = vmatpush1.bf16.msra.mxu0 0
      %2132 = vmatprep.subr.bf16.mxu0 0
      %2133 = vmatpush1.bf16.msra.mxu0 0
      %2134 = vmatprep.subr.bf16.mxu0 0
      %2135 = vmatpush1.bf16.msra.mxu0 0
      %2136 = vmatprep.subr.bf16.mxu0 0
      %2137 = vmatpush1.bf16.msra.mxu0 0
      %2138 = vmatprep.subr.bf16.mxu0 0
      %2139 = vmatpush1.bf16.msra.mxu0 0
      %2140 = vmatprep.subr.bf16.mxu0 0
      %2141 = vmatpush1.bf16.msra.mxu0 0
      %2142 = vmatprep.subr.bf16.mxu0 0
      %2143 = vmatpush1.bf16.msra.mxu0 0
      %2144 = vmatprep.mubr.bf16.mxu0 0
      %2145 = vmatmul.mubr.bf16.gmra.mrb[0].mxu0 %v2107
      %v2146 = vpop.f32.mrb[0].mxu0
      %v2147 = vadd.f32 0.0, %v2146
      %v2148 = vpop.f32.mrb[0].mxu0
      %v2149 = vpop.f32.mrb[0].mxu0
      %v2150 = vpop.f32.mrb[0].mxu0
      %2151 = vdwg.mxu0
      %v2153 = vsel %vm1828, %v1819, 0
      %v2156 = vsel %vm1832, %v845, 0
      %2158 = vmatprep.subr.bf16.mxu0 0
      %2159 = vmatpush1.bf16.msra.mxu0 %v2156
      %2160 = vmatprep.subr.bf16.mxu0 0
      %2161 = vmatpush1.bf16.msra.mxu0 0
      %2162 = vmatprep.subr.bf16.mxu0 0
      %2163 = vmatpush1.bf16.msra.mxu0 0
      %2164 = vmatprep.subr.bf16.mxu0 0
      %2165 = vmatpush1.bf16.msra.mxu0 0
      %2166 = vmatprep.subr.bf16.mxu0 0
      %2167 = vmatpush1.bf16.msra.mxu0 0
      %2168 = vmatprep.subr.bf16.mxu0 0
      %2169 = vmatpush1.bf16.msra.mxu0 0
      %2170 = vmatprep.subr.bf16.mxu0 0
      %2171 = vmatpush1.bf16.msra.mxu0 0
      %2172 = vmatprep.subr.bf16.mxu0 0
      %2173 = vmatpush1.bf16.msra.mxu0 0
      %2174 = vmatprep.subr.bf16.mxu0 0
      %2175 = vmatpush1.bf16.msra.mxu0 0
      %2176 = vmatprep.subr.bf16.mxu0 0
      %2177 = vmatpush1.bf16.msra.mxu0 0
      %2178 = vmatprep.subr.bf16.mxu0 0
      %2179 = vmatpush1.bf16.msra.mxu0 0
      %2180 = vmatprep.subr.bf16.mxu0 0
      %2181 = vmatpush1.bf16.msra.mxu0 0
      %2182 = vmatprep.subr.bf16.mxu0 0
      %2183 = vmatpush1.bf16.msra.mxu0 0
      %2184 = vmatprep.subr.bf16.mxu0 0
      %2185 = vmatpush1.bf16.msra.mxu0 0
      %2186 = vmatprep.subr.bf16.mxu0 0
      %2187 = vmatpush1.bf16.msra.mxu0 0
      %2188 = vmatprep.subr.bf16.mxu0 0
      %2189 = vmatpush1.bf16.msra.mxu0 0
      %2190 = vmatprep.mubr.bf16.mxu0 0
      %2191 = vmatmul.mubr.bf16.gmra.mrb[0].mxu0 %v2153
      %v2192 = vpop.f32.mrb[0].mxu0
      %v2193 = vadd.f32 0.0, %v2192
      %v2194 = vpop.f32.mrb[0].mxu0
      %v2195 = vpop.f32.mrb[0].mxu0
      %v2196 = vpop.f32.mrb[0].mxu0
      %2197 = vdwg.mxu0
      %v2199 = vsel %vm1828, %v1820, 0
      %v2202 = vsel %vm1832, %v847, 0
      %2204 = vmatprep.subr.bf16.mxu0 0
      %2205 = vmatpush1.bf16.msra.mxu0 %v2202
      %2206 = vmatprep.subr.bf16.mxu0 0
      %2207 = vmatpush1.bf16.msra.mxu0 0
      %2208 = vmatprep.subr.bf16.mxu0 0
      %2209 = vmatpush1.bf16.msra.mxu0 0
      %2210 = vmatprep.subr.bf16.mxu0 0
      %2211 = vmatpush1.bf16.msra.mxu0 0
      %2212 = vmatprep.subr.bf16.mxu0 0
      %2213 = vmatpush1.bf16.msra.mxu0 0
      %2214 = vmatprep.subr.bf16.mxu0 0
      %2215 = vmatpush1.bf16.msra.mxu0 0
      %2216 = vmatprep.subr.bf16.mxu0 0
      %2217 = vmatpush1.bf16.msra.mxu0 0
      %2218 = vmatprep.subr.bf16.mxu0 0
      %2219 = vmatpush1.bf16.msra.mxu0 0
      %2220 = vmatprep.subr.bf16.mxu0 0
      %2221 = vmatpush1.bf16.msra.mxu0 0
      %2222 = vmatprep.subr.bf16.mxu0 0
      %2223 = vmatpush1.bf16.msra.mxu0 0
      %2224 = vmatprep.subr.bf16.mxu0 0
      %2225 = vmatpush1.bf16.msra.mxu0 0
      %2226 = vmatprep.subr.bf16.mxu0 0
      %2227 = vmatpush1.bf16.msra.mxu0 0
      %2228 = vmatprep.subr.bf16.mxu0 0
      %2229 = vmatpush1.bf16.msra.mxu0 0
      %2230 = vmatprep.subr.bf16.mxu0 0
      %2231 = vmatpush1.bf16.msra.mxu0 0
      %2232 = vmatprep.subr.bf16.mxu0 0
      %2233 = vmatpush1.bf16.msra.mxu0 0
      %2234 = vmatprep.subr.bf16.mxu0 0
      %2235 = vmatpush1.bf16.msra.mxu0 0
      %2236 = vmatprep.mubr.bf16.mxu0 0
      %2237 = vmatmul.mubr.bf16.gmra.mrb[0].mxu0 %v2199
      %v2238 = vpop.f32.mrb[0].mxu0
      %v2239 = vadd.f32 0.0, %v2238
      %v2240 = vpop.f32.mrb[0].mxu0
      %v2241 = vpop.f32.mrb[0].mxu0
      %v2242 = vpop.f32.mrb[0].mxu0
      %2243 = vdwg.mxu0
      %v2245 = vsel %vm1828, %v1821, 0
      %v2248 = vsel %vm1832, %v849, 0
      %2250 = vmatprep.subr.bf16.mxu0 0
      %2251 = vmatpush1.bf16.msra.mxu0 %v2248
      %2252 = vmatprep.subr.bf16.mxu0 0
      %2253 = vmatpush1.bf16.msra.mxu0 0
      %2254 = vmatprep.subr.bf16.mxu0 0
      %2255 = vmatpush1.bf16.msra.mxu0 0
      %2256 = vmatprep.subr.bf16.mxu0 0
      %2257 = vmatpush1.bf16.msra.mxu0 0
      %2258 = vmatprep.subr.bf16.mxu0 0
      %2259 = vmatpush1.bf16.msra.mxu0 0
      %2260 = vmatprep.subr.bf16.mxu0 0
      %2261 = vmatpush1.bf16.msra.mxu0 0
      %2262 = vmatprep.subr.bf16.mxu0 0
      %2263 = vmatpush1.bf16.msra.mxu0 0
      %2264 = vmatprep.subr.bf16.mxu0 0
      %2265 = vmatpush1.bf16.msra.mxu0 0
      %2266 = vmatprep.subr.bf16.mxu0 0
      %2267 = vmatpush1.bf16.msra.mxu0 0
      %2268 = vmatprep.subr.bf16.mxu0 0
      %2269 = vmatpush1.bf16.msra.mxu0 0
      %2270 = vmatprep.subr.bf16.mxu0 0
      %2271 = vmatpush1.bf16.msra.mxu0 0
      %2272 = vmatprep.subr.bf16.mxu0 0
      %2273 = vmatpush1.bf16.msra.mxu0 0
      %2274 = vmatprep.subr.bf16.mxu0 0
      %2275 = vmatpush1.bf16.msra.mxu0 0
      %2276 = vmatprep.subr.bf16.mxu0 0
      %2277 = vmatpush1.bf16.msra.mxu0 0
      %2278 = vmatprep.subr.bf16.mxu0 0
      %2279 = vmatpush1.bf16.msra.mxu0 0
      %2280 = vmatprep.subr.bf16.mxu0 0
      %2281 = vmatpush1.bf16.msra.mxu0 0
      %2282 = vmatprep.mubr.bf16.mxu0 0
      %2283 = vmatmul.mubr.bf16.gmra.mrb[0].mxu0 %v2245
      %v2284 = vpop.f32.mrb[0].mxu0
      %v2285 = vadd.f32 0.0, %v2284
      %v2286 = vpop.f32.mrb[0].mxu0
      %v2287 = vpop.f32.mrb[0].mxu0
      %v2288 = vpop.f32.mrb[0].mxu0
      %2289 = vdwg.mxu0
      %v2291 = vsel %vm1828, %v1822, 0
      %v2294 = vsel %vm1832, %v851, 0
      %2296 = vmatprep.subr.bf16.mxu0 0
      %2297 = vmatpush1.bf16.msra.mxu0 %v2294
      %2298 = vmatprep.subr.bf16.mxu0 0
      %2299 = vmatpush1.bf16.msra.mxu0 0
      %2300 = vmatprep.subr.bf16.mxu0 0
      %2301 = vmatpush1.bf16.msra.mxu0 0
      %2302 = vmatprep.subr.bf16.mxu0 0
      %2303 = vmatpush1.bf16.msra.mxu0 0
      %2304 = vmatprep.subr.bf16.mxu0 0
      %2305 = vmatpush1.bf16.msra.mxu0 0
      %2306 = vmatprep.subr.bf16.mxu0 0
      %2307 = vmatpush1.bf16.msra.mxu0 0
      %2308 = vmatprep.subr.bf16.mxu0 0
      %2309 = vmatpush1.bf16.msra.mxu0 0
      %2310 = vmatprep.subr.bf16.mxu0 0
      %2311 = vmatpush1.bf16.msra.mxu0 0
      %2312 = vmatprep.subr.bf16.mxu0 0
      %2313 = vmatpush1.bf16.msra.mxu0 0
      %2314 = vmatprep.subr.bf16.mxu0 0
      %2315 = vmatpush1.bf16.msra.mxu0 0
      %2316 = vmatprep.subr.bf16.mxu0 0
      %2317 = vmatpush1.bf16.msra.mxu0 0
      %2318 = vmatprep.subr.bf16.mxu0 0
      %2319 = vmatpush1.bf16.msra.mxu0 0
      %2320 = vmatprep.subr.bf16.mxu0 0
      %2321 = vmatpush1.bf16.msra.mxu0 0
      %2322 = vmatprep.subr.bf16.mxu0 0
      %2323 = vmatpush1.bf16.msra.mxu0 0
      %2324 = vmatprep.subr.bf16.mxu0 0
      %2325 = vmatpush1.bf16.msra.mxu0 0
      %2326 = vmatprep.subr.bf16.mxu0 0
      %2327 = vmatpush1.bf16.msra.mxu0 0
      %2328 = vmatprep.mubr.bf16.mxu0 0
      %2329 = vmatmul.mubr.bf16.gmra.mrb[0].mxu0 %v2291
      %v2330 = vpop.f32.mrb[0].mxu0
      %v2331 = vadd.f32 0.0, %v2330
      %v2332 = vpop.f32.mrb[0].mxu0
      %v2333 = vpop.f32.mrb[0].mxu0
      %v2334 = vpop.f32.mrb[0].mxu0
      %2335 = vdwg.mxu0
      %v2337 = vsel %vm1828, %v1823, 0
      %v2340 = vsel %vm1832, %v853, 0
      %2342 = vmatprep.subr.bf16.mxu0 0
      %2343 = vmatpush1.bf16.msra.mxu0 %v2340
      %2344 = vmatprep.subr.bf16.mxu0 0
      %2345 = vmatpush1.bf16.msra.mxu0 0
      %2346 = vmatprep.subr.bf16.mxu0 0
      %2347 = vmatpush1.bf16.msra.mxu0 0
      %2348 = vmatprep.subr.bf16.mxu0 0
      %2349 = vmatpush1.bf16.msra.mxu0 0
      %2350 = vmatprep.subr.bf16.mxu0 0
      %2351 = vmatpush1.bf16.msra.mxu0 0
      %2352 = vmatprep.subr.bf16.mxu0 0
      %2353 = vmatpush1.bf16.msra.mxu0 0
      %2354 = vmatprep.subr.bf16.mxu0 0
      %2355 = vmatpush1.bf16.msra.mxu0 0
      %2356 = vmatprep.subr.bf16.mxu0 0
      %2357 = vmatpush1.bf16.msra.mxu0 0
      %2358 = vmatprep.subr.bf16.mxu0 0
      %2359 = vmatpush1.bf16.msra.mxu0 0
      %2360 = vmatprep.subr.bf16.mxu0 0
      %2361 = vmatpush1.bf16.msra.mxu0 0
      %2362 = vmatprep.subr.bf16.mxu0 0
      %2363 = vmatpush1.bf16.msra.mxu0 0
      %2364 = vmatprep.subr.bf16.mxu0 0
      %2365 = vmatpush1.bf16.msra.mxu0 0
      %2366 = vmatprep.subr.bf16.mxu0 0
      %2367 = vmatpush1.bf16.msra.mxu0 0
      %2368 = vmatprep.subr.bf16.mxu0 0
      %2369 = vmatpush1.bf16.msra.mxu0 0
      %2370 = vmatprep.subr.bf16.mxu0 0
      %2371 = vmatpush1.bf16.msra.mxu0 0
      %2372 = vmatprep.subr.bf16.mxu0 0
      %2373 = vmatpush1.bf16.msra.mxu0 0
      %2374 = vmatprep.mubr.bf16.mxu0 0
      %2375 = vmatmul.mubr.bf16.gmra.mrb[0].mxu0 %v2337
      %v2376 = vpop.f32.mrb[0].mxu0
      %v2377 = vadd.f32 0.0, %v2376
      %v2378 = vpop.f32.mrb[0].mxu0
      %v2379 = vpop.f32.mrb[0].mxu0
      %v2380 = vpop.f32.mrb[0].mxu0
      %2381 = vdwg.mxu0
      %v2383 = vsel %vm1828, %v1824, 0
      %v2386 = vsel %vm1832, %v855, 0
      %2388 = vmatprep.subr.bf16.mxu0 0
      %2389 = vmatpush1.bf16.msra.mxu0 %v2386
      %2390 = vmatprep.subr.bf16.mxu0 0
      %2391 = vmatpush1.bf16.msra.mxu0 0
      %2392 = vmatprep.subr.bf16.mxu0 0
      %2393 = vmatpush1.bf16.msra.mxu0 0
      %2394 = vmatprep.subr.bf16.mxu0 0
      %2395 = vmatpush1.bf16.msra.mxu0 0
      %2396 = vmatprep.subr.bf16.mxu0 0
      %2397 = vmatpush1.bf16.msra.mxu0 0
      %2398 = vmatprep.subr.bf16.mxu0 0
      %2399 = vmatpush1.bf16.msra.mxu0 0
      %2400 = vmatprep.subr.bf16.mxu0 0
      %2401 = vmatpush1.bf16.msra.mxu0 0
      %2402 = vmatprep.subr.bf16.mxu0 0
      %2403 = vmatpush1.bf16.msra.mxu0 0
      %2404 = vmatprep.subr.bf16.mxu0 0
      %2405 = vmatpush1.bf16.msra.mxu0 0
      %2406 = vmatprep.subr.bf16.mxu0 0
      %2407 = vmatpush1.bf16.msra.mxu0 0
      %2408 = vmatprep.subr.bf16.mxu0 0
      %2409 = vmatpush1.bf16.msra.mxu0 0
      %2410 = vmatprep.subr.bf16.mxu0 0
      %2411 = vmatpush1.bf16.msra.mxu0 0
      %2412 = vmatprep.subr.bf16.mxu0 0
      %2413 = vmatpush1.bf16.msra.mxu0 0
      %2414 = vmatprep.subr.bf16.mxu0 0
      %2415 = vmatpush1.bf16.msra.mxu0 0
      %2416 = vmatprep.subr.bf16.mxu0 0
      %2417 = vmatpush1.bf16.msra.mxu0 0
      %2418 = vmatprep.subr.bf16.mxu0 0
      %2419 = vmatpush1.bf16.msra.mxu0 0
      %2420 = vmatprep.mubr.bf16.mxu0 0
      %2421 = vmatmul.mubr.bf16.gmra.mrb[0].mxu0 %v2383
      %v2422 = vpop.f32.mrb[0].mxu0
      %v2423 = vadd.f32 0.0, %v2422
      %v2424 = vpop.f32.mrb[0].mxu0
      %v2425 = vpop.f32.mrb[0].mxu0
      %v2426 = vpop.f32.mrb[0].mxu0
      %2427 = vdwg.mxu0
      %v2429 = vsel %vm1828, %v1825, 0
      %v2432 = vsel %vm1832, %v857, 0
      %2434 = vmatprep.subr.bf16.mxu0 0
      %2435 = vmatpush1.bf16.msra.mxu0 %v2432
      %2436 = vmatprep.subr.bf16.mxu0 0
      %2437 = vmatpush1.bf16.msra.mxu0 0
      %2438 = vmatprep.subr.bf16.mxu0 0
      %2439 = vmatpush1.bf16.msra.mxu0 0
      %2440 = vmatprep.subr.bf16.mxu0 0
      %2441 = vmatpush1.bf16.msra.mxu0 0
      %2442 = vmatprep.subr.bf16.mxu0 0
      %2443 = vmatpush1.bf16.msra.mxu0 0
      %2444 = vmatprep.subr.bf16.mxu0 0
      %2445 = vmatpush1.bf16.msra.mxu0 0
      %2446 = vmatprep.subr.bf16.mxu0 0
      %2447 = vmatpush1.bf16.msra.mxu0 0
      %2448 = vmatprep.subr.bf16.mxu0 0
      %2449 = vmatpush1.bf16.msra.mxu0 0
      %2450 = vmatprep.subr.bf16.mxu0 0
      %2451 = vmatpush1.bf16.msra.mxu0 0
      %2452 = vmatprep.subr.bf16.mxu0 0
      %2453 = vmatpush1.bf16.msra.mxu0 0
      %2454 = vmatprep.subr.bf16.mxu0 0
      %2455 = vmatpush1.bf16.msra.mxu0 0
      %2456 = vmatprep.subr.bf16.mxu0 0
      %2457 = vmatpush1.bf16.msra.mxu0 0
      %2458 = vmatprep.subr.bf16.mxu0 0
      %2459 = vmatpush1.bf16.msra.mxu0 0
      %2460 = vmatprep.subr.bf16.mxu0 0
      %2461 = vmatpush1.bf16.msra.mxu0 0
      %2462 = vmatprep.subr.bf16.mxu0 0
      %2463 = vmatpush1.bf16.msra.mxu0 0
      %2464 = vmatprep.subr.bf16.mxu0 0
      %2465 = vmatpush1.bf16.msra.mxu0 0
      %2466 = vmatprep.mubr.bf16.mxu0 0
      %2467 = vmatmul.mubr.bf16.gmra.mrb[0].mxu0 %v2429
      %v2468 = vpop.f32.mrb[0].mxu0
      %v2469 = vadd.f32 0.0, %v2468
      %v2470 = vpop.f32.mrb[0].mxu0
      %v2471 = vpop.f32.mrb[0].mxu0
      %v2472 = vpop.f32.mrb[0].mxu0
      %2473 = vdwg.mxu0
      %v2475 = vsel %vm1828, %v1826, 0
      %v2478 = vsel %vm1832, %v859, 0
      %2480 = vmatprep.subr.bf16.mxu0 0
      %2481 = vmatpush1.bf16.msra.mxu0 %v2478
      %2482 = vmatprep.subr.bf16.mxu0 0
      %2483 = vmatpush1.bf16.msra.mxu0 0
      %2484 = vmatprep.subr.bf16.mxu0 0
      %2485 = vmatpush1.bf16.msra.mxu0 0
      %2486 = vmatprep.subr.bf16.mxu0 0
      %2487 = vmatpush1.bf16.msra.mxu0 0
      %2488 = vmatprep.subr.bf16.mxu0 0
      %2489 = vmatpush1.bf16.msra.mxu0 0
      %2490 = vmatprep.subr.bf16.mxu0 0
      %2491 = vmatpush1.bf16.msra.mxu0 0
      %2492 = vmatprep.subr.bf16.mxu0 0
      %2493 = vmatpush1.bf16.msra.mxu0 0
      %2494 = vmatprep.subr.bf16.mxu0 0
      %2495 = vmatpush1.bf16.msra.mxu0 0
      %2496 = vmatprep.subr.bf16.mxu0 0
      %2497 = vmatpush1.bf16.msra.mxu0 0
      %2498 = vmatprep.subr.bf16.mxu0 0
      %2499 = vmatpush1.bf16.msra.mxu0 0
      %2500 = vmatprep.subr.bf16.mxu0 0
      %2501 = vmatpush1.bf16.msra.mxu0 0
      %2502 = vmatprep.subr.bf16.mxu0 0
      %2503 = vmatpush1.bf16.msra.mxu0 0
      %2504 = vmatprep.subr.bf16.mxu0 0
      %2505 = vmatpush1.bf16.msra.mxu0 0
      %2506 = vmatprep.subr.bf16.mxu0 0
      %2507 = vmatpush1.bf16.msra.mxu0 0
      %2508 = vmatprep.subr.bf16.mxu0 0
      %2509 = vmatpush1.bf16.msra.mxu0 0
      %2510 = vmatprep.subr.bf16.mxu0 0
      %2511 = vmatpush1.bf16.msra.mxu0 0
      %2512 = vmatprep.mubr.bf16.mxu0 0
      %2513 = vmatmul.mubr.bf16.gmra.mrb[0].mxu0 %v2475
      %v2514 = vpop.f32.mrb[0].mxu0
      %v2515 = vadd.f32 0.0, %v2514
      %v2516 = vpop.f32.mrb[0].mxu0
      %v2517 = vpop.f32.mrb[0].mxu0
      %v2518 = vpop.f32.mrb[0].mxu0
      %2519 = vdwg.mxu0
      %v2521 = vsel %vm1828, %v1827, 0
      %v2524 = vsel %vm1832, %v861, 0
      %2526 = vmatprep.subr.bf16.mxu0 0
      %2527 = vmatpush1.bf16.msra.mxu0 %v2524
      %2528 = vmatprep.subr.bf16.mxu0 0
      %2529 = vmatpush1.bf16.msra.mxu0 0
      %2530 = vmatprep.subr.bf16.mxu0 0
      %2531 = vmatpush1.bf16.msra.mxu0 0
      %2532 = vmatprep.subr.bf16.mxu0 0
      %2533 = vmatpush1.bf16.msra.mxu0 0
      %2534 = vmatprep.subr.bf16.mxu0 0
      %2535 = vmatpush1.bf16.msra.mxu0 0
      %2536 = vmatprep.subr.bf16.mxu0 0
      %2537 = vmatpush1.bf16.msra.mxu0 0
      %2538 = vmatprep.subr.bf16.mxu0 0
      %2539 = vmatpush1.bf16.msra.mxu0 0
      %2540 = vmatprep.subr.bf16.mxu0 0
      %2541 = vmatpush1.bf16.msra.mxu0 0
      %2542 = vmatprep.subr.bf16.mxu0 0
      %2543 = vmatpush1.bf16.msra.mxu0 0
      %2544 = vmatprep.subr.bf16.mxu0 0
      %2545 = vmatpush1.bf16.msra.mxu0 0
      %2546 = vmatprep.subr.bf16.mxu0 0
      %2547 = vmatpush1.bf16.msra.mxu0 0
      %2548 = vmatprep.subr.bf16.mxu0 0
      %2549 = vmatpush1.bf16.msra.mxu0 0
      %2550 = vmatprep.subr.bf16.mxu0 0
      %2551 = vmatpush1.bf16.msra.mxu0 0
      %2552 = vmatprep.subr.bf16.mxu0 0
      %2553 = vmatpush1.bf16.msra.mxu0 0
      %2554 = vmatprep.subr.bf16.mxu0 0
      %2555 = vmatpush1.bf16.msra.mxu0 0
      %2556 = vmatprep.subr.bf16.mxu0 0
      %2557 = vmatpush1.bf16.msra.mxu0 0
      %2558 = vmatprep.mubr.bf16.mxu0 0
      %2559 = vmatmul.mubr.bf16.gmra.mrb[0].mxu0 %v2521
      %v2560 = vpop.f32.mrb[0].mxu0
      %v2561 = vadd.f32 0.0, %v2560
      %v2562 = vpop.f32.mrb[0].mxu0
      %v2563 = vpop.f32.mrb[0].mxu0
      %v2564 = vpop.f32.mrb[0].mxu0
      %2565 = vdwg.mxu0
      %2570 = vrot.lane.b32.xlu0 %v2055, 8
      %v2571 = vpop.permute.xlu0 %2570
      %2572 = vrot.lane.b32.xlu0 %v2101, 8
      %v2573 = vpop.permute.xlu0 %2572
      %2574 = vrot.lane.b32.xlu0 %v2147, 8
      %v2575 = vpop.permute.xlu0 %2574
      %2576 = vrot.lane.b32.xlu0 %v2193, 8
      %v2577 = vpop.permute.xlu0 %2576
      %2586 = vrot.lane.b32.xlu0 %v2239, 16
      %v2587 = vpop.permute.xlu0 %2586
      %2588 = vrot.lane.b32.xlu0 %v2285, 16
      %v2589 = vpop.permute.xlu0 %2588
      %2590 = vrot.lane.b32.xlu0 %v2331, 16
      %v2591 = vpop.permute.xlu0 %2590
      %2592 = vrot.lane.b32.xlu0 %v2377, 16
      %v2593 = vpop.permute.xlu0 %2592
      %2602 = vrot.lane.b32.xlu0 %v2423, 24
      %v2603 = vpop.permute.xlu0 %2602
      %2604 = vrot.lane.b32.xlu0 %v2469, 24
      %v2605 = vpop.permute.xlu0 %2604
      %2606 = vrot.lane.b32.xlu0 %v2515, 24
      %v2607 = vpop.permute.xlu0 %2606
      %2608 = vrot.lane.b32.xlu0 %v2561, 24
      %v2609 = vpop.permute.xlu0 %2608
      %v2614 = vsel %vm898, %v1871, %v2571
      %v2615 = vsel %vm898, %v1917, %v2573
      %v2616 = vsel %vm898, %v1963, %v2575
      %v2617 = vsel %vm898, %v2009, %v2577
      %vm2618 = vcmask 130048
      %v2619 = vsel %vm2618, %v2614, %v2587
      %v2620 = vsel %vm2618, %v2615, %v2589
      %v2621 = vsel %vm2618, %v2616, %v2591
      %v2622 = vsel %vm2618, %v2617, %v2593
      %vm2623 = vcmask 195584
      %v2624 = vsel %vm2623, %v2619, %v2603
      %v2625 = vsel %vm2623, %v2620, %v2605
      %v2626 = vsel %vm2623, %v2621, %v2607
      %v2627 = vsel %vm2623, %v2622, %v2609
      %v2632 = vcombine.low %v2624, %v2625
      %v2633 = vcombine.low %v2626, %v2627
      %v2636 = vpack.c.bf16 %v2633, %v2632
      %v2637 = vld [vmem:[%s9] sm:$0xf]
      %v2638 = vld [vmem:[%s9 + $0x4] sm:$0xf]
      %v2639 = vld [vmem:[%s9 + $0x8] sm:$0xf]
      %v2640 = vld [vmem:[%s9 + $0xc] sm:$0xf]
      %v2641 = vld [vmem:[%s10] sm:$0x1]
      %v2643 = vlaneseq
      %v2644 = vshrl.u32 %v2643, 7
      %v2645 = vsub.s32 0, %v2644
      %v2646 = vrot.slane %v2641, %v2645
      %v2652 = vunpack.c.l.b16 %v2637
      %v2653 = vunpack.c.l.b16 %v2638
      %v2654 = vunpack.c.l.b16 %v2639
      %v2655 = vunpack.c.l.b16 %v2640
      %v2656 = vpack.c.b16 %v2653, %v2652
      %v2657 = vpack.c.b16 %v2655, %v2654
      %v2661 = vsel %vm567, %v2636, 0
      %2663 = vmatprep.subr.bf16.mxu0 0
      %2664 = vmatpush1.bf16.msra.mxu0 %v2656
      %2665 = vmatprep.subr.bf16.mxu0 0
      %2666 = vmatpush1.bf16.msra.mxu0 %v2657
      %2667 = vmatprep.subr.bf16.mxu0 0
      %2668 = vmatpush1.bf16.msra.mxu0 0
      %2669 = vmatprep.subr.bf16.mxu0 0
      %2670 = vmatpush1.bf16.msra.mxu0 0
      %2671 = vmatprep.subr.bf16.mxu0 0
      %2672 = vmatpush1.bf16.msra.mxu0 0
      %2673 = vmatprep.subr.bf16.mxu0 0
      %2674 = vmatpush1.bf16.msra.mxu0 0
      %2675 = vmatprep.subr.bf16.mxu0 0
      %2676 = vmatpush1.bf16.msra.mxu0 0
      %2677 = vmatprep.subr.bf16.mxu0 0
      %2678 = vmatpush1.bf16.msra.mxu0 0
      %2679 = vmatprep.subr.bf16.mxu0 0
      %2680 = vmatpush1.bf16.msra.mxu0 0
      %2681 = vmatprep.subr.bf16.mxu0 0
      %2682 = vmatpush1.bf16.msra.mxu0 0
      %2683 = vmatprep.subr.bf16.mxu0 0
      %2684 = vmatpush1.bf16.msra.mxu0 0
      %2685 = vmatprep.subr.bf16.mxu0 0
      %2686 = vmatpush1.bf16.msra.mxu0 0
      %2687 = vmatprep.subr.bf16.mxu0 0
      %2688 = vmatpush1.bf16.msra.mxu0 0
      %2689 = vmatprep.subr.bf16.mxu0 0
      %2690 = vmatpush1.bf16.msra.mxu0 0
      %2691 = vmatprep.subr.bf16.mxu0 0
      %2692 = vmatpush1.bf16.msra.mxu0 0
      %2693 = vmatprep.subr.bf16.mxu0 0
      %2694 = vmatpush1.bf16.msra.mxu0 0
      %2695 = vmatprep.mubr.bf16.mxu0 0
      %2696 = vmatmul.mubr.bf16.gmra.mrb[0].mxu0 %v2661
      %v2697 = vpop.f32.mrb[0].mxu0
      %v2698 = vadd.f32 %v2646, %v2697
      %v2699 = vpop.f32.mrb[0].mxu0
      %v2700 = vpop.f32.mrb[0].mxu0
      %v2701 = vadd.f32 %v2646, %v2700
      %v2702 = vpop.f32.mrb[0].mxu0
      %2703 = vdwg.mxu0
      %v2704 = vadd.f32 %v535, %v2698
      %v2705 = vadd.f32 %v536, %v2701
      %v2706 = vsel %vm567, %v2704, 0.0
      %v2707 = vsel %vm567, %v2705, 0.0
      %v2708 = vadd.f32 %v2706, %v2707
      %v2709 = vrot.slane %v2708, 4
      %v2710 = vadd.f32 %v2708, %v2709
      %v2711 = vrot.slane %v2710, 2
      %v2712 = vadd.f32 %v2710, %v2711
      %v2713 = vrot.slane %v2712, 1
      %v2714 = vadd.f32 %v2712, %v2713
      %v2715 = vmul.f32 %v2714, 0.0625
      %v2716 = vsub.f32 %v2704, %v2715
      %v2717 = vsub.f32 %v2705, %v2715
      %v2718 = vmul.f32 %v2716, %v2716
      %v2719 = vmul.f32 %v2717, %v2717
      %v2720 = vsel %vm567, %v2718, 0.0
      %v2721 = vsel %vm567, %v2719, 0.0
      %v2722 = vadd.f32 %v2720, %v2721
      %v2723 = vrot.slane %v2722, 4
      %v2724 = vadd.f32 %v2722, %v2723
      %v2725 = vrot.slane %v2724, 2
      %v2726 = vadd.f32 %v2724, %v2725
      %v2727 = vrot.slane %v2726, 1
      %v2728 = vadd.f32 %v2726, %v2727
      %v2729 = vmul.f32 %v2728, 0.0625
      %v2730 = vadd.f32 %v2729, 1e-05
      %v2731 = vrsqrt.pop %v2730
      %v2732 = vmul.f32 %v2716, %v2731
      %v2733 = vmul.f32 %v2717, %v2731
      %v2734 = vpack.c.bf16 %v2733, %v2732
      %v2735 = vld [vmem:[%s11] sm:$0xf]
      %v2736 = vld [vmem:[%s11 + $0x4] sm:$0xf]
      %v2737 = vld [vmem:[%s11 + $0x8] sm:$0xf]
      %v2738 = vld [vmem:[%s11 + $0xc] sm:$0xf]
      %v2739 = vld [vmem:[%s12] sm:$0x1]
      %v2741 = vlaneseq
      %v2742 = vshrl.u32 %v2741, 7
      %v2743 = vsub.s32 0, %v2742
      %v2744 = vrot.slane %v2739, %v2743
      %v2750 = vunpack.c.l.b16 %v2735
      %v2751 = vunpack.c.l.b16 %v2736
      %v2752 = vunpack.c.l.b16 %v2737
      %v2753 = vunpack.c.l.b16 %v2738
      %v2754 = vpack.c.b16 %v2751, %v2750
      %v2755 = vpack.c.b16 %v2753, %v2752
      %v2759 = vsel %vm567, %v2734, 0
      %2761 = vmatprep.subr.bf16.mxu0 0
      %2762 = vmatpush1.bf16.msra.mxu0 %v2754
      %2763 = vmatprep.subr.bf16.mxu0 0
      %2764 = vmatpush1.bf16.msra.mxu0 %v2755
      %2765 = vmatprep.subr.bf16.mxu0 0
      %2766 = vmatpush1.bf16.msra.mxu0 0
      %2767 = vmatprep.subr.bf16.mxu0 0
      %2768 = vmatpush1.bf16.msra.mxu0 0
      %2769 = vmatprep.subr.bf16.mxu0 0
      %2770 = vmatpush1.bf16.msra.mxu0 0
      %2771 = vmatprep.subr.bf16.mxu0 0
      %2772 = vmatpush1.bf16.msra.mxu0 0
      %2773 = vmatprep.subr.bf16.mxu0 0
      %2774 = vmatpush1.bf16.msra.mxu0 0
      %2775 = vmatprep.subr.bf16.mxu0 0
      %2776 = vmatpush1.bf16.msra.mxu0 0
      %2777 = vmatprep.subr.bf16.mxu0 0
      %2778 = vmatpush1.bf16.msra.mxu0 0
      %2779 = vmatprep.subr.bf16.mxu0 0
      %2780 = vmatpush1.bf16.msra.mxu0 0
      %2781 = vmatprep.subr.bf16.mxu0 0
      %2782 = vmatpush1.bf16.msra.mxu0 0
      %2783 = vmatprep.subr.bf16.mxu0 0
      %2784 = vmatpush1.bf16.msra.mxu0 0
      %2785 = vmatprep.subr.bf16.mxu0 0
      %2786 = vmatpush1.bf16.msra.mxu0 0
      %2787 = vmatprep.subr.bf16.mxu0 0
      %2788 = vmatpush1.bf16.msra.mxu0 0
      %2789 = vmatprep.subr.bf16.mxu0 0
      %2790 = vmatpush1.bf16.msra.mxu0 0
      %2791 = vmatprep.subr.bf16.mxu0 0
      %2792 = vmatpush1.bf16.msra.mxu0 0
      %2793 = vmatprep.mubr.bf16.mxu0 0
      %2794 = vmatmul.mubr.bf16.gmra.mrb[0].mxu0 %v2759
      %v2795 = vpop.f32.mrb[0].mxu0
      %v2796 = vadd.f32 %v2744, %v2795
      %v2797 = vpop.f32.mrb[0].mxu0
      %v2798 = vpop.f32.mrb[0].mxu0
      %v2799 = vadd.f32 %v2744, %v2798
      %v2800 = vpop.f32.mrb[0].mxu0
      %2801 = vdwg.mxu0
      %v2802 = vmax.f32 %v2796, 0.0
      %v2803 = vmax.f32 %v2799, 0.0
      %v2804 = vpack.c.bf16 %v2803, %v2802
      %v2805 = vld [vmem:[%s13] sm:$0xf]
      %v2806 = vld [vmem:[%s13 + $0x4] sm:$0xf]
      %v2807 = vld [vmem:[%s13 + $0x8] sm:$0xf]
      %v2808 = vld [vmem:[%s13 + $0xc] sm:$0xf]
      %v2809 = vld [vmem:[%s13 + $0x10] sm:$0xf]
      %v2810 = vld [vmem:[%s13 + $0x14] sm:$0xf]
      %v2811 = vld [vmem:[%s13 + $0x18] sm:$0xf]
      %v2812 = vld [vmem:[%s13 + $0x1c] sm:$0xf]
      %v2813 = vld [vmem:[%s14] sm:$0x1]
      %v2815 = vlaneseq
      %v2816 = vshrl.u32 %v2815, 7
      %v2817 = vsub.s32 0, %v2816
      %v2818 = vrot.slane %v2813, %v2817
      %v2828 = vunpack.c.l.b16 %v2805
      %v2829 = vunpack.c.l.b16 %v2806
      %v2830 = vunpack.c.l.b16 %v2807
      %v2831 = vunpack.c.l.b16 %v2808
      %v2832 = vunpack.c.l.b16 %v2809
      %v2833 = vunpack.c.l.b16 %v2810
      %v2834 = vunpack.c.l.b16 %v2811
      %v2835 = vunpack.c.l.b16 %v2812
      %v2836 = vpack.c.b16 %v2829, %v2828
      %v2837 = vpack.c.b16 %v2831, %v2830
      %v2838 = vpack.c.b16 %v2833, %v2832
      %v2839 = vpack.c.b16 %v2835, %v2834
      %vm2844 = vcmask 523264
      %v2846 = vsel %vm2844, %v2804, 0
      %2848 = vmatprep.subr.bf16.mxu0 0
      %2849 = vmatpush1.bf16.msra.mxu0 %v2836
      %2850 = vmatprep.subr.bf16.mxu0 0
      %2851 = vmatpush1.bf16.msra.mxu0 %v2837
      %2852 = vmatprep.subr.bf16.mxu0 0
      %2853 = vmatpush1.bf16.msra.mxu0 %v2838
      %2854 = vmatprep.subr.bf16.mxu0 0
      %2855 = vmatpush1.bf16.msra.mxu0 %v2839
      %2856 = vmatprep.subr.bf16.mxu0 0
      %2857 = vmatpush1.bf16.msra.mxu0 0
      %2858 = vmatprep.subr.bf16.mxu0 0
      %2859 = vmatpush1.bf16.msra.mxu0 0
      %2860 = vmatprep.subr.bf16.mxu0 0
      %2861 = vmatpush1.bf16.msra.mxu0 0
      %2862 = vmatprep.subr.bf16.mxu0 0
      %2863 = vmatpush1.bf16.msra.mxu0 0
      %2864 = vmatprep.subr.bf16.mxu0 0
      %2865 = vmatpush1.bf16.msra.mxu0 0
      %2866 = vmatprep.subr.bf16.mxu0 0
      %2867 = vmatpush1.bf16.msra.mxu0 0
      %2868 = vmatprep.subr.bf16.mxu0 0
      %2869 = vmatpush1.bf16.msra.mxu0 0
      %2870 = vmatprep.subr.bf16.mxu0 0
      %2871 = vmatpush1.bf16.msra.mxu0 0
      %2872 = vmatprep.subr.bf16.mxu0 0
      %2873 = vmatpush1.bf16.msra.mxu0 0
      %2874 = vmatprep.subr.bf16.mxu0 0
      %2875 = vmatpush1.bf16.msra.mxu0 0
      %2876 = vmatprep.subr.bf16.mxu0 0
      %2877 = vmatpush1.bf16.msra.mxu0 0
      %2878 = vmatprep.subr.bf16.mxu0 0
      %2879 = vmatpush1.bf16.msra.mxu0 0
      %2880 = vmatprep.mubr.bf16.mxu0 0
      %2881 = vmatmul.mubr.bf16.gmra.mrb[0].mxu0 %v2846
      %v2882 = vpop.f32.mrb[0].mxu0
      %v2883 = vadd.f32 %v2818, %v2882
      %v2884 = vpop.f32.mrb[0].mxu0
      %v2885 = vpop.f32.mrb[0].mxu0
      %v2886 = vadd.f32 %v2818, %v2885
      %v2887 = vpop.f32.mrb[0].mxu0
      %2888 = vdwg.mxu0
      %v2889 = vadd.f32 %v2732, %v2883
      %v2890 = vadd.f32 %v2733, %v2886
      %v2891 = vsel %vm567, %v2889, 0.0
      %v2892 = vsel %vm567, %v2890, 0.0
      %v2893 = vadd.f32 %v2891, %v2892
      %v2894 = vrot.slane %v2893, 4
      %v2895 = vadd.f32 %v2893, %v2894
      %v2896 = vrot.slane %v2895, 2
      %v2897 = vadd.f32 %v2895, %v2896
      %v2898 = vrot.slane %v2897, 1
      %v2899 = vadd.f32 %v2897, %v2898
      %v2900 = vmul.f32 %v2899, 0.0625
      %v2901 = vsub.f32 %v2889, %v2900
      %v2902 = vsub.f32 %v2890, %v2900
      %v2903 = vmul.f32 %v2901, %v2901
      %v2904 = vmul.f32 %v2902, %v2902
      %v2905 = vsel %vm567, %v2903, 0.0
      %v2906 = vsel %vm567, %v2904, 0.0
      %v2907 = vadd.f32 %v2905, %v2906
      %v2908 = vrot.slane %v2907, 4
      %v2909 = vadd.f32 %v2907, %v2908
      %v2910 = vrot.slane %v2909, 2
      %v2911 = vadd.f32 %v2909, %v2910
      %v2912 = vrot.slane %v2911, 1
      %v2913 = vadd.f32 %v2911, %v2912
      %v2914 = vmul.f32 %v2913, 0.0625
      %v2915 = vadd.f32 %v2914, 1e-05
      %v2916 = vrsqrt.pop %v2915
      %v2917 = vmul.f32 %v2901, %v2916
      %v2918 = vmul.f32 %v2902, %v2916
      %v2919 = vpack.c.bf16 %v2918, %v2917
      %v2921 = vunpack.c.l.b16 %v2919
      %v2922 = vunpack.c.h.b16 %v2919
      %v2923 = vpack.c.b16 %v2921, %v2921
      %v2924 = vpack.c.b16 %v2922, %v2922
      %vm2927 = vcmask 257024
      %2928 = vst.msk [vmem:[%s531] sm:$0xf] %vm2927, %v2923
      %2929 = vst.msk [vmem:[%s531 + $0x4] sm:$0xf] %vm2927, %v2924
      %p2930 = scmp.lt.s32.totalorder %s26, 1
      %s2931 = scalar_select %p2930, %s26, 1
      %s2932 = smul.addr %s2931, 2
      %s2933 = smul.addr %s2932, 4
      %s2934 = scalar_lea.vmem %s15, %s2933
      // Predicated region
      $region81: #{eut_single_stage.10} parent=79 // pred_check
        %p2935 = pneg %p374
      $region82: #{eut_single_stage.10} parent=79 // pred_check_branch
        %2937 = sbr.rel (%p2935) target = $region84
      $region83: #{eut_single_stage.10} parent=79 // pred_region
        _
      $region84: #{eut_single_stage.10} parent=79 // pred_fallthru
        _
    $region80: #{eut_single_stage.10} parent=5 // pred_fallthru
      _
    %p2938 = scmp.le.s32.totalorder 2, %s21
    // Predicated region
    $region85: #{eut_single_stage.10} parent=5 // pred_check
      %p2939 = pneg %p2938
    $region86: #{eut_single_stage.10} parent=5 // pred_check_branch
      %2941 = sbr.rel (%p2939) target = $region88
    $region87: #{eut_single_stage.10} parent=5 // pred_region
      %s2942 = ssub.s32 %s21, 2
      // Predicated region
      $region89: #{eut_single_stage.10} parent=87 // pred_check
        %p2943 = pneg %p380
      $region90: #{eut_single_stage.10} parent=87 // pred_check_branch
        %2945 = sbr.rel (%p2943) target = $region92
      $region91: #{eut_single_stage.10} parent=87 // pred_region
        %p2946 = scmp.lt.s32.totalorder %s27, 1
        %s2947 = scalar_select %p2946, %s27, 1
        %s2948 = smul.addr %s2947, 2
        %s2949 = smul.addr %s2948, 4
        %s2950 = scalar_lea.vmem %s15, %s2949
      $region92: #{eut_single_stage.10} parent=87 // pred_fallthru
        _
    $region88: #{eut_single_stage.10} parent=5 // pred_fallthru
      _
  $region6: #{eut_single_stage.10} parent=0 // loop_footer
    %s25 = sadd.s32 1, %s21
  $region7: #{eut_single_stage.10} parent=0 // loop_footer_branch
    %20 = sbr.rel target = $region3
  $region8: #{eut_single_stage.10} parent=0 // loop_exit
    _

</llo_original>
